<compile_context>
chip_gen: v5e
topology: v5e:2x2
jax: 0.10.0
libtpu: 0.0.40
codegen_flags: <defaults>
</compile_context>

<pallas_src>
import functools
import math

import jax
import jax.numpy as jnp
import numpy as np
from jax.experimental import pallas as pl
from jax.experimental.pallas import tpu as pltpu


# ----------------------------- fused Pallas kernel -----------------------------

def _dqn_fused_kernel(h_dims, mxu_dtype, x_ref,
                      w1_ref, s1_ref, b1_ref,
                      w2_ref, s2_ref, b2_ref,
                      w3_ref, s3_ref, b3_ref,
                      wh_ref, bh_ref, o_ref):
    """One batch element per grid step.

    x_ref : (1, H0, W0)      input image (Cin == 1)
    w{l}  : (3, K_l, N_l)    banded conv weights (bf16), one slab per kernel row ki
    s{l}/b{l}: (1, N_l)      folded-BN scale / bias tiled over W positions, f32
    wh    : (H3, K_h, OPAD)  head weights permuted to the kernel flatten order (bf16)
    bh    : (1, OPAD)        head bias (zero-padded), f32
    o_ref : (1, 1, OPAD)     head output (padded), f32
    """
    ho1, ho2, ho3 = h_dims

    def conv_bn_act(x, w_ref, s_ref, b_ref, ho, act):
        # y[ho, wo*C + co] = sum_ki  x[ho+ki, :] @ W_banded[ki]   (im2col is implicit)
        n_out = w_ref.shape[2]
        acc = jnp.zeros((ho, n_out), jnp.float32)
        for ki in range(3):                                         # static unroll
            lhs = x[ki:ki + ho, :].astype(mxu_dtype)
            acc = acc + jnp.dot(lhs, w_ref[ki],
                                preferred_element_type=jnp.float32)
        y = acc * s_ref[...] + b_ref[...]
        if act == "relu":
            return jnp.maximum(y, 0.0)
        return jnp.tanh(y)

    x0 = x_ref[0]                                                   # (H0, W0) f32
    h1 = conv_bn_act(x0, w1_ref, s1_ref, b1_ref, ho1, "relu")       # (H1, W1p*32)
    h2 = conv_bn_act(h1, w2_ref, s2_ref, b2_ref, ho2, "relu")       # (H2, W2p*32)
    h3 = conv_bn_act(h2, w3_ref, s3_ref, b3_ref, ho3, "tanh")       # (H3, W3p*32)

    # Linear head: full contraction over (h, w*C+c); one mat-vec per output row h.
    acc = bh_ref[...]                                               # (1, OPAD) f32
    for r in range(ho3):                                            # static unroll
        acc = acc + jnp.dot(h3[r:r + 1, :].astype(mxu_dtype), wh_ref[r],
                            preferred_element_type=jnp.float32)
    o_ref[0] = acc


# ----------------------------- forward wrapper -----------------------------

def dqn_forward(x_nchw, prepped):
    meta = prepped["meta"]
    h0, w0 = meta["H"][0], meta["W"][0]
    h1, h2, h3 = meta["H"][1], meta["H"][2], meta["H"][3]
    opad = meta["opad"]
    outputs = meta["outputs"]

    n = x_nchw.shape[0]
    x = x_nchw[:, 0, :, :]                      # NCHW with C == 1 -> (N, H, W)

    weight_keys = ("w1", "s1", "b1", "w2", "s2", "b2", "w3", "s3", "b3", "wh", "bh")
    weight_args = [prepped[k] for k in weight_keys]

    def full_spec(a):
        zeros = (0,) * a.ndim
        return pl.BlockSpec(a.shape, lambda i: zeros)   # constant block: DMA'd once

    in_specs = [pl.BlockSpec((1, h0, w0), lambda i: (i, 0, 0))]
    in_specs += [full_spec(a) for a in weight_args]
    out_specs = pl.BlockSpec((1, 1, opad), lambda i: (i, 0, 0))
    out_shape = jax.ShapeDtypeStruct((n, 1, opad), jnp.float32)

    # Advisory cost estimate so XLA schedules the custom call correctly.
    flops = 0
    for wkey, ho in (("w1", h1), ("w2", h2), ("w3", h3)):
        _, kk, nn = prepped[wkey].shape
        flops += 2 * 3 * ho * kk * nn
    flops += 2 * h3 * prepped["wh"].shape[1] * opad
    flops *= n
    transcendentals = n * h3 * prepped["w3"].shape[2]               # tanh count
    bytes_accessed = int(x.size * x.dtype.itemsize
                         + sum(a.size * a.dtype.itemsize for a in weight_args)
                         + n * opad * 4)

    out = pl.pallas_call(
        functools.partial(_dqn_fused_kernel, (h1, h2, h3), prepped["w1"].dtype),
        out_shape=out_shape,
        grid=(n,),
        in_specs=in_specs,
        out_specs=out_specs,
        compiler_params=pltpu.CompilerParams(
            dimension_semantics=("parallel",)),        # v7x: batch sharded over both TCs
        cost_estimate=pl.CostEstimate(
            flops=flops, transcendentals=transcendentals,
            bytes_accessed=bytes_accessed),
    )(x, *weight_args)

    return out[:, 0, :outputs]


# ----------------------------- one-time parameter prep -----------------------------

def _ceil_to(v, m):
    return -(-v // m) * m


def prepare_params(params, h, w, outputs, eps=1e-5, mxu_dtype=jnp.bfloat16):
    """Fold BN into scale/bias, build banded conv weights and the permuted head weight.

    Runs once at init time (off the per-call hot path)."""
    C = 32
    KH = KW = 3
    Hs, Ws = [h], [w]
    for _ in range(3):
        Hs.append(Hs[-1] - (KH - 1))
        Ws.append(Ws[-1] - (KW - 1))
    c_ins = (1, C, C)
    # pad each layer's flattened W*C lane width up to a multiple of 128 (lane-dense)
    w_pads = [Ws[0]] + [_ceil_to(Ws[l] * C, 128) // C for l in (1, 2, 3)]

    prepped = {}
    for l in range(3):
        w_hwio = np.asarray(params[f"w{l+1}"], np.float32)          # (3, 3, Cin, Cout)
        conv_b = np.asarray(params[f"b{l+1}"], np.float32)
        gamma = np.asarray(params[f"g{l+1}"], np.float32)
        beta = np.asarray(params[f"be{l+1}"], np.float32)
        mean = np.asarray(params[f"m{l+1}"], np.float32)
        var = np.asarray(params[f"v{l+1}"], np.float32)

        scale_c = gamma / np.sqrt(var + eps)
        bias_c = beta + scale_c * (conv_b - mean)

        cin = c_ins[l]
        win_real, win_pad = Ws[l], w_pads[l]
        wo_real, wo_pad = Ws[l + 1], w_pads[l + 1]

        # banded weight: W[ki][(wo+kj)*Cin + ci, wo*C + co] = w[ki, kj, ci, co]
        wb = np.zeros((KH, win_pad * cin, wo_pad * C), np.float32)
        for ki in range(KH):
            for kj in range(KW):
                for wo in range(wo_real):
                    wi = wo + kj
                    if wi < win_real:
                        wb[ki, wi * cin:(wi + 1) * cin, wo * C:(wo + 1) * C] = w_hwio[ki, kj]

        prepped[f"w{l+1}"] = jnp.asarray(wb, mxu_dtype)
        prepped[f"s{l+1}"] = jnp.asarray(np.tile(scale_c, wo_pad)[None, :], jnp.float32)
        prepped[f"b{l+1}"] = jnp.asarray(np.tile(bias_c, wo_pad)[None, :], jnp.float32)

    # Linear head: permute columns from PyTorch's NCHW flatten (c*H*W + h*W + w) into the
    # kernel's (h, w*C + c) layout; pad outputs up to 128 lanes.
    convh, convw = Hs[3], Ws[3]
    w3_pad = w_pads[3]
    opad = max(128, _ceil_to(outputs, 128))
    head_w = np.asarray(params["head_w"], np.float32)               # (outputs, C*convh*convw)
    head_b = np.asarray(params["head_b"], np.float32)
    hw4 = head_w.reshape(outputs, C, convh, convw)                  # [o, c, h, w]
    wh = np.zeros((convh, w3_pad * C, opad), np.float32)
    wh[:, :convw * C, :outputs] = np.transpose(hw4, (2, 3, 1, 0)).reshape(
        convh, convw * C, outputs)
    bh = np.zeros((1, opad), np.float32)
    bh[0, :outputs] = head_b
    prepped["wh"] = jnp.asarray(wh, mxu_dtype)
    prepped["bh"] = jnp.asarray(bh)

    prepped["meta"] = {"H": Hs, "W": Ws, "Wpad": w_pads, "opad": opad, "outputs": outputs}
    return prepped


# ----------------------------- parameter init (PyTorch-equivalent) -----------------------------

def init_params(key, h, w, outputs):
    def conv2d_size_out(size, kernel_size=3, stride=1):
        return (size - (kernel_size - 1) - 1) // stride + 1
    convw = conv2d_size_out(conv2d_size_out(conv2d_size_out(w)))
    convh = conv2d_size_out(conv2d_size_out(conv2d_size_out(h)))
    lin_in = convw * convh * 32

    keys = jax.random.split(key, 8)

    def uni(k, shape, fan_in):
        bound = 1.0 / math.sqrt(fan_in)
        return jax.random.uniform(k, shape, jnp.float32, -bound, bound)

    p = {}
    p["w1"] = uni(keys[0], (3, 3, 1, 32), 1 * 9)     # HWIO
    p["b1"] = uni(keys[1], (32,), 1 * 9)
    p["w2"] = uni(keys[2], (3, 3, 32, 32), 32 * 9)
    p["b2"] = uni(keys[3], (32,), 32 * 9)
    p["w3"] = uni(keys[4], (3, 3, 32, 32), 32 * 9)
    p["b3"] = uni(keys[5], (32,), 32 * 9)
    for i in (1, 2, 3):                              # fresh BatchNorm2d
        p[f"g{i}"] = jnp.ones((32,), jnp.float32)
        p[f"be{i}"] = jnp.zeros((32,), jnp.float32)
        p[f"m{i}"] = jnp.zeros((32,), jnp.float32)
        p[f"v{i}"] = jnp.ones((32,), jnp.float32)
    p["head_w"] = uni(keys[6], (outputs, lin_in), lin_in)   # PyTorch (out, in)
    p["head_b"] = uni(keys[7], (outputs,), lin_in)
    return p


# ----------------------------- reference (pure JAX, f32) -----------------------------

def dqn_forward_ref(x_nchw, params, eps=1e-5):
    x = x_nchw

    def conv(x, w_hwio, b):
        y = jax.lax.conv_general_dilated(
            x, jnp.transpose(w_hwio, (3, 2, 0, 1)),  # HWIO -> OIHW
            window_strides=(1, 1), padding="VALID",
            dimension_numbers=("NCHW", "OIHW", "NCHW"))
        return y + b.reshape(1, -1, 1, 1)

    def bn(x, g, be, m, v):
        return (x - m.reshape(1, -1, 1, 1)) / jnp.sqrt(v.reshape(1, -1, 1, 1) + eps) \
            * g.reshape(1, -1, 1, 1) + be.reshape(1, -1, 1, 1)

    x = jax.nn.relu(bn(conv(x, params["w1"], params["b1"]),
                       params["g1"], params["be1"], params["m1"], params["v1"]))
    x = jax.nn.relu(bn(conv(x, params["w2"], params["b2"]),
                       params["g2"], params["be2"], params["m2"], params["v2"]))
    x = jnp.tanh(bn(conv(x, params["w3"], params["b3"]),
                    params["g3"], params["be3"], params["m3"], params["v3"]))
    x = x.reshape(x.shape[0], -1)
    return x @ params["head_w"].T + params["head_b"]


# ----------------------------- main -----------------------------

if __name__ == "__main__":
    H, W, OUTPUTS, BATCH = 16, 16, 4, 2
    key = jax.random.PRNGKey(0)
    kp, kx = jax.random.split(key)
    params = init_params(kp, H, W, OUTPUTS)
    prepped = prepare_params(params, H, W, OUTPUTS)
    x = jax.random.normal(kx, (BATCH, 1, H, W), jnp.float32)   # NCHW like PyTorch

    out = jax.block_until_ready(dqn_forward(x, prepped))
    ref = jax.block_until_ready(dqn_forward_ref(x, params))

    assert out.shape == (BATCH, OUTPUTS), out.shape
    # bf16 MXU operands with f32 accumulation: tolerance set accordingly.
    assert jnp.allclose(out, ref, atol=5e-2, rtol=5e-2), (out, ref)
    print("KERNEL_OK")
</pallas_src>

<mosaic_0001>
module attributes {stable_mosaic.version = 11 : i64} {
  func.func @_dqn_fused_kernel(%arg0: i32, %arg1: memref<1x16x16xf32, #tpu.memory_space<vmem>>, %arg2: memref<3x16x512xbf16, #tpu.memory_space<vmem>>, %arg3: memref<1x512xf32, #tpu.memory_space<vmem>>, %arg4: memref<1x512xf32, #tpu.memory_space<vmem>>, %arg5: memref<3x512x384xbf16, #tpu.memory_space<vmem>>, %arg6: memref<1x384xf32, #tpu.memory_space<vmem>>, %arg7: memref<1x384xf32, #tpu.memory_space<vmem>>, %arg8: memref<3x384x384xbf16, #tpu.memory_space<vmem>>, %arg9: memref<1x384xf32, #tpu.memory_space<vmem>>, %arg10: memref<1x384xf32, #tpu.memory_space<vmem>>, %arg11: memref<10x384x128xbf16, #tpu.memory_space<vmem>>, %arg12: memref<1x128xf32, #tpu.memory_space<vmem>>, %arg13: memref<1x1x128xf32, #tpu.memory_space<vmem>>) attributes {dimension_semantics = [#tpu.dimension_semantics<parallel>], iteration_bounds = array<i64: 2>, scalar_prefetch = 0 : i64, scratch_operands = 0 : i64, tpu.core_type = #tpu.core_type<tc>, window_params = [{transform_indices = @transform_0, window_bounds = array<i64: 1, 16, 16>}, {pipeline_mode = #tpu.pipeline_mode<synchronous>, transform_indices = @transform_1, window_bounds = array<i64: 3, 16, 512>}, {pipeline_mode = #tpu.pipeline_mode<synchronous>, transform_indices = @transform_2, window_bounds = array<i64: 1, 512>}, {pipeline_mode = #tpu.pipeline_mode<synchronous>, transform_indices = @transform_3, window_bounds = array<i64: 1, 512>}, {pipeline_mode = #tpu.pipeline_mode<synchronous>, transform_indices = @transform_4, window_bounds = array<i64: 3, 512, 384>}, {pipeline_mode = #tpu.pipeline_mode<synchronous>, transform_indices = @transform_5, window_bounds = array<i64: 1, 384>}, {pipeline_mode = #tpu.pipeline_mode<synchronous>, transform_indices = @transform_6, window_bounds = array<i64: 1, 384>}, {pipeline_mode = #tpu.pipeline_mode<synchronous>, transform_indices = @transform_7, window_bounds = array<i64: 3, 384, 384>}, {pipeline_mode = #tpu.pipeline_mode<synchronous>, transform_indices = @transform_8, window_bounds = array<i64: 1, 384>}, {pipeline_mode = #tpu.pipeline_mode<synchronous>, transform_indices = @transform_9, window_bounds = array<i64: 1, 384>}, {pipeline_mode = #tpu.pipeline_mode<synchronous>, transform_indices = @transform_10, window_bounds = array<i64: 10, 384, 128>}, {pipeline_mode = #tpu.pipeline_mode<synchronous>, transform_indices = @transform_11, window_bounds = array<i64: 1, 128>}, {transform_indices = @transform_12, window_bounds = array<i64: 1, 1, 128>}]} {
    %c0 = arith.constant 0 : index
    %c0_0 = arith.constant 0 : index
    %c0_1 = arith.constant 0 : index
    %0 = vector.load %arg1[%c0, %c0_0, %c0_1] : memref<1x16x16xf32, #tpu.memory_space<vmem>>, vector<1x16x16xf32>
    %1 = vector.shape_cast %0 : vector<1x16x16xf32> to vector<16x16xf32>
    %cst = arith.constant 0.000000e+00 : f32
    %2 = vector.broadcast %cst : f32 to vector<14x512xf32>
    %3 = vector.extract_strided_slice %1 {offsets = [0, 0], sizes = [14, 16], strides = [1, 1]} : vector<16x16xf32> to vector<14x16xf32>
    %4 = arith.truncf %3 : vector<14x16xf32> to vector<14x16xbf16>
    %c0_2 = arith.constant 0 : index
    %c0_3 = arith.constant 0 : index
    %c0_4 = arith.constant 0 : index
    %5 = vector.load %arg2[%c0_2, %c0_3, %c0_4] : memref<3x16x512xbf16, #tpu.memory_space<vmem>>, vector<1x16x512xbf16>
    %6 = vector.shape_cast %5 : vector<1x16x512xbf16> to vector<16x512xbf16>
    %cst_5 = arith.constant dense<0.000000e+00> : vector<14x512xf32>
    %7 = tpu.matmul %4, %6, %cst_5 {dimension_numbers = #tpu.dot_dimension_numbers<[1], [0], [0], [1], [0, 0, 1, 1], [], []>} : vector<14x16xbf16>, vector<16x512xbf16>, vector<14x512xf32> -> vector<14x512xf32>
    %8 = arith.addf %2, %7 : vector<14x512xf32>
    %9 = vector.extract_strided_slice %1 {offsets = [1, 0], sizes = [14, 16], strides = [1, 1]} : vector<16x16xf32> to vector<14x16xf32>
    %10 = arith.truncf %9 : vector<14x16xf32> to vector<14x16xbf16>
    %c1 = arith.constant 1 : index
    %c0_6 = arith.constant 0 : index
    %c0_7 = arith.constant 0 : index
    %11 = vector.load %arg2[%c1, %c0_6, %c0_7] : memref<3x16x512xbf16, #tpu.memory_space<vmem>>, vector<1x16x512xbf16>
    %12 = vector.shape_cast %11 : vector<1x16x512xbf16> to vector<16x512xbf16>
    %cst_8 = arith.constant dense<0.000000e+00> : vector<14x512xf32>
    %13 = tpu.matmul %10, %12, %cst_8 {dimension_numbers = #tpu.dot_dimension_numbers<[1], [0], [0], [1], [0, 0, 1, 1], [], []>} : vector<14x16xbf16>, vector<16x512xbf16>, vector<14x512xf32> -> vector<14x512xf32>
    %14 = arith.addf %8, %13 : vector<14x512xf32>
    %15 = vector.extract_strided_slice %1 {offsets = [2, 0], sizes = [14, 16], strides = [1, 1]} : vector<16x16xf32> to vector<14x16xf32>
    %16 = arith.truncf %15 : vector<14x16xf32> to vector<14x16xbf16>
    %c2 = arith.constant 2 : index
    %c0_9 = arith.constant 0 : index
    %c0_10 = arith.constant 0 : index
    %17 = vector.load %arg2[%c2, %c0_9, %c0_10] : memref<3x16x512xbf16, #tpu.memory_space<vmem>>, vector<1x16x512xbf16>
    %18 = vector.shape_cast %17 : vector<1x16x512xbf16> to vector<16x512xbf16>
    %cst_11 = arith.constant dense<0.000000e+00> : vector<14x512xf32>
    %19 = tpu.matmul %16, %18, %cst_11 {dimension_numbers = #tpu.dot_dimension_numbers<[1], [0], [0], [1], [0, 0, 1, 1], [], []>} : vector<14x16xbf16>, vector<16x512xbf16>, vector<14x512xf32> -> vector<14x512xf32>
    %20 = arith.addf %14, %19 : vector<14x512xf32>
    %c0_12 = arith.constant 0 : index
    %c0_13 = arith.constant 0 : index
    %21 = vector.load %arg3[%c0_12, %c0_13] : memref<1x512xf32, #tpu.memory_space<vmem>>, vector<1x512xf32>
    %22 = vector.broadcast %21 : vector<1x512xf32> to vector<14x512xf32>
    %23 = arith.mulf %20, %22 : vector<14x512xf32>
    %c0_14 = arith.constant 0 : index
    %c0_15 = arith.constant 0 : index
    %24 = vector.load %arg4[%c0_14, %c0_15] : memref<1x512xf32, #tpu.memory_space<vmem>>, vector<1x512xf32>
    %25 = vector.broadcast %24 : vector<1x512xf32> to vector<14x512xf32>
    %26 = arith.addf %23, %25 : vector<14x512xf32>
    %cst_16 = arith.constant 0.000000e+00 : f32
    %27 = vector.broadcast %cst_16 : f32 to vector<14x512xf32>
    %28 = arith.maximumf %26, %27 : vector<14x512xf32>
    %cst_17 = arith.constant 0.000000e+00 : f32
    %29 = vector.broadcast %cst_17 : f32 to vector<12x384xf32>
    %30 = vector.extract_strided_slice %28 {offsets = [0, 0], sizes = [12, 512], strides = [1, 1]} : vector<14x512xf32> to vector<12x512xf32>
    %31 = arith.truncf %30 : vector<12x512xf32> to vector<12x512xbf16>
    %c0_18 = arith.constant 0 : index
    %c0_19 = arith.constant 0 : index
    %c0_20 = arith.constant 0 : index
    %32 = vector.load %arg5[%c0_18, %c0_19, %c0_20] : memref<3x512x384xbf16, #tpu.memory_space<vmem>>, vector<1x512x384xbf16>
    %33 = vector.shape_cast %32 : vector<1x512x384xbf16> to vector<512x384xbf16>
    %cst_21 = arith.constant dense<0.000000e+00> : vector<12x384xf32>
    %34 = tpu.matmul %31, %33, %cst_21 {dimension_numbers = #tpu.dot_dimension_numbers<[1], [0], [0], [1], [0, 0, 1, 1], [], []>} : vector<12x512xbf16>, vector<512x384xbf16>, vector<12x384xf32> -> vector<12x384xf32>
    %35 = arith.addf %29, %34 : vector<12x384xf32>
    %36 = vector.extract_strided_slice %28 {offsets = [1, 0], sizes = [12, 512], strides = [1, 1]} : vector<14x512xf32> to vector<12x512xf32>
    %37 = arith.truncf %36 : vector<12x512xf32> to vector<12x512xbf16>
    %c1_22 = arith.constant 1 : index
    %c0_23 = arith.constant 0 : index
    %c0_24 = arith.constant 0 : index
    %38 = vector.load %arg5[%c1_22, %c0_23, %c0_24] : memref<3x512x384xbf16, #tpu.memory_space<vmem>>, vector<1x512x384xbf16>
    %39 = vector.shape_cast %38 : vector<1x512x384xbf16> to vector<512x384xbf16>
    %cst_25 = arith.constant dense<0.000000e+00> : vector<12x384xf32>
    %40 = tpu.matmul %37, %39, %cst_25 {dimension_numbers = #tpu.dot_dimension_numbers<[1], [0], [0], [1], [0, 0, 1, 1], [], []>} : vector<12x512xbf16>, vector<512x384xbf16>, vector<12x384xf32> -> vector<12x384xf32>
    %41 = arith.addf %35, %40 : vector<12x384xf32>
    %42 = vector.extract_strided_slice %28 {offsets = [2, 0], sizes = [12, 512], strides = [1, 1]} : vector<14x512xf32> to vector<12x512xf32>
    %43 = arith.truncf %42 : vector<12x512xf32> to vector<12x512xbf16>
    %c2_26 = arith.constant 2 : index
    %c0_27 = arith.constant 0 : index
    %c0_28 = arith.constant 0 : index
    %44 = vector.load %arg5[%c2_26, %c0_27, %c0_28] : memref<3x512x384xbf16, #tpu.memory_space<vmem>>, vector<1x512x384xbf16>
    %45 = vector.shape_cast %44 : vector<1x512x384xbf16> to vector<512x384xbf16>
    %cst_29 = arith.constant dense<0.000000e+00> : vector<12x384xf32>
    %46 = tpu.matmul %43, %45, %cst_29 {dimension_numbers = #tpu.dot_dimension_numbers<[1], [0], [0], [1], [0, 0, 1, 1], [], []>} : vector<12x512xbf16>, vector<512x384xbf16>, vector<12x384xf32> -> vector<12x384xf32>
    %47 = arith.addf %41, %46 : vector<12x384xf32>
    %c0_30 = arith.constant 0 : index
    %c0_31 = arith.constant 0 : index
    %48 = vector.load %arg6[%c0_30, %c0_31] : memref<1x384xf32, #tpu.memory_space<vmem>>, vector<1x384xf32>
    %49 = vector.broadcast %48 : vector<1x384xf32> to vector<12x384xf32>
    %50 = arith.mulf %47, %49 : vector<12x384xf32>
    %c0_32 = arith.constant 0 : index
    %c0_33 = arith.constant 0 : index
    %51 = vector.load %arg7[%c0_32, %c0_33] : memref<1x384xf32, #tpu.memory_space<vmem>>, vector<1x384xf32>
    %52 = vector.broadcast %51 : vector<1x384xf32> to vector<12x384xf32>
    %53 = arith.addf %50, %52 : vector<12x384xf32>
    %cst_34 = arith.constant 0.000000e+00 : f32
    %54 = vector.broadcast %cst_34 : f32 to vector<12x384xf32>
    %55 = arith.maximumf %53, %54 : vector<12x384xf32>
    %cst_35 = arith.constant 0.000000e+00 : f32
    %56 = vector.broadcast %cst_35 : f32 to vector<10x384xf32>
    %57 = vector.extract_strided_slice %55 {offsets = [0, 0], sizes = [10, 384], strides = [1, 1]} : vector<12x384xf32> to vector<10x384xf32>
    %58 = arith.truncf %57 : vector<10x384xf32> to vector<10x384xbf16>
    %c0_36 = arith.constant 0 : index
    %c0_37 = arith.constant 0 : index
    %c0_38 = arith.constant 0 : index
    %59 = vector.load %arg8[%c0_36, %c0_37, %c0_38] : memref<3x384x384xbf16, #tpu.memory_space<vmem>>, vector<1x384x384xbf16>
    %60 = vector.shape_cast %59 : vector<1x384x384xbf16> to vector<384x384xbf16>
    %cst_39 = arith.constant dense<0.000000e+00> : vector<10x384xf32>
    %61 = tpu.matmul %58, %60, %cst_39 {dimension_numbers = #tpu.dot_dimension_numbers<[1], [0], [0], [1], [0, 0, 1, 1], [], []>} : vector<10x384xbf16>, vector<384x384xbf16>, vector<10x384xf32> -> vector<10x384xf32>
    %62 = arith.addf %56, %61 : vector<10x384xf32>
    %63 = vector.extract_strided_slice %55 {offsets = [1, 0], sizes = [10, 384], strides = [1, 1]} : vector<12x384xf32> to vector<10x384xf32>
    %64 = arith.truncf %63 : vector<10x384xf32> to vector<10x384xbf16>
    %c1_40 = arith.constant 1 : index
    %c0_41 = arith.constant 0 : index
    %c0_42 = arith.constant 0 : index
    %65 = vector.load %arg8[%c1_40, %c0_41, %c0_42] : memref<3x384x384xbf16, #tpu.memory_space<vmem>>, vector<1x384x384xbf16>
    %66 = vector.shape_cast %65 : vector<1x384x384xbf16> to vector<384x384xbf16>
    %cst_43 = arith.constant dense<0.000000e+00> : vector<10x384xf32>
    %67 = tpu.matmul %64, %66, %cst_43 {dimension_numbers = #tpu.dot_dimension_numbers<[1], [0], [0], [1], [0, 0, 1, 1], [], []>} : vector<10x384xbf16>, vector<384x384xbf16>, vector<10x384xf32> -> vector<10x384xf32>
    %68 = arith.addf %62, %67 : vector<10x384xf32>
    %69 = vector.extract_strided_slice %55 {offsets = [2, 0], sizes = [10, 384], strides = [1, 1]} : vector<12x384xf32> to vector<10x384xf32>
    %70 = arith.truncf %69 : vector<10x384xf32> to vector<10x384xbf16>
    %c2_44 = arith.constant 2 : index
    %c0_45 = arith.constant 0 : index
    %c0_46 = arith.constant 0 : index
    %71 = vector.load %arg8[%c2_44, %c0_45, %c0_46] : memref<3x384x384xbf16, #tpu.memory_space<vmem>>, vector<1x384x384xbf16>
    %72 = vector.shape_cast %71 : vector<1x384x384xbf16> to vector<384x384xbf16>
    %cst_47 = arith.constant dense<0.000000e+00> : vector<10x384xf32>
    %73 = tpu.matmul %70, %72, %cst_47 {dimension_numbers = #tpu.dot_dimension_numbers<[1], [0], [0], [1], [0, 0, 1, 1], [], []>} : vector<10x384xbf16>, vector<384x384xbf16>, vector<10x384xf32> -> vector<10x384xf32>
    %74 = arith.addf %68, %73 : vector<10x384xf32>
    %c0_48 = arith.constant 0 : index
    %c0_49 = arith.constant 0 : index
    %75 = vector.load %arg9[%c0_48, %c0_49] : memref<1x384xf32, #tpu.memory_space<vmem>>, vector<1x384xf32>
    %76 = vector.broadcast %75 : vector<1x384xf32> to vector<10x384xf32>
    %77 = arith.mulf %74, %76 : vector<10x384xf32>
    %c0_50 = arith.constant 0 : index
    %c0_51 = arith.constant 0 : index
    %78 = vector.load %arg10[%c0_50, %c0_51] : memref<1x384xf32, #tpu.memory_space<vmem>>, vector<1x384xf32>
    %79 = vector.broadcast %78 : vector<1x384xf32> to vector<10x384xf32>
    %80 = arith.addf %77, %79 : vector<10x384xf32>
    %81 = math.tanh %80 : vector<10x384xf32>
    %c0_52 = arith.constant 0 : index
    %c0_53 = arith.constant 0 : index
    %82 = vector.load %arg12[%c0_52, %c0_53] : memref<1x128xf32, #tpu.memory_space<vmem>>, vector<1x128xf32>
    %83 = vector.extract_strided_slice %81 {offsets = [0, 0], sizes = [1, 384], strides = [1, 1]} : vector<10x384xf32> to vector<1x384xf32>
    %84 = arith.truncf %83 : vector<1x384xf32> to vector<1x384xbf16>
    %c0_54 = arith.constant 0 : index
    %c0_55 = arith.constant 0 : index
    %c0_56 = arith.constant 0 : index
    %85 = vector.load %arg11[%c0_54, %c0_55, %c0_56] : memref<10x384x128xbf16, #tpu.memory_space<vmem>>, vector<1x384x128xbf16>
    %86 = vector.shape_cast %85 : vector<1x384x128xbf16> to vector<384x128xbf16>
    %cst_57 = arith.constant dense<0.000000e+00> : vector<1x128xf32>
    %87 = tpu.matmul %84, %86, %cst_57 {dimension_numbers = #tpu.dot_dimension_numbers<[1], [0], [0], [1], [0, 0, 1, 1], [], []>} : vector<1x384xbf16>, vector<384x128xbf16>, vector<1x128xf32> -> vector<1x128xf32>
    %88 = arith.addf %82, %87 : vector<1x128xf32>
    %89 = vector.extract_strided_slice %81 {offsets = [1, 0], sizes = [1, 384], strides = [1, 1]} : vector<10x384xf32> to vector<1x384xf32>
    %90 = arith.truncf %89 : vector<1x384xf32> to vector<1x384xbf16>
    %c1_58 = arith.constant 1 : index
    %c0_59 = arith.constant 0 : index
    %c0_60 = arith.constant 0 : index
    %91 = vector.load %arg11[%c1_58, %c0_59, %c0_60] : memref<10x384x128xbf16, #tpu.memory_space<vmem>>, vector<1x384x128xbf16>
    %92 = vector.shape_cast %91 : vector<1x384x128xbf16> to vector<384x128xbf16>
    %cst_61 = arith.constant dense<0.000000e+00> : vector<1x128xf32>
    %93 = tpu.matmul %90, %92, %cst_61 {dimension_numbers = #tpu.dot_dimension_numbers<[1], [0], [0], [1], [0, 0, 1, 1], [], []>} : vector<1x384xbf16>, vector<384x128xbf16>, vector<1x128xf32> -> vector<1x128xf32>
    %94 = arith.addf %88, %93 : vector<1x128xf32>
    %95 = vector.extract_strided_slice %81 {offsets = [2, 0], sizes = [1, 384], strides = [1, 1]} : vector<10x384xf32> to vector<1x384xf32>
    %96 = arith.truncf %95 : vector<1x384xf32> to vector<1x384xbf16>
    %c2_62 = arith.constant 2 : index
    %c0_63 = arith.constant 0 : index
    %c0_64 = arith.constant 0 : index
    %97 = vector.load %arg11[%c2_62, %c0_63, %c0_64] : memref<10x384x128xbf16, #tpu.memory_space<vmem>>, vector<1x384x128xbf16>
    %98 = vector.shape_cast %97 : vector<1x384x128xbf16> to vector<384x128xbf16>
    %cst_65 = arith.constant dense<0.000000e+00> : vector<1x128xf32>
    %99 = tpu.matmul %96, %98, %cst_65 {dimension_numbers = #tpu.dot_dimension_numbers<[1], [0], [0], [1], [0, 0, 1, 1], [], []>} : vector<1x384xbf16>, vector<384x128xbf16>, vector<1x128xf32> -> vector<1x128xf32>
    %100 = arith.addf %94, %99 : vector<1x128xf32>
    %101 = vector.extract_strided_slice %81 {offsets = [3, 0], sizes = [1, 384], strides = [1, 1]} : vector<10x384xf32> to vector<1x384xf32>
    %102 = arith.truncf %101 : vector<1x384xf32> to vector<1x384xbf16>
    %c3 = arith.constant 3 : index
    %c0_66 = arith.constant 0 : index
    %c0_67 = arith.constant 0 : index
    %103 = vector.load %arg11[%c3, %c0_66, %c0_67] : memref<10x384x128xbf16, #tpu.memory_space<vmem>>, vector<1x384x128xbf16>
    %104 = vector.shape_cast %103 : vector<1x384x128xbf16> to vector<384x128xbf16>
    %cst_68 = arith.constant dense<0.000000e+00> : vector<1x128xf32>
    %105 = tpu.matmul %102, %104, %cst_68 {dimension_numbers = #tpu.dot_dimension_numbers<[1], [0], [0], [1], [0, 0, 1, 1], [], []>} : vector<1x384xbf16>, vector<384x128xbf16>, vector<1x128xf32> -> vector<1x128xf32>
    %106 = arith.addf %100, %105 : vector<1x128xf32>
    %107 = vector.extract_strided_slice %81 {offsets = [4, 0], sizes = [1, 384], strides = [1, 1]} : vector<10x384xf32> to vector<1x384xf32>
    %108 = arith.truncf %107 : vector<1x384xf32> to vector<1x384xbf16>
    %c4 = arith.constant 4 : index
    %c0_69 = arith.constant 0 : index
    %c0_70 = arith.constant 0 : index
    %109 = vector.load %arg11[%c4, %c0_69, %c0_70] : memref<10x384x128xbf16, #tpu.memory_space<vmem>>, vector<1x384x128xbf16>
    %110 = vector.shape_cast %109 : vector<1x384x128xbf16> to vector<384x128xbf16>
    %cst_71 = arith.constant dense<0.000000e+00> : vector<1x128xf32>
    %111 = tpu.matmul %108, %110, %cst_71 {dimension_numbers = #tpu.dot_dimension_numbers<[1], [0], [0], [1], [0, 0, 1, 1], [], []>} : vector<1x384xbf16>, vector<384x128xbf16>, vector<1x128xf32> -> vector<1x128xf32>
    %112 = arith.addf %106, %111 : vector<1x128xf32>
    %113 = vector.extract_strided_slice %81 {offsets = [5, 0], sizes = [1, 384], strides = [1, 1]} : vector<10x384xf32> to vector<1x384xf32>
    %114 = arith.truncf %113 : vector<1x384xf32> to vector<1x384xbf16>
    %c5 = arith.constant 5 : index
    %c0_72 = arith.constant 0 : index
    %c0_73 = arith.constant 0 : index
    %115 = vector.load %arg11[%c5, %c0_72, %c0_73] : memref<10x384x128xbf16, #tpu.memory_space<vmem>>, vector<1x384x128xbf16>
    %116 = vector.shape_cast %115 : vector<1x384x128xbf16> to vector<384x128xbf16>
    %cst_74 = arith.constant dense<0.000000e+00> : vector<1x128xf32>
    %117 = tpu.matmul %114, %116, %cst_74 {dimension_numbers = #tpu.dot_dimension_numbers<[1], [0], [0], [1], [0, 0, 1, 1], [], []>} : vector<1x384xbf16>, vector<384x128xbf16>, vector<1x128xf32> -> vector<1x128xf32>
    %118 = arith.addf %112, %117 : vector<1x128xf32>
    %119 = vector.extract_strided_slice %81 {offsets = [6, 0], sizes = [1, 384], strides = [1, 1]} : vector<10x384xf32> to vector<1x384xf32>
    %120 = arith.truncf %119 : vector<1x384xf32> to vector<1x384xbf16>
    %c6 = arith.constant 6 : index
    %c0_75 = arith.constant 0 : index
    %c0_76 = arith.constant 0 : index
    %121 = vector.load %arg11[%c6, %c0_75, %c0_76] : memref<10x384x128xbf16, #tpu.memory_space<vmem>>, vector<1x384x128xbf16>
    %122 = vector.shape_cast %121 : vector<1x384x128xbf16> to vector<384x128xbf16>
    %cst_77 = arith.constant dense<0.000000e+00> : vector<1x128xf32>
    %123 = tpu.matmul %120, %122, %cst_77 {dimension_numbers = #tpu.dot_dimension_numbers<[1], [0], [0], [1], [0, 0, 1, 1], [], []>} : vector<1x384xbf16>, vector<384x128xbf16>, vector<1x128xf32> -> vector<1x128xf32>
    %124 = arith.addf %118, %123 : vector<1x128xf32>
    %125 = vector.extract_strided_slice %81 {offsets = [7, 0], sizes = [1, 384], strides = [1, 1]} : vector<10x384xf32> to vector<1x384xf32>
    %126 = arith.truncf %125 : vector<1x384xf32> to vector<1x384xbf16>
    %c7 = arith.constant 7 : index
    %c0_78 = arith.constant 0 : index
    %c0_79 = arith.constant 0 : index
    %127 = vector.load %arg11[%c7, %c0_78, %c0_79] : memref<10x384x128xbf16, #tpu.memory_space<vmem>>, vector<1x384x128xbf16>
    %128 = vector.shape_cast %127 : vector<1x384x128xbf16> to vector<384x128xbf16>
    %cst_80 = arith.constant dense<0.000000e+00> : vector<1x128xf32>
    %129 = tpu.matmul %126, %128, %cst_80 {dimension_numbers = #tpu.dot_dimension_numbers<[1], [0], [0], [1], [0, 0, 1, 1], [], []>} : vector<1x384xbf16>, vector<384x128xbf16>, vector<1x128xf32> -> vector<1x128xf32>
    %130 = arith.addf %124, %129 : vector<1x128xf32>
    %131 = vector.extract_strided_slice %81 {offsets = [8, 0], sizes = [1, 384], strides = [1, 1]} : vector<10x384xf32> to vector<1x384xf32>
    %132 = arith.truncf %131 : vector<1x384xf32> to vector<1x384xbf16>
    %c8 = arith.constant 8 : index
    %c0_81 = arith.constant 0 : index
    %c0_82 = arith.constant 0 : index
    %133 = vector.load %arg11[%c8, %c0_81, %c0_82] : memref<10x384x128xbf16, #tpu.memory_space<vmem>>, vector<1x384x128xbf16>
    %134 = vector.shape_cast %133 : vector<1x384x128xbf16> to vector<384x128xbf16>
    %cst_83 = arith.constant dense<0.000000e+00> : vector<1x128xf32>
    %135 = tpu.matmul %132, %134, %cst_83 {dimension_numbers = #tpu.dot_dimension_numbers<[1], [0], [0], [1], [0, 0, 1, 1], [], []>} : vector<1x384xbf16>, vector<384x128xbf16>, vector<1x128xf32> -> vector<1x128xf32>
    %136 = arith.addf %130, %135 : vector<1x128xf32>
    %137 = vector.extract_strided_slice %81 {offsets = [9, 0], sizes = [1, 384], strides = [1, 1]} : vector<10x384xf32> to vector<1x384xf32>
    %138 = arith.truncf %137 : vector<1x384xf32> to vector<1x384xbf16>
    %c9 = arith.constant 9 : index
    %c0_84 = arith.constant 0 : index
    %c0_85 = arith.constant 0 : index
    %139 = vector.load %arg11[%c9, %c0_84, %c0_85] : memref<10x384x128xbf16, #tpu.memory_space<vmem>>, vector<1x384x128xbf16>
    %140 = vector.shape_cast %139 : vector<1x384x128xbf16> to vector<384x128xbf16>
    %cst_86 = arith.constant dense<0.000000e+00> : vector<1x128xf32>
    %141 = tpu.matmul %138, %140, %cst_86 {dimension_numbers = #tpu.dot_dimension_numbers<[1], [0], [0], [1], [0, 0, 1, 1], [], []>} : vector<1x384xbf16>, vector<384x128xbf16>, vector<1x128xf32> -> vector<1x128xf32>
    %142 = arith.addf %136, %141 : vector<1x128xf32>
    %c0_87 = arith.constant 0 : index
    %c0_88 = arith.constant 0 : index
    %c0_89 = arith.constant 0 : index
    %143 = vector.load %arg13[%c0_87, %c0_88, %c0_89] : memref<1x1x128xf32, #tpu.memory_space<vmem>>, vector<1x1x128xf32>
    %144 = vector.shape_cast %143 : vector<1x1x128xf32> to vector<1x128xf32>
    %145 = vector.shape_cast %142 : vector<1x128xf32> to vector<1x1x128xf32>
    tpu.vector_store %arg13[%c0_87, %c0_88, %c0_89], %145 {strides = array<i32>} : memref<1x1x128xf32, #tpu.memory_space<vmem>>, vector<1x1x128xf32>,
    return
  }
  func.func @transform_0(%arg0: i32) -> (i32, i32, i32) {
    %c0_i32 = arith.constant 0 : i32
    %c0_i32_0 = arith.constant 0 : i32
    %c0_i32_1 = arith.constant 0 : i32
    return %arg0, %c0_i32, %c0_i32_0 : i32, i32, i32
  }
  func.func @transform_1(%arg0: i32) -> (i32, i32, i32) {
    %c0_i32 = arith.constant 0 : i32
    %c0_i32_0 = arith.constant 0 : i32
    %c0_i32_1 = arith.constant 0 : i32
    %c0_i32_2 = arith.constant 0 : i32
    return %c0_i32, %c0_i32_0, %c0_i32_1 : i32, i32, i32
  }
  func.func @transform_2(%arg0: i32) -> (i32, i32) {
    %c0_i32 = arith.constant 0 : i32
    %c0_i32_0 = arith.constant 0 : i32
    %c0_i32_1 = arith.constant 0 : i32
    return %c0_i32, %c0_i32_0 : i32, i32
  }
  func.func @transform_3(%arg0: i32) -> (i32, i32) {
    %c0_i32 = arith.constant 0 : i32
    %c0_i32_0 = arith.constant 0 : i32
    %c0_i32_1 = arith.constant 0 : i32
    return %c0_i32, %c0_i32_0 : i32, i32
  }
  func.func @transform_4(%arg0: i32) -> (i32, i32, i32) {
    %c0_i32 = arith.constant 0 : i32
    %c0_i32_0 = arith.constant 0 : i32
    %c0_i32_1 = arith.constant 0 : i32
    %c0_i32_2 = arith.constant 0 : i32
    return %c0_i32, %c0_i32_0, %c0_i32_1 : i32, i32, i32
  }
  func.func @transform_5(%arg0: i32) -> (i32, i32) {
    %c0_i32 = arith.constant 0 : i32
    %c0_i32_0 = arith.constant 0 : i32
    %c0_i32_1 = arith.constant 0 : i32
    return %c0_i32, %c0_i32_0 : i32, i32
  }
  func.func @transform_6(%arg0: i32) -> (i32, i32) {
    %c0_i32 = arith.constant 0 : i32
    %c0_i32_0 = arith.constant 0 : i32
    %c0_i32_1 = arith.constant 0 : i32
    return %c0_i32, %c0_i32_0 : i32, i32
  }
  func.func @transform_7(%arg0: i32) -> (i32, i32, i32) {
    %c0_i32 = arith.constant 0 : i32
    %c0_i32_0 = arith.constant 0 : i32
    %c0_i32_1 = arith.constant 0 : i32
    %c0_i32_2 = arith.constant 0 : i32
    return %c0_i32, %c0_i32_0, %c0_i32_1 : i32, i32, i32
  }
  func.func @transform_8(%arg0: i32) -> (i32, i32) {
    %c0_i32 = arith.constant 0 : i32
    %c0_i32_0 = arith.constant 0 : i32
    %c0_i32_1 = arith.constant 0 : i32
    return %c0_i32, %c0_i32_0 : i32, i32
  }
  func.func @transform_9(%arg0: i32) -> (i32, i32) {
    %c0_i32 = arith.constant 0 : i32
    %c0_i32_0 = arith.constant 0 : i32
    %c0_i32_1 = arith.constant 0 : i32
    return %c0_i32, %c0_i32_0 : i32, i32
  }
  func.func @transform_10(%arg0: i32) -> (i32, i32, i32) {
    %c0_i32 = arith.constant 0 : i32
    %c0_i32_0 = arith.constant 0 : i32
    %c0_i32_1 = arith.constant 0 : i32
    %c0_i32_2 = arith.constant 0 : i32
    return %c0_i32, %c0_i32_0, %c0_i32_1 : i32, i32, i32
  }
  func.func @transform_11(%arg0: i32) -> (i32, i32) {
    %c0_i32 = arith.constant 0 : i32
    %c0_i32_0 = arith.constant 0 : i32
    %c0_i32_1 = arith.constant 0 : i32
    return %c0_i32, %c0_i32_0 : i32, i32
  }
  func.func @transform_12(%arg0: i32) -> (i32, i32, i32) {
    %c0_i32 = arith.constant 0 : i32
    %c0_i32_0 = arith.constant 0 : i32
    %c0_i32_1 = arith.constant 0 : i32
    return %arg0, %c0_i32, %c0_i32_0 : i32, i32, i32
  }
}

</mosaic_0001>

<llo_original>
// kernel: tpu_custom_call.1
$region0: #{tpu_custom_call.1}
  #allocation0 [shape = 'u32[]', space=smem, size = 0x4, offset = 0x4, fixed_abs, tag = 'smem constant byte address 0x4 - core index']
  #allocation1 [shape = 'u32[72,128]{1,0:T(1,128)}', space=vmem, size = 0x9000, scoped, tag = 'internal scratch']
  %s0 = inlined_call_operand.hbm [shape: f32[2,16,16], index: 0, kind: input, shape index: {}]
  %s1 = inlined_call_operand.hbm [shape: bf16[3,16,512], index: 1, kind: input, shape index: {}]
  %s2 = inlined_call_operand.hbm [shape: f32[1,512], index: 2, kind: input, shape index: {}]
  %s3 = inlined_call_operand.hbm [shape: f32[1,512], index: 3, kind: input, shape index: {}]
  %s4 = inlined_call_operand.hbm [shape: bf16[3,512,384], index: 4, kind: input, shape index: {}]
  %s5 = inlined_call_operand.hbm [shape: f32[1,384], index: 5, kind: input, shape index: {}]
  %s6 = inlined_call_operand.hbm [shape: f32[1,384], index: 6, kind: input, shape index: {}]
  %s7 = inlined_call_operand.hbm [shape: bf16[3,384,384], index: 7, kind: input, shape index: {}]
  %s8 = inlined_call_operand.hbm [shape: f32[1,384], index: 8, kind: input, shape index: {}]
  %s9 = inlined_call_operand.hbm [shape: f32[1,384], index: 9, kind: input, shape index: {}]
  %s10 = inlined_call_operand.hbm [shape: bf16[10,384,128], index: 10, kind: input, shape index: {}]
  %s11 = inlined_call_operand.hbm [shape: f32[1,128], index: 11, kind: input, shape index: {}]
  %s12 = inlined_call_operand.hbm [shape: f32[2,1,128], index: 12, kind: output, shape index: {}]
  %s13 = sld [smem:[#allocation0]]
  $region129: #{tpu_custom_call.1} parent=0
    _
  %s15 = ssub.s32 1, %s13
  %s16 = scalar_select 0, %s15, %s13
  $region1: #{tpu_custom_call.1} parent=0
    #allocation2 [shape = 'u8[16384]{0}', space=vmem, size = 0x4000, scoped, tag = 'input window, operand 0']
    #allocation3 [shape = 's32[2]{0}', space=sflag, size = 0x8, scoped, tag = 'scoped memory for tpu_custom_call.1']
    #allocation4 [shape = 's32[2]{0}', space=sflag, size = 0x8, scoped, tag = 'scoped memory for tpu_custom_call.1']
    #allocation5 [shape = 'u8[49152]{0}', space=vmem, size = 0xc000, scoped, tag = 'input window, operand 1, single buffered']
    #allocation6 [shape = 's32[1]{0}', space=sflag, size = 0x4, scoped, tag = 'scoped memory for tpu_custom_call.1']
    #allocation7 [shape = 'u8[2048]{0}', space=vmem, size = 0x800, scoped, tag = 'input window, operand 2, single buffered']
    #allocation8 [shape = 'u8[2048]{0}', space=vmem, size = 0x800, scoped, tag = 'input window, operand 3, single buffered']
    #allocation9 [shape = 's32[1]{0}', space=sflag, size = 0x4, scoped, tag = 'scoped memory for tpu_custom_call.1']
    #allocation10 [shape = 'u8[1179648]{0}', space=vmem, size = 0x120000, scoped, tag = 'input window, operand 4, single buffered']
    #allocation11 [shape = 'u8[1536]{0}', space=vmem, size = 0x800, scoped, tag = 'input window, operand 5, single buffered']
    #allocation12 [shape = 's32[1]{0}', space=sflag, size = 0x4, scoped, tag = 'scoped memory for tpu_custom_call.1']
    #allocation13 [shape = 'u8[1536]{0}', space=vmem, size = 0x800, scoped, tag = 'input window, operand 6, single buffered']
    #allocation14 [shape = 'u8[884736]{0}', space=vmem, size = 0xd8000, scoped, tag = 'input window, operand 7, single buffered']
    #allocation15 [shape = 's32[1]{0}', space=sflag, size = 0x4, scoped, tag = 'scoped memory for tpu_custom_call.1']
    #allocation16 [shape = 'u8[1536]{0}', space=vmem, size = 0x800, scoped, tag = 'input window, operand 8, single buffered']
    #allocation17 [shape = 'u8[1536]{0}', space=vmem, size = 0x800, scoped, tag = 'input window, operand 9, single buffered']
    #allocation18 [shape = 's32[1]{0}', space=sflag, size = 0x4, scoped, tag = 'scoped memory for tpu_custom_call.1']
    #allocation19 [shape = 'u8[983040]{0}', space=vmem, size = 0xf0000, scoped, tag = 'input window, operand 10, single buffered']
    #allocation20 [shape = 'u8[512]{0}', space=vmem, size = 0x400, scoped, tag = 'input window, operand 11, single buffered']
    #allocation21 [shape = 's32[1]{0}', space=sflag, size = 0x4, scoped, tag = 'scoped memory for tpu_custom_call.1']
    #allocation22 [shape = 'u8[1024]{0}', space=vmem, size = 0x400, scoped, tag = 'output window, operand 0']
    %17 = vsyncpa [#allocation3], 0
    %s18 = scalar_lea.sflag [#allocation3], 1
    %19 = vsyncpa %s18, 0
    %20 = vsyncpa [#allocation6], 0
    %21 = vsyncpa [#allocation9], 0
    %22 = vsyncpa [#allocation12], 0
    %23 = vsyncpa [#allocation15], 0
    %24 = vsyncpa [#allocation18], 0
    %25 = vsyncpa [#allocation21], 0
    %26 = vsyncpa [#allocation4], 0
    %s27 = scalar_lea.sflag [#allocation4], 1
    %28 = vsyncpa %s27, 0
    loop: start=0, step=1, limit=4
    $region2: #{tpu_custom_call.1} parent=1 // loop_pre_header
      _
    $region3: #{tpu_custom_call.1} parent=1 // loop_header
      %s30 = sphi 0, %s34
      %p31 = scmp.ge.s32.totalorder %s30, 4
      %s40 = sphi 0, %s42
      %s43 = sphi 0, %s40
      %s44 = sphi 0, %s43
      %s60 = sphi 0, %s44
      %s64 = sphi 0, %s64
      %s66 = sphi 0, %s64
      %s67 = sphi 0, %s66
      %s81 = sphi 0, %s67
      %s85 = sphi 0, %s85
      %s87 = sphi 0, %s85
      %s88 = sphi 0, %s87
      %s102 = sphi 0, %s88
      %s106 = sphi 0, %s106
      %s108 = sphi 0, %s106
      %s109 = sphi 0, %s108
      %s123 = sphi 0, %s109
      %s127 = sphi 0, %s127
      %s129 = sphi 0, %s127
      %s130 = sphi 0, %s129
      %s144 = sphi 0, %s130
      %s148 = sphi 0, %s148
      %s150 = sphi 0, %s148
      %s151 = sphi 0, %s150
      %s165 = sphi 0, %s151
      %s169 = sphi 0, %s169
      %s171 = sphi 0, %s169
      %s172 = sphi 0, %s171
      %s186 = sphi 0, %s172
      %s190 = sphi 0, %s190
      %s192 = sphi 0, %s190
      %s193 = sphi 0, %s192
      %s207 = sphi 0, %s193
      %s211 = sphi 0, %s211
      %s213 = sphi 0, %s211
      %s214 = sphi 0, %s213
      %s228 = sphi 0, %s214
      %s232 = sphi 0, %s232
      %s234 = sphi 0, %s232
      %s235 = sphi 0, %s234
      %s249 = sphi 0, %s235
      %s253 = sphi 0, %s253
      %s255 = sphi 0, %s253
      %s256 = sphi 0, %s255
      %s270 = sphi 0, %s256
      %s274 = sphi 0, %s274
      %s276 = sphi 0, %s274
      %s277 = sphi 0, %s276
      %s291 = sphi 0, %s277
      %s297 = sphi 0, %s299
      %s300 = sphi 0, %s297
      %s301 = sphi 0, %s300
      %s317 = sphi 0, %s301
    $region4: #{tpu_custom_call.1} parent=1 // loop_header_branch
      %33 = sbr.rel (%p31) target = $region8
    $region5: #{tpu_custom_call.1} parent=1 // loop_body
      %s35 = ssub.s32 %s30, 1
      %s36 = ssub.s32 %s30, 2
      %s37 = sadd.s32 %s30, 1
      %s38 = ssub.s32 %s30, %s37
      %p39 = scmp.eq.s32.totalorder %s38, 0
      %s41 = sadd.s32 %s40, 1
      %s42 = scalar_select %p39, %s40, %s41
      %p45 = pneg %p39
      %p46 = scmp.eq.s32.totalorder %s30, 1
      %p47 = por %p45, %p46
      %p48 = scmp.ne.s32.totalorder %s40, %s43
      %p49 = scmp.eq.s32.totalorder %s30, 0
      %p50 = por %p48, %p49
      %p51 = scmp.ne.s32.totalorder %s40, %s43
      %p52 = scmp.eq.s32.totalorder %s35, 1
      %p53 = por %p51, %p52
      %p54 = scmp.ne.s32.totalorder %s43, %s44
      %p55 = scmp.eq.s32.totalorder %s35, 0
      %p56 = por %p54, %p55
      %p57 = scmp.ne.s32.totalorder %s43, %s44
      %p58 = scmp.eq.s32.totalorder %s36, 1
      %p59 = por %p57, %p58
      %p61 = scmp.ne.s32.totalorder %s44, %s60
      %p62 = scmp.eq.s32.totalorder %s36, 0
      %p63 = por %p61, %p62
      %s65 = sadd.s32 %s64, 1
      %p68 = scmp.eq.s32.totalorder %s30, 1
      %p69 = scmp.ne.s32.totalorder %s64, %s66
      %p70 = scmp.eq.s32.totalorder %s30, 0
      %p71 = por %p69, %p70
      %p72 = scmp.ne.s32.totalorder %s64, %s66
      %p73 = scmp.eq.s32.totalorder %s35, 1
      %p74 = por %p72, %p73
      %p75 = scmp.ne.s32.totalorder %s66, %s67
      %p76 = scmp.eq.s32.totalorder %s35, 0
      %p77 = por %p75, %p76
      %p78 = scmp.ne.s32.totalorder %s66, %s67
      %p79 = scmp.eq.s32.totalorder %s36, 1
      %p80 = por %p78, %p79
      %p82 = scmp.ne.s32.totalorder %s67, %s81
      %p83 = scmp.eq.s32.totalorder %s36, 0
      %p84 = por %p82, %p83
      %s86 = sadd.s32 %s85, 1
      %p89 = scmp.eq.s32.totalorder %s30, 1
      %p90 = scmp.ne.s32.totalorder %s85, %s87
      %p91 = scmp.eq.s32.totalorder %s30, 0
      %p92 = por %p90, %p91
      %p93 = scmp.ne.s32.totalorder %s85, %s87
      %p94 = scmp.eq.s32.totalorder %s35, 1
      %p95 = por %p93, %p94
      %p96 = scmp.ne.s32.totalorder %s87, %s88
      %p97 = scmp.eq.s32.totalorder %s35, 0
      %p98 = por %p96, %p97
      %p99 = scmp.ne.s32.totalorder %s87, %s88
      %p100 = scmp.eq.s32.totalorder %s36, 1
      %p101 = por %p99, %p100
      %p103 = scmp.ne.s32.totalorder %s88, %s102
      %p104 = scmp.eq.s32.totalorder %s36, 0
      %p105 = por %p103, %p104
      %s107 = sadd.s32 %s106, 1
      %p110 = scmp.eq.s32.totalorder %s30, 1
      %p111 = scmp.ne.s32.totalorder %s106, %s108
      %p112 = scmp.eq.s32.totalorder %s30, 0
      %p113 = por %p111, %p112
      %p114 = scmp.ne.s32.totalorder %s106, %s108
      %p115 = scmp.eq.s32.totalorder %s35, 1
      %p116 = por %p114, %p115
      %p117 = scmp.ne.s32.totalorder %s108, %s109
      %p118 = scmp.eq.s32.totalorder %s35, 0
      %p119 = por %p117, %p118
      %p120 = scmp.ne.s32.totalorder %s108, %s109
      %p121 = scmp.eq.s32.totalorder %s36, 1
      %p122 = por %p120, %p121
      %p124 = scmp.ne.s32.totalorder %s109, %s123
      %p125 = scmp.eq.s32.totalorder %s36, 0
      %p126 = por %p124, %p125
      %s128 = sadd.s32 %s127, 1
      %p131 = scmp.eq.s32.totalorder %s30, 1
      %p132 = scmp.ne.s32.totalorder %s127, %s129
      %p133 = scmp.eq.s32.totalorder %s30, 0
      %p134 = por %p132, %p133
      %p135 = scmp.ne.s32.totalorder %s127, %s129
      %p136 = scmp.eq.s32.totalorder %s35, 1
      %p137 = por %p135, %p136
      %p138 = scmp.ne.s32.totalorder %s129, %s130
      %p139 = scmp.eq.s32.totalorder %s35, 0
      %p140 = por %p138, %p139
      %p141 = scmp.ne.s32.totalorder %s129, %s130
      %p142 = scmp.eq.s32.totalorder %s36, 1
      %p143 = por %p141, %p142
      %p145 = scmp.ne.s32.totalorder %s130, %s144
      %p146 = scmp.eq.s32.totalorder %s36, 0
      %p147 = por %p145, %p146
      %s149 = sadd.s32 %s148, 1
      %p152 = scmp.eq.s32.totalorder %s30, 1
      %p153 = scmp.ne.s32.totalorder %s148, %s150
      %p154 = scmp.eq.s32.totalorder %s30, 0
      %p155 = por %p153, %p154
      %p156 = scmp.ne.s32.totalorder %s148, %s150
      %p157 = scmp.eq.s32.totalorder %s35, 1
      %p158 = por %p156, %p157
      %p159 = scmp.ne.s32.totalorder %s150, %s151
      %p160 = scmp.eq.s32.totalorder %s35, 0
      %p161 = por %p159, %p160
      %p162 = scmp.ne.s32.totalorder %s150, %s151
      %p163 = scmp.eq.s32.totalorder %s36, 1
      %p164 = por %p162, %p163
      %p166 = scmp.ne.s32.totalorder %s151, %s165
      %p167 = scmp.eq.s32.totalorder %s36, 0
      %p168 = por %p166, %p167
      %s170 = sadd.s32 %s169, 1
      %p173 = scmp.eq.s32.totalorder %s30, 1
      %p174 = scmp.ne.s32.totalorder %s169, %s171
      %p175 = scmp.eq.s32.totalorder %s30, 0
      %p176 = por %p174, %p175
      %p177 = scmp.ne.s32.totalorder %s169, %s171
      %p178 = scmp.eq.s32.totalorder %s35, 1
      %p179 = por %p177, %p178
      %p180 = scmp.ne.s32.totalorder %s171, %s172
      %p181 = scmp.eq.s32.totalorder %s35, 0
      %p182 = por %p180, %p181
      %p183 = scmp.ne.s32.totalorder %s171, %s172
      %p184 = scmp.eq.s32.totalorder %s36, 1
      %p185 = por %p183, %p184
      %p187 = scmp.ne.s32.totalorder %s172, %s186
      %p188 = scmp.eq.s32.totalorder %s36, 0
      %p189 = por %p187, %p188
      %s191 = sadd.s32 %s190, 1
      %p194 = scmp.eq.s32.totalorder %s30, 1
      %p195 = scmp.ne.s32.totalorder %s190, %s192
      %p196 = scmp.eq.s32.totalorder %s30, 0
      %p197 = por %p195, %p196
      %p198 = scmp.ne.s32.totalorder %s190, %s192
      %p199 = scmp.eq.s32.totalorder %s35, 1
      %p200 = por %p198, %p199
      %p201 = scmp.ne.s32.totalorder %s192, %s193
      %p202 = scmp.eq.s32.totalorder %s35, 0
      %p203 = por %p201, %p202
      %p204 = scmp.ne.s32.totalorder %s192, %s193
      %p205 = scmp.eq.s32.totalorder %s36, 1
      %p206 = por %p204, %p205
      %p208 = scmp.ne.s32.totalorder %s193, %s207
      %p209 = scmp.eq.s32.totalorder %s36, 0
      %p210 = por %p208, %p209
      %s212 = sadd.s32 %s211, 1
      %p215 = scmp.eq.s32.totalorder %s30, 1
      %p216 = scmp.ne.s32.totalorder %s211, %s213
      %p217 = scmp.eq.s32.totalorder %s30, 0
      %p218 = por %p216, %p217
      %p219 = scmp.ne.s32.totalorder %s211, %s213
      %p220 = scmp.eq.s32.totalorder %s35, 1
      %p221 = por %p219, %p220
      %p222 = scmp.ne.s32.totalorder %s213, %s214
      %p223 = scmp.eq.s32.totalorder %s35, 0
      %p224 = por %p222, %p223
      %p225 = scmp.ne.s32.totalorder %s213, %s214
      %p226 = scmp.eq.s32.totalorder %s36, 1
      %p227 = por %p225, %p226
      %p229 = scmp.ne.s32.totalorder %s214, %s228
      %p230 = scmp.eq.s32.totalorder %s36, 0
      %p231 = por %p229, %p230
      %s233 = sadd.s32 %s232, 1
      %p236 = scmp.eq.s32.totalorder %s30, 1
      %p237 = scmp.ne.s32.totalorder %s232, %s234
      %p238 = scmp.eq.s32.totalorder %s30, 0
      %p239 = por %p237, %p238
      %p240 = scmp.ne.s32.totalorder %s232, %s234
      %p241 = scmp.eq.s32.totalorder %s35, 1
      %p242 = por %p240, %p241
      %p243 = scmp.ne.s32.totalorder %s234, %s235
      %p244 = scmp.eq.s32.totalorder %s35, 0
      %p245 = por %p243, %p244
      %p246 = scmp.ne.s32.totalorder %s234, %s235
      %p247 = scmp.eq.s32.totalorder %s36, 1
      %p248 = por %p246, %p247
      %p250 = scmp.ne.s32.totalorder %s235, %s249
      %p251 = scmp.eq.s32.totalorder %s36, 0
      %p252 = por %p250, %p251
      %s254 = sadd.s32 %s253, 1
      %p257 = scmp.eq.s32.totalorder %s30, 1
      %p258 = scmp.ne.s32.totalorder %s253, %s255
      %p259 = scmp.eq.s32.totalorder %s30, 0
      %p260 = por %p258, %p259
      %p261 = scmp.ne.s32.totalorder %s253, %s255
      %p262 = scmp.eq.s32.totalorder %s35, 1
      %p263 = por %p261, %p262
      %p264 = scmp.ne.s32.totalorder %s255, %s256
      %p265 = scmp.eq.s32.totalorder %s35, 0
      %p266 = por %p264, %p265
      %p267 = scmp.ne.s32.totalorder %s255, %s256
      %p268 = scmp.eq.s32.totalorder %s36, 1
      %p269 = por %p267, %p268
      %p271 = scmp.ne.s32.totalorder %s256, %s270
      %p272 = scmp.eq.s32.totalorder %s36, 0
      %p273 = por %p271, %p272
      %s275 = sadd.s32 %s274, 1
      %p278 = scmp.eq.s32.totalorder %s30, 1
      %p279 = scmp.ne.s32.totalorder %s274, %s276
      %p280 = scmp.eq.s32.totalorder %s30, 0
      %p281 = por %p279, %p280
      %p282 = scmp.ne.s32.totalorder %s274, %s276
      %p283 = scmp.eq.s32.totalorder %s35, 1
      %p284 = por %p282, %p283
      %p285 = scmp.ne.s32.totalorder %s276, %s277
      %p286 = scmp.eq.s32.totalorder %s35, 0
      %p287 = por %p285, %p286
      %p288 = scmp.ne.s32.totalorder %s276, %s277
      %p289 = scmp.eq.s32.totalorder %s36, 1
      %p290 = por %p288, %p289
      %p292 = scmp.ne.s32.totalorder %s277, %s291
      %p293 = scmp.eq.s32.totalorder %s36, 0
      %p294 = por %p292, %p293
      %s295 = ssub.s32 %s30, %s37
      %p296 = scmp.eq.s32.totalorder %s295, 0
      %s298 = sadd.s32 %s297, 1
      %s299 = scalar_select %p296, %s297, %s298
      %p302 = pneg %p296
      %p303 = scmp.eq.s32.totalorder %s30, 1
      %p304 = por %p302, %p303
      %p305 = scmp.ne.s32.totalorder %s297, %s300
      %p306 = scmp.eq.s32.totalorder %s30, 0
      %p307 = por %p305, %p306
      %p308 = scmp.ne.s32.totalorder %s297, %s300
      %p309 = scmp.eq.s32.totalorder %s35, 1
      %p310 = por %p308, %p309
      %p311 = scmp.ne.s32.totalorder %s300, %s301
      %p312 = scmp.eq.s32.totalorder %s35, 0
      %p313 = por %p311, %p312
      %p314 = scmp.ne.s32.totalorder %s300, %s301
      %p315 = scmp.eq.s32.totalorder %s36, 1
      %p316 = por %p314, %p315
      %p318 = scmp.ne.s32.totalorder %s301, %s317
      %p319 = scmp.eq.s32.totalorder %s36, 0
      %p320 = por %p318, %p319
      %p321 = scmp.le.s32.totalorder 1, %s30
      %p322 = scmp.lt.s32.totalorder %s30, 3
      %p323 = pnand %p321, %p322
      %p324 = pneg %p323
      // Predicated region
      $region9: #{tpu_custom_call.1} parent=5 // pred_check
        _
      $region10: #{tpu_custom_call.1} parent=5 // pred_check_branch
        %326 = sbr.rel (%p323) target = $region12
      $region11: #{tpu_custom_call.1} parent=5 // pred_region
        %s327 = ssub.s32 %s30, 1
        // Predicated region
        $region13: #{tpu_custom_call.1} parent=11 // pred_check
          %p328 = pneg %p77
        $region14: #{tpu_custom_call.1} parent=11 // pred_check_branch
          %330 = sbr.rel (%p328) target = $region16
        $region15: #{tpu_custom_call.1} parent=11 // pred_region
          %332 = vsyncadd [#allocation6], 0
          %s333 = sshll.u32 %s1, 4
          %s334 = int_to_ptr.hbm [resolvable:$true] %s333
          %s335 = sshll.u32 [#allocation5], 4
          %s336 = int_to_ptr.vmem [resolvable:$true] %s335
          %341 = dma.hbm_to_vmem [thread:$0]  %s334, 1536, %s336, [#allocation6], 256, 256, 16
        $region16: #{tpu_custom_call.1} parent=11 // pred_fallthru
          _
        // Predicated region
        $region17: #{tpu_custom_call.1} parent=11 // pred_check
          %p342 = pneg %p98
        $region18: #{tpu_custom_call.1} parent=11 // pred_check_branch
          %344 = sbr.rel (%p342) target = $region20
        $region19: #{tpu_custom_call.1} parent=11 // pred_region
          %346 = vsyncadd [#allocation6], 0
          %s348 = sshll.u32 %s2, 4
          %s349 = int_to_ptr.hbm [resolvable:$true] %s348
          %s350 = sshll.u32 [#allocation7], 4
          %s351 = int_to_ptr.vmem [resolvable:$true] %s350
          %353 = dma.hbm_to_vmem [thread:$0]  %s349, 64, %s351, [#allocation6]
        $region20: #{tpu_custom_call.1} parent=11 // pred_fallthru
          _
        // Predicated region
        $region21: #{tpu_custom_call.1} parent=11 // pred_check
          %p354 = pneg %p119
        $region22: #{tpu_custom_call.1} parent=11 // pred_check_branch
          %356 = sbr.rel (%p354) target = $region24
        $region23: #{tpu_custom_call.1} parent=11 // pred_region
          %358 = vsyncadd [#allocation9], 0
          %s360 = sshll.u32 %s3, 4
          %s361 = int_to_ptr.hbm [resolvable:$true] %s360
          %s362 = sshll.u32 [#allocation8], 4
          %s363 = int_to_ptr.vmem [resolvable:$true] %s362
          %365 = dma.hbm_to_vmem [thread:$0]  %s361, 64, %s363, [#allocation9]
        $region24: #{tpu_custom_call.1} parent=11 // pred_fallthru
          _
        // Predicated region
        $region25: #{tpu_custom_call.1} parent=11 // pred_check
          %p366 = pneg %p140
        $region26: #{tpu_custom_call.1} parent=11 // pred_check_branch
          %368 = sbr.rel (%p366) target = $region28
        $region27: #{tpu_custom_call.1} parent=11 // pred_region
          %370 = vsyncadd [#allocation9], 0
          %s371 = sshll.u32 %s4, 4
          %s372 = int_to_ptr.hbm [resolvable:$true] %s371
          %s373 = sshll.u32 [#allocation10], 4
          %s374 = int_to_ptr.vmem [resolvable:$true] %s373
          %379 = dma.hbm_to_vmem [thread:$0]  %s372, 36864, %s374, [#allocation9], 192, 192, 12
        $region28: #{tpu_custom_call.1} parent=11 // pred_fallthru
          _
        // Predicated region
        $region29: #{tpu_custom_call.1} parent=11 // pred_check
          %p380 = pneg %p161
        $region30: #{tpu_custom_call.1} parent=11 // pred_check_branch
          %382 = sbr.rel (%p380) target = $region32
        $region31: #{tpu_custom_call.1} parent=11 // pred_region
          %384 = vsyncadd [#allocation12], 0
          %s386 = sshll.u32 %s5, 4
          %s387 = int_to_ptr.hbm [resolvable:$true] %s386
          %s388 = sshll.u32 [#allocation11], 4
          %s389 = int_to_ptr.vmem [resolvable:$true] %s388
          %391 = dma.hbm_to_vmem [thread:$0]  %s387, 48, %s389, [#allocation12]
        $region32: #{tpu_custom_call.1} parent=11 // pred_fallthru
          _
        // Predicated region
        $region33: #{tpu_custom_call.1} parent=11 // pred_check
          %p392 = pneg %p182
        $region34: #{tpu_custom_call.1} parent=11 // pred_check_branch
          %394 = sbr.rel (%p392) target = $region36
        $region35: #{tpu_custom_call.1} parent=11 // pred_region
          %396 = vsyncadd [#allocation12], 0
          %s398 = sshll.u32 %s6, 4
          %s399 = int_to_ptr.hbm [resolvable:$true] %s398
          %s400 = sshll.u32 [#allocation13], 4
          %s401 = int_to_ptr.vmem [resolvable:$true] %s400
          %403 = dma.hbm_to_vmem [thread:$0]  %s399, 48, %s401, [#allocation12]
        $region36: #{tpu_custom_call.1} parent=11 // pred_fallthru
          _
        // Predicated region
        $region37: #{tpu_custom_call.1} parent=11 // pred_check
          %p404 = pneg %p203
        $region38: #{tpu_custom_call.1} parent=11 // pred_check_branch
          %406 = sbr.rel (%p404) target = $region40
        $region39: #{tpu_custom_call.1} parent=11 // pred_region
          %408 = vsyncadd [#allocation15], 0
          %s409 = sshll.u32 %s7, 4
          %s410 = int_to_ptr.hbm [resolvable:$true] %s409
          %s411 = sshll.u32 [#allocation14], 4
          %s412 = int_to_ptr.vmem [resolvable:$true] %s411
          %417 = dma.hbm_to_vmem [thread:$0]  %s410, 27648, %s412, [#allocation15], 192, 192, 12
        $region40: #{tpu_custom_call.1} parent=11 // pred_fallthru
          _
        // Predicated region
        $region41: #{tpu_custom_call.1} parent=11 // pred_check
          %p418 = pneg %p224
        $region42: #{tpu_custom_call.1} parent=11 // pred_check_branch
          %420 = sbr.rel (%p418) target = $region44
        $region43: #{tpu_custom_call.1} parent=11 // pred_region
          %422 = vsyncadd [#allocation15], 0
          %s424 = sshll.u32 %s8, 4
          %s425 = int_to_ptr.hbm [resolvable:$true] %s424
          %s426 = sshll.u32 [#allocation16], 4
          %s427 = int_to_ptr.vmem [resolvable:$true] %s426
          %429 = dma.hbm_to_vmem [thread:$0]  %s425, 48, %s427, [#allocation15]
        $region44: #{tpu_custom_call.1} parent=11 // pred_fallthru
          _
        // Predicated region
        $region45: #{tpu_custom_call.1} parent=11 // pred_check
          %p430 = pneg %p245
        $region46: #{tpu_custom_call.1} parent=11 // pred_check_branch
          %432 = sbr.rel (%p430) target = $region48
        $region47: #{tpu_custom_call.1} parent=11 // pred_region
          %434 = vsyncadd [#allocation18], 0
          %s436 = sshll.u32 %s9, 4
          %s437 = int_to_ptr.hbm [resolvable:$true] %s436
          %s438 = sshll.u32 [#allocation17], 4
          %s439 = int_to_ptr.vmem [resolvable:$true] %s438
          %441 = dma.hbm_to_vmem [thread:$0]  %s437, 48, %s439, [#allocation18]
        $region48: #{tpu_custom_call.1} parent=11 // pred_fallthru
          _
        // Predicated region
        $region49: #{tpu_custom_call.1} parent=11 // pred_check
          %p442 = pneg %p266
        $region50: #{tpu_custom_call.1} parent=11 // pred_check_branch
          %444 = sbr.rel (%p442) target = $region52
        $region51: #{tpu_custom_call.1} parent=11 // pred_region
          %446 = vsyncadd [#allocation18], 0
          %s447 = sshll.u32 %s10, 4
          %s448 = int_to_ptr.hbm [resolvable:$true] %s447
          %s449 = sshll.u32 [#allocation19], 4
          %s450 = int_to_ptr.vmem [resolvable:$true] %s449
          %455 = dma.hbm_to_vmem [thread:$0]  %s448, 30720, %s450, [#allocation18], 64, 64, 4
        $region52: #{tpu_custom_call.1} parent=11 // pred_fallthru
          _
        // Predicated region
        $region53: #{tpu_custom_call.1} parent=11 // pred_check
          %p456 = pneg %p287
        $region54: #{tpu_custom_call.1} parent=11 // pred_check_branch
          %458 = sbr.rel (%p456) target = $region56
        $region55: #{tpu_custom_call.1} parent=11 // pred_region
          %460 = vsyncadd [#allocation21], 0
          %s462 = sshll.u32 %s11, 4
          %s463 = int_to_ptr.hbm [resolvable:$true] %s462
          %s464 = sshll.u32 [#allocation20], 4
          %s465 = int_to_ptr.vmem [resolvable:$true] %s464
          %467 = dma.hbm_to_vmem [thread:$0]  %s463, 16, %s465, [#allocation21]
        $region56: #{tpu_custom_call.1} parent=11 // pred_fallthru
          _
      $region12: #{tpu_custom_call.1} parent=5 // pred_fallthru
        _
      %p468 = scmp.lt.s32.totalorder %s30, 2
      // Predicated region
      $region57: #{tpu_custom_call.1} parent=5 // pred_check
        %p469 = pneg %p468
      $region58: #{tpu_custom_call.1} parent=5 // pred_check_branch
        %471 = sbr.rel (%p469) target = $region60
      $region59: #{tpu_custom_call.1} parent=5 // pred_region
        // Predicated region
        $region61: #{tpu_custom_call.1} parent=59 // pred_check
          %p472 = pneg %p50
        $region62: #{tpu_custom_call.1} parent=59 // pred_check_branch
          %474 = sbr.rel (%p472) target = $region64
        $region63: #{tpu_custom_call.1} parent=59 // pred_region
          %s475 = sand.u32 %s40, 1
          %s476 = scalar_lea.sflag [#allocation3], %s475
          %s477 = sand.u32 %s40, 1
          %s478 = smul.addr %s477, 16
          %s479 = scalar_lea.vmem [#allocation2], %s478
          %481 = vsyncadd %s476, 0
          %s482 = smul.addr %s30, 2
          %s483 = smul.addr %s482, 8
          %s484 = scalar_lea.hbm %s0, %s483
          %s485 = sshll.u32 %s484, 4
          %s486 = int_to_ptr.hbm [resolvable:$true] %s485
          %s487 = sshll.u32 %s479, 4
          %s488 = int_to_ptr.vmem [resolvable:$true] %s487
          %493 = dma.hbm_to_vmem [thread:$0]  %s486, 256, %s488, %s476, 128, 128, 8
        $region64: #{tpu_custom_call.1} parent=59 // pred_fallthru
          _
      $region60: #{tpu_custom_call.1} parent=5 // pred_fallthru
        _
      %p494 = scmp.le.s32.totalorder 1, %s30
      %p495 = scmp.lt.s32.totalorder %s30, 3
      %p496 = pnand %p494, %p495
      %p497 = pneg %p496
      // Predicated region
      $region65: #{tpu_custom_call.1} parent=5 // pred_check
        _
      $region66: #{tpu_custom_call.1} parent=5 // pred_check_branch
        %499 = sbr.rel (%p496) target = $region68
      $region67: #{tpu_custom_call.1} parent=5 // pred_region
        %s500 = ssub.s32 %s30, 1
        %s501 = sand.u32 %s43, 1
        %s502 = scalar_lea.sflag [#allocation3], %s501
        %s503 = sand.u32 %s43, 1
        %s504 = smul.addr %s503, 16
        %s505 = scalar_lea.vmem [#allocation2], %s504
        // Predicated region
        $region69: #{tpu_custom_call.1} parent=67 // pred_check
          %p506 = pneg %p56
        $region70: #{tpu_custom_call.1} parent=67 // pred_check_branch
          %508 = sbr.rel (%p506) target = $region72
        $region71: #{tpu_custom_call.1} parent=67 // pred_region
          %510 = dma.done %s502, 256
        $region72: #{tpu_custom_call.1} parent=67 // pred_fallthru
          _
        // Predicated region
        $region73: #{tpu_custom_call.1} parent=67 // pred_check
          %p511 = pneg %p77
        $region74: #{tpu_custom_call.1} parent=67 // pred_check_branch
          %513 = sbr.rel (%p511) target = $region76
        $region75: #{tpu_custom_call.1} parent=67 // pred_region
          %515 = dma.done [#allocation6], 1536
        $region76: #{tpu_custom_call.1} parent=67 // pred_fallthru
          _
        // Predicated region
        $region77: #{tpu_custom_call.1} parent=67 // pred_check
          %p516 = pneg %p98
        $region78: #{tpu_custom_call.1} parent=67 // pred_check_branch
          %518 = sbr.rel (%p516) target = $region80
        $region79: #{tpu_custom_call.1} parent=67 // pred_region
          %520 = dma.done [#allocation6], 64
        $region80: #{tpu_custom_call.1} parent=67 // pred_fallthru
          _
        // Predicated region
        $region81: #{tpu_custom_call.1} parent=67 // pred_check
          %p521 = pneg %p119
        $region82: #{tpu_custom_call.1} parent=67 // pred_check_branch
          %523 = sbr.rel (%p521) target = $region84
        $region83: #{tpu_custom_call.1} parent=67 // pred_region
          %525 = dma.done [#allocation9], 64
        $region84: #{tpu_custom_call.1} parent=67 // pred_fallthru
          _
        // Predicated region
        $region85: #{tpu_custom_call.1} parent=67 // pred_check
          %p526 = pneg %p140
        $region86: #{tpu_custom_call.1} parent=67 // pred_check_branch
          %528 = sbr.rel (%p526) target = $region88
        $region87: #{tpu_custom_call.1} parent=67 // pred_region
          %530 = dma.done [#allocation9], 36864
        $region88: #{tpu_custom_call.1} parent=67 // pred_fallthru
          _
        // Predicated region
        $region89: #{tpu_custom_call.1} parent=67 // pred_check
          %p531 = pneg %p161
        $region90: #{tpu_custom_call.1} parent=67 // pred_check_branch
          %533 = sbr.rel (%p531) target = $region92
        $region91: #{tpu_custom_call.1} parent=67 // pred_region
          %535 = dma.done [#allocation12], 48
        $region92: #{tpu_custom_call.1} parent=67 // pred_fallthru
          _
        // Predicated region
        $region93: #{tpu_custom_call.1} parent=67 // pred_check
          %p536 = pneg %p182
        $region94: #{tpu_custom_call.1} parent=67 // pred_check_branch
          %538 = sbr.rel (%p536) target = $region96
        $region95: #{tpu_custom_call.1} parent=67 // pred_region
          %540 = dma.done [#allocation12], 48
        $region96: #{tpu_custom_call.1} parent=67 // pred_fallthru
          _
        // Predicated region
        $region97: #{tpu_custom_call.1} parent=67 // pred_check
          %p541 = pneg %p203
        $region98: #{tpu_custom_call.1} parent=67 // pred_check_branch
          %543 = sbr.rel (%p541) target = $region100
        $region99: #{tpu_custom_call.1} parent=67 // pred_region
          %545 = dma.done [#allocation15], 27648
        $region100: #{tpu_custom_call.1} parent=67 // pred_fallthru
          _
        // Predicated region
        $region101: #{tpu_custom_call.1} parent=67 // pred_check
          %p546 = pneg %p224
        $region102: #{tpu_custom_call.1} parent=67 // pred_check_branch
          %548 = sbr.rel (%p546) target = $region104
        $region103: #{tpu_custom_call.1} parent=67 // pred_region
          %550 = dma.done [#allocation15], 48
        $region104: #{tpu_custom_call.1} parent=67 // pred_fallthru
          _
        // Predicated region
        $region105: #{tpu_custom_call.1} parent=67 // pred_check
          %p551 = pneg %p245
        $region106: #{tpu_custom_call.1} parent=67 // pred_check_branch
          %553 = sbr.rel (%p551) target = $region108
        $region107: #{tpu_custom_call.1} parent=67 // pred_region
          %555 = dma.done [#allocation18], 48
        $region108: #{tpu_custom_call.1} parent=67 // pred_fallthru
          _
        // Predicated region
        $region109: #{tpu_custom_call.1} parent=67 // pred_check
          %p556 = pneg %p266
        $region110: #{tpu_custom_call.1} parent=67 // pred_check_branch
          %558 = sbr.rel (%p556) target = $region112
        $region111: #{tpu_custom_call.1} parent=67 // pred_region
          %560 = dma.done [#allocation18], 30720
        $region112: #{tpu_custom_call.1} parent=67 // pred_fallthru
          _
        // Predicated region
        $region113: #{tpu_custom_call.1} parent=67 // pred_check
          %p561 = pneg %p287
        $region114: #{tpu_custom_call.1} parent=67 // pred_check_branch
          %563 = sbr.rel (%p561) target = $region116
        $region115: #{tpu_custom_call.1} parent=67 // pred_region
          %565 = dma.done [#allocation21], 16
        $region116: #{tpu_custom_call.1} parent=67 // pred_fallthru
          _
        %s566 = sand.u32 %s43, 1
        %s567 = scalar_lea.sflag [#allocation3], %s566
        %s568 = sand.u32 %s43, 1
        %s569 = smul.addr %s568, 16
        %s570 = scalar_lea.vmem [#allocation2], %s569
        %p571 = pneg %p56
        %p572 = pneg %p53
        %p573 = pneg %p77
        %p574 = pneg %p74
        %p575 = pneg %p98
        %p576 = pneg %p95
        %p577 = pneg %p119
        %p578 = pneg %p116
        %p579 = pneg %p140
        %p580 = pneg %p137
        %p581 = pneg %p161
        %p582 = pneg %p158
        %p583 = pneg %p182
        %p584 = pneg %p179
        %p585 = pneg %p203
        %p586 = pneg %p200
        %p587 = pneg %p224
        %p588 = pneg %p221
        %p589 = pneg %p245
        %p590 = pneg %p242
        %p591 = pneg %p266
        %p592 = pneg %p263
        %p593 = pneg %p287
        %p594 = pneg %p284
        %p595 = pneg %p313
        %p596 = pneg %p310
        %s597 = sand.u32 %s300, 1
        %s598 = scalar_lea.sflag [#allocation4], %s597
        %s599 = sand.u32 %s300, 1
        %s600 = scalar_lea.vmem [#allocation22], %s599
        %v602 = vld [vmem:[%s505] sm:$0xff]
        %v603 = vld [vmem:[%s505 + $0x8] sm:$0xff]
        %v604 = vpack.c.bf16 %v603, %v602
        %v605 = vld [vmem:[#allocation5] sm:$0xff]
        %v606 = vld [vmem:[#allocation5 + $0x8] sm:$0xff]
        %v607 = vld [vmem:[#allocation5 + $0x10] sm:$0xff]
        %v608 = vld [vmem:[#allocation5 + $0x18] sm:$0xff]
        %s609 = scalar_lea.vmem [#allocation5], 32
        %v610 = vld [vmem:[%s609] sm:$0xff]
        %v611 = vld [vmem:[%s609 + $0x8] sm:$0xff]
        %v612 = vld [vmem:[%s609 + $0x10] sm:$0xff]
        %v613 = vld [vmem:[%s609 + $0x18] sm:$0xff]
        %v615 = vshrl.u32 %v604, 16
        %v617 = vshll.u32 %v604, 16
        %v619 = vrot.slane %v617, 1
        %v620 = vor.u32 %v615, %v619
        %v625 = vunpack.c.l.b16 %v610
        %v626 = vunpack.c.h.b16 %v610
        %v627 = vunpack.c.l.b16 %v611
        %v628 = vunpack.c.h.b16 %v611
        %v629 = vunpack.c.l.b16 %v612
        %v630 = vunpack.c.h.b16 %v612
        %v631 = vunpack.c.l.b16 %v613
        %v632 = vunpack.c.h.b16 %v613
        %v633 = vpack.c.b16 %v629, %v625
        %v634 = vpack.c.b16 %v630, %v626
        %v635 = vpack.c.b16 %v631, %v627
        %v636 = vpack.c.b16 %v632, %v628
        %vm641 = vcmask 130048
        %v643 = vsel %vm641, %v620, 0
        %645 = vmatpush.bf16.msra.mxu0 0
        %646 = vmatpush.bf16.msra.mxu0 0
        %647 = vmatpush.bf16.msra.mxu0 0
        %648 = vmatpush.bf16.msra.mxu0 0
        %649 = vmatpush.bf16.msra.mxu0 0
        %650 = vmatpush.bf16.msra.mxu0 0
        %651 = vmatpush.bf16.msra.mxu0 0
        %652 = vmatpush.bf16.msra.mxu0 %v633
        %653 = vmatmul.bf16.gmra.mxu0 %v643
        %v654 = vpop.f32.mrf.mxu0
        %v655 = vadd.f32 0.0, %v654
        %v656 = vpop.f32.mrf.mxu0
        %v657 = vadd.f32 0.0, %v656
        %658 = vdwg.mxu0
        %659 = vmatpush.bf16.msra.mxu0 0
        %660 = vmatpush.bf16.msra.mxu0 0
        %661 = vmatpush.bf16.msra.mxu0 0
        %662 = vmatpush.bf16.msra.mxu0 0
        %663 = vmatpush.bf16.msra.mxu0 0
        %664 = vmatpush.bf16.msra.mxu0 0
        %665 = vmatpush.bf16.msra.mxu0 0
        %666 = vmatpush.bf16.msra.mxu0 %v634
        %667 = vmatmul.bf16.gmra.mxu0 %v643
        %v668 = vpop.f32.mrf.mxu0
        %v669 = vadd.f32 0.0, %v668
        %v670 = vpop.f32.mrf.mxu0
        %v671 = vadd.f32 0.0, %v670
        %672 = vdwg.mxu0
        %673 = vmatpush.bf16.msra.mxu0 0
        %674 = vmatpush.bf16.msra.mxu0 0
        %675 = vmatpush.bf16.msra.mxu0 0
        %676 = vmatpush.bf16.msra.mxu0 0
        %677 = vmatpush.bf16.msra.mxu0 0
        %678 = vmatpush.bf16.msra.mxu0 0
        %679 = vmatpush.bf16.msra.mxu0 0
        %680 = vmatpush.bf16.msra.mxu0 %v635
        %681 = vmatmul.bf16.gmra.mxu0 %v643
        %v682 = vpop.f32.mrf.mxu0
        %v683 = vadd.f32 0.0, %v682
        %v684 = vpop.f32.mrf.mxu0
        %v685 = vadd.f32 0.0, %v684
        %686 = vdwg.mxu0
        %687 = vmatpush.bf16.msra.mxu0 0
        %688 = vmatpush.bf16.msra.mxu0 0
        %689 = vmatpush.bf16.msra.mxu0 0
        %690 = vmatpush.bf16.msra.mxu0 0
        %691 = vmatpush.bf16.msra.mxu0 0
        %692 = vmatpush.bf16.msra.mxu0 0
        %693 = vmatpush.bf16.msra.mxu0 0
        %694 = vmatpush.bf16.msra.mxu0 %v636
        %695 = vmatmul.bf16.gmra.mxu0 %v643
        %v696 = vpop.f32.mrf.mxu0
        %v697 = vadd.f32 0.0, %v696
        %v698 = vpop.f32.mrf.mxu0
        %v699 = vadd.f32 0.0, %v698
        %700 = vdwg.mxu0
        %v705 = vunpack.c.l.b16 %v605
        %v706 = vunpack.c.h.b16 %v605
        %v707 = vunpack.c.l.b16 %v606
        %v708 = vunpack.c.h.b16 %v606
        %v709 = vunpack.c.l.b16 %v607
        %v710 = vunpack.c.h.b16 %v607
        %v711 = vunpack.c.l.b16 %v608
        %v712 = vunpack.c.h.b16 %v608
        %v713 = vpack.c.b16 %v709, %v705
        %v714 = vpack.c.b16 %v710, %v706
        %v715 = vpack.c.b16 %v711, %v707
        %v716 = vpack.c.b16 %v712, %v708
        %v721 = vsel %vm641, %v604, 0
        %723 = vmatpush.bf16.msra.mxu0 0
        %724 = vmatpush.bf16.msra.mxu0 0
        %725 = vmatpush.bf16.msra.mxu0 0
        %726 = vmatpush.bf16.msra.mxu0 0
        %727 = vmatpush.bf16.msra.mxu0 0
        %728 = vmatpush.bf16.msra.mxu0 0
        %729 = vmatpush.bf16.msra.mxu0 0
        %730 = vmatpush.bf16.msra.mxu0 %v713
        %731 = vmatmul.bf16.gmra.mxu0 %v721
        %v732 = vpop.f32.mrf.mxu0
        %v733 = vadd.f32 %v655, %v732
        %v734 = vpop.f32.mrf.mxu0
        %v735 = vadd.f32 %v657, %v734
        %736 = vdwg.mxu0
        %737 = vmatpush.bf16.msra.mxu0 0
        %738 = vmatpush.bf16.msra.mxu0 0
        %739 = vmatpush.bf16.msra.mxu0 0
        %740 = vmatpush.bf16.msra.mxu0 0
        %741 = vmatpush.bf16.msra.mxu0 0
        %742 = vmatpush.bf16.msra.mxu0 0
        %743 = vmatpush.bf16.msra.mxu0 0
        %744 = vmatpush.bf16.msra.mxu0 %v714
        %745 = vmatmul.bf16.gmra.mxu0 %v721
        %v746 = vpop.f32.mrf.mxu0
        %v747 = vadd.f32 %v669, %v746
        %v748 = vpop.f32.mrf.mxu0
        %v749 = vadd.f32 %v671, %v748
        %750 = vdwg.mxu0
        %751 = vmatpush.bf16.msra.mxu0 0
        %752 = vmatpush.bf16.msra.mxu0 0
        %753 = vmatpush.bf16.msra.mxu0 0
        %754 = vmatpush.bf16.msra.mxu0 0
        %755 = vmatpush.bf16.msra.mxu0 0
        %756 = vmatpush.bf16.msra.mxu0 0
        %757 = vmatpush.bf16.msra.mxu0 0
        %758 = vmatpush.bf16.msra.mxu0 %v715
        %759 = vmatmul.bf16.gmra.mxu0 %v721
        %v760 = vpop.f32.mrf.mxu0
        %v761 = vadd.f32 %v683, %v760
        %v762 = vpop.f32.mrf.mxu0
        %v763 = vadd.f32 %v685, %v762
        %764 = vdwg.mxu0
        %765 = vmatpush.bf16.msra.mxu0 0
        %766 = vmatpush.bf16.msra.mxu0 0
        %767 = vmatpush.bf16.msra.mxu0 0
        %768 = vmatpush.bf16.msra.mxu0 0
        %769 = vmatpush.bf16.msra.mxu0 0
        %770 = vmatpush.bf16.msra.mxu0 0
        %771 = vmatpush.bf16.msra.mxu0 0
        %772 = vmatpush.bf16.msra.mxu0 %v716
        %773 = vmatmul.bf16.gmra.mxu0 %v721
        %v774 = vpop.f32.mrf.mxu0
        %v775 = vadd.f32 %v697, %v774
        %v776 = vpop.f32.mrf.mxu0
        %v777 = vadd.f32 %v699, %v776
        %778 = vdwg.mxu0
        %s779 = scalar_lea.vmem [#allocation5], 64
        %v780 = vld [vmem:[%s779] sm:$0xff]
        %v781 = vld [vmem:[%s779 + $0x8] sm:$0xff]
        %v782 = vld [vmem:[%s779 + $0x10] sm:$0xff]
        %v783 = vld [vmem:[%s779 + $0x18] sm:$0xff]
        %v785 = vrot.slane %v604, 1
        %v790 = vunpack.c.l.b16 %v780
        %v791 = vunpack.c.h.b16 %v780
        %v792 = vunpack.c.l.b16 %v781
        %v793 = vunpack.c.h.b16 %v781
        %v794 = vunpack.c.l.b16 %v782
        %v795 = vunpack.c.h.b16 %v782
        %v796 = vunpack.c.l.b16 %v783
        %v797 = vunpack.c.h.b16 %v783
        %v798 = vpack.c.b16 %v794, %v790
        %v799 = vpack.c.b16 %v795, %v791
        %v800 = vpack.c.b16 %v796, %v792
        %v801 = vpack.c.b16 %v797, %v793
        %v807 = vsel %vm641, %v785, 0
        %809 = vmatpush.bf16.msra.mxu0 0
        %810 = vmatpush.bf16.msra.mxu0 0
        %811 = vmatpush.bf16.msra.mxu0 0
        %812 = vmatpush.bf16.msra.mxu0 0
        %813 = vmatpush.bf16.msra.mxu0 0
        %814 = vmatpush.bf16.msra.mxu0 0
        %815 = vmatpush.bf16.msra.mxu0 0
        %816 = vmatpush.bf16.msra.mxu0 %v798
        %817 = vmatmul.bf16.gmra.mxu0 %v807
        %v818 = vpop.f32.mrf.mxu0
        %v819 = vadd.f32 0.0, %v818
        %v820 = vpop.f32.mrf.mxu0
        %v821 = vadd.f32 0.0, %v820
        %822 = vdwg.mxu0
        %823 = vmatpush.bf16.msra.mxu0 0
        %824 = vmatpush.bf16.msra.mxu0 0
        %825 = vmatpush.bf16.msra.mxu0 0
        %826 = vmatpush.bf16.msra.mxu0 0
        %827 = vmatpush.bf16.msra.mxu0 0
        %828 = vmatpush.bf16.msra.mxu0 0
        %829 = vmatpush.bf16.msra.mxu0 0
        %830 = vmatpush.bf16.msra.mxu0 %v799
        %831 = vmatmul.bf16.gmra.mxu0 %v807
        %v832 = vpop.f32.mrf.mxu0
        %v833 = vadd.f32 0.0, %v832
        %v834 = vpop.f32.mrf.mxu0
        %v835 = vadd.f32 0.0, %v834
        %836 = vdwg.mxu0
        %837 = vmatpush.bf16.msra.mxu0 0
        %838 = vmatpush.bf16.msra.mxu0 0
        %839 = vmatpush.bf16.msra.mxu0 0
        %840 = vmatpush.bf16.msra.mxu0 0
        %841 = vmatpush.bf16.msra.mxu0 0
        %842 = vmatpush.bf16.msra.mxu0 0
        %843 = vmatpush.bf16.msra.mxu0 0
        %844 = vmatpush.bf16.msra.mxu0 %v800
        %845 = vmatmul.bf16.gmra.mxu0 %v807
        %v846 = vpop.f32.mrf.mxu0
        %v847 = vadd.f32 0.0, %v846
        %v848 = vpop.f32.mrf.mxu0
        %v849 = vadd.f32 0.0, %v848
        %850 = vdwg.mxu0
        %851 = vmatpush.bf16.msra.mxu0 0
        %852 = vmatpush.bf16.msra.mxu0 0
        %853 = vmatpush.bf16.msra.mxu0 0
        %854 = vmatpush.bf16.msra.mxu0 0
        %855 = vmatpush.bf16.msra.mxu0 0
        %856 = vmatpush.bf16.msra.mxu0 0
        %857 = vmatpush.bf16.msra.mxu0 0
        %858 = vmatpush.bf16.msra.mxu0 %v801
        %859 = vmatmul.bf16.gmra.mxu0 %v807
        %v860 = vpop.f32.mrf.mxu0
        %v861 = vadd.f32 0.0, %v860
        %v862 = vpop.f32.mrf.mxu0
        %v863 = vadd.f32 0.0, %v862
        %864 = vdwg.mxu0
        %v865 = vadd.f32 %v733, %v819
        %v866 = vadd.f32 %v747, %v833
        %v867 = vadd.f32 %v761, %v847
        %v868 = vadd.f32 %v775, %v861
        %v869 = vadd.f32 %v735, %v821
        %v870 = vadd.f32 %v749, %v835
        %v871 = vadd.f32 %v763, %v849
        %v872 = vadd.f32 %v777, %v863
        %v873 = vld [vmem:[#allocation7] sm:$0xf]
        %v875 = vperm.slane %v873, 0
        %v876 = vperm.slane %v873, 1
        %v877 = vperm.slane %v873, 2
        %v878 = vperm.slane %v873, 3
        %v883 = vmul.f32 %v865, %v875
        %v884 = vmul.f32 %v866, %v876
        %v885 = vmul.f32 %v867, %v877
        %v886 = vmul.f32 %v868, %v878
        %v887 = vmul.f32 %v869, %v875
        %v888 = vmul.f32 %v870, %v876
        %v889 = vmul.f32 %v871, %v877
        %v890 = vmul.f32 %v872, %v878
        %v891 = vld [vmem:[#allocation8] sm:$0xf]
        %v893 = vperm.slane %v891, 0
        %v894 = vperm.slane %v891, 1
        %v895 = vperm.slane %v891, 2
        %v896 = vperm.slane %v891, 3
        %v901 = vadd.f32 %v883, %v893
        %v902 = vadd.f32 %v884, %v894
        %v903 = vadd.f32 %v885, %v895
        %v904 = vadd.f32 %v886, %v896
        %v905 = vadd.f32 %v887, %v893
        %v906 = vadd.f32 %v888, %v894
        %v907 = vadd.f32 %v889, %v895
        %v908 = vadd.f32 %v890, %v896
        %v909 = vmax.f32 %v901, 0.0
        %v910 = vmax.f32 %v902, 0.0
        %v911 = vmax.f32 %v903, 0.0
        %v912 = vmax.f32 %v904, 0.0
        %v913 = vmax.f32 %v905, 0.0
        %v914 = vmax.f32 %v906, 0.0
        %v915 = vmax.f32 %v907, 0.0
        %v916 = vmax.f32 %v908, 0.0
        %v917 = vpack.c.bf16 %v913, %v909
        %v918 = vpack.c.bf16 %v914, %v910
        %v919 = vpack.c.bf16 %v915, %v911
        %v920 = vpack.c.bf16 %v916, %v912
        %v921 = vld [vmem:[#allocation10] sm:$0xff]
        %v922 = vld [vmem:[#allocation10 + $0x8] sm:$0xf]
        %v923 = vld [vmem:[#allocation10 + $0xc] sm:$0xff]
        %v924 = vld [vmem:[#allocation10 + $0x14] sm:$0xf]
        %v925 = vld [vmem:[#allocation10 + $0x18] sm:$0xff]
        %v926 = vld [vmem:[#allocation10 + $0x20] sm:$0xf]
        %v927 = vld [vmem:[#allocation10 + $0x24] sm:$0xff]
        %v928 = vld [vmem:[#allocation10 + $0x2c] sm:$0xf]
        %v929 = vld [vmem:[#allocation10 + $0x30] sm:$0xff]
        %v930 = vld [vmem:[#allocation10 + $0x38] sm:$0xf]
        %v931 = vld [vmem:[#allocation10 + $0x3c] sm:$0xff]
        %v932 = vld [vmem:[#allocation10 + $0x44] sm:$0xf]
        %v933 = vld [vmem:[#allocation10 + $0x48] sm:$0xff]
        %v934 = vld [vmem:[#allocation10 + $0x50] sm:$0xf]
        %v935 = vld [vmem:[#allocation10 + $0x54] sm:$0xff]
        %v936 = vld [vmem:[#allocation10 + $0x5c] sm:$0xf]
        %v937 = vld [vmem:[#allocation10 + $0x60] sm:$0xff]
        %v938 = vld [vmem:[#allocation10 + $0x68] sm:$0xf]
        %v939 = vld [vmem:[#allocation10 + $0x6c] sm:$0xff]
        %v940 = vld [vmem:[#allocation10 + $0x74] sm:$0xf]
        %v941 = vld [vmem:[#allocation10 + $0x78] sm:$0xff]
        %v942 = vld [vmem:[#allocation10 + $0x80] sm:$0xf]
        %v943 = vld [vmem:[#allocation10 + $0x84] sm:$0xff]
        %v944 = vld [vmem:[#allocation10 + $0x8c] sm:$0xf]
        %v945 = vld [vmem:[#allocation10 + $0x90] sm:$0xff]
        %v946 = vld [vmem:[#allocation10 + $0x98] sm:$0xf]
        %v947 = vld [vmem:[#allocation10 + $0x9c] sm:$0xff]
        %v948 = vld [vmem:[#allocation10 + $0xa4] sm:$0xf]
        %v949 = vld [vmem:[#allocation10 + $0xa8] sm:$0xff]
        %v950 = vld [vmem:[#allocation10 + $0xb0] sm:$0xf]
        %v951 = vld [vmem:[#allocation10 + $0xb4] sm:$0xff]
        %v952 = vld [vmem:[#allocation10 + $0xbc] sm:$0xf]
        %v953 = vld [vmem:[#allocation10 + $0xc0] sm:$0xff]
        %v954 = vld [vmem:[#allocation10 + $0xc8] sm:$0xf]
        %v955 = vld [vmem:[#allocation10 + $0xcc] sm:$0xff]
        %v956 = vld [vmem:[#allocation10 + $0xd4] sm:$0xf]
        %v957 = vld [vmem:[#allocation10 + $0xd8] sm:$0xff]
        %v958 = vld [vmem:[#allocation10 + $0xe0] sm:$0xf]
        %v959 = vld [vmem:[#allocation10 + $0xe4] sm:$0xff]
        %v960 = vld [vmem:[#allocation10 + $0xec] sm:$0xf]
        %v961 = vld [vmem:[#allocation10 + $0xf0] sm:$0xff]
        %v962 = vld [vmem:[#allocation10 + $0xf8] sm:$0xf]
        %v963 = vld [vmem:[#allocation10 + $0xfc] sm:$0xff]
        %v964 = vld [vmem:[#allocation10 + $0x104] sm:$0xf]
        %v965 = vld [vmem:[#allocation10 + $0x108] sm:$0xff]
        %v966 = vld [vmem:[#allocation10 + $0x110] sm:$0xf]
        %v967 = vld [vmem:[#allocation10 + $0x114] sm:$0xff]
        %v968 = vld [vmem:[#allocation10 + $0x11c] sm:$0xf]
        %v969 = vld [vmem:[#allocation10 + $0x120] sm:$0xff]
        %v970 = vld [vmem:[#allocation10 + $0x128] sm:$0xf]
        %v971 = vld [vmem:[#allocation10 + $0x12c] sm:$0xff]
        %v972 = vld [vmem:[#allocation10 + $0x134] sm:$0xf]
        %v973 = vld [vmem:[#allocation10 + $0x138] sm:$0xff]
        %v974 = vld [vmem:[#allocation10 + $0x140] sm:$0xf]
        %v975 = vld [vmem:[#allocation10 + $0x144] sm:$0xff]
        %v976 = vld [vmem:[#allocation10 + $0x14c] sm:$0xf]
        %v977 = vld [vmem:[#allocation10 + $0x150] sm:$0xff]
        %v978 = vld [vmem:[#allocation10 + $0x158] sm:$0xf]
        %v979 = vld [vmem:[#allocation10 + $0x15c] sm:$0xff]
        %v980 = vld [vmem:[#allocation10 + $0x164] sm:$0xf]
        %v981 = vld [vmem:[#allocation10 + $0x168] sm:$0xff]
        %v982 = vld [vmem:[#allocation10 + $0x170] sm:$0xf]
        %v983 = vld [vmem:[#allocation10 + $0x174] sm:$0xff]
        %v984 = vld [vmem:[#allocation10 + $0x17c] sm:$0xf]
        %v985 = vld [vmem:[#allocation10 + $0x180] sm:$0xff]
        %v986 = vld [vmem:[#allocation10 + $0x188] sm:$0xf]
        %v987 = vld [vmem:[#allocation10 + $0x18c] sm:$0xff]
        %v988 = vld [vmem:[#allocation10 + $0x194] sm:$0xf]
        %v989 = vld [vmem:[#allocation10 + $0x198] sm:$0xff]
        %v990 = vld [vmem:[#allocation10 + $0x1a0] sm:$0xf]
        %v991 = vld [vmem:[#allocation10 + $0x1a4] sm:$0xff]
        %v992 = vld [vmem:[#allocation10 + $0x1ac] sm:$0xf]
        %v993 = vld [vmem:[#allocation10 + $0x1b0] sm:$0xff]
        %v994 = vld [vmem:[#allocation10 + $0x1b8] sm:$0xf]
        %v995 = vld [vmem:[#allocation10 + $0x1bc] sm:$0xff]
        %v996 = vld [vmem:[#allocation10 + $0x1c4] sm:$0xf]
        %v997 = vld [vmem:[#allocation10 + $0x1c8] sm:$0xff]
        %v998 = vld [vmem:[#allocation10 + $0x1d0] sm:$0xf]
        %v999 = vld [vmem:[#allocation10 + $0x1d4] sm:$0xff]
        %v1000 = vld [vmem:[#allocation10 + $0x1dc] sm:$0xf]
        %v1001 = vld [vmem:[#allocation10 + $0x1e0] sm:$0xff]
        %v1002 = vld [vmem:[#allocation10 + $0x1e8] sm:$0xf]
        %v1003 = vld [vmem:[#allocation10 + $0x1ec] sm:$0xff]
        %v1004 = vld [vmem:[#allocation10 + $0x1f4] sm:$0xf]
        %v1005 = vld [vmem:[#allocation10 + $0x1f8] sm:$0xff]
        %v1006 = vld [vmem:[#allocation10 + $0x200] sm:$0xf]
        %v1007 = vld [vmem:[#allocation10 + $0x204] sm:$0xff]
        %v1008 = vld [vmem:[#allocation10 + $0x20c] sm:$0xf]
        %v1009 = vld [vmem:[#allocation10 + $0x210] sm:$0xff]
        %v1010 = vld [vmem:[#allocation10 + $0x218] sm:$0xf]
        %v1011 = vld [vmem:[#allocation10 + $0x21c] sm:$0xff]
        %v1012 = vld [vmem:[#allocation10 + $0x224] sm:$0xf]
        %v1013 = vld [vmem:[#allocation10 + $0x228] sm:$0xff]
        %v1014 = vld [vmem:[#allocation10 + $0x230] sm:$0xf]
        %v1015 = vld [vmem:[#allocation10 + $0x234] sm:$0xff]
        %v1016 = vld [vmem:[#allocation10 + $0x23c] sm:$0xf]
        %v1017 = vld [vmem:[#allocation10 + $0x240] sm:$0xff]
        %v1018 = vld [vmem:[#allocation10 + $0x248] sm:$0xf]
        %v1019 = vld [vmem:[#allocation10 + $0x24c] sm:$0xff]
        %v1020 = vld [vmem:[#allocation10 + $0x254] sm:$0xf]
        %v1021 = vld [vmem:[#allocation10 + $0x258] sm:$0xff]
        %v1022 = vld [vmem:[#allocation10 + $0x260] sm:$0xf]
        %v1023 = vld [vmem:[#allocation10 + $0x264] sm:$0xff]
        %v1024 = vld [vmem:[#allocation10 + $0x26c] sm:$0xf]
        %v1025 = vld [vmem:[#allocation10 + $0x270] sm:$0xff]
        %v1026 = vld [vmem:[#allocation10 + $0x278] sm:$0xf]
        %v1027 = vld [vmem:[#allocation10 + $0x27c] sm:$0xff]
        %v1028 = vld [vmem:[#allocation10 + $0x284] sm:$0xf]
        %v1029 = vld [vmem:[#allocation10 + $0x288] sm:$0xff]
        %v1030 = vld [vmem:[#allocation10 + $0x290] sm:$0xf]
        %v1031 = vld [vmem:[#allocation10 + $0x294] sm:$0xff]
        %v1032 = vld [vmem:[#allocation10 + $0x29c] sm:$0xf]
        %v1033 = vld [vmem:[#allocation10 + $0x2a0] sm:$0xff]
        %v1034 = vld [vmem:[#allocation10 + $0x2a8] sm:$0xf]
        %v1035 = vld [vmem:[#allocation10 + $0x2ac] sm:$0xff]
        %v1036 = vld [vmem:[#allocation10 + $0x2b4] sm:$0xf]
        %v1037 = vld [vmem:[#allocation10 + $0x2b8] sm:$0xff]
        %v1038 = vld [vmem:[#allocation10 + $0x2c0] sm:$0xf]
        %v1039 = vld [vmem:[#allocation10 + $0x2c4] sm:$0xff]
        %v1040 = vld [vmem:[#allocation10 + $0x2cc] sm:$0xf]
        %v1041 = vld [vmem:[#allocation10 + $0x2d0] sm:$0xff]
        %v1042 = vld [vmem:[#allocation10 + $0x2d8] sm:$0xf]
        %v1043 = vld [vmem:[#allocation10 + $0x2dc] sm:$0xff]
        %v1044 = vld [vmem:[#allocation10 + $0x2e4] sm:$0xf]
        %v1045 = vld [vmem:[#allocation10 + $0x2e8] sm:$0xff]
        %v1046 = vld [vmem:[#allocation10 + $0x2f0] sm:$0xf]
        %v1047 = vld [vmem:[#allocation10 + $0x2f4] sm:$0xff]
        %v1048 = vld [vmem:[#allocation10 + $0x2fc] sm:$0xf]
        %s1049 = scalar_lea.vmem [#allocation10], 768
        %v1050 = vld [vmem:[%s1049] sm:$0xff]
        %v1051 = vld [vmem:[%s1049 + $0x8] sm:$0xf]
        %v1052 = vld [vmem:[%s1049 + $0xc] sm:$0xff]
        %v1053 = vld [vmem:[%s1049 + $0x14] sm:$0xf]
        %v1054 = vld [vmem:[%s1049 + $0x18] sm:$0xff]
        %v1055 = vld [vmem:[%s1049 + $0x20] sm:$0xf]
        %v1056 = vld [vmem:[%s1049 + $0x24] sm:$0xff]
        %v1057 = vld [vmem:[%s1049 + $0x2c] sm:$0xf]
        %v1058 = vld [vmem:[%s1049 + $0x30] sm:$0xff]
        %v1059 = vld [vmem:[%s1049 + $0x38] sm:$0xf]
        %v1060 = vld [vmem:[%s1049 + $0x3c] sm:$0xff]
        %v1061 = vld [vmem:[%s1049 + $0x44] sm:$0xf]
        %v1062 = vld [vmem:[%s1049 + $0x48] sm:$0xff]
        %v1063 = vld [vmem:[%s1049 + $0x50] sm:$0xf]
        %v1064 = vld [vmem:[%s1049 + $0x54] sm:$0xff]
        %v1065 = vld [vmem:[%s1049 + $0x5c] sm:$0xf]
        %v1066 = vld [vmem:[%s1049 + $0x60] sm:$0xff]
        %v1067 = vld [vmem:[%s1049 + $0x68] sm:$0xf]
        %v1068 = vld [vmem:[%s1049 + $0x6c] sm:$0xff]
        %v1069 = vld [vmem:[%s1049 + $0x74] sm:$0xf]
        %v1070 = vld [vmem:[%s1049 + $0x78] sm:$0xff]
        %v1071 = vld [vmem:[%s1049 + $0x80] sm:$0xf]
        %v1072 = vld [vmem:[%s1049 + $0x84] sm:$0xff]
        %v1073 = vld [vmem:[%s1049 + $0x8c] sm:$0xf]
        %v1074 = vld [vmem:[%s1049 + $0x90] sm:$0xff]
        %v1075 = vld [vmem:[%s1049 + $0x98] sm:$0xf]
        %v1076 = vld [vmem:[%s1049 + $0x9c] sm:$0xff]
        %v1077 = vld [vmem:[%s1049 + $0xa4] sm:$0xf]
        %v1078 = vld [vmem:[%s1049 + $0xa8] sm:$0xff]
        %v1079 = vld [vmem:[%s1049 + $0xb0] sm:$0xf]
        %v1080 = vld [vmem:[%s1049 + $0xb4] sm:$0xff]
        %v1081 = vld [vmem:[%s1049 + $0xbc] sm:$0xf]
        %v1082 = vld [vmem:[%s1049 + $0xc0] sm:$0xff]
        %v1083 = vld [vmem:[%s1049 + $0xc8] sm:$0xf]
        %v1084 = vld [vmem:[%s1049 + $0xcc] sm:$0xff]
        %v1085 = vld [vmem:[%s1049 + $0xd4] sm:$0xf]
        %v1086 = vld [vmem:[%s1049 + $0xd8] sm:$0xff]
        %v1087 = vld [vmem:[%s1049 + $0xe0] sm:$0xf]
        %v1088 = vld [vmem:[%s1049 + $0xe4] sm:$0xff]
        %v1089 = vld [vmem:[%s1049 + $0xec] sm:$0xf]
        %v1090 = vld [vmem:[%s1049 + $0xf0] sm:$0xff]
        %v1091 = vld [vmem:[%s1049 + $0xf8] sm:$0xf]
        %v1092 = vld [vmem:[%s1049 + $0xfc] sm:$0xff]
        %v1093 = vld [vmem:[%s1049 + $0x104] sm:$0xf]
        %v1094 = vld [vmem:[%s1049 + $0x108] sm:$0xff]
        %v1095 = vld [vmem:[%s1049 + $0x110] sm:$0xf]
        %v1096 = vld [vmem:[%s1049 + $0x114] sm:$0xff]
        %v1097 = vld [vmem:[%s1049 + $0x11c] sm:$0xf]
        %v1098 = vld [vmem:[%s1049 + $0x120] sm:$0xff]
        %v1099 = vld [vmem:[%s1049 + $0x128] sm:$0xf]
        %v1100 = vld [vmem:[%s1049 + $0x12c] sm:$0xff]
        %v1101 = vld [vmem:[%s1049 + $0x134] sm:$0xf]
        %v1102 = vld [vmem:[%s1049 + $0x138] sm:$0xff]
        %v1103 = vld [vmem:[%s1049 + $0x140] sm:$0xf]
        %v1104 = vld [vmem:[%s1049 + $0x144] sm:$0xff]
        %v1105 = vld [vmem:[%s1049 + $0x14c] sm:$0xf]
        %v1106 = vld [vmem:[%s1049 + $0x150] sm:$0xff]
        %v1107 = vld [vmem:[%s1049 + $0x158] sm:$0xf]
        %v1108 = vld [vmem:[%s1049 + $0x15c] sm:$0xff]
        %v1109 = vld [vmem:[%s1049 + $0x164] sm:$0xf]
        %v1110 = vld [vmem:[%s1049 + $0x168] sm:$0xff]
        %v1111 = vld [vmem:[%s1049 + $0x170] sm:$0xf]
        %v1112 = vld [vmem:[%s1049 + $0x174] sm:$0xff]
        %v1113 = vld [vmem:[%s1049 + $0x17c] sm:$0xf]
        %v1114 = vld [vmem:[%s1049 + $0x180] sm:$0xff]
        %v1115 = vld [vmem:[%s1049 + $0x188] sm:$0xf]
        %v1116 = vld [vmem:[%s1049 + $0x18c] sm:$0xff]
        %v1117 = vld [vmem:[%s1049 + $0x194] sm:$0xf]
        %v1118 = vld [vmem:[%s1049 + $0x198] sm:$0xff]
        %v1119 = vld [vmem:[%s1049 + $0x1a0] sm:$0xf]
        %v1120 = vld [vmem:[%s1049 + $0x1a4] sm:$0xff]
        %v1121 = vld [vmem:[%s1049 + $0x1ac] sm:$0xf]
        %v1122 = vld [vmem:[%s1049 + $0x1b0] sm:$0xff]
        %v1123 = vld [vmem:[%s1049 + $0x1b8] sm:$0xf]
        %v1124 = vld [vmem:[%s1049 + $0x1bc] sm:$0xff]
        %v1125 = vld [vmem:[%s1049 + $0x1c4] sm:$0xf]
        %v1126 = vld [vmem:[%s1049 + $0x1c8] sm:$0xff]
        %v1127 = vld [vmem:[%s1049 + $0x1d0] sm:$0xf]
        %v1128 = vld [vmem:[%s1049 + $0x1d4] sm:$0xff]
        %v1129 = vld [vmem:[%s1049 + $0x1dc] sm:$0xf]
        %v1130 = vld [vmem:[%s1049 + $0x1e0] sm:$0xff]
        %v1131 = vld [vmem:[%s1049 + $0x1e8] sm:$0xf]
        %v1132 = vld [vmem:[%s1049 + $0x1ec] sm:$0xff]
        %v1133 = vld [vmem:[%s1049 + $0x1f4] sm:$0xf]
        %v1134 = vld [vmem:[%s1049 + $0x1f8] sm:$0xff]
        %v1135 = vld [vmem:[%s1049 + $0x200] sm:$0xf]
        %v1136 = vld [vmem:[%s1049 + $0x204] sm:$0xff]
        %v1137 = vld [vmem:[%s1049 + $0x20c] sm:$0xf]
        %v1138 = vld [vmem:[%s1049 + $0x210] sm:$0xff]
        %v1139 = vld [vmem:[%s1049 + $0x218] sm:$0xf]
        %v1140 = vld [vmem:[%s1049 + $0x21c] sm:$0xff]
        %v1141 = vld [vmem:[%s1049 + $0x224] sm:$0xf]
        %v1142 = vld [vmem:[%s1049 + $0x228] sm:$0xff]
        %v1143 = vld [vmem:[%s1049 + $0x230] sm:$0xf]
        %v1144 = vld [vmem:[%s1049 + $0x234] sm:$0xff]
        %v1145 = vld [vmem:[%s1049 + $0x23c] sm:$0xf]
        %v1146 = vld [vmem:[%s1049 + $0x240] sm:$0xff]
        %v1147 = vld [vmem:[%s1049 + $0x248] sm:$0xf]
        %v1148 = vld [vmem:[%s1049 + $0x24c] sm:$0xff]
        %v1149 = vld [vmem:[%s1049 + $0x254] sm:$0xf]
        %v1150 = vld [vmem:[%s1049 + $0x258] sm:$0xff]
        %v1151 = vld [vmem:[%s1049 + $0x260] sm:$0xf]
        %v1152 = vld [vmem:[%s1049 + $0x264] sm:$0xff]
        %v1153 = vld [vmem:[%s1049 + $0x26c] sm:$0xf]
        %v1154 = vld [vmem:[%s1049 + $0x270] sm:$0xff]
        %v1155 = vld [vmem:[%s1049 + $0x278] sm:$0xf]
        %v1156 = vld [vmem:[%s1049 + $0x27c] sm:$0xff]
        %v1157 = vld [vmem:[%s1049 + $0x284] sm:$0xf]
        %v1158 = vld [vmem:[%s1049 + $0x288] sm:$0xff]
        %v1159 = vld [vmem:[%s1049 + $0x290] sm:$0xf]
        %v1160 = vld [vmem:[%s1049 + $0x294] sm:$0xff]
        %v1161 = vld [vmem:[%s1049 + $0x29c] sm:$0xf]
        %v1162 = vld [vmem:[%s1049 + $0x2a0] sm:$0xff]
        %v1163 = vld [vmem:[%s1049 + $0x2a8] sm:$0xf]
        %v1164 = vld [vmem:[%s1049 + $0x2ac] sm:$0xff]
        %v1165 = vld [vmem:[%s1049 + $0x2b4] sm:$0xf]
        %v1166 = vld [vmem:[%s1049 + $0x2b8] sm:$0xff]
        %v1167 = vld [vmem:[%s1049 + $0x2c0] sm:$0xf]
        %v1168 = vld [vmem:[%s1049 + $0x2c4] sm:$0xff]
        %v1169 = vld [vmem:[%s1049 + $0x2cc] sm:$0xf]
        %v1170 = vld [vmem:[%s1049 + $0x2d0] sm:$0xff]
        %v1171 = vld [vmem:[%s1049 + $0x2d8] sm:$0xf]
        %v1172 = vld [vmem:[%s1049 + $0x2dc] sm:$0xff]
        %v1173 = vld [vmem:[%s1049 + $0x2e4] sm:$0xf]
        %v1174 = vld [vmem:[%s1049 + $0x2e8] sm:$0xff]
        %v1175 = vld [vmem:[%s1049 + $0x2f0] sm:$0xf]
        %v1176 = vld [vmem:[%s1049 + $0x2f4] sm:$0xff]
        %v1177 = vld [vmem:[%s1049 + $0x2fc] sm:$0xf]
        %v1179 = vshrl.u32 %v917, 16
        %v1181 = vshll.u32 %v917, 16
        %v1183 = vrot.slane %v1181, 1
        %v1184 = vor.u32 %v1179, %v1183
        %v1186 = vshrl.u32 %v918, 16
        %v1188 = vshll.u32 %v918, 16
        %v1190 = vrot.slane %v1188, 1
        %v1191 = vor.u32 %v1186, %v1190
        %v1193 = vshrl.u32 %v919, 16
        %v1195 = vshll.u32 %v919, 16
        %v1197 = vrot.slane %v1195, 1
        %v1198 = vor.u32 %v1193, %v1197
        %v1200 = vshrl.u32 %v920, 16
        %v1202 = vshll.u32 %v920, 16
        %v1204 = vrot.slane %v1202, 1
        %v1205 = vor.u32 %v1200, %v1204
        %v1338 = vunpack.c.l.b16 %v1050
        %v1339 = vunpack.c.h.b16 %v1050
        %v1340 = vunpack.c.l.b16 %v1051
        %v1341 = vunpack.c.l.b16 %v1052
        %v1342 = vunpack.c.h.b16 %v1052
        %v1343 = vunpack.c.l.b16 %v1053
        %v1344 = vunpack.c.l.b16 %v1054
        %v1345 = vunpack.c.h.b16 %v1054
        %v1346 = vunpack.c.l.b16 %v1055
        %v1347 = vunpack.c.l.b16 %v1056
        %v1348 = vunpack.c.h.b16 %v1056
        %v1349 = vunpack.c.l.b16 %v1057
        %v1350 = vunpack.c.l.b16 %v1058
        %v1351 = vunpack.c.h.b16 %v1058
        %v1352 = vunpack.c.l.b16 %v1059
        %v1353 = vunpack.c.l.b16 %v1060
        %v1354 = vunpack.c.h.b16 %v1060
        %v1355 = vunpack.c.l.b16 %v1061
        %v1356 = vunpack.c.l.b16 %v1062
        %v1357 = vunpack.c.h.b16 %v1062
        %v1358 = vunpack.c.l.b16 %v1063
        %v1359 = vunpack.c.l.b16 %v1064
        %v1360 = vunpack.c.h.b16 %v1064
        %v1361 = vunpack.c.l.b16 %v1065
        %v1362 = vunpack.c.l.b16 %v1066
        %v1363 = vunpack.c.h.b16 %v1066
        %v1364 = vunpack.c.l.b16 %v1067
        %v1365 = vunpack.c.l.b16 %v1068
        %v1366 = vunpack.c.h.b16 %v1068
        %v1367 = vunpack.c.l.b16 %v1069
        %v1368 = vunpack.c.l.b16 %v1070
        %v1369 = vunpack.c.h.b16 %v1070
        %v1370 = vunpack.c.l.b16 %v1071
        %v1371 = vunpack.c.l.b16 %v1072
        %v1372 = vunpack.c.h.b16 %v1072
        %v1373 = vunpack.c.l.b16 %v1073
        %v1374 = vunpack.c.l.b16 %v1074
        %v1375 = vunpack.c.h.b16 %v1074
        %v1376 = vunpack.c.l.b16 %v1075
        %v1377 = vunpack.c.l.b16 %v1076
        %v1378 = vunpack.c.h.b16 %v1076
        %v1379 = vunpack.c.l.b16 %v1077
        %v1380 = vunpack.c.l.b16 %v1078
        %v1381 = vunpack.c.h.b16 %v1078
        %v1382 = vunpack.c.l.b16 %v1079
        %v1383 = vunpack.c.l.b16 %v1080
        %v1384 = vunpack.c.h.b16 %v1080
        %v1385 = vunpack.c.l.b16 %v1081
        %v1386 = vunpack.c.l.b16 %v1082
        %v1387 = vunpack.c.h.b16 %v1082
        %v1388 = vunpack.c.l.b16 %v1083
        %v1389 = vunpack.c.l.b16 %v1084
        %v1390 = vunpack.c.h.b16 %v1084
        %v1391 = vunpack.c.l.b16 %v1085
        %v1392 = vunpack.c.l.b16 %v1086
        %v1393 = vunpack.c.h.b16 %v1086
        %v1394 = vunpack.c.l.b16 %v1087
        %v1395 = vunpack.c.l.b16 %v1088
        %v1396 = vunpack.c.h.b16 %v1088
        %v1397 = vunpack.c.l.b16 %v1089
        %v1398 = vunpack.c.l.b16 %v1090
        %v1399 = vunpack.c.h.b16 %v1090
        %v1400 = vunpack.c.l.b16 %v1091
        %v1401 = vunpack.c.l.b16 %v1092
        %v1402 = vunpack.c.h.b16 %v1092
        %v1403 = vunpack.c.l.b16 %v1093
        %v1404 = vunpack.c.l.b16 %v1094
        %v1405 = vunpack.c.h.b16 %v1094
        %v1406 = vunpack.c.l.b16 %v1095
        %v1407 = vunpack.c.l.b16 %v1096
        %v1408 = vunpack.c.h.b16 %v1096
        %v1409 = vunpack.c.l.b16 %v1097
        %v1410 = vunpack.c.l.b16 %v1098
        %v1411 = vunpack.c.h.b16 %v1098
        %v1412 = vunpack.c.l.b16 %v1099
        %v1413 = vunpack.c.l.b16 %v1100
        %v1414 = vunpack.c.h.b16 %v1100
        %v1415 = vunpack.c.l.b16 %v1101
        %v1416 = vunpack.c.l.b16 %v1102
        %v1417 = vunpack.c.h.b16 %v1102
        %v1418 = vunpack.c.l.b16 %v1103
        %v1419 = vunpack.c.l.b16 %v1104
        %v1420 = vunpack.c.h.b16 %v1104
        %v1421 = vunpack.c.l.b16 %v1105
        %v1422 = vunpack.c.l.b16 %v1106
        %v1423 = vunpack.c.h.b16 %v1106
        %v1424 = vunpack.c.l.b16 %v1107
        %v1425 = vunpack.c.l.b16 %v1108
        %v1426 = vunpack.c.h.b16 %v1108
        %v1427 = vunpack.c.l.b16 %v1109
        %v1428 = vunpack.c.l.b16 %v1110
        %v1429 = vunpack.c.h.b16 %v1110
        %v1430 = vunpack.c.l.b16 %v1111
        %v1431 = vunpack.c.l.b16 %v1112
        %v1432 = vunpack.c.h.b16 %v1112
        %v1433 = vunpack.c.l.b16 %v1113
        %v1434 = vunpack.c.l.b16 %v1114
        %v1435 = vunpack.c.h.b16 %v1114
        %v1436 = vunpack.c.l.b16 %v1115
        %v1437 = vunpack.c.l.b16 %v1116
        %v1438 = vunpack.c.h.b16 %v1116
        %v1439 = vunpack.c.l.b16 %v1117
        %v1440 = vunpack.c.l.b16 %v1118
        %v1441 = vunpack.c.h.b16 %v1118
        %v1442 = vunpack.c.l.b16 %v1119
        %v1443 = vunpack.c.l.b16 %v1120
        %v1444 = vunpack.c.h.b16 %v1120
        %v1445 = vunpack.c.l.b16 %v1121
        %v1446 = vunpack.c.l.b16 %v1122
        %v1447 = vunpack.c.h.b16 %v1122
        %v1448 = vunpack.c.l.b16 %v1123
        %v1449 = vunpack.c.l.b16 %v1124
        %v1450 = vunpack.c.h.b16 %v1124
        %v1451 = vunpack.c.l.b16 %v1125
        %v1452 = vunpack.c.l.b16 %v1126
        %v1453 = vunpack.c.h.b16 %v1126
        %v1454 = vunpack.c.l.b16 %v1127
        %v1455 = vunpack.c.l.b16 %v1128
        %v1456 = vunpack.c.h.b16 %v1128
        %v1457 = vunpack.c.l.b16 %v1129
        %v1458 = vunpack.c.l.b16 %v1130
        %v1459 = vunpack.c.h.b16 %v1130
        %v1460 = vunpack.c.l.b16 %v1131
        %v1461 = vunpack.c.l.b16 %v1132
        %v1462 = vunpack.c.h.b16 %v1132
        %v1463 = vunpack.c.l.b16 %v1133
        %v1464 = vunpack.c.l.b16 %v1134
        %v1465 = vunpack.c.h.b16 %v1134
        %v1466 = vunpack.c.l.b16 %v1135
        %v1467 = vunpack.c.l.b16 %v1136
        %v1468 = vunpack.c.h.b16 %v1136
        %v1469 = vunpack.c.l.b16 %v1137
        %v1470 = vunpack.c.l.b16 %v1138
        %v1471 = vunpack.c.h.b16 %v1138
        %v1472 = vunpack.c.l.b16 %v1139
        %v1473 = vunpack.c.l.b16 %v1140
        %v1474 = vunpack.c.h.b16 %v1140
        %v1475 = vunpack.c.l.b16 %v1141
        %v1476 = vunpack.c.l.b16 %v1142
        %v1477 = vunpack.c.h.b16 %v1142
        %v1478 = vunpack.c.l.b16 %v1143
        %v1479 = vunpack.c.l.b16 %v1144
        %v1480 = vunpack.c.h.b16 %v1144
        %v1481 = vunpack.c.l.b16 %v1145
        %v1482 = vunpack.c.l.b16 %v1146
        %v1483 = vunpack.c.h.b16 %v1146
        %v1484 = vunpack.c.l.b16 %v1147
        %v1485 = vunpack.c.l.b16 %v1148
        %v1486 = vunpack.c.h.b16 %v1148
        %v1487 = vunpack.c.l.b16 %v1149
        %v1488 = vunpack.c.l.b16 %v1150
        %v1489 = vunpack.c.h.b16 %v1150
        %v1490 = vunpack.c.l.b16 %v1151
        %v1491 = vunpack.c.l.b16 %v1152
        %v1492 = vunpack.c.h.b16 %v1152
        %v1493 = vunpack.c.l.b16 %v1153
        %v1494 = vunpack.c.l.b16 %v1154
        %v1495 = vunpack.c.h.b16 %v1154
        %v1496 = vunpack.c.l.b16 %v1155
        %v1497 = vunpack.c.l.b16 %v1156
        %v1498 = vunpack.c.h.b16 %v1156
        %v1499 = vunpack.c.l.b16 %v1157
        %v1500 = vunpack.c.l.b16 %v1158
        %v1501 = vunpack.c.h.b16 %v1158
        %v1502 = vunpack.c.l.b16 %v1159
        %v1503 = vunpack.c.l.b16 %v1160
        %v1504 = vunpack.c.h.b16 %v1160
        %v1505 = vunpack.c.l.b16 %v1161
        %v1506 = vunpack.c.l.b16 %v1162
        %v1507 = vunpack.c.h.b16 %v1162
        %v1508 = vunpack.c.l.b16 %v1163
        %v1509 = vunpack.c.l.b16 %v1164
        %v1510 = vunpack.c.h.b16 %v1164
        %v1511 = vunpack.c.l.b16 %v1165
        %v1512 = vunpack.c.l.b16 %v1166
        %v1513 = vunpack.c.h.b16 %v1166
        %v1514 = vunpack.c.l.b16 %v1167
        %v1515 = vunpack.c.l.b16 %v1168
        %v1516 = vunpack.c.h.b16 %v1168
        %v1517 = vunpack.c.l.b16 %v1169
        %v1518 = vunpack.c.l.b16 %v1170
        %v1519 = vunpack.c.h.b16 %v1170
        %v1520 = vunpack.c.l.b16 %v1171
        %v1521 = vunpack.c.l.b16 %v1172
        %v1522 = vunpack.c.h.b16 %v1172
        %v1523 = vunpack.c.l.b16 %v1173
        %v1524 = vunpack.c.l.b16 %v1174
        %v1525 = vunpack.c.h.b16 %v1174
        %v1526 = vunpack.c.l.b16 %v1175
        %v1527 = vunpack.c.l.b16 %v1176
        %v1528 = vunpack.c.h.b16 %v1176
        %v1529 = vunpack.c.l.b16 %v1177
        %v1530 = vpack.c.b16 %v1341, %v1338
        %v1531 = vpack.c.b16 %v1342, %v1339
        %v1532 = vpack.c.b16 %v1343, %v1340
        %v1533 = vpack.c.b16 %v1347, %v1344
        %v1534 = vpack.c.b16 %v1348, %v1345
        %v1535 = vpack.c.b16 %v1349, %v1346
        %v1536 = vpack.c.b16 %v1353, %v1350
        %v1537 = vpack.c.b16 %v1354, %v1351
        %v1538 = vpack.c.b16 %v1355, %v1352
        %v1539 = vpack.c.b16 %v1359, %v1356
        %v1540 = vpack.c.b16 %v1360, %v1357
        %v1541 = vpack.c.b16 %v1361, %v1358
        %v1542 = vpack.c.b16 %v1365, %v1362
        %v1543 = vpack.c.b16 %v1366, %v1363
        %v1544 = vpack.c.b16 %v1367, %v1364
        %v1545 = vpack.c.b16 %v1371, %v1368
        %v1546 = vpack.c.b16 %v1372, %v1369
        %v1547 = vpack.c.b16 %v1373, %v1370
        %v1548 = vpack.c.b16 %v1377, %v1374
        %v1549 = vpack.c.b16 %v1378, %v1375
        %v1550 = vpack.c.b16 %v1379, %v1376
        %v1551 = vpack.c.b16 %v1383, %v1380
        %v1552 = vpack.c.b16 %v1384, %v1381
        %v1553 = vpack.c.b16 %v1385, %v1382
        %v1554 = vpack.c.b16 %v1389, %v1386
        %v1555 = vpack.c.b16 %v1390, %v1387
        %v1556 = vpack.c.b16 %v1391, %v1388
        %v1557 = vpack.c.b16 %v1395, %v1392
        %v1558 = vpack.c.b16 %v1396, %v1393
        %v1559 = vpack.c.b16 %v1397, %v1394
        %v1560 = vpack.c.b16 %v1401, %v1398
        %v1561 = vpack.c.b16 %v1402, %v1399
        %v1562 = vpack.c.b16 %v1403, %v1400
        %v1563 = vpack.c.b16 %v1407, %v1404
        %v1564 = vpack.c.b16 %v1408, %v1405
        %v1565 = vpack.c.b16 %v1409, %v1406
        %v1566 = vpack.c.b16 %v1413, %v1410
        %v1567 = vpack.c.b16 %v1414, %v1411
        %v1568 = vpack.c.b16 %v1415, %v1412
        %v1569 = vpack.c.b16 %v1419, %v1416
        %v1570 = vpack.c.b16 %v1420, %v1417
        %v1571 = vpack.c.b16 %v1421, %v1418
        %v1572 = vpack.c.b16 %v1425, %v1422
        %v1573 = vpack.c.b16 %v1426, %v1423
        %v1574 = vpack.c.b16 %v1427, %v1424
        %v1575 = vpack.c.b16 %v1431, %v1428
        %v1576 = vpack.c.b16 %v1432, %v1429
        %v1577 = vpack.c.b16 %v1433, %v1430
        %v1578 = vpack.c.b16 %v1437, %v1434
        %v1579 = vpack.c.b16 %v1438, %v1435
        %v1580 = vpack.c.b16 %v1439, %v1436
        %v1581 = vpack.c.b16 %v1443, %v1440
        %v1582 = vpack.c.b16 %v1444, %v1441
        %v1583 = vpack.c.b16 %v1445, %v1442
        %v1584 = vpack.c.b16 %v1449, %v1446
        %v1585 = vpack.c.b16 %v1450, %v1447
        %v1586 = vpack.c.b16 %v1451, %v1448
        %v1587 = vpack.c.b16 %v1455, %v1452
        %v1588 = vpack.c.b16 %v1456, %v1453
        %v1589 = vpack.c.b16 %v1457, %v1454
        %v1590 = vpack.c.b16 %v1461, %v1458
        %v1591 = vpack.c.b16 %v1462, %v1459
        %v1592 = vpack.c.b16 %v1463, %v1460
        %v1593 = vpack.c.b16 %v1467, %v1464
        %v1594 = vpack.c.b16 %v1468, %v1465
        %v1595 = vpack.c.b16 %v1469, %v1466
        %v1596 = vpack.c.b16 %v1473, %v1470
        %v1597 = vpack.c.b16 %v1474, %v1471
        %v1598 = vpack.c.b16 %v1475, %v1472
        %v1599 = vpack.c.b16 %v1479, %v1476
        %v1600 = vpack.c.b16 %v1480, %v1477
        %v1601 = vpack.c.b16 %v1481, %v1478
        %v1602 = vpack.c.b16 %v1485, %v1482
        %v1603 = vpack.c.b16 %v1486, %v1483
        %v1604 = vpack.c.b16 %v1487, %v1484
        %v1605 = vpack.c.b16 %v1491, %v1488
        %v1606 = vpack.c.b16 %v1492, %v1489
        %v1607 = vpack.c.b16 %v1493, %v1490
        %v1608 = vpack.c.b16 %v1497, %v1494
        %v1609 = vpack.c.b16 %v1498, %v1495
        %v1610 = vpack.c.b16 %v1499, %v1496
        %v1611 = vpack.c.b16 %v1503, %v1500
        %v1612 = vpack.c.b16 %v1504, %v1501
        %v1613 = vpack.c.b16 %v1505, %v1502
        %v1614 = vpack.c.b16 %v1509, %v1506
        %v1615 = vpack.c.b16 %v1510, %v1507
        %v1616 = vpack.c.b16 %v1511, %v1508
        %v1617 = vpack.c.b16 %v1515, %v1512
        %v1618 = vpack.c.b16 %v1516, %v1513
        %v1619 = vpack.c.b16 %v1517, %v1514
        %v1620 = vpack.c.b16 %v1521, %v1518
        %v1621 = vpack.c.b16 %v1522, %v1519
        %v1622 = vpack.c.b16 %v1523, %v1520
        %v1623 = vpack.c.b16 %v1527, %v1524
        %v1624 = vpack.c.b16 %v1528, %v1525
        %v1625 = vpack.c.b16 %v1529, %v1526
        %1722 = vmatpush.bf16.msra.mxu0 %v1551
        %1723 = vmatpush.bf16.msra.mxu0 %v1548
        %1724 = vmatpush.bf16.msra.mxu0 %v1545
        %1725 = vmatpush.bf16.msra.mxu0 %v1542
        %1726 = vmatpush.bf16.msra.mxu0 %v1539
        %1727 = vmatpush.bf16.msra.mxu0 %v1536
        %1728 = vmatpush.bf16.msra.mxu0 %v1533
        %1729 = vmatpush.bf16.msra.mxu0 %v1530
        %1730 = vmatmul.bf16.gmra.mxu0 %v1184
        %v1731 = vpop.f32.mrf.mxu0
        %v1732 = vadd.f32 0.0, %v1731
        %v1733 = vpop.f32.mrf.mxu0
        %v1734 = vadd.f32 0.0, %v1733
        %1735 = vdwg.mxu0
        %1736 = vmatpush.bf16.msra.mxu0 %v1575
        %1737 = vmatpush.bf16.msra.mxu0 %v1572
        %1738 = vmatpush.bf16.msra.mxu0 %v1569
        %1739 = vmatpush.bf16.msra.mxu0 %v1566
        %1740 = vmatpush.bf16.msra.mxu0 %v1563
        %1741 = vmatpush.bf16.msra.mxu0 %v1560
        %1742 = vmatpush.bf16.msra.mxu0 %v1557
        %1743 = vmatpush.bf16.msra.mxu0 %v1554
        %1744 = vmatmul.bf16.gmra.mxu0 %v1191
        %v1745 = vpop.f32.mrf.mxu0
        %v1746 = vadd.f32 %v1732, %v1745
        %v1747 = vpop.f32.mrf.mxu0
        %v1748 = vadd.f32 %v1734, %v1747
        %1749 = vdwg.mxu0
        %1750 = vmatpush.bf16.msra.mxu0 %v1599
        %1751 = vmatpush.bf16.msra.mxu0 %v1596
        %1752 = vmatpush.bf16.msra.mxu0 %v1593
        %1753 = vmatpush.bf16.msra.mxu0 %v1590
        %1754 = vmatpush.bf16.msra.mxu0 %v1587
        %1755 = vmatpush.bf16.msra.mxu0 %v1584
        %1756 = vmatpush.bf16.msra.mxu0 %v1581
        %1757 = vmatpush.bf16.msra.mxu0 %v1578
        %1758 = vmatmul.bf16.gmra.mxu0 %v1198
        %v1759 = vpop.f32.mrf.mxu0
        %v1760 = vadd.f32 %v1746, %v1759
        %v1761 = vpop.f32.mrf.mxu0
        %v1762 = vadd.f32 %v1748, %v1761
        %1763 = vdwg.mxu0
        %1764 = vmatpush.bf16.msra.mxu0 %v1623
        %1765 = vmatpush.bf16.msra.mxu0 %v1620
        %1766 = vmatpush.bf16.msra.mxu0 %v1617
        %1767 = vmatpush.bf16.msra.mxu0 %v1614
        %1768 = vmatpush.bf16.msra.mxu0 %v1611
        %1769 = vmatpush.bf16.msra.mxu0 %v1608
        %1770 = vmatpush.bf16.msra.mxu0 %v1605
        %1771 = vmatpush.bf16.msra.mxu0 %v1602
        %1772 = vmatmul.bf16.gmra.mxu0 %v1205
        %v1773 = vpop.f32.mrf.mxu0
        %v1774 = vadd.f32 %v1760, %v1773
        %v1775 = vpop.f32.mrf.mxu0
        %v1776 = vadd.f32 %v1762, %v1775
        %1777 = vdwg.mxu0
        %1778 = vmatpush.bf16.msra.mxu0 %v1552
        %1779 = vmatpush.bf16.msra.mxu0 %v1549
        %1780 = vmatpush.bf16.msra.mxu0 %v1546
        %1781 = vmatpush.bf16.msra.mxu0 %v1543
        %1782 = vmatpush.bf16.msra.mxu0 %v1540
        %1783 = vmatpush.bf16.msra.mxu0 %v1537
        %1784 = vmatpush.bf16.msra.mxu0 %v1534
        %1785 = vmatpush.bf16.msra.mxu0 %v1531
        %1786 = vmatmul.bf16.gmra.mxu0 %v1184
        %v1787 = vpop.f32.mrf.mxu0
        %v1788 = vadd.f32 0.0, %v1787
        %v1789 = vpop.f32.mrf.mxu0
        %v1790 = vadd.f32 0.0, %v1789
        %1791 = vdwg.mxu0
        %1792 = vmatpush.bf16.msra.mxu0 %v1576
        %1793 = vmatpush.bf16.msra.mxu0 %v1573
        %1794 = vmatpush.bf16.msra.mxu0 %v1570
        %1795 = vmatpush.bf16.msra.mxu0 %v1567
        %1796 = vmatpush.bf16.msra.mxu0 %v1564
        %1797 = vmatpush.bf16.msra.mxu0 %v1561
        %1798 = vmatpush.bf16.msra.mxu0 %v1558
        %1799 = vmatpush.bf16.msra.mxu0 %v1555
        %1800 = vmatmul.bf16.gmra.mxu0 %v1191
        %v1801 = vpop.f32.mrf.mxu0
        %v1802 = vadd.f32 %v1788, %v1801
        %v1803 = vpop.f32.mrf.mxu0
        %v1804 = vadd.f32 %v1790, %v1803
        %1805 = vdwg.mxu0
        %1806 = vmatpush.bf16.msra.mxu0 %v1600
        %1807 = vmatpush.bf16.msra.mxu0 %v1597
        %1808 = vmatpush.bf16.msra.mxu0 %v1594
        %1809 = vmatpush.bf16.msra.mxu0 %v1591
        %1810 = vmatpush.bf16.msra.mxu0 %v1588
        %1811 = vmatpush.bf16.msra.mxu0 %v1585
        %1812 = vmatpush.bf16.msra.mxu0 %v1582
        %1813 = vmatpush.bf16.msra.mxu0 %v1579
        %1814 = vmatmul.bf16.gmra.mxu0 %v1198
        %v1815 = vpop.f32.mrf.mxu0
        %v1816 = vadd.f32 %v1802, %v1815
        %v1817 = vpop.f32.mrf.mxu0
        %v1818 = vadd.f32 %v1804, %v1817
        %1819 = vdwg.mxu0
        %1820 = vmatpush.bf16.msra.mxu0 %v1624
        %1821 = vmatpush.bf16.msra.mxu0 %v1621
        %1822 = vmatpush.bf16.msra.mxu0 %v1618
        %1823 = vmatpush.bf16.msra.mxu0 %v1615
        %1824 = vmatpush.bf16.msra.mxu0 %v1612
        %1825 = vmatpush.bf16.msra.mxu0 %v1609
        %1826 = vmatpush.bf16.msra.mxu0 %v1606
        %1827 = vmatpush.bf16.msra.mxu0 %v1603
        %1828 = vmatmul.bf16.gmra.mxu0 %v1205
        %v1829 = vpop.f32.mrf.mxu0
        %v1830 = vadd.f32 %v1816, %v1829
        %v1831 = vpop.f32.mrf.mxu0
        %v1832 = vadd.f32 %v1818, %v1831
        %1833 = vdwg.mxu0
        %1834 = vmatpush.bf16.msra.mxu0 %v1553
        %1835 = vmatpush.bf16.msra.mxu0 %v1550
        %1836 = vmatpush.bf16.msra.mxu0 %v1547
        %1837 = vmatpush.bf16.msra.mxu0 %v1544
        %1838 = vmatpush.bf16.msra.mxu0 %v1541
        %1839 = vmatpush.bf16.msra.mxu0 %v1538
        %1840 = vmatpush.bf16.msra.mxu0 %v1535
        %1841 = vmatpush.bf16.msra.mxu0 %v1532
        %1842 = vmatmul.bf16.gmra.mxu0 %v1184
        %v1843 = vpop.f32.mrf.mxu0
        %v1844 = vadd.f32 0.0, %v1843
        %v1845 = vpop.f32.mrf.mxu0
        %v1846 = vadd.f32 0.0, %v1845
        %1847 = vdwg.mxu0
        %1848 = vmatpush.bf16.msra.mxu0 %v1577
        %1849 = vmatpush.bf16.msra.mxu0 %v1574
        %1850 = vmatpush.bf16.msra.mxu0 %v1571
        %1851 = vmatpush.bf16.msra.mxu0 %v1568
        %1852 = vmatpush.bf16.msra.mxu0 %v1565
        %1853 = vmatpush.bf16.msra.mxu0 %v1562
        %1854 = vmatpush.bf16.msra.mxu0 %v1559
        %1855 = vmatpush.bf16.msra.mxu0 %v1556
        %1856 = vmatmul.bf16.gmra.mxu0 %v1191
        %v1857 = vpop.f32.mrf.mxu0
        %v1858 = vadd.f32 %v1844, %v1857
        %v1859 = vpop.f32.mrf.mxu0
        %v1860 = vadd.f32 %v1846, %v1859
        %1861 = vdwg.mxu0
        %1862 = vmatpush.bf16.msra.mxu0 %v1601
        %1863 = vmatpush.bf16.msra.mxu0 %v1598
        %1864 = vmatpush.bf16.msra.mxu0 %v1595
        %1865 = vmatpush.bf16.msra.mxu0 %v1592
        %1866 = vmatpush.bf16.msra.mxu0 %v1589
        %1867 = vmatpush.bf16.msra.mxu0 %v1586
        %1868 = vmatpush.bf16.msra.mxu0 %v1583
        %1869 = vmatpush.bf16.msra.mxu0 %v1580
        %1870 = vmatmul.bf16.gmra.mxu0 %v1198
        %v1871 = vpop.f32.mrf.mxu0
        %v1872 = vadd.f32 %v1858, %v1871
        %v1873 = vpop.f32.mrf.mxu0
        %v1874 = vadd.f32 %v1860, %v1873
        %1875 = vdwg.mxu0
        %1876 = vmatpush.bf16.msra.mxu0 %v1625
        %1877 = vmatpush.bf16.msra.mxu0 %v1622
        %1878 = vmatpush.bf16.msra.mxu0 %v1619
        %1879 = vmatpush.bf16.msra.mxu0 %v1616
        %1880 = vmatpush.bf16.msra.mxu0 %v1613
        %1881 = vmatpush.bf16.msra.mxu0 %v1610
        %1882 = vmatpush.bf16.msra.mxu0 %v1607
        %1883 = vmatpush.bf16.msra.mxu0 %v1604
        %1884 = vmatmul.bf16.gmra.mxu0 %v1205
        %v1885 = vpop.f32.mrf.mxu0
        %v1886 = vadd.f32 %v1872, %v1885
        %v1887 = vpop.f32.mrf.mxu0
        %v1888 = vadd.f32 %v1874, %v1887
        %1889 = vdwg.mxu0
        %v2018 = vunpack.c.l.b16 %v921
        %v2019 = vunpack.c.h.b16 %v921
        %v2020 = vunpack.c.l.b16 %v922
        %v2021 = vunpack.c.l.b16 %v923
        %v2022 = vunpack.c.h.b16 %v923
        %v2023 = vunpack.c.l.b16 %v924
        %v2024 = vunpack.c.l.b16 %v925
        %v2025 = vunpack.c.h.b16 %v925
        %v2026 = vunpack.c.l.b16 %v926
        %v2027 = vunpack.c.l.b16 %v927
        %v2028 = vunpack.c.h.b16 %v927
        %v2029 = vunpack.c.l.b16 %v928
        %v2030 = vunpack.c.l.b16 %v929
        %v2031 = vunpack.c.h.b16 %v929
        %v2032 = vunpack.c.l.b16 %v930
        %v2033 = vunpack.c.l.b16 %v931
        %v2034 = vunpack.c.h.b16 %v931
        %v2035 = vunpack.c.l.b16 %v932
        %v2036 = vunpack.c.l.b16 %v933
        %v2037 = vunpack.c.h.b16 %v933
        %v2038 = vunpack.c.l.b16 %v934
        %v2039 = vunpack.c.l.b16 %v935
        %v2040 = vunpack.c.h.b16 %v935
        %v2041 = vunpack.c.l.b16 %v936
        %v2042 = vunpack.c.l.b16 %v937
        %v2043 = vunpack.c.h.b16 %v937
        %v2044 = vunpack.c.l.b16 %v938
        %v2045 = vunpack.c.l.b16 %v939
        %v2046 = vunpack.c.h.b16 %v939
        %v2047 = vunpack.c.l.b16 %v940
        %v2048 = vunpack.c.l.b16 %v941
        %v2049 = vunpack.c.h.b16 %v941
        %v2050 = vunpack.c.l.b16 %v942
        %v2051 = vunpack.c.l.b16 %v943
        %v2052 = vunpack.c.h.b16 %v943
        %v2053 = vunpack.c.l.b16 %v944
        %v2054 = vunpack.c.l.b16 %v945
        %v2055 = vunpack.c.h.b16 %v945
        %v2056 = vunpack.c.l.b16 %v946
        %v2057 = vunpack.c.l.b16 %v947
        %v2058 = vunpack.c.h.b16 %v947
        %v2059 = vunpack.c.l.b16 %v948
        %v2060 = vunpack.c.l.b16 %v949
        %v2061 = vunpack.c.h.b16 %v949
        %v2062 = vunpack.c.l.b16 %v950
        %v2063 = vunpack.c.l.b16 %v951
        %v2064 = vunpack.c.h.b16 %v951
        %v2065 = vunpack.c.l.b16 %v952
        %v2066 = vunpack.c.l.b16 %v953
        %v2067 = vunpack.c.h.b16 %v953
        %v2068 = vunpack.c.l.b16 %v954
        %v2069 = vunpack.c.l.b16 %v955
        %v2070 = vunpack.c.h.b16 %v955
        %v2071 = vunpack.c.l.b16 %v956
        %v2072 = vunpack.c.l.b16 %v957
        %v2073 = vunpack.c.h.b16 %v957
        %v2074 = vunpack.c.l.b16 %v958
        %v2075 = vunpack.c.l.b16 %v959
        %v2076 = vunpack.c.h.b16 %v959
        %v2077 = vunpack.c.l.b16 %v960
        %v2078 = vunpack.c.l.b16 %v961
        %v2079 = vunpack.c.h.b16 %v961
        %v2080 = vunpack.c.l.b16 %v962
        %v2081 = vunpack.c.l.b16 %v963
        %v2082 = vunpack.c.h.b16 %v963
        %v2083 = vunpack.c.l.b16 %v964
        %v2084 = vunpack.c.l.b16 %v965
        %v2085 = vunpack.c.h.b16 %v965
        %v2086 = vunpack.c.l.b16 %v966
        %v2087 = vunpack.c.l.b16 %v967
        %v2088 = vunpack.c.h.b16 %v967
        %v2089 = vunpack.c.l.b16 %v968
        %v2090 = vunpack.c.l.b16 %v969
        %v2091 = vunpack.c.h.b16 %v969
        %v2092 = vunpack.c.l.b16 %v970
        %v2093 = vunpack.c.l.b16 %v971
        %v2094 = vunpack.c.h.b16 %v971
        %v2095 = vunpack.c.l.b16 %v972
        %v2096 = vunpack.c.l.b16 %v973
        %v2097 = vunpack.c.h.b16 %v973
        %v2098 = vunpack.c.l.b16 %v974
        %v2099 = vunpack.c.l.b16 %v975
        %v2100 = vunpack.c.h.b16 %v975
        %v2101 = vunpack.c.l.b16 %v976
        %v2102 = vunpack.c.l.b16 %v977
        %v2103 = vunpack.c.h.b16 %v977
        %v2104 = vunpack.c.l.b16 %v978
        %v2105 = vunpack.c.l.b16 %v979
        %v2106 = vunpack.c.h.b16 %v979
        %v2107 = vunpack.c.l.b16 %v980
        %v2108 = vunpack.c.l.b16 %v981
        %v2109 = vunpack.c.h.b16 %v981
        %v2110 = vunpack.c.l.b16 %v982
        %v2111 = vunpack.c.l.b16 %v983
        %v2112 = vunpack.c.h.b16 %v983
        %v2113 = vunpack.c.l.b16 %v984
        %v2114 = vunpack.c.l.b16 %v985
        %v2115 = vunpack.c.h.b16 %v985
        %v2116 = vunpack.c.l.b16 %v986
        %v2117 = vunpack.c.l.b16 %v987
        %v2118 = vunpack.c.h.b16 %v987
        %v2119 = vunpack.c.l.b16 %v988
        %v2120 = vunpack.c.l.b16 %v989
        %v2121 = vunpack.c.h.b16 %v989
        %v2122 = vunpack.c.l.b16 %v990
        %v2123 = vunpack.c.l.b16 %v991
        %v2124 = vunpack.c.h.b16 %v991
        %v2125 = vunpack.c.l.b16 %v992
        %v2126 = vunpack.c.l.b16 %v993
        %v2127 = vunpack.c.h.b16 %v993
        %v2128 = vunpack.c.l.b16 %v994
        %v2129 = vunpack.c.l.b16 %v995
        %v2130 = vunpack.c.h.b16 %v995
        %v2131 = vunpack.c.l.b16 %v996
        %v2132 = vunpack.c.l.b16 %v997
        %v2133 = vunpack.c.h.b16 %v997
        %v2134 = vunpack.c.l.b16 %v998
        %v2135 = vunpack.c.l.b16 %v999
        %v2136 = vunpack.c.h.b16 %v999
        %v2137 = vunpack.c.l.b16 %v1000
        %v2138 = vunpack.c.l.b16 %v1001
        %v2139 = vunpack.c.h.b16 %v1001
        %v2140 = vunpack.c.l.b16 %v1002
        %v2141 = vunpack.c.l.b16 %v1003
        %v2142 = vunpack.c.h.b16 %v1003
        %v2143 = vunpack.c.l.b16 %v1004
        %v2144 = vunpack.c.l.b16 %v1005
        %v2145 = vunpack.c.h.b16 %v1005
        %v2146 = vunpack.c.l.b16 %v1006
        %v2147 = vunpack.c.l.b16 %v1007
        %v2148 = vunpack.c.h.b16 %v1007
        %v2149 = vunpack.c.l.b16 %v1008
        %v2150 = vunpack.c.l.b16 %v1009
        %v2151 = vunpack.c.h.b16 %v1009
        %v2152 = vunpack.c.l.b16 %v1010
        %v2153 = vunpack.c.l.b16 %v1011
        %v2154 = vunpack.c.h.b16 %v1011
        %v2155 = vunpack.c.l.b16 %v1012
        %v2156 = vunpack.c.l.b16 %v1013
        %v2157 = vunpack.c.h.b16 %v1013
        %v2158 = vunpack.c.l.b16 %v1014
        %v2159 = vunpack.c.l.b16 %v1015
        %v2160 = vunpack.c.h.b16 %v1015
        %v2161 = vunpack.c.l.b16 %v1016
        %v2162 = vunpack.c.l.b16 %v1017
        %v2163 = vunpack.c.h.b16 %v1017
        %v2164 = vunpack.c.l.b16 %v1018
        %v2165 = vunpack.c.l.b16 %v1019
        %v2166 = vunpack.c.h.b16 %v1019
        %v2167 = vunpack.c.l.b16 %v1020
        %v2168 = vunpack.c.l.b16 %v1021
        %v2169 = vunpack.c.h.b16 %v1021
        %v2170 = vunpack.c.l.b16 %v1022
        %v2171 = vunpack.c.l.b16 %v1023
        %v2172 = vunpack.c.h.b16 %v1023
        %v2173 = vunpack.c.l.b16 %v1024
        %v2174 = vunpack.c.l.b16 %v1025
        %v2175 = vunpack.c.h.b16 %v1025
        %v2176 = vunpack.c.l.b16 %v1026
        %v2177 = vunpack.c.l.b16 %v1027
        %v2178 = vunpack.c.h.b16 %v1027
        %v2179 = vunpack.c.l.b16 %v1028
        %v2180 = vunpack.c.l.b16 %v1029
        %v2181 = vunpack.c.h.b16 %v1029
        %v2182 = vunpack.c.l.b16 %v1030
        %v2183 = vunpack.c.l.b16 %v1031
        %v2184 = vunpack.c.h.b16 %v1031
        %v2185 = vunpack.c.l.b16 %v1032
        %v2186 = vunpack.c.l.b16 %v1033
        %v2187 = vunpack.c.h.b16 %v1033
        %v2188 = vunpack.c.l.b16 %v1034
        %v2189 = vunpack.c.l.b16 %v1035
        %v2190 = vunpack.c.h.b16 %v1035
        %v2191 = vunpack.c.l.b16 %v1036
        %v2192 = vunpack.c.l.b16 %v1037
        %v2193 = vunpack.c.h.b16 %v1037
        %v2194 = vunpack.c.l.b16 %v1038
        %v2195 = vunpack.c.l.b16 %v1039
        %v2196 = vunpack.c.h.b16 %v1039
        %v2197 = vunpack.c.l.b16 %v1040
        %v2198 = vunpack.c.l.b16 %v1041
        %v2199 = vunpack.c.h.b16 %v1041
        %v2200 = vunpack.c.l.b16 %v1042
        %v2201 = vunpack.c.l.b16 %v1043
        %v2202 = vunpack.c.h.b16 %v1043
        %v2203 = vunpack.c.l.b16 %v1044
        %v2204 = vunpack.c.l.b16 %v1045
        %v2205 = vunpack.c.h.b16 %v1045
        %v2206 = vunpack.c.l.b16 %v1046
        %v2207 = vunpack.c.l.b16 %v1047
        %v2208 = vunpack.c.h.b16 %v1047
        %v2209 = vunpack.c.l.b16 %v1048
        %v2210 = vpack.c.b16 %v2021, %v2018
        %v2211 = vpack.c.b16 %v2022, %v2019
        %v2212 = vpack.c.b16 %v2023, %v2020
        %v2213 = vpack.c.b16 %v2027, %v2024
        %v2214 = vpack.c.b16 %v2028, %v2025
        %v2215 = vpack.c.b16 %v2029, %v2026
        %v2216 = vpack.c.b16 %v2033, %v2030
        %v2217 = vpack.c.b16 %v2034, %v2031
        %v2218 = vpack.c.b16 %v2035, %v2032
        %v2219 = vpack.c.b16 %v2039, %v2036
        %v2220 = vpack.c.b16 %v2040, %v2037
        %v2221 = vpack.c.b16 %v2041, %v2038
        %v2222 = vpack.c.b16 %v2045, %v2042
        %v2223 = vpack.c.b16 %v2046, %v2043
        %v2224 = vpack.c.b16 %v2047, %v2044
        %v2225 = vpack.c.b16 %v2051, %v2048
        %v2226 = vpack.c.b16 %v2052, %v2049
        %v2227 = vpack.c.b16 %v2053, %v2050
        %v2228 = vpack.c.b16 %v2057, %v2054
        %v2229 = vpack.c.b16 %v2058, %v2055
        %v2230 = vpack.c.b16 %v2059, %v2056
        %v2231 = vpack.c.b16 %v2063, %v2060
        %v2232 = vpack.c.b16 %v2064, %v2061
        %v2233 = vpack.c.b16 %v2065, %v2062
        %v2234 = vpack.c.b16 %v2069, %v2066
        %v2235 = vpack.c.b16 %v2070, %v2067
        %v2236 = vpack.c.b16 %v2071, %v2068
        %v2237 = vpack.c.b16 %v2075, %v2072
        %v2238 = vpack.c.b16 %v2076, %v2073
        %v2239 = vpack.c.b16 %v2077, %v2074
        %v2240 = vpack.c.b16 %v2081, %v2078
        %v2241 = vpack.c.b16 %v2082, %v2079
        %v2242 = vpack.c.b16 %v2083, %v2080
        %v2243 = vpack.c.b16 %v2087, %v2084
        %v2244 = vpack.c.b16 %v2088, %v2085
        %v2245 = vpack.c.b16 %v2089, %v2086
        %v2246 = vpack.c.b16 %v2093, %v2090
        %v2247 = vpack.c.b16 %v2094, %v2091
        %v2248 = vpack.c.b16 %v2095, %v2092
        %v2249 = vpack.c.b16 %v2099, %v2096
        %v2250 = vpack.c.b16 %v2100, %v2097
        %v2251 = vpack.c.b16 %v2101, %v2098
        %v2252 = vpack.c.b16 %v2105, %v2102
        %v2253 = vpack.c.b16 %v2106, %v2103
        %v2254 = vpack.c.b16 %v2107, %v2104
        %v2255 = vpack.c.b16 %v2111, %v2108
        %v2256 = vpack.c.b16 %v2112, %v2109
        %v2257 = vpack.c.b16 %v2113, %v2110
        %v2258 = vpack.c.b16 %v2117, %v2114
        %v2259 = vpack.c.b16 %v2118, %v2115
        %v2260 = vpack.c.b16 %v2119, %v2116
        %v2261 = vpack.c.b16 %v2123, %v2120
        %v2262 = vpack.c.b16 %v2124, %v2121
        %v2263 = vpack.c.b16 %v2125, %v2122
        %v2264 = vpack.c.b16 %v2129, %v2126
        %v2265 = vpack.c.b16 %v2130, %v2127
        %v2266 = vpack.c.b16 %v2131, %v2128
        %v2267 = vpack.c.b16 %v2135, %v2132
        %v2268 = vpack.c.b16 %v2136, %v2133
        %v2269 = vpack.c.b16 %v2137, %v2134
        %v2270 = vpack.c.b16 %v2141, %v2138
        %v2271 = vpack.c.b16 %v2142, %v2139
        %v2272 = vpack.c.b16 %v2143, %v2140
        %v2273 = vpack.c.b16 %v2147, %v2144
        %v2274 = vpack.c.b16 %v2148, %v2145
        %v2275 = vpack.c.b16 %v2149, %v2146
        %v2276 = vpack.c.b16 %v2153, %v2150
        %v2277 = vpack.c.b16 %v2154, %v2151
        %v2278 = vpack.c.b16 %v2155, %v2152
        %v2279 = vpack.c.b16 %v2159, %v2156
        %v2280 = vpack.c.b16 %v2160, %v2157
        %v2281 = vpack.c.b16 %v2161, %v2158
        %v2282 = vpack.c.b16 %v2165, %v2162
        %v2283 = vpack.c.b16 %v2166, %v2163
        %v2284 = vpack.c.b16 %v2167, %v2164
        %v2285 = vpack.c.b16 %v2171, %v2168
        %v2286 = vpack.c.b16 %v2172, %v2169
        %v2287 = vpack.c.b16 %v2173, %v2170
        %v2288 = vpack.c.b16 %v2177, %v2174
        %v2289 = vpack.c.b16 %v2178, %v2175
        %v2290 = vpack.c.b16 %v2179, %v2176
        %v2291 = vpack.c.b16 %v2183, %v2180
        %v2292 = vpack.c.b16 %v2184, %v2181
        %v2293 = vpack.c.b16 %v2185, %v2182
        %v2294 = vpack.c.b16 %v2189, %v2186
        %v2295 = vpack.c.b16 %v2190, %v2187
        %v2296 = vpack.c.b16 %v2191, %v2188
        %v2297 = vpack.c.b16 %v2195, %v2192
        %v2298 = vpack.c.b16 %v2196, %v2193
        %v2299 = vpack.c.b16 %v2197, %v2194
        %v2300 = vpack.c.b16 %v2201, %v2198
        %v2301 = vpack.c.b16 %v2202, %v2199
        %v2302 = vpack.c.b16 %v2203, %v2200
        %v2303 = vpack.c.b16 %v2207, %v2204
        %v2304 = vpack.c.b16 %v2208, %v2205
        %v2305 = vpack.c.b16 %v2209, %v2206
        %2402 = vmatpush.bf16.msra.mxu0 %v2231
        %2403 = vmatpush.bf16.msra.mxu0 %v2228
        %2404 = vmatpush.bf16.msra.mxu0 %v2225
        %2405 = vmatpush.bf16.msra.mxu0 %v2222
        %2406 = vmatpush.bf16.msra.mxu0 %v2219
        %2407 = vmatpush.bf16.msra.mxu0 %v2216
        %2408 = vmatpush.bf16.msra.mxu0 %v2213
        %2409 = vmatpush.bf16.msra.mxu0 %v2210
        %2410 = vmatmul.bf16.gmra.mxu0 %v917
        %v2411 = vpop.f32.mrf.mxu0
        %v2412 = vadd.f32 %v1774, %v2411
        %v2413 = vpop.f32.mrf.mxu0
        %v2414 = vadd.f32 %v1776, %v2413
        %2415 = vdwg.mxu0
        %2416 = vmatpush.bf16.msra.mxu0 %v2255
        %2417 = vmatpush.bf16.msra.mxu0 %v2252
        %2418 = vmatpush.bf16.msra.mxu0 %v2249
        %2419 = vmatpush.bf16.msra.mxu0 %v2246
        %2420 = vmatpush.bf16.msra.mxu0 %v2243
        %2421 = vmatpush.bf16.msra.mxu0 %v2240
        %2422 = vmatpush.bf16.msra.mxu0 %v2237
        %2423 = vmatpush.bf16.msra.mxu0 %v2234
        %2424 = vmatmul.bf16.gmra.mxu0 %v918
        %v2425 = vpop.f32.mrf.mxu0
        %v2426 = vadd.f32 %v2412, %v2425
        %v2427 = vpop.f32.mrf.mxu0
        %v2428 = vadd.f32 %v2414, %v2427
        %2429 = vdwg.mxu0
        %2430 = vmatpush.bf16.msra.mxu0 %v2279
        %2431 = vmatpush.bf16.msra.mxu0 %v2276
        %2432 = vmatpush.bf16.msra.mxu0 %v2273
        %2433 = vmatpush.bf16.msra.mxu0 %v2270
        %2434 = vmatpush.bf16.msra.mxu0 %v2267
        %2435 = vmatpush.bf16.msra.mxu0 %v2264
        %2436 = vmatpush.bf16.msra.mxu0 %v2261
        %2437 = vmatpush.bf16.msra.mxu0 %v2258
        %2438 = vmatmul.bf16.gmra.mxu0 %v919
        %v2439 = vpop.f32.mrf.mxu0
        %v2440 = vadd.f32 %v2426, %v2439
        %v2441 = vpop.f32.mrf.mxu0
        %v2442 = vadd.f32 %v2428, %v2441
        %2443 = vdwg.mxu0
        %2444 = vmatpush.bf16.msra.mxu0 %v2303
        %2445 = vmatpush.bf16.msra.mxu0 %v2300
        %2446 = vmatpush.bf16.msra.mxu0 %v2297
        %2447 = vmatpush.bf16.msra.mxu0 %v2294
        %2448 = vmatpush.bf16.msra.mxu0 %v2291
        %2449 = vmatpush.bf16.msra.mxu0 %v2288
        %2450 = vmatpush.bf16.msra.mxu0 %v2285
        %2451 = vmatpush.bf16.msra.mxu0 %v2282
        %2452 = vmatmul.bf16.gmra.mxu0 %v920
        %v2453 = vpop.f32.mrf.mxu0
        %v2454 = vadd.f32 %v2440, %v2453
        %v2455 = vpop.f32.mrf.mxu0
        %v2456 = vadd.f32 %v2442, %v2455
        %2457 = vdwg.mxu0
        %2458 = vmatpush.bf16.msra.mxu0 %v2232
        %2459 = vmatpush.bf16.msra.mxu0 %v2229
        %2460 = vmatpush.bf16.msra.mxu0 %v2226
        %2461 = vmatpush.bf16.msra.mxu0 %v2223
        %2462 = vmatpush.bf16.msra.mxu0 %v2220
        %2463 = vmatpush.bf16.msra.mxu0 %v2217
        %2464 = vmatpush.bf16.msra.mxu0 %v2214
        %2465 = vmatpush.bf16.msra.mxu0 %v2211
        %2466 = vmatmul.bf16.gmra.mxu0 %v917
        %v2467 = vpop.f32.mrf.mxu0
        %v2468 = vadd.f32 %v1830, %v2467
        %v2469 = vpop.f32.mrf.mxu0
        %v2470 = vadd.f32 %v1832, %v2469
        %2471 = vdwg.mxu0
        %2472 = vmatpush.bf16.msra.mxu0 %v2256
        %2473 = vmatpush.bf16.msra.mxu0 %v2253
        %2474 = vmatpush.bf16.msra.mxu0 %v2250
        %2475 = vmatpush.bf16.msra.mxu0 %v2247
        %2476 = vmatpush.bf16.msra.mxu0 %v2244
        %2477 = vmatpush.bf16.msra.mxu0 %v2241
        %2478 = vmatpush.bf16.msra.mxu0 %v2238
        %2479 = vmatpush.bf16.msra.mxu0 %v2235
        %2480 = vmatmul.bf16.gmra.mxu0 %v918
        %v2481 = vpop.f32.mrf.mxu0
        %v2482 = vadd.f32 %v2468, %v2481
        %v2483 = vpop.f32.mrf.mxu0
        %v2484 = vadd.f32 %v2470, %v2483
        %2485 = vdwg.mxu0
        %2486 = vmatpush.bf16.msra.mxu0 %v2280
        %2487 = vmatpush.bf16.msra.mxu0 %v2277
        %2488 = vmatpush.bf16.msra.mxu0 %v2274
        %2489 = vmatpush.bf16.msra.mxu0 %v2271
        %2490 = vmatpush.bf16.msra.mxu0 %v2268
        %2491 = vmatpush.bf16.msra.mxu0 %v2265
        %2492 = vmatpush.bf16.msra.mxu0 %v2262
        %2493 = vmatpush.bf16.msra.mxu0 %v2259
        %2494 = vmatmul.bf16.gmra.mxu0 %v919
        %v2495 = vpop.f32.mrf.mxu0
        %v2496 = vadd.f32 %v2482, %v2495
        %v2497 = vpop.f32.mrf.mxu0
        %v2498 = vadd.f32 %v2484, %v2497
        %2499 = vdwg.mxu0
        %2500 = vmatpush.bf16.msra.mxu0 %v2304
        %2501 = vmatpush.bf16.msra.mxu0 %v2301
        %2502 = vmatpush.bf16.msra.mxu0 %v2298
        %2503 = vmatpush.bf16.msra.mxu0 %v2295
        %2504 = vmatpush.bf16.msra.mxu0 %v2292
        %2505 = vmatpush.bf16.msra.mxu0 %v2289
        %2506 = vmatpush.bf16.msra.mxu0 %v2286
        %2507 = vmatpush.bf16.msra.mxu0 %v2283
        %2508 = vmatmul.bf16.gmra.mxu0 %v920
        %v2509 = vpop.f32.mrf.mxu0
        %v2510 = vadd.f32 %v2496, %v2509
        %v2511 = vpop.f32.mrf.mxu0
        %v2512 = vadd.f32 %v2498, %v2511
        %2513 = vdwg.mxu0
        %2514 = vmatpush.bf16.msra.mxu0 %v2233
        %2515 = vmatpush.bf16.msra.mxu0 %v2230
        %2516 = vmatpush.bf16.msra.mxu0 %v2227
        %2517 = vmatpush.bf16.msra.mxu0 %v2224
        %2518 = vmatpush.bf16.msra.mxu0 %v2221
        %2519 = vmatpush.bf16.msra.mxu0 %v2218
        %2520 = vmatpush.bf16.msra.mxu0 %v2215
        %2521 = vmatpush.bf16.msra.mxu0 %v2212
        %2522 = vmatmul.bf16.gmra.mxu0 %v917
        %v2523 = vpop.f32.mrf.mxu0
        %v2524 = vadd.f32 %v1886, %v2523
        %v2525 = vpop.f32.mrf.mxu0
        %v2526 = vadd.f32 %v1888, %v2525
        %2527 = vdwg.mxu0
        %2528 = vmatpush.bf16.msra.mxu0 %v2257
        %2529 = vmatpush.bf16.msra.mxu0 %v2254
        %2530 = vmatpush.bf16.msra.mxu0 %v2251
        %2531 = vmatpush.bf16.msra.mxu0 %v2248
        %2532 = vmatpush.bf16.msra.mxu0 %v2245
        %2533 = vmatpush.bf16.msra.mxu0 %v2242
        %2534 = vmatpush.bf16.msra.mxu0 %v2239
        %2535 = vmatpush.bf16.msra.mxu0 %v2236
        %2536 = vmatmul.bf16.gmra.mxu0 %v918
        %v2537 = vpop.f32.mrf.mxu0
        %v2538 = vadd.f32 %v2524, %v2537
        %v2539 = vpop.f32.mrf.mxu0
        %v2540 = vadd.f32 %v2526, %v2539
        %2541 = vdwg.mxu0
        %2542 = vmatpush.bf16.msra.mxu0 %v2281
        %2543 = vmatpush.bf16.msra.mxu0 %v2278
        %2544 = vmatpush.bf16.msra.mxu0 %v2275
        %2545 = vmatpush.bf16.msra.mxu0 %v2272
        %2546 = vmatpush.bf16.msra.mxu0 %v2269
        %2547 = vmatpush.bf16.msra.mxu0 %v2266
        %2548 = vmatpush.bf16.msra.mxu0 %v2263
        %2549 = vmatpush.bf16.msra.mxu0 %v2260
        %2550 = vmatmul.bf16.gmra.mxu0 %v919
        %v2551 = vpop.f32.mrf.mxu0
        %v2552 = vadd.f32 %v2538, %v2551
        %v2553 = vpop.f32.mrf.mxu0
        %v2554 = vadd.f32 %v2540, %v2553
        %2555 = vdwg.mxu0
        %2556 = vmatpush.bf16.msra.mxu0 %v2305
        %2557 = vmatpush.bf16.msra.mxu0 %v2302
        %2558 = vmatpush.bf16.msra.mxu0 %v2299
        %2559 = vmatpush.bf16.msra.mxu0 %v2296
        %2560 = vmatpush.bf16.msra.mxu0 %v2293
        %2561 = vmatpush.bf16.msra.mxu0 %v2290
        %2562 = vmatpush.bf16.msra.mxu0 %v2287
        %2563 = vmatpush.bf16.msra.mxu0 %v2284
        %2564 = vmatmul.bf16.gmra.mxu0 %v920
        %v2565 = vpop.f32.mrf.mxu0
        %v2566 = vadd.f32 %v2552, %v2565
        %v2567 = vpop.f32.mrf.mxu0
        %v2568 = vadd.f32 %v2554, %v2567
        %2569 = vdwg.mxu0
        %s2570 = scalar_lea.vmem [#allocation10], 1536
        %v2571 = vld [vmem:[%s2570] sm:$0xff]
        %v2572 = vld [vmem:[%s2570 + $0x8] sm:$0xf]
        %v2573 = vld [vmem:[%s2570 + $0xc] sm:$0xff]
        %v2574 = vld [vmem:[%s2570 + $0x14] sm:$0xf]
        %v2575 = vld [vmem:[%s2570 + $0x18] sm:$0xff]
        %v2576 = vld [vmem:[%s2570 + $0x20] sm:$0xf]
        %v2577 = vld [vmem:[%s2570 + $0x24] sm:$0xff]
        %v2578 = vld [vmem:[%s2570 + $0x2c] sm:$0xf]
        %v2579 = vld [vmem:[%s2570 + $0x30] sm:$0xff]
        %v2580 = vld [vmem:[%s2570 + $0x38] sm:$0xf]
        %v2581 = vld [vmem:[%s2570 + $0x3c] sm:$0xff]
        %v2582 = vld [vmem:[%s2570 + $0x44] sm:$0xf]
        %v2583 = vld [vmem:[%s2570 + $0x48] sm:$0xff]
        %v2584 = vld [vmem:[%s2570 + $0x50] sm:$0xf]
        %v2585 = vld [vmem:[%s2570 + $0x54] sm:$0xff]
        %v2586 = vld [vmem:[%s2570 + $0x5c] sm:$0xf]
        %v2587 = vld [vmem:[%s2570 + $0x60] sm:$0xff]
        %v2588 = vld [vmem:[%s2570 + $0x68] sm:$0xf]
        %v2589 = vld [vmem:[%s2570 + $0x6c] sm:$0xff]
        %v2590 = vld [vmem:[%s2570 + $0x74] sm:$0xf]
        %v2591 = vld [vmem:[%s2570 + $0x78] sm:$0xff]
        %v2592 = vld [vmem:[%s2570 + $0x80] sm:$0xf]
        %v2593 = vld [vmem:[%s2570 + $0x84] sm:$0xff]
        %v2594 = vld [vmem:[%s2570 + $0x8c] sm:$0xf]
        %v2595 = vld [vmem:[%s2570 + $0x90] sm:$0xff]
        %v2596 = vld [vmem:[%s2570 + $0x98] sm:$0xf]
        %v2597 = vld [vmem:[%s2570 + $0x9c] sm:$0xff]
        %v2598 = vld [vmem:[%s2570 + $0xa4] sm:$0xf]
        %v2599 = vld [vmem:[%s2570 + $0xa8] sm:$0xff]
        %v2600 = vld [vmem:[%s2570 + $0xb0] sm:$0xf]
        %v2601 = vld [vmem:[%s2570 + $0xb4] sm:$0xff]
        %v2602 = vld [vmem:[%s2570 + $0xbc] sm:$0xf]
        %v2603 = vld [vmem:[%s2570 + $0xc0] sm:$0xff]
        %v2604 = vld [vmem:[%s2570 + $0xc8] sm:$0xf]
        %v2605 = vld [vmem:[%s2570 + $0xcc] sm:$0xff]
        %v2606 = vld [vmem:[%s2570 + $0xd4] sm:$0xf]
        %v2607 = vld [vmem:[%s2570 + $0xd8] sm:$0xff]
        %v2608 = vld [vmem:[%s2570 + $0xe0] sm:$0xf]
        %v2609 = vld [vmem:[%s2570 + $0xe4] sm:$0xff]
        %v2610 = vld [vmem:[%s2570 + $0xec] sm:$0xf]
        %v2611 = vld [vmem:[%s2570 + $0xf0] sm:$0xff]
        %v2612 = vld [vmem:[%s2570 + $0xf8] sm:$0xf]
        %v2613 = vld [vmem:[%s2570 + $0xfc] sm:$0xff]
        %v2614 = vld [vmem:[%s2570 + $0x104] sm:$0xf]
        %v2615 = vld [vmem:[%s2570 + $0x108] sm:$0xff]
        %v2616 = vld [vmem:[%s2570 + $0x110] sm:$0xf]
        %v2617 = vld [vmem:[%s2570 + $0x114] sm:$0xff]
        %v2618 = vld [vmem:[%s2570 + $0x11c] sm:$0xf]
        %v2619 = vld [vmem:[%s2570 + $0x120] sm:$0xff]
        %v2620 = vld [vmem:[%s2570 + $0x128] sm:$0xf]
        %v2621 = vld [vmem:[%s2570 + $0x12c] sm:$0xff]
        %v2622 = vld [vmem:[%s2570 + $0x134] sm:$0xf]
        %v2623 = vld [vmem:[%s2570 + $0x138] sm:$0xff]
        %v2624 = vld [vmem:[%s2570 + $0x140] sm:$0xf]
        %v2625 = vld [vmem:[%s2570 + $0x144] sm:$0xff]
        %v2626 = vld [vmem:[%s2570 + $0x14c] sm:$0xf]
        %v2627 = vld [vmem:[%s2570 + $0x150] sm:$0xff]
        %v2628 = vld [vmem:[%s2570 + $0x158] sm:$0xf]
        %v2629 = vld [vmem:[%s2570 + $0x15c] sm:$0xff]
        %v2630 = vld [vmem:[%s2570 + $0x164] sm:$0xf]
        %v2631 = vld [vmem:[%s2570 + $0x168] sm:$0xff]
        %v2632 = vld [vmem:[%s2570 + $0x170] sm:$0xf]
        %v2633 = vld [vmem:[%s2570 + $0x174] sm:$0xff]
        %v2634 = vld [vmem:[%s2570 + $0x17c] sm:$0xf]
        %v2635 = vld [vmem:[%s2570 + $0x180] sm:$0xff]
        %v2636 = vld [vmem:[%s2570 + $0x188] sm:$0xf]
        %v2637 = vld [vmem:[%s2570 + $0x18c] sm:$0xff]
        %v2638 = vld [vmem:[%s2570 + $0x194] sm:$0xf]
        %v2639 = vld [vmem:[%s2570 + $0x198] sm:$0xff]
        %v2640 = vld [vmem:[%s2570 + $0x1a0] sm:$0xf]
        %v2641 = vld [vmem:[%s2570 + $0x1a4] sm:$0xff]
        %v2642 = vld [vmem:[%s2570 + $0x1ac] sm:$0xf]
        %v2643 = vld [vmem:[%s2570 + $0x1b0] sm:$0xff]
        %v2644 = vld [vmem:[%s2570 + $0x1b8] sm:$0xf]
        %v2645 = vld [vmem:[%s2570 + $0x1bc] sm:$0xff]
        %v2646 = vld [vmem:[%s2570 + $0x1c4] sm:$0xf]
        %v2647 = vld [vmem:[%s2570 + $0x1c8] sm:$0xff]
        %v2648 = vld [vmem:[%s2570 + $0x1d0] sm:$0xf]
        %v2649 = vld [vmem:[%s2570 + $0x1d4] sm:$0xff]
        %v2650 = vld [vmem:[%s2570 + $0x1dc] sm:$0xf]
        %v2651 = vld [vmem:[%s2570 + $0x1e0] sm:$0xff]
        %v2652 = vld [vmem:[%s2570 + $0x1e8] sm:$0xf]
        %v2653 = vld [vmem:[%s2570 + $0x1ec] sm:$0xff]
        %v2654 = vld [vmem:[%s2570 + $0x1f4] sm:$0xf]
        %v2655 = vld [vmem:[%s2570 + $0x1f8] sm:$0xff]
        %v2656 = vld [vmem:[%s2570 + $0x200] sm:$0xf]
        %v2657 = vld [vmem:[%s2570 + $0x204] sm:$0xff]
        %v2658 = vld [vmem:[%s2570 + $0x20c] sm:$0xf]
        %v2659 = vld [vmem:[%s2570 + $0x210] sm:$0xff]
        %v2660 = vld [vmem:[%s2570 + $0x218] sm:$0xf]
        %v2661 = vld [vmem:[%s2570 + $0x21c] sm:$0xff]
        %v2662 = vld [vmem:[%s2570 + $0x224] sm:$0xf]
        %v2663 = vld [vmem:[%s2570 + $0x228] sm:$0xff]
        %v2664 = vld [vmem:[%s2570 + $0x230] sm:$0xf]
        %v2665 = vld [vmem:[%s2570 + $0x234] sm:$0xff]
        %v2666 = vld [vmem:[%s2570 + $0x23c] sm:$0xf]
        %v2667 = vld [vmem:[%s2570 + $0x240] sm:$0xff]
        %v2668 = vld [vmem:[%s2570 + $0x248] sm:$0xf]
        %v2669 = vld [vmem:[%s2570 + $0x24c] sm:$0xff]
        %v2670 = vld [vmem:[%s2570 + $0x254] sm:$0xf]
        %v2671 = vld [vmem:[%s2570 + $0x258] sm:$0xff]
        %v2672 = vld [vmem:[%s2570 + $0x260] sm:$0xf]
        %v2673 = vld [vmem:[%s2570 + $0x264] sm:$0xff]
        %v2674 = vld [vmem:[%s2570 + $0x26c] sm:$0xf]
        %v2675 = vld [vmem:[%s2570 + $0x270] sm:$0xff]
        %v2676 = vld [vmem:[%s2570 + $0x278] sm:$0xf]
        %v2677 = vld [vmem:[%s2570 + $0x27c] sm:$0xff]
        %v2678 = vld [vmem:[%s2570 + $0x284] sm:$0xf]
        %v2679 = vld [vmem:[%s2570 + $0x288] sm:$0xff]
        %v2680 = vld [vmem:[%s2570 + $0x290] sm:$0xf]
        %v2681 = vld [vmem:[%s2570 + $0x294] sm:$0xff]
        %v2682 = vld [vmem:[%s2570 + $0x29c] sm:$0xf]
        %v2683 = vld [vmem:[%s2570 + $0x2a0] sm:$0xff]
        %v2684 = vld [vmem:[%s2570 + $0x2a8] sm:$0xf]
        %v2685 = vld [vmem:[%s2570 + $0x2ac] sm:$0xff]
        %v2686 = vld [vmem:[%s2570 + $0x2b4] sm:$0xf]
        %v2687 = vld [vmem:[%s2570 + $0x2b8] sm:$0xff]
        %v2688 = vld [vmem:[%s2570 + $0x2c0] sm:$0xf]
        %v2689 = vld [vmem:[%s2570 + $0x2c4] sm:$0xff]
        %v2690 = vld [vmem:[%s2570 + $0x2cc] sm:$0xf]
        %v2691 = vld [vmem:[%s2570 + $0x2d0] sm:$0xff]
        %v2692 = vld [vmem:[%s2570 + $0x2d8] sm:$0xf]
        %v2693 = vld [vmem:[%s2570 + $0x2dc] sm:$0xff]
        %v2694 = vld [vmem:[%s2570 + $0x2e4] sm:$0xf]
        %v2695 = vld [vmem:[%s2570 + $0x2e8] sm:$0xff]
        %v2696 = vld [vmem:[%s2570 + $0x2f0] sm:$0xf]
        %v2697 = vld [vmem:[%s2570 + $0x2f4] sm:$0xff]
        %v2698 = vld [vmem:[%s2570 + $0x2fc] sm:$0xf]
        %v2703 = vrot.slane %v917, 1
        %v2704 = vrot.slane %v918, 1
        %v2705 = vrot.slane %v919, 1
        %v2706 = vrot.slane %v920, 1
        %v2839 = vunpack.c.l.b16 %v2571
        %v2840 = vunpack.c.h.b16 %v2571
        %v2841 = vunpack.c.l.b16 %v2572
        %v2842 = vunpack.c.l.b16 %v2573
        %v2843 = vunpack.c.h.b16 %v2573
        %v2844 = vunpack.c.l.b16 %v2574
        %v2845 = vunpack.c.l.b16 %v2575
        %v2846 = vunpack.c.h.b16 %v2575
        %v2847 = vunpack.c.l.b16 %v2576
        %v2848 = vunpack.c.l.b16 %v2577
        %v2849 = vunpack.c.h.b16 %v2577
        %v2850 = vunpack.c.l.b16 %v2578
        %v2851 = vunpack.c.l.b16 %v2579
        %v2852 = vunpack.c.h.b16 %v2579
        %v2853 = vunpack.c.l.b16 %v2580
        %v2854 = vunpack.c.l.b16 %v2581
        %v2855 = vunpack.c.h.b16 %v2581
        %v2856 = vunpack.c.l.b16 %v2582
        %v2857 = vunpack.c.l.b16 %v2583
        %v2858 = vunpack.c.h.b16 %v2583
        %v2859 = vunpack.c.l.b16 %v2584
        %v2860 = vunpack.c.l.b16 %v2585
        %v2861 = vunpack.c.h.b16 %v2585
        %v2862 = vunpack.c.l.b16 %v2586
        %v2863 = vunpack.c.l.b16 %v2587
        %v2864 = vunpack.c.h.b16 %v2587
        %v2865 = vunpack.c.l.b16 %v2588
        %v2866 = vunpack.c.l.b16 %v2589
        %v2867 = vunpack.c.h.b16 %v2589
        %v2868 = vunpack.c.l.b16 %v2590
        %v2869 = vunpack.c.l.b16 %v2591
        %v2870 = vunpack.c.h.b16 %v2591
        %v2871 = vunpack.c.l.b16 %v2592
        %v2872 = vunpack.c.l.b16 %v2593
        %v2873 = vunpack.c.h.b16 %v2593
        %v2874 = vunpack.c.l.b16 %v2594
        %v2875 = vunpack.c.l.b16 %v2595
        %v2876 = vunpack.c.h.b16 %v2595
        %v2877 = vunpack.c.l.b16 %v2596
        %v2878 = vunpack.c.l.b16 %v2597
        %v2879 = vunpack.c.h.b16 %v2597
        %v2880 = vunpack.c.l.b16 %v2598
        %v2881 = vunpack.c.l.b16 %v2599
        %v2882 = vunpack.c.h.b16 %v2599
        %v2883 = vunpack.c.l.b16 %v2600
        %v2884 = vunpack.c.l.b16 %v2601
        %v2885 = vunpack.c.h.b16 %v2601
        %v2886 = vunpack.c.l.b16 %v2602
        %v2887 = vunpack.c.l.b16 %v2603
        %v2888 = vunpack.c.h.b16 %v2603
        %v2889 = vunpack.c.l.b16 %v2604
        %v2890 = vunpack.c.l.b16 %v2605
        %v2891 = vunpack.c.h.b16 %v2605
        %v2892 = vunpack.c.l.b16 %v2606
        %v2893 = vunpack.c.l.b16 %v2607
        %v2894 = vunpack.c.h.b16 %v2607
        %v2895 = vunpack.c.l.b16 %v2608
        %v2896 = vunpack.c.l.b16 %v2609
        %v2897 = vunpack.c.h.b16 %v2609
        %v2898 = vunpack.c.l.b16 %v2610
        %v2899 = vunpack.c.l.b16 %v2611
        %v2900 = vunpack.c.h.b16 %v2611
        %v2901 = vunpack.c.l.b16 %v2612
        %v2902 = vunpack.c.l.b16 %v2613
        %v2903 = vunpack.c.h.b16 %v2613
        %v2904 = vunpack.c.l.b16 %v2614
        %v2905 = vunpack.c.l.b16 %v2615
        %v2906 = vunpack.c.h.b16 %v2615
        %v2907 = vunpack.c.l.b16 %v2616
        %v2908 = vunpack.c.l.b16 %v2617
        %v2909 = vunpack.c.h.b16 %v2617
        %v2910 = vunpack.c.l.b16 %v2618
        %v2911 = vunpack.c.l.b16 %v2619
        %v2912 = vunpack.c.h.b16 %v2619
        %v2913 = vunpack.c.l.b16 %v2620
        %v2914 = vunpack.c.l.b16 %v2621
        %v2915 = vunpack.c.h.b16 %v2621
        %v2916 = vunpack.c.l.b16 %v2622
        %v2917 = vunpack.c.l.b16 %v2623
        %v2918 = vunpack.c.h.b16 %v2623
        %v2919 = vunpack.c.l.b16 %v2624
        %v2920 = vunpack.c.l.b16 %v2625
        %v2921 = vunpack.c.h.b16 %v2625
        %v2922 = vunpack.c.l.b16 %v2626
        %v2923 = vunpack.c.l.b16 %v2627
        %v2924 = vunpack.c.h.b16 %v2627
        %v2925 = vunpack.c.l.b16 %v2628
        %v2926 = vunpack.c.l.b16 %v2629
        %v2927 = vunpack.c.h.b16 %v2629
        %v2928 = vunpack.c.l.b16 %v2630
        %v2929 = vunpack.c.l.b16 %v2631
        %v2930 = vunpack.c.h.b16 %v2631
        %v2931 = vunpack.c.l.b16 %v2632
        %v2932 = vunpack.c.l.b16 %v2633
        %v2933 = vunpack.c.h.b16 %v2633
        %v2934 = vunpack.c.l.b16 %v2634
        %v2935 = vunpack.c.l.b16 %v2635
        %v2936 = vunpack.c.h.b16 %v2635
        %v2937 = vunpack.c.l.b16 %v2636
        %v2938 = vunpack.c.l.b16 %v2637
        %v2939 = vunpack.c.h.b16 %v2637
        %v2940 = vunpack.c.l.b16 %v2638
        %v2941 = vunpack.c.l.b16 %v2639
        %v2942 = vunpack.c.h.b16 %v2639
        %v2943 = vunpack.c.l.b16 %v2640
        %v2944 = vunpack.c.l.b16 %v2641
        %v2945 = vunpack.c.h.b16 %v2641
        %v2946 = vunpack.c.l.b16 %v2642
        %v2947 = vunpack.c.l.b16 %v2643
        %v2948 = vunpack.c.h.b16 %v2643
        %v2949 = vunpack.c.l.b16 %v2644
        %v2950 = vunpack.c.l.b16 %v2645
        %v2951 = vunpack.c.h.b16 %v2645
        %v2952 = vunpack.c.l.b16 %v2646
        %v2953 = vunpack.c.l.b16 %v2647
        %v2954 = vunpack.c.h.b16 %v2647
        %v2955 = vunpack.c.l.b16 %v2648
        %v2956 = vunpack.c.l.b16 %v2649
        %v2957 = vunpack.c.h.b16 %v2649
        %v2958 = vunpack.c.l.b16 %v2650
        %v2959 = vunpack.c.l.b16 %v2651
        %v2960 = vunpack.c.h.b16 %v2651
        %v2961 = vunpack.c.l.b16 %v2652
        %v2962 = vunpack.c.l.b16 %v2653
        %v2963 = vunpack.c.h.b16 %v2653
        %v2964 = vunpack.c.l.b16 %v2654
        %v2965 = vunpack.c.l.b16 %v2655
        %v2966 = vunpack.c.h.b16 %v2655
        %v2967 = vunpack.c.l.b16 %v2656
        %v2968 = vunpack.c.l.b16 %v2657
        %v2969 = vunpack.c.h.b16 %v2657
        %v2970 = vunpack.c.l.b16 %v2658
        %v2971 = vunpack.c.l.b16 %v2659
        %v2972 = vunpack.c.h.b16 %v2659
        %v2973 = vunpack.c.l.b16 %v2660
        %v2974 = vunpack.c.l.b16 %v2661
        %v2975 = vunpack.c.h.b16 %v2661
        %v2976 = vunpack.c.l.b16 %v2662
        %v2977 = vunpack.c.l.b16 %v2663
        %v2978 = vunpack.c.h.b16 %v2663
        %v2979 = vunpack.c.l.b16 %v2664
        %v2980 = vunpack.c.l.b16 %v2665
        %v2981 = vunpack.c.h.b16 %v2665
        %v2982 = vunpack.c.l.b16 %v2666
        %v2983 = vunpack.c.l.b16 %v2667
        %v2984 = vunpack.c.h.b16 %v2667
        %v2985 = vunpack.c.l.b16 %v2668
        %v2986 = vunpack.c.l.b16 %v2669
        %v2987 = vunpack.c.h.b16 %v2669
        %v2988 = vunpack.c.l.b16 %v2670
        %v2989 = vunpack.c.l.b16 %v2671
        %v2990 = vunpack.c.h.b16 %v2671
        %v2991 = vunpack.c.l.b16 %v2672
        %v2992 = vunpack.c.l.b16 %v2673
        %v2993 = vunpack.c.h.b16 %v2673
        %v2994 = vunpack.c.l.b16 %v2674
        %v2995 = vunpack.c.l.b16 %v2675
        %v2996 = vunpack.c.h.b16 %v2675
        %v2997 = vunpack.c.l.b16 %v2676
        %v2998 = vunpack.c.l.b16 %v2677
        %v2999 = vunpack.c.h.b16 %v2677
        %v3000 = vunpack.c.l.b16 %v2678
        %v3001 = vunpack.c.l.b16 %v2679
        %v3002 = vunpack.c.h.b16 %v2679
        %v3003 = vunpack.c.l.b16 %v2680
        %v3004 = vunpack.c.l.b16 %v2681
        %v3005 = vunpack.c.h.b16 %v2681
        %v3006 = vunpack.c.l.b16 %v2682
        %v3007 = vunpack.c.l.b16 %v2683
        %v3008 = vunpack.c.h.b16 %v2683
        %v3009 = vunpack.c.l.b16 %v2684
        %v3010 = vunpack.c.l.b16 %v2685
        %v3011 = vunpack.c.h.b16 %v2685
        %v3012 = vunpack.c.l.b16 %v2686
        %v3013 = vunpack.c.l.b16 %v2687
        %v3014 = vunpack.c.h.b16 %v2687
        %v3015 = vunpack.c.l.b16 %v2688
        %v3016 = vunpack.c.l.b16 %v2689
        %v3017 = vunpack.c.h.b16 %v2689
        %v3018 = vunpack.c.l.b16 %v2690
        %v3019 = vunpack.c.l.b16 %v2691
        %v3020 = vunpack.c.h.b16 %v2691
        %v3021 = vunpack.c.l.b16 %v2692
        %v3022 = vunpack.c.l.b16 %v2693
        %v3023 = vunpack.c.h.b16 %v2693
        %v3024 = vunpack.c.l.b16 %v2694
        %v3025 = vunpack.c.l.b16 %v2695
        %v3026 = vunpack.c.h.b16 %v2695
        %v3027 = vunpack.c.l.b16 %v2696
        %v3028 = vunpack.c.l.b16 %v2697
        %v3029 = vunpack.c.h.b16 %v2697
        %v3030 = vunpack.c.l.b16 %v2698
        %v3031 = vpack.c.b16 %v2842, %v2839
        %v3032 = vpack.c.b16 %v2843, %v2840
        %v3033 = vpack.c.b16 %v2844, %v2841
        %v3034 = vpack.c.b16 %v2848, %v2845
        %v3035 = vpack.c.b16 %v2849, %v2846
        %v3036 = vpack.c.b16 %v2850, %v2847
        %v3037 = vpack.c.b16 %v2854, %v2851
        %v3038 = vpack.c.b16 %v2855, %v2852
        %v3039 = vpack.c.b16 %v2856, %v2853
        %v3040 = vpack.c.b16 %v2860, %v2857
        %v3041 = vpack.c.b16 %v2861, %v2858
        %v3042 = vpack.c.b16 %v2862, %v2859
        %v3043 = vpack.c.b16 %v2866, %v2863
        %v3044 = vpack.c.b16 %v2867, %v2864
        %v3045 = vpack.c.b16 %v2868, %v2865
        %v3046 = vpack.c.b16 %v2872, %v2869
        %v3047 = vpack.c.b16 %v2873, %v2870
        %v3048 = vpack.c.b16 %v2874, %v2871
        %v3049 = vpack.c.b16 %v2878, %v2875
        %v3050 = vpack.c.b16 %v2879, %v2876
        %v3051 = vpack.c.b16 %v2880, %v2877
        %v3052 = vpack.c.b16 %v2884, %v2881
        %v3053 = vpack.c.b16 %v2885, %v2882
        %v3054 = vpack.c.b16 %v2886, %v2883
        %v3055 = vpack.c.b16 %v2890, %v2887
        %v3056 = vpack.c.b16 %v2891, %v2888
        %v3057 = vpack.c.b16 %v2892, %v2889
        %v3058 = vpack.c.b16 %v2896, %v2893
        %v3059 = vpack.c.b16 %v2897, %v2894
        %v3060 = vpack.c.b16 %v2898, %v2895
        %v3061 = vpack.c.b16 %v2902, %v2899
        %v3062 = vpack.c.b16 %v2903, %v2900
        %v3063 = vpack.c.b16 %v2904, %v2901
        %v3064 = vpack.c.b16 %v2908, %v2905
        %v3065 = vpack.c.b16 %v2909, %v2906
        %v3066 = vpack.c.b16 %v2910, %v2907
        %v3067 = vpack.c.b16 %v2914, %v2911
        %v3068 = vpack.c.b16 %v2915, %v2912
        %v3069 = vpack.c.b16 %v2916, %v2913
        %v3070 = vpack.c.b16 %v2920, %v2917
        %v3071 = vpack.c.b16 %v2921, %v2918
        %v3072 = vpack.c.b16 %v2922, %v2919
        %v3073 = vpack.c.b16 %v2926, %v2923
        %v3074 = vpack.c.b16 %v2927, %v2924
        %v3075 = vpack.c.b16 %v2928, %v2925
        %v3076 = vpack.c.b16 %v2932, %v2929
        %v3077 = vpack.c.b16 %v2933, %v2930
        %v3078 = vpack.c.b16 %v2934, %v2931
        %v3079 = vpack.c.b16 %v2938, %v2935
        %v3080 = vpack.c.b16 %v2939, %v2936
        %v3081 = vpack.c.b16 %v2940, %v2937
        %v3082 = vpack.c.b16 %v2944, %v2941
        %v3083 = vpack.c.b16 %v2945, %v2942
        %v3084 = vpack.c.b16 %v2946, %v2943
        %v3085 = vpack.c.b16 %v2950, %v2947
        %v3086 = vpack.c.b16 %v2951, %v2948
        %v3087 = vpack.c.b16 %v2952, %v2949
        %v3088 = vpack.c.b16 %v2956, %v2953
        %v3089 = vpack.c.b16 %v2957, %v2954
        %v3090 = vpack.c.b16 %v2958, %v2955
        %v3091 = vpack.c.b16 %v2962, %v2959
        %v3092 = vpack.c.b16 %v2963, %v2960
        %v3093 = vpack.c.b16 %v2964, %v2961
        %v3094 = vpack.c.b16 %v2968, %v2965
        %v3095 = vpack.c.b16 %v2969, %v2966
        %v3096 = vpack.c.b16 %v2970, %v2967
        %v3097 = vpack.c.b16 %v2974, %v2971
        %v3098 = vpack.c.b16 %v2975, %v2972
        %v3099 = vpack.c.b16 %v2976, %v2973
        %v3100 = vpack.c.b16 %v2980, %v2977
        %v3101 = vpack.c.b16 %v2981, %v2978
        %v3102 = vpack.c.b16 %v2982, %v2979
        %v3103 = vpack.c.b16 %v2986, %v2983
        %v3104 = vpack.c.b16 %v2987, %v2984
        %v3105 = vpack.c.b16 %v2988, %v2985
        %v3106 = vpack.c.b16 %v2992, %v2989
        %v3107 = vpack.c.b16 %v2993, %v2990
        %v3108 = vpack.c.b16 %v2994, %v2991
        %v3109 = vpack.c.b16 %v2998, %v2995
        %v3110 = vpack.c.b16 %v2999, %v2996
        %v3111 = vpack.c.b16 %v3000, %v2997
        %v3112 = vpack.c.b16 %v3004, %v3001
        %v3113 = vpack.c.b16 %v3005, %v3002
        %v3114 = vpack.c.b16 %v3006, %v3003
        %v3115 = vpack.c.b16 %v3010, %v3007
        %v3116 = vpack.c.b16 %v3011, %v3008
        %v3117 = vpack.c.b16 %v3012, %v3009
        %v3118 = vpack.c.b16 %v3016, %v3013
        %v3119 = vpack.c.b16 %v3017, %v3014
        %v3120 = vpack.c.b16 %v3018, %v3015
        %v3121 = vpack.c.b16 %v3022, %v3019
        %v3122 = vpack.c.b16 %v3023, %v3020
        %v3123 = vpack.c.b16 %v3024, %v3021
        %v3124 = vpack.c.b16 %v3028, %v3025
        %v3125 = vpack.c.b16 %v3029, %v3026
        %v3126 = vpack.c.b16 %v3030, %v3027
        %3223 = vmatpush.bf16.msra.mxu0 %v3052
        %3224 = vmatpush.bf16.msra.mxu0 %v3049
        %3225 = vmatpush.bf16.msra.mxu0 %v3046
        %3226 = vmatpush.bf16.msra.mxu0 %v3043
        %3227 = vmatpush.bf16.msra.mxu0 %v3040
        %3228 = vmatpush.bf16.msra.mxu0 %v3037
        %3229 = vmatpush.bf16.msra.mxu0 %v3034
        %3230 = vmatpush.bf16.msra.mxu0 %v3031
        %3231 = vmatmul.bf16.gmra.mxu0 %v2703
        %v3232 = vpop.f32.mrf.mxu0
        %v3233 = vadd.f32 0.0, %v3232
        %v3234 = vpop.f32.mrf.mxu0
        %v3235 = vadd.f32 0.0, %v3234
        %3236 = vdwg.mxu0
        %3237 = vmatpush.bf16.msra.mxu0 %v3076
        %3238 = vmatpush.bf16.msra.mxu0 %v3073
        %3239 = vmatpush.bf16.msra.mxu0 %v3070
        %3240 = vmatpush.bf16.msra.mxu0 %v3067
        %3241 = vmatpush.bf16.msra.mxu0 %v3064
        %3242 = vmatpush.bf16.msra.mxu0 %v3061
        %3243 = vmatpush.bf16.msra.mxu0 %v3058
        %3244 = vmatpush.bf16.msra.mxu0 %v3055
        %3245 = vmatmul.bf16.gmra.mxu0 %v2704
        %v3246 = vpop.f32.mrf.mxu0
        %v3247 = vadd.f32 %v3233, %v3246
        %v3248 = vpop.f32.mrf.mxu0
        %v3249 = vadd.f32 %v3235, %v3248
        %3250 = vdwg.mxu0
        %3251 = vmatpush.bf16.msra.mxu0 %v3100
        %3252 = vmatpush.bf16.msra.mxu0 %v3097
        %3253 = vmatpush.bf16.msra.mxu0 %v3094
        %3254 = vmatpush.bf16.msra.mxu0 %v3091
        %3255 = vmatpush.bf16.msra.mxu0 %v3088
        %3256 = vmatpush.bf16.msra.mxu0 %v3085
        %3257 = vmatpush.bf16.msra.mxu0 %v3082
        %3258 = vmatpush.bf16.msra.mxu0 %v3079
        %3259 = vmatmul.bf16.gmra.mxu0 %v2705
        %v3260 = vpop.f32.mrf.mxu0
        %v3261 = vadd.f32 %v3247, %v3260
        %v3262 = vpop.f32.mrf.mxu0
        %v3263 = vadd.f32 %v3249, %v3262
        %3264 = vdwg.mxu0
        %3265 = vmatpush.bf16.msra.mxu0 %v3124
        %3266 = vmatpush.bf16.msra.mxu0 %v3121
        %3267 = vmatpush.bf16.msra.mxu0 %v3118
        %3268 = vmatpush.bf16.msra.mxu0 %v3115
        %3269 = vmatpush.bf16.msra.mxu0 %v3112
        %3270 = vmatpush.bf16.msra.mxu0 %v3109
        %3271 = vmatpush.bf16.msra.mxu0 %v3106
        %3272 = vmatpush.bf16.msra.mxu0 %v3103
        %3273 = vmatmul.bf16.gmra.mxu0 %v2706
        %v3274 = vpop.f32.mrf.mxu0
        %v3275 = vadd.f32 %v3261, %v3274
        %v3276 = vpop.f32.mrf.mxu0
        %v3277 = vadd.f32 %v3263, %v3276
        %3278 = vdwg.mxu0
        %3279 = vmatpush.bf16.msra.mxu0 %v3053
        %3280 = vmatpush.bf16.msra.mxu0 %v3050
        %3281 = vmatpush.bf16.msra.mxu0 %v3047
        %3282 = vmatpush.bf16.msra.mxu0 %v3044
        %3283 = vmatpush.bf16.msra.mxu0 %v3041
        %3284 = vmatpush.bf16.msra.mxu0 %v3038
        %3285 = vmatpush.bf16.msra.mxu0 %v3035
        %3286 = vmatpush.bf16.msra.mxu0 %v3032
        %3287 = vmatmul.bf16.gmra.mxu0 %v2703
        %v3288 = vpop.f32.mrf.mxu0
        %v3289 = vadd.f32 0.0, %v3288
        %v3290 = vpop.f32.mrf.mxu0
        %v3291 = vadd.f32 0.0, %v3290
        %3292 = vdwg.mxu0
        %3293 = vmatpush.bf16.msra.mxu0 %v3077
        %3294 = vmatpush.bf16.msra.mxu0 %v3074
        %3295 = vmatpush.bf16.msra.mxu0 %v3071
        %3296 = vmatpush.bf16.msra.mxu0 %v3068
        %3297 = vmatpush.bf16.msra.mxu0 %v3065
        %3298 = vmatpush.bf16.msra.mxu0 %v3062
        %3299 = vmatpush.bf16.msra.mxu0 %v3059
        %3300 = vmatpush.bf16.msra.mxu0 %v3056
        %3301 = vmatmul.bf16.gmra.mxu0 %v2704
        %v3302 = vpop.f32.mrf.mxu0
        %v3303 = vadd.f32 %v3289, %v3302
        %v3304 = vpop.f32.mrf.mxu0
        %v3305 = vadd.f32 %v3291, %v3304
        %3306 = vdwg.mxu0
        %3307 = vmatpush.bf16.msra.mxu0 %v3101
        %3308 = vmatpush.bf16.msra.mxu0 %v3098
        %3309 = vmatpush.bf16.msra.mxu0 %v3095
        %3310 = vmatpush.bf16.msra.mxu0 %v3092
        %3311 = vmatpush.bf16.msra.mxu0 %v3089
        %3312 = vmatpush.bf16.msra.mxu0 %v3086
        %3313 = vmatpush.bf16.msra.mxu0 %v3083
        %3314 = vmatpush.bf16.msra.mxu0 %v3080
        %3315 = vmatmul.bf16.gmra.mxu0 %v2705
        %v3316 = vpop.f32.mrf.mxu0
        %v3317 = vadd.f32 %v3303, %v3316
        %v3318 = vpop.f32.mrf.mxu0
        %v3319 = vadd.f32 %v3305, %v3318
        %3320 = vdwg.mxu0
        %3321 = vmatpush.bf16.msra.mxu0 %v3125
        %3322 = vmatpush.bf16.msra.mxu0 %v3122
        %3323 = vmatpush.bf16.msra.mxu0 %v3119
        %3324 = vmatpush.bf16.msra.mxu0 %v3116
        %3325 = vmatpush.bf16.msra.mxu0 %v3113
        %3326 = vmatpush.bf16.msra.mxu0 %v3110
        %3327 = vmatpush.bf16.msra.mxu0 %v3107
        %3328 = vmatpush.bf16.msra.mxu0 %v3104
        %3329 = vmatmul.bf16.gmra.mxu0 %v2706
        %v3330 = vpop.f32.mrf.mxu0
        %v3331 = vadd.f32 %v3317, %v3330
        %v3332 = vpop.f32.mrf.mxu0
        %v3333 = vadd.f32 %v3319, %v3332
        %3334 = vdwg.mxu0
        %3335 = vmatpush.bf16.msra.mxu0 %v3054
        %3336 = vmatpush.bf16.msra.mxu0 %v3051
        %3337 = vmatpush.bf16.msra.mxu0 %v3048
        %3338 = vmatpush.bf16.msra.mxu0 %v3045
        %3339 = vmatpush.bf16.msra.mxu0 %v3042
        %3340 = vmatpush.bf16.msra.mxu0 %v3039
        %3341 = vmatpush.bf16.msra.mxu0 %v3036
        %3342 = vmatpush.bf16.msra.mxu0 %v3033
        %3343 = vmatmul.bf16.gmra.mxu0 %v2703
        %v3344 = vpop.f32.mrf.mxu0
        %v3345 = vadd.f32 0.0, %v3344
        %v3346 = vpop.f32.mrf.mxu0
        %v3347 = vadd.f32 0.0, %v3346
        %3348 = vdwg.mxu0
        %3349 = vmatpush.bf16.msra.mxu0 %v3078
        %3350 = vmatpush.bf16.msra.mxu0 %v3075
        %3351 = vmatpush.bf16.msra.mxu0 %v3072
        %3352 = vmatpush.bf16.msra.mxu0 %v3069
        %3353 = vmatpush.bf16.msra.mxu0 %v3066
        %3354 = vmatpush.bf16.msra.mxu0 %v3063
        %3355 = vmatpush.bf16.msra.mxu0 %v3060
        %3356 = vmatpush.bf16.msra.mxu0 %v3057
        %3357 = vmatmul.bf16.gmra.mxu0 %v2704
        %v3358 = vpop.f32.mrf.mxu0
        %v3359 = vadd.f32 %v3345, %v3358
        %v3360 = vpop.f32.mrf.mxu0
        %v3361 = vadd.f32 %v3347, %v3360
        %3362 = vdwg.mxu0
        %3363 = vmatpush.bf16.msra.mxu0 %v3102
        %3364 = vmatpush.bf16.msra.mxu0 %v3099
        %3365 = vmatpush.bf16.msra.mxu0 %v3096
        %3366 = vmatpush.bf16.msra.mxu0 %v3093
        %3367 = vmatpush.bf16.msra.mxu0 %v3090
        %3368 = vmatpush.bf16.msra.mxu0 %v3087
        %3369 = vmatpush.bf16.msra.mxu0 %v3084
        %3370 = vmatpush.bf16.msra.mxu0 %v3081
        %3371 = vmatmul.bf16.gmra.mxu0 %v2705
        %v3372 = vpop.f32.mrf.mxu0
        %v3373 = vadd.f32 %v3359, %v3372
        %v3374 = vpop.f32.mrf.mxu0
        %v3375 = vadd.f32 %v3361, %v3374
        %3376 = vdwg.mxu0
        %3377 = vmatpush.bf16.msra.mxu0 %v3126
        %3378 = vmatpush.bf16.msra.mxu0 %v3123
        %3379 = vmatpush.bf16.msra.mxu0 %v3120
        %3380 = vmatpush.bf16.msra.mxu0 %v3117
        %3381 = vmatpush.bf16.msra.mxu0 %v3114
        %3382 = vmatpush.bf16.msra.mxu0 %v3111
        %3383 = vmatpush.bf16.msra.mxu0 %v3108
        %3384 = vmatpush.bf16.msra.mxu0 %v3105
        %3385 = vmatmul.bf16.gmra.mxu0 %v2706
        %v3386 = vpop.f32.mrf.mxu0
        %v3387 = vadd.f32 %v3373, %v3386
        %v3388 = vpop.f32.mrf.mxu0
        %v3389 = vadd.f32 %v3375, %v3388
        %3390 = vdwg.mxu0
        %v3391 = vadd.f32 %v2454, %v3275
        %v3392 = vadd.f32 %v2510, %v3331
        %v3393 = vadd.f32 %v2566, %v3387
        %v3394 = vadd.f32 %v2456, %v3277
        %v3395 = vadd.f32 %v2512, %v3333
        %v3396 = vadd.f32 %v2568, %v3389
        %v3397 = vld [vmem:[#allocation11] sm:$0x7]
        %v3399 = vperm.slane %v3397, 0
        %v3400 = vperm.slane %v3397, 1
        %v3401 = vperm.slane %v3397, 2
        %v3405 = vmul.f32 %v3391, %v3399
        %v3406 = vmul.f32 %v3392, %v3400
        %v3407 = vmul.f32 %v3393, %v3401
        %v3408 = vmul.f32 %v3394, %v3399
        %v3409 = vmul.f32 %v3395, %v3400
        %v3410 = vmul.f32 %v3396, %v3401
        %v3411 = vld [vmem:[#allocation13] sm:$0x7]
        %v3413 = vperm.slane %v3411, 0
        %v3414 = vperm.slane %v3411, 1
        %v3415 = vperm.slane %v3411, 2
        %v3419 = vadd.f32 %v3405, %v3413
        %v3420 = vadd.f32 %v3406, %v3414
        %v3421 = vadd.f32 %v3407, %v3415
        %v3422 = vadd.f32 %v3408, %v3413
        %v3423 = vadd.f32 %v3409, %v3414
        %v3424 = vadd.f32 %v3410, %v3415
        %v3425 = vmax.f32 %v3419, 0.0
        %v3426 = vmax.f32 %v3420, 0.0
        %v3427 = vmax.f32 %v3421, 0.0
        %v3428 = vmax.f32 %v3422, 0.0
        %v3429 = vmax.f32 %v3423, 0.0
        %v3430 = vmax.f32 %v3424, 0.0
        %v3431 = vpack.c.bf16 %v3428, %v3425
        %v3432 = vpack.c.bf16 %v3429, %v3426
        %v3433 = vpack.c.bf16 %v3430, %v3427
        %v3434 = vld [vmem:[#allocation14] sm:$0xff]
        %v3435 = vld [vmem:[#allocation14 + $0x8] sm:$0xf]
        %v3436 = vld [vmem:[#allocation14 + $0xc] sm:$0xff]
        %v3437 = vld [vmem:[#allocation14 + $0x14] sm:$0xf]
        %v3438 = vld [vmem:[#allocation14 + $0x18] sm:$0xff]
        %v3439 = vld [vmem:[#allocation14 + $0x20] sm:$0xf]
        %v3440 = vld [vmem:[#allocation14 + $0x24] sm:$0xff]
        %v3441 = vld [vmem:[#allocation14 + $0x2c] sm:$0xf]
        %v3442 = vld [vmem:[#allocation14 + $0x30] sm:$0xff]
        %v3443 = vld [vmem:[#allocation14 + $0x38] sm:$0xf]
        %v3444 = vld [vmem:[#allocation14 + $0x3c] sm:$0xff]
        %v3445 = vld [vmem:[#allocation14 + $0x44] sm:$0xf]
        %v3446 = vld [vmem:[#allocation14 + $0x48] sm:$0xff]
        %v3447 = vld [vmem:[#allocation14 + $0x50] sm:$0xf]
        %v3448 = vld [vmem:[#allocation14 + $0x54] sm:$0xff]
        %v3449 = vld [vmem:[#allocation14 + $0x5c] sm:$0xf]
        %v3450 = vld [vmem:[#allocation14 + $0x60] sm:$0xff]
        %v3451 = vld [vmem:[#allocation14 + $0x68] sm:$0xf]
        %v3452 = vld [vmem:[#allocation14 + $0x6c] sm:$0xff]
        %v3453 = vld [vmem:[#allocation14 + $0x74] sm:$0xf]
        %v3454 = vld [vmem:[#allocation14 + $0x78] sm:$0xff]
        %v3455 = vld [vmem:[#allocation14 + $0x80] sm:$0xf]
        %v3456 = vld [vmem:[#allocation14 + $0x84] sm:$0xff]
        %v3457 = vld [vmem:[#allocation14 + $0x8c] sm:$0xf]
        %v3458 = vld [vmem:[#allocation14 + $0x90] sm:$0xff]
        %v3459 = vld [vmem:[#allocation14 + $0x98] sm:$0xf]
        %v3460 = vld [vmem:[#allocation14 + $0x9c] sm:$0xff]
        %v3461 = vld [vmem:[#allocation14 + $0xa4] sm:$0xf]
        %v3462 = vld [vmem:[#allocation14 + $0xa8] sm:$0xff]
        %v3463 = vld [vmem:[#allocation14 + $0xb0] sm:$0xf]
        %v3464 = vld [vmem:[#allocation14 + $0xb4] sm:$0xff]
        %v3465 = vld [vmem:[#allocation14 + $0xbc] sm:$0xf]
        %v3466 = vld [vmem:[#allocation14 + $0xc0] sm:$0xff]
        %v3467 = vld [vmem:[#allocation14 + $0xc8] sm:$0xf]
        %v3468 = vld [vmem:[#allocation14 + $0xcc] sm:$0xff]
        %v3469 = vld [vmem:[#allocation14 + $0xd4] sm:$0xf]
        %v3470 = vld [vmem:[#allocation14 + $0xd8] sm:$0xff]
        %v3471 = vld [vmem:[#allocation14 + $0xe0] sm:$0xf]
        %v3472 = vld [vmem:[#allocation14 + $0xe4] sm:$0xff]
        %v3473 = vld [vmem:[#allocation14 + $0xec] sm:$0xf]
        %v3474 = vld [vmem:[#allocation14 + $0xf0] sm:$0xff]
        %v3475 = vld [vmem:[#allocation14 + $0xf8] sm:$0xf]
        %v3476 = vld [vmem:[#allocation14 + $0xfc] sm:$0xff]
        %v3477 = vld [vmem:[#allocation14 + $0x104] sm:$0xf]
        %v3478 = vld [vmem:[#allocation14 + $0x108] sm:$0xff]
        %v3479 = vld [vmem:[#allocation14 + $0x110] sm:$0xf]
        %v3480 = vld [vmem:[#allocation14 + $0x114] sm:$0xff]
        %v3481 = vld [vmem:[#allocation14 + $0x11c] sm:$0xf]
        %v3482 = vld [vmem:[#allocation14 + $0x120] sm:$0xff]
        %v3483 = vld [vmem:[#allocation14 + $0x128] sm:$0xf]
        %v3484 = vld [vmem:[#allocation14 + $0x12c] sm:$0xff]
        %v3485 = vld [vmem:[#allocation14 + $0x134] sm:$0xf]
        %v3486 = vld [vmem:[#allocation14 + $0x138] sm:$0xff]
        %v3487 = vld [vmem:[#allocation14 + $0x140] sm:$0xf]
        %v3488 = vld [vmem:[#allocation14 + $0x144] sm:$0xff]
        %v3489 = vld [vmem:[#allocation14 + $0x14c] sm:$0xf]
        %v3490 = vld [vmem:[#allocation14 + $0x150] sm:$0xff]
        %v3491 = vld [vmem:[#allocation14 + $0x158] sm:$0xf]
        %v3492 = vld [vmem:[#allocation14 + $0x15c] sm:$0xff]
        %v3493 = vld [vmem:[#allocation14 + $0x164] sm:$0xf]
        %v3494 = vld [vmem:[#allocation14 + $0x168] sm:$0xff]
        %v3495 = vld [vmem:[#allocation14 + $0x170] sm:$0xf]
        %v3496 = vld [vmem:[#allocation14 + $0x174] sm:$0xff]
        %v3497 = vld [vmem:[#allocation14 + $0x17c] sm:$0xf]
        %v3498 = vld [vmem:[#allocation14 + $0x180] sm:$0xff]
        %v3499 = vld [vmem:[#allocation14 + $0x188] sm:$0xf]
        %v3500 = vld [vmem:[#allocation14 + $0x18c] sm:$0xff]
        %v3501 = vld [vmem:[#allocation14 + $0x194] sm:$0xf]
        %v3502 = vld [vmem:[#allocation14 + $0x198] sm:$0xff]
        %v3503 = vld [vmem:[#allocation14 + $0x1a0] sm:$0xf]
        %v3504 = vld [vmem:[#allocation14 + $0x1a4] sm:$0xff]
        %v3505 = vld [vmem:[#allocation14 + $0x1ac] sm:$0xf]
        %v3506 = vld [vmem:[#allocation14 + $0x1b0] sm:$0xff]
        %v3507 = vld [vmem:[#allocation14 + $0x1b8] sm:$0xf]
        %v3508 = vld [vmem:[#allocation14 + $0x1bc] sm:$0xff]
        %v3509 = vld [vmem:[#allocation14 + $0x1c4] sm:$0xf]
        %v3510 = vld [vmem:[#allocation14 + $0x1c8] sm:$0xff]
        %v3511 = vld [vmem:[#allocation14 + $0x1d0] sm:$0xf]
        %v3512 = vld [vmem:[#allocation14 + $0x1d4] sm:$0xff]
        %v3513 = vld [vmem:[#allocation14 + $0x1dc] sm:$0xf]
        %v3514 = vld [vmem:[#allocation14 + $0x1e0] sm:$0xff]
        %v3515 = vld [vmem:[#allocation14 + $0x1e8] sm:$0xf]
        %v3516 = vld [vmem:[#allocation14 + $0x1ec] sm:$0xff]
        %v3517 = vld [vmem:[#allocation14 + $0x1f4] sm:$0xf]
        %v3518 = vld [vmem:[#allocation14 + $0x1f8] sm:$0xff]
        %v3519 = vld [vmem:[#allocation14 + $0x200] sm:$0xf]
        %v3520 = vld [vmem:[#allocation14 + $0x204] sm:$0xff]
        %v3521 = vld [vmem:[#allocation14 + $0x20c] sm:$0xf]
        %v3522 = vld [vmem:[#allocation14 + $0x210] sm:$0xff]
        %v3523 = vld [vmem:[#allocation14 + $0x218] sm:$0xf]
        %v3524 = vld [vmem:[#allocation14 + $0x21c] sm:$0xff]
        %v3525 = vld [vmem:[#allocation14 + $0x224] sm:$0xf]
        %v3526 = vld [vmem:[#allocation14 + $0x228] sm:$0xff]
        %v3527 = vld [vmem:[#allocation14 + $0x230] sm:$0xf]
        %v3528 = vld [vmem:[#allocation14 + $0x234] sm:$0xff]
        %v3529 = vld [vmem:[#allocation14 + $0x23c] sm:$0xf]
        %s3530 = scalar_lea.vmem [#allocation14], 576
        %v3531 = vld [vmem:[%s3530] sm:$0xff]
        %v3532 = vld [vmem:[%s3530 + $0x8] sm:$0xf]
        %v3533 = vld [vmem:[%s3530 + $0xc] sm:$0xff]
        %v3534 = vld [vmem:[%s3530 + $0x14] sm:$0xf]
        %v3535 = vld [vmem:[%s3530 + $0x18] sm:$0xff]
        %v3536 = vld [vmem:[%s3530 + $0x20] sm:$0xf]
        %v3537 = vld [vmem:[%s3530 + $0x24] sm:$0xff]
        %v3538 = vld [vmem:[%s3530 + $0x2c] sm:$0xf]
        %v3539 = vld [vmem:[%s3530 + $0x30] sm:$0xff]
        %v3540 = vld [vmem:[%s3530 + $0x38] sm:$0xf]
        %v3541 = vld [vmem:[%s3530 + $0x3c] sm:$0xff]
        %v3542 = vld [vmem:[%s3530 + $0x44] sm:$0xf]
        %v3543 = vld [vmem:[%s3530 + $0x48] sm:$0xff]
        %v3544 = vld [vmem:[%s3530 + $0x50] sm:$0xf]
        %v3545 = vld [vmem:[%s3530 + $0x54] sm:$0xff]
        %v3546 = vld [vmem:[%s3530 + $0x5c] sm:$0xf]
        %v3547 = vld [vmem:[%s3530 + $0x60] sm:$0xff]
        %v3548 = vld [vmem:[%s3530 + $0x68] sm:$0xf]
        %v3549 = vld [vmem:[%s3530 + $0x6c] sm:$0xff]
        %v3550 = vld [vmem:[%s3530 + $0x74] sm:$0xf]
        %v3551 = vld [vmem:[%s3530 + $0x78] sm:$0xff]
        %v3552 = vld [vmem:[%s3530 + $0x80] sm:$0xf]
        %v3553 = vld [vmem:[%s3530 + $0x84] sm:$0xff]
        %v3554 = vld [vmem:[%s3530 + $0x8c] sm:$0xf]
        %v3555 = vld [vmem:[%s3530 + $0x90] sm:$0xff]
        %v3556 = vld [vmem:[%s3530 + $0x98] sm:$0xf]
        %v3557 = vld [vmem:[%s3530 + $0x9c] sm:$0xff]
        %v3558 = vld [vmem:[%s3530 + $0xa4] sm:$0xf]
        %v3559 = vld [vmem:[%s3530 + $0xa8] sm:$0xff]
        %v3560 = vld [vmem:[%s3530 + $0xb0] sm:$0xf]
        %v3561 = vld [vmem:[%s3530 + $0xb4] sm:$0xff]
        %v3562 = vld [vmem:[%s3530 + $0xbc] sm:$0xf]
        %v3563 = vld [vmem:[%s3530 + $0xc0] sm:$0xff]
        %v3564 = vld [vmem:[%s3530 + $0xc8] sm:$0xf]
        %v3565 = vld [vmem:[%s3530 + $0xcc] sm:$0xff]
        %v3566 = vld [vmem:[%s3530 + $0xd4] sm:$0xf]
        %v3567 = vld [vmem:[%s3530 + $0xd8] sm:$0xff]
        %v3568 = vld [vmem:[%s3530 + $0xe0] sm:$0xf]
        %v3569 = vld [vmem:[%s3530 + $0xe4] sm:$0xff]
        %v3570 = vld [vmem:[%s3530 + $0xec] sm:$0xf]
        %v3571 = vld [vmem:[%s3530 + $0xf0] sm:$0xff]
        %v3572 = vld [vmem:[%s3530 + $0xf8] sm:$0xf]
        %v3573 = vld [vmem:[%s3530 + $0xfc] sm:$0xff]
        %v3574 = vld [vmem:[%s3530 + $0x104] sm:$0xf]
        %v3575 = vld [vmem:[%s3530 + $0x108] sm:$0xff]
        %v3576 = vld [vmem:[%s3530 + $0x110] sm:$0xf]
        %v3577 = vld [vmem:[%s3530 + $0x114] sm:$0xff]
        %v3578 = vld [vmem:[%s3530 + $0x11c] sm:$0xf]
        %v3579 = vld [vmem:[%s3530 + $0x120] sm:$0xff]
        %v3580 = vld [vmem:[%s3530 + $0x128] sm:$0xf]
        %v3581 = vld [vmem:[%s3530 + $0x12c] sm:$0xff]
        %v3582 = vld [vmem:[%s3530 + $0x134] sm:$0xf]
        %v3583 = vld [vmem:[%s3530 + $0x138] sm:$0xff]
        %v3584 = vld [vmem:[%s3530 + $0x140] sm:$0xf]
        %v3585 = vld [vmem:[%s3530 + $0x144] sm:$0xff]
        %v3586 = vld [vmem:[%s3530 + $0x14c] sm:$0xf]
        %v3587 = vld [vmem:[%s3530 + $0x150] sm:$0xff]
        %v3588 = vld [vmem:[%s3530 + $0x158] sm:$0xf]
        %v3589 = vld [vmem:[%s3530 + $0x15c] sm:$0xff]
        %v3590 = vld [vmem:[%s3530 + $0x164] sm:$0xf]
        %v3591 = vld [vmem:[%s3530 + $0x168] sm:$0xff]
        %v3592 = vld [vmem:[%s3530 + $0x170] sm:$0xf]
        %v3593 = vld [vmem:[%s3530 + $0x174] sm:$0xff]
        %v3594 = vld [vmem:[%s3530 + $0x17c] sm:$0xf]
        %v3595 = vld [vmem:[%s3530 + $0x180] sm:$0xff]
        %v3596 = vld [vmem:[%s3530 + $0x188] sm:$0xf]
        %v3597 = vld [vmem:[%s3530 + $0x18c] sm:$0xff]
        %v3598 = vld [vmem:[%s3530 + $0x194] sm:$0xf]
        %v3599 = vld [vmem:[%s3530 + $0x198] sm:$0xff]
        %v3600 = vld [vmem:[%s3530 + $0x1a0] sm:$0xf]
        %v3601 = vld [vmem:[%s3530 + $0x1a4] sm:$0xff]
        %v3602 = vld [vmem:[%s3530 + $0x1ac] sm:$0xf]
        %v3603 = vld [vmem:[%s3530 + $0x1b0] sm:$0xff]
        %v3604 = vld [vmem:[%s3530 + $0x1b8] sm:$0xf]
        %v3605 = vld [vmem:[%s3530 + $0x1bc] sm:$0xff]
        %v3606 = vld [vmem:[%s3530 + $0x1c4] sm:$0xf]
        %v3607 = vld [vmem:[%s3530 + $0x1c8] sm:$0xff]
        %v3608 = vld [vmem:[%s3530 + $0x1d0] sm:$0xf]
        %v3609 = vld [vmem:[%s3530 + $0x1d4] sm:$0xff]
        %v3610 = vld [vmem:[%s3530 + $0x1dc] sm:$0xf]
        %v3611 = vld [vmem:[%s3530 + $0x1e0] sm:$0xff]
        %v3612 = vld [vmem:[%s3530 + $0x1e8] sm:$0xf]
        %v3613 = vld [vmem:[%s3530 + $0x1ec] sm:$0xff]
        %v3614 = vld [vmem:[%s3530 + $0x1f4] sm:$0xf]
        %v3615 = vld [vmem:[%s3530 + $0x1f8] sm:$0xff]
        %v3616 = vld [vmem:[%s3530 + $0x200] sm:$0xf]
        %v3617 = vld [vmem:[%s3530 + $0x204] sm:$0xff]
        %v3618 = vld [vmem:[%s3530 + $0x20c] sm:$0xf]
        %v3619 = vld [vmem:[%s3530 + $0x210] sm:$0xff]
        %v3620 = vld [vmem:[%s3530 + $0x218] sm:$0xf]
        %v3621 = vld [vmem:[%s3530 + $0x21c] sm:$0xff]
        %v3622 = vld [vmem:[%s3530 + $0x224] sm:$0xf]
        %v3623 = vld [vmem:[%s3530 + $0x228] sm:$0xff]
        %v3624 = vld [vmem:[%s3530 + $0x230] sm:$0xf]
        %v3625 = vld [vmem:[%s3530 + $0x234] sm:$0xff]
        %v3626 = vld [vmem:[%s3530 + $0x23c] sm:$0xf]
        %v3628 = vshrl.u32 %v3431, 16
        %v3630 = vshll.u32 %v3431, 16
        %v3632 = vrot.slane %v3630, 1
        %v3633 = vor.u32 %v3628, %v3632
        %v3635 = vshrl.u32 %v3432, 16
        %v3637 = vshll.u32 %v3432, 16
        %v3639 = vrot.slane %v3637, 1
        %v3640 = vor.u32 %v3635, %v3639
        %v3642 = vshrl.u32 %v3433, 16
        %v3644 = vshll.u32 %v3433, 16
        %v3646 = vrot.slane %v3644, 1
        %v3647 = vor.u32 %v3642, %v3646
        %v3747 = vunpack.c.l.b16 %v3531
        %v3748 = vunpack.c.h.b16 %v3531
        %v3749 = vunpack.c.l.b16 %v3532
        %v3750 = vunpack.c.l.b16 %v3533
        %v3751 = vunpack.c.h.b16 %v3533
        %v3752 = vunpack.c.l.b16 %v3534
        %v3753 = vunpack.c.l.b16 %v3535
        %v3754 = vunpack.c.h.b16 %v3535
        %v3755 = vunpack.c.l.b16 %v3536
        %v3756 = vunpack.c.l.b16 %v3537
        %v3757 = vunpack.c.h.b16 %v3537
        %v3758 = vunpack.c.l.b16 %v3538
        %v3759 = vunpack.c.l.b16 %v3539
        %v3760 = vunpack.c.h.b16 %v3539
        %v3761 = vunpack.c.l.b16 %v3540
        %v3762 = vunpack.c.l.b16 %v3541
        %v3763 = vunpack.c.h.b16 %v3541
        %v3764 = vunpack.c.l.b16 %v3542
        %v3765 = vunpack.c.l.b16 %v3543
        %v3766 = vunpack.c.h.b16 %v3543
        %v3767 = vunpack.c.l.b16 %v3544
        %v3768 = vunpack.c.l.b16 %v3545
        %v3769 = vunpack.c.h.b16 %v3545
        %v3770 = vunpack.c.l.b16 %v3546
        %v3771 = vunpack.c.l.b16 %v3547
        %v3772 = vunpack.c.h.b16 %v3547
        %v3773 = vunpack.c.l.b16 %v3548
        %v3774 = vunpack.c.l.b16 %v3549
        %v3775 = vunpack.c.h.b16 %v3549
        %v3776 = vunpack.c.l.b16 %v3550
        %v3777 = vunpack.c.l.b16 %v3551
        %v3778 = vunpack.c.h.b16 %v3551
        %v3779 = vunpack.c.l.b16 %v3552
        %v3780 = vunpack.c.l.b16 %v3553
        %v3781 = vunpack.c.h.b16 %v3553
        %v3782 = vunpack.c.l.b16 %v3554
        %v3783 = vunpack.c.l.b16 %v3555
        %v3784 = vunpack.c.h.b16 %v3555
        %v3785 = vunpack.c.l.b16 %v3556
        %v3786 = vunpack.c.l.b16 %v3557
        %v3787 = vunpack.c.h.b16 %v3557
        %v3788 = vunpack.c.l.b16 %v3558
        %v3789 = vunpack.c.l.b16 %v3559
        %v3790 = vunpack.c.h.b16 %v3559
        %v3791 = vunpack.c.l.b16 %v3560
        %v3792 = vunpack.c.l.b16 %v3561
        %v3793 = vunpack.c.h.b16 %v3561
        %v3794 = vunpack.c.l.b16 %v3562
        %v3795 = vunpack.c.l.b16 %v3563
        %v3796 = vunpack.c.h.b16 %v3563
        %v3797 = vunpack.c.l.b16 %v3564
        %v3798 = vunpack.c.l.b16 %v3565
        %v3799 = vunpack.c.h.b16 %v3565
        %v3800 = vunpack.c.l.b16 %v3566
        %v3801 = vunpack.c.l.b16 %v3567
        %v3802 = vunpack.c.h.b16 %v3567
        %v3803 = vunpack.c.l.b16 %v3568
        %v3804 = vunpack.c.l.b16 %v3569
        %v3805 = vunpack.c.h.b16 %v3569
        %v3806 = vunpack.c.l.b16 %v3570
        %v3807 = vunpack.c.l.b16 %v3571
        %v3808 = vunpack.c.h.b16 %v3571
        %v3809 = vunpack.c.l.b16 %v3572
        %v3810 = vunpack.c.l.b16 %v3573
        %v3811 = vunpack.c.h.b16 %v3573
        %v3812 = vunpack.c.l.b16 %v3574
        %v3813 = vunpack.c.l.b16 %v3575
        %v3814 = vunpack.c.h.b16 %v3575
        %v3815 = vunpack.c.l.b16 %v3576
        %v3816 = vunpack.c.l.b16 %v3577
        %v3817 = vunpack.c.h.b16 %v3577
        %v3818 = vunpack.c.l.b16 %v3578
        %v3819 = vunpack.c.l.b16 %v3579
        %v3820 = vunpack.c.h.b16 %v3579
        %v3821 = vunpack.c.l.b16 %v3580
        %v3822 = vunpack.c.l.b16 %v3581
        %v3823 = vunpack.c.h.b16 %v3581
        %v3824 = vunpack.c.l.b16 %v3582
        %v3825 = vunpack.c.l.b16 %v3583
        %v3826 = vunpack.c.h.b16 %v3583
        %v3827 = vunpack.c.l.b16 %v3584
        %v3828 = vunpack.c.l.b16 %v3585
        %v3829 = vunpack.c.h.b16 %v3585
        %v3830 = vunpack.c.l.b16 %v3586
        %v3831 = vunpack.c.l.b16 %v3587
        %v3832 = vunpack.c.h.b16 %v3587
        %v3833 = vunpack.c.l.b16 %v3588
        %v3834 = vunpack.c.l.b16 %v3589
        %v3835 = vunpack.c.h.b16 %v3589
        %v3836 = vunpack.c.l.b16 %v3590
        %v3837 = vunpack.c.l.b16 %v3591
        %v3838 = vunpack.c.h.b16 %v3591
        %v3839 = vunpack.c.l.b16 %v3592
        %v3840 = vunpack.c.l.b16 %v3593
        %v3841 = vunpack.c.h.b16 %v3593
        %v3842 = vunpack.c.l.b16 %v3594
        %v3843 = vunpack.c.l.b16 %v3595
        %v3844 = vunpack.c.h.b16 %v3595
        %v3845 = vunpack.c.l.b16 %v3596
        %v3846 = vunpack.c.l.b16 %v3597
        %v3847 = vunpack.c.h.b16 %v3597
        %v3848 = vunpack.c.l.b16 %v3598
        %v3849 = vunpack.c.l.b16 %v3599
        %v3850 = vunpack.c.h.b16 %v3599
        %v3851 = vunpack.c.l.b16 %v3600
        %v3852 = vunpack.c.l.b16 %v3601
        %v3853 = vunpack.c.h.b16 %v3601
        %v3854 = vunpack.c.l.b16 %v3602
        %v3855 = vunpack.c.l.b16 %v3603
        %v3856 = vunpack.c.h.b16 %v3603
        %v3857 = vunpack.c.l.b16 %v3604
        %v3858 = vunpack.c.l.b16 %v3605
        %v3859 = vunpack.c.h.b16 %v3605
        %v3860 = vunpack.c.l.b16 %v3606
        %v3861 = vunpack.c.l.b16 %v3607
        %v3862 = vunpack.c.h.b16 %v3607
        %v3863 = vunpack.c.l.b16 %v3608
        %v3864 = vunpack.c.l.b16 %v3609
        %v3865 = vunpack.c.h.b16 %v3609
        %v3866 = vunpack.c.l.b16 %v3610
        %v3867 = vunpack.c.l.b16 %v3611
        %v3868 = vunpack.c.h.b16 %v3611
        %v3869 = vunpack.c.l.b16 %v3612
        %v3870 = vunpack.c.l.b16 %v3613
        %v3871 = vunpack.c.h.b16 %v3613
        %v3872 = vunpack.c.l.b16 %v3614
        %v3873 = vunpack.c.l.b16 %v3615
        %v3874 = vunpack.c.h.b16 %v3615
        %v3875 = vunpack.c.l.b16 %v3616
        %v3876 = vunpack.c.l.b16 %v3617
        %v3877 = vunpack.c.h.b16 %v3617
        %v3878 = vunpack.c.l.b16 %v3618
        %v3879 = vunpack.c.l.b16 %v3619
        %v3880 = vunpack.c.h.b16 %v3619
        %v3881 = vunpack.c.l.b16 %v3620
        %v3882 = vunpack.c.l.b16 %v3621
        %v3883 = vunpack.c.h.b16 %v3621
        %v3884 = vunpack.c.l.b16 %v3622
        %v3885 = vunpack.c.l.b16 %v3623
        %v3886 = vunpack.c.h.b16 %v3623
        %v3887 = vunpack.c.l.b16 %v3624
        %v3888 = vunpack.c.l.b16 %v3625
        %v3889 = vunpack.c.h.b16 %v3625
        %v3890 = vunpack.c.l.b16 %v3626
        %v3891 = vpack.c.b16 %v3750, %v3747
        %v3892 = vpack.c.b16 %v3751, %v3748
        %v3893 = vpack.c.b16 %v3752, %v3749
        %v3894 = vpack.c.b16 %v3756, %v3753
        %v3895 = vpack.c.b16 %v3757, %v3754
        %v3896 = vpack.c.b16 %v3758, %v3755
        %v3897 = vpack.c.b16 %v3762, %v3759
        %v3898 = vpack.c.b16 %v3763, %v3760
        %v3899 = vpack.c.b16 %v3764, %v3761
        %v3900 = vpack.c.b16 %v3768, %v3765
        %v3901 = vpack.c.b16 %v3769, %v3766
        %v3902 = vpack.c.b16 %v3770, %v3767
        %v3903 = vpack.c.b16 %v3774, %v3771
        %v3904 = vpack.c.b16 %v3775, %v3772
        %v3905 = vpack.c.b16 %v3776, %v3773
        %v3906 = vpack.c.b16 %v3780, %v3777
        %v3907 = vpack.c.b16 %v3781, %v3778
        %v3908 = vpack.c.b16 %v3782, %v3779
        %v3909 = vpack.c.b16 %v3786, %v3783
        %v3910 = vpack.c.b16 %v3787, %v3784
        %v3911 = vpack.c.b16 %v3788, %v3785
        %v3912 = vpack.c.b16 %v3792, %v3789
        %v3913 = vpack.c.b16 %v3793, %v3790
        %v3914 = vpack.c.b16 %v3794, %v3791
        %v3915 = vpack.c.b16 %v3798, %v3795
        %v3916 = vpack.c.b16 %v3799, %v3796
        %v3917 = vpack.c.b16 %v3800, %v3797
        %v3918 = vpack.c.b16 %v3804, %v3801
        %v3919 = vpack.c.b16 %v3805, %v3802
        %v3920 = vpack.c.b16 %v3806, %v3803
        %v3921 = vpack.c.b16 %v3810, %v3807
        %v3922 = vpack.c.b16 %v3811, %v3808
        %v3923 = vpack.c.b16 %v3812, %v3809
        %v3924 = vpack.c.b16 %v3816, %v3813
        %v3925 = vpack.c.b16 %v3817, %v3814
        %v3926 = vpack.c.b16 %v3818, %v3815
        %v3927 = vpack.c.b16 %v3822, %v3819
        %v3928 = vpack.c.b16 %v3823, %v3820
        %v3929 = vpack.c.b16 %v3824, %v3821
        %v3930 = vpack.c.b16 %v3828, %v3825
        %v3931 = vpack.c.b16 %v3829, %v3826
        %v3932 = vpack.c.b16 %v3830, %v3827
        %v3933 = vpack.c.b16 %v3834, %v3831
        %v3934 = vpack.c.b16 %v3835, %v3832
        %v3935 = vpack.c.b16 %v3836, %v3833
        %v3936 = vpack.c.b16 %v3840, %v3837
        %v3937 = vpack.c.b16 %v3841, %v3838
        %v3938 = vpack.c.b16 %v3842, %v3839
        %v3939 = vpack.c.b16 %v3846, %v3843
        %v3940 = vpack.c.b16 %v3847, %v3844
        %v3941 = vpack.c.b16 %v3848, %v3845
        %v3942 = vpack.c.b16 %v3852, %v3849
        %v3943 = vpack.c.b16 %v3853, %v3850
        %v3944 = vpack.c.b16 %v3854, %v3851
        %v3945 = vpack.c.b16 %v3858, %v3855
        %v3946 = vpack.c.b16 %v3859, %v3856
        %v3947 = vpack.c.b16 %v3860, %v3857
        %v3948 = vpack.c.b16 %v3864, %v3861
        %v3949 = vpack.c.b16 %v3865, %v3862
        %v3950 = vpack.c.b16 %v3866, %v3863
        %v3951 = vpack.c.b16 %v3870, %v3867
        %v3952 = vpack.c.b16 %v3871, %v3868
        %v3953 = vpack.c.b16 %v3872, %v3869
        %v3954 = vpack.c.b16 %v3876, %v3873
        %v3955 = vpack.c.b16 %v3877, %v3874
        %v3956 = vpack.c.b16 %v3878, %v3875
        %v3957 = vpack.c.b16 %v3882, %v3879
        %v3958 = vpack.c.b16 %v3883, %v3880
        %v3959 = vpack.c.b16 %v3884, %v3881
        %v3960 = vpack.c.b16 %v3888, %v3885
        %v3961 = vpack.c.b16 %v3889, %v3886
        %v3962 = vpack.c.b16 %v3890, %v3887
        %4035 = vmatpush.bf16.msra.mxu0 %v3912
        %4036 = vmatpush.bf16.msra.mxu0 %v3909
        %4037 = vmatpush.bf16.msra.mxu0 %v3906
        %4038 = vmatpush.bf16.msra.mxu0 %v3903
        %4039 = vmatpush.bf16.msra.mxu0 %v3900
        %4040 = vmatpush.bf16.msra.mxu0 %v3897
        %4041 = vmatpush.bf16.msra.mxu0 %v3894
        %4042 = vmatpush.bf16.msra.mxu0 %v3891
        %4043 = vmatmul.bf16.gmra.mxu0 %v3633
        %v4044 = vpop.f32.mrf.mxu0
        %v4045 = vadd.f32 0.0, %v4044
        %v4046 = vpop.f32.mrf.mxu0
        %v4047 = vadd.f32 0.0, %v4046
        %4048 = vdwg.mxu0
        %4049 = vmatpush.bf16.msra.mxu0 %v3936
        %4050 = vmatpush.bf16.msra.mxu0 %v3933
        %4051 = vmatpush.bf16.msra.mxu0 %v3930
        %4052 = vmatpush.bf16.msra.mxu0 %v3927
        %4053 = vmatpush.bf16.msra.mxu0 %v3924
        %4054 = vmatpush.bf16.msra.mxu0 %v3921
        %4055 = vmatpush.bf16.msra.mxu0 %v3918
        %4056 = vmatpush.bf16.msra.mxu0 %v3915
        %4057 = vmatmul.bf16.gmra.mxu0 %v3640
        %v4058 = vpop.f32.mrf.mxu0
        %v4059 = vadd.f32 %v4045, %v4058
        %v4060 = vpop.f32.mrf.mxu0
        %v4061 = vadd.f32 %v4047, %v4060
        %4062 = vdwg.mxu0
        %4063 = vmatpush.bf16.msra.mxu0 %v3960
        %4064 = vmatpush.bf16.msra.mxu0 %v3957
        %4065 = vmatpush.bf16.msra.mxu0 %v3954
        %4066 = vmatpush.bf16.msra.mxu0 %v3951
        %4067 = vmatpush.bf16.msra.mxu0 %v3948
        %4068 = vmatpush.bf16.msra.mxu0 %v3945
        %4069 = vmatpush.bf16.msra.mxu0 %v3942
        %4070 = vmatpush.bf16.msra.mxu0 %v3939
        %4071 = vmatmul.bf16.gmra.mxu0 %v3647
        %v4072 = vpop.f32.mrf.mxu0
        %v4073 = vadd.f32 %v4059, %v4072
        %v4074 = vpop.f32.mrf.mxu0
        %v4075 = vadd.f32 %v4061, %v4074
        %4076 = vdwg.mxu0
        %4077 = vmatpush.bf16.msra.mxu0 %v3913
        %4078 = vmatpush.bf16.msra.mxu0 %v3910
        %4079 = vmatpush.bf16.msra.mxu0 %v3907
        %4080 = vmatpush.bf16.msra.mxu0 %v3904
        %4081 = vmatpush.bf16.msra.mxu0 %v3901
        %4082 = vmatpush.bf16.msra.mxu0 %v3898
        %4083 = vmatpush.bf16.msra.mxu0 %v3895
        %4084 = vmatpush.bf16.msra.mxu0 %v3892
        %4085 = vmatmul.bf16.gmra.mxu0 %v3633
        %v4086 = vpop.f32.mrf.mxu0
        %v4087 = vadd.f32 0.0, %v4086
        %v4088 = vpop.f32.mrf.mxu0
        %v4089 = vadd.f32 0.0, %v4088
        %4090 = vdwg.mxu0
        %4091 = vmatpush.bf16.msra.mxu0 %v3937
        %4092 = vmatpush.bf16.msra.mxu0 %v3934
        %4093 = vmatpush.bf16.msra.mxu0 %v3931
        %4094 = vmatpush.bf16.msra.mxu0 %v3928
        %4095 = vmatpush.bf16.msra.mxu0 %v3925
        %4096 = vmatpush.bf16.msra.mxu0 %v3922
        %4097 = vmatpush.bf16.msra.mxu0 %v3919
        %4098 = vmatpush.bf16.msra.mxu0 %v3916
        %4099 = vmatmul.bf16.gmra.mxu0 %v3640
        %v4100 = vpop.f32.mrf.mxu0
        %v4101 = vadd.f32 %v4087, %v4100
        %v4102 = vpop.f32.mrf.mxu0
        %v4103 = vadd.f32 %v4089, %v4102
        %4104 = vdwg.mxu0
        %4105 = vmatpush.bf16.msra.mxu0 %v3961
        %4106 = vmatpush.bf16.msra.mxu0 %v3958
        %4107 = vmatpush.bf16.msra.mxu0 %v3955
        %4108 = vmatpush.bf16.msra.mxu0 %v3952
        %4109 = vmatpush.bf16.msra.mxu0 %v3949
        %4110 = vmatpush.bf16.msra.mxu0 %v3946
        %4111 = vmatpush.bf16.msra.mxu0 %v3943
        %4112 = vmatpush.bf16.msra.mxu0 %v3940
        %4113 = vmatmul.bf16.gmra.mxu0 %v3647
        %v4114 = vpop.f32.mrf.mxu0
        %v4115 = vadd.f32 %v4101, %v4114
        %v4116 = vpop.f32.mrf.mxu0
        %v4117 = vadd.f32 %v4103, %v4116
        %4118 = vdwg.mxu0
        %4119 = vmatpush.bf16.msra.mxu0 %v3914
        %4120 = vmatpush.bf16.msra.mxu0 %v3911
        %4121 = vmatpush.bf16.msra.mxu0 %v3908
        %4122 = vmatpush.bf16.msra.mxu0 %v3905
        %4123 = vmatpush.bf16.msra.mxu0 %v3902
        %4124 = vmatpush.bf16.msra.mxu0 %v3899
        %4125 = vmatpush.bf16.msra.mxu0 %v3896
        %4126 = vmatpush.bf16.msra.mxu0 %v3893
        %4127 = vmatmul.bf16.gmra.mxu0 %v3633
        %v4128 = vpop.f32.mrf.mxu0
        %v4129 = vadd.f32 0.0, %v4128
        %v4130 = vpop.f32.mrf.mxu0
        %v4131 = vadd.f32 0.0, %v4130
        %4132 = vdwg.mxu0
        %4133 = vmatpush.bf16.msra.mxu0 %v3938
        %4134 = vmatpush.bf16.msra.mxu0 %v3935
        %4135 = vmatpush.bf16.msra.mxu0 %v3932
        %4136 = vmatpush.bf16.msra.mxu0 %v3929
        %4137 = vmatpush.bf16.msra.mxu0 %v3926
        %4138 = vmatpush.bf16.msra.mxu0 %v3923
        %4139 = vmatpush.bf16.msra.mxu0 %v3920
        %4140 = vmatpush.bf16.msra.mxu0 %v3917
        %4141 = vmatmul.bf16.gmra.mxu0 %v3640
        %v4142 = vpop.f32.mrf.mxu0
        %v4143 = vadd.f32 %v4129, %v4142
        %v4144 = vpop.f32.mrf.mxu0
        %v4145 = vadd.f32 %v4131, %v4144
        %4146 = vdwg.mxu0
        %4147 = vmatpush.bf16.msra.mxu0 %v3962
        %4148 = vmatpush.bf16.msra.mxu0 %v3959
        %4149 = vmatpush.bf16.msra.mxu0 %v3956
        %4150 = vmatpush.bf16.msra.mxu0 %v3953
        %4151 = vmatpush.bf16.msra.mxu0 %v3950
        %4152 = vmatpush.bf16.msra.mxu0 %v3947
        %4153 = vmatpush.bf16.msra.mxu0 %v3944
        %4154 = vmatpush.bf16.msra.mxu0 %v3941
        %4155 = vmatmul.bf16.gmra.mxu0 %v3647
        %v4156 = vpop.f32.mrf.mxu0
        %v4157 = vadd.f32 %v4143, %v4156
        %v4158 = vpop.f32.mrf.mxu0
        %v4159 = vadd.f32 %v4145, %v4158
        %4160 = vdwg.mxu0
        %v4257 = vunpack.c.l.b16 %v3434
        %v4258 = vunpack.c.h.b16 %v3434
        %v4259 = vunpack.c.l.b16 %v3435
        %v4260 = vunpack.c.l.b16 %v3436
        %v4261 = vunpack.c.h.b16 %v3436
        %v4262 = vunpack.c.l.b16 %v3437
        %v4263 = vunpack.c.l.b16 %v3438
        %v4264 = vunpack.c.h.b16 %v3438
        %v4265 = vunpack.c.l.b16 %v3439
        %v4266 = vunpack.c.l.b16 %v3440
        %v4267 = vunpack.c.h.b16 %v3440
        %v4268 = vunpack.c.l.b16 %v3441
        %v4269 = vunpack.c.l.b16 %v3442
        %v4270 = vunpack.c.h.b16 %v3442
        %v4271 = vunpack.c.l.b16 %v3443
        %v4272 = vunpack.c.l.b16 %v3444
        %v4273 = vunpack.c.h.b16 %v3444
        %v4274 = vunpack.c.l.b16 %v3445
        %v4275 = vunpack.c.l.b16 %v3446
        %v4276 = vunpack.c.h.b16 %v3446
        %v4277 = vunpack.c.l.b16 %v3447
        %v4278 = vunpack.c.l.b16 %v3448
        %v4279 = vunpack.c.h.b16 %v3448
        %v4280 = vunpack.c.l.b16 %v3449
        %v4281 = vunpack.c.l.b16 %v3450
        %v4282 = vunpack.c.h.b16 %v3450
        %v4283 = vunpack.c.l.b16 %v3451
        %v4284 = vunpack.c.l.b16 %v3452
        %v4285 = vunpack.c.h.b16 %v3452
        %v4286 = vunpack.c.l.b16 %v3453
        %v4287 = vunpack.c.l.b16 %v3454
        %v4288 = vunpack.c.h.b16 %v3454
        %v4289 = vunpack.c.l.b16 %v3455
        %v4290 = vunpack.c.l.b16 %v3456
        %v4291 = vunpack.c.h.b16 %v3456
        %v4292 = vunpack.c.l.b16 %v3457
        %v4293 = vunpack.c.l.b16 %v3458
        %v4294 = vunpack.c.h.b16 %v3458
        %v4295 = vunpack.c.l.b16 %v3459
        %v4296 = vunpack.c.l.b16 %v3460
        %v4297 = vunpack.c.h.b16 %v3460
        %v4298 = vunpack.c.l.b16 %v3461
        %v4299 = vunpack.c.l.b16 %v3462
        %v4300 = vunpack.c.h.b16 %v3462
        %v4301 = vunpack.c.l.b16 %v3463
        %v4302 = vunpack.c.l.b16 %v3464
        %v4303 = vunpack.c.h.b16 %v3464
        %v4304 = vunpack.c.l.b16 %v3465
        %v4305 = vunpack.c.l.b16 %v3466
        %v4306 = vunpack.c.h.b16 %v3466
        %v4307 = vunpack.c.l.b16 %v3467
        %v4308 = vunpack.c.l.b16 %v3468
        %v4309 = vunpack.c.h.b16 %v3468
        %v4310 = vunpack.c.l.b16 %v3469
        %v4311 = vunpack.c.l.b16 %v3470
        %v4312 = vunpack.c.h.b16 %v3470
        %v4313 = vunpack.c.l.b16 %v3471
        %v4314 = vunpack.c.l.b16 %v3472
        %v4315 = vunpack.c.h.b16 %v3472
        %v4316 = vunpack.c.l.b16 %v3473
        %v4317 = vunpack.c.l.b16 %v3474
        %v4318 = vunpack.c.h.b16 %v3474
        %v4319 = vunpack.c.l.b16 %v3475
        %v4320 = vunpack.c.l.b16 %v3476
        %v4321 = vunpack.c.h.b16 %v3476
        %v4322 = vunpack.c.l.b16 %v3477
        %v4323 = vunpack.c.l.b16 %v3478
        %v4324 = vunpack.c.h.b16 %v3478
        %v4325 = vunpack.c.l.b16 %v3479
        %v4326 = vunpack.c.l.b16 %v3480
        %v4327 = vunpack.c.h.b16 %v3480
        %v4328 = vunpack.c.l.b16 %v3481
        %v4329 = vunpack.c.l.b16 %v3482
        %v4330 = vunpack.c.h.b16 %v3482
        %v4331 = vunpack.c.l.b16 %v3483
        %v4332 = vunpack.c.l.b16 %v3484
        %v4333 = vunpack.c.h.b16 %v3484
        %v4334 = vunpack.c.l.b16 %v3485
        %v4335 = vunpack.c.l.b16 %v3486
        %v4336 = vunpack.c.h.b16 %v3486
        %v4337 = vunpack.c.l.b16 %v3487
        %v4338 = vunpack.c.l.b16 %v3488
        %v4339 = vunpack.c.h.b16 %v3488
        %v4340 = vunpack.c.l.b16 %v3489
        %v4341 = vunpack.c.l.b16 %v3490
        %v4342 = vunpack.c.h.b16 %v3490
        %v4343 = vunpack.c.l.b16 %v3491
        %v4344 = vunpack.c.l.b16 %v3492
        %v4345 = vunpack.c.h.b16 %v3492
        %v4346 = vunpack.c.l.b16 %v3493
        %v4347 = vunpack.c.l.b16 %v3494
        %v4348 = vunpack.c.h.b16 %v3494
        %v4349 = vunpack.c.l.b16 %v3495
        %v4350 = vunpack.c.l.b16 %v3496
        %v4351 = vunpack.c.h.b16 %v3496
        %v4352 = vunpack.c.l.b16 %v3497
        %v4353 = vunpack.c.l.b16 %v3498
        %v4354 = vunpack.c.h.b16 %v3498
        %v4355 = vunpack.c.l.b16 %v3499
        %v4356 = vunpack.c.l.b16 %v3500
        %v4357 = vunpack.c.h.b16 %v3500
        %v4358 = vunpack.c.l.b16 %v3501
        %v4359 = vunpack.c.l.b16 %v3502
        %v4360 = vunpack.c.h.b16 %v3502
        %v4361 = vunpack.c.l.b16 %v3503
        %v4362 = vunpack.c.l.b16 %v3504
        %v4363 = vunpack.c.h.b16 %v3504
        %v4364 = vunpack.c.l.b16 %v3505
        %v4365 = vunpack.c.l.b16 %v3506
        %v4366 = vunpack.c.h.b16 %v3506
        %v4367 = vunpack.c.l.b16 %v3507
        %v4368 = vunpack.c.l.b16 %v3508
        %v4369 = vunpack.c.h.b16 %v3508
        %v4370 = vunpack.c.l.b16 %v3509
        %v4371 = vunpack.c.l.b16 %v3510
        %v4372 = vunpack.c.h.b16 %v3510
        %v4373 = vunpack.c.l.b16 %v3511
        %v4374 = vunpack.c.l.b16 %v3512
        %v4375 = vunpack.c.h.b16 %v3512
        %v4376 = vunpack.c.l.b16 %v3513
        %v4377 = vunpack.c.l.b16 %v3514
        %v4378 = vunpack.c.h.b16 %v3514
        %v4379 = vunpack.c.l.b16 %v3515
        %v4380 = vunpack.c.l.b16 %v3516
        %v4381 = vunpack.c.h.b16 %v3516
        %v4382 = vunpack.c.l.b16 %v3517
        %v4383 = vunpack.c.l.b16 %v3518
        %v4384 = vunpack.c.h.b16 %v3518
        %v4385 = vunpack.c.l.b16 %v3519
        %v4386 = vunpack.c.l.b16 %v3520
        %v4387 = vunpack.c.h.b16 %v3520
        %v4388 = vunpack.c.l.b16 %v3521
        %v4389 = vunpack.c.l.b16 %v3522
        %v4390 = vunpack.c.h.b16 %v3522
        %v4391 = vunpack.c.l.b16 %v3523
        %v4392 = vunpack.c.l.b16 %v3524
        %v4393 = vunpack.c.h.b16 %v3524
        %v4394 = vunpack.c.l.b16 %v3525
        %v4395 = vunpack.c.l.b16 %v3526
        %v4396 = vunpack.c.h.b16 %v3526
        %v4397 = vunpack.c.l.b16 %v3527
        %v4398 = vunpack.c.l.b16 %v3528
        %v4399 = vunpack.c.h.b16 %v3528
        %v4400 = vunpack.c.l.b16 %v3529
        %v4401 = vpack.c.b16 %v4260, %v4257
        %v4402 = vpack.c.b16 %v4261, %v4258
        %v4403 = vpack.c.b16 %v4262, %v4259
        %v4404 = vpack.c.b16 %v4266, %v4263
        %v4405 = vpack.c.b16 %v4267, %v4264
        %v4406 = vpack.c.b16 %v4268, %v4265
        %v4407 = vpack.c.b16 %v4272, %v4269
        %v4408 = vpack.c.b16 %v4273, %v4270
        %v4409 = vpack.c.b16 %v4274, %v4271
        %v4410 = vpack.c.b16 %v4278, %v4275
        %v4411 = vpack.c.b16 %v4279, %v4276
        %v4412 = vpack.c.b16 %v4280, %v4277
        %v4413 = vpack.c.b16 %v4284, %v4281
        %v4414 = vpack.c.b16 %v4285, %v4282
        %v4415 = vpack.c.b16 %v4286, %v4283
        %v4416 = vpack.c.b16 %v4290, %v4287
        %v4417 = vpack.c.b16 %v4291, %v4288
        %v4418 = vpack.c.b16 %v4292, %v4289
        %v4419 = vpack.c.b16 %v4296, %v4293
        %v4420 = vpack.c.b16 %v4297, %v4294
        %v4421 = vpack.c.b16 %v4298, %v4295
        %v4422 = vpack.c.b16 %v4302, %v4299
        %v4423 = vpack.c.b16 %v4303, %v4300
        %v4424 = vpack.c.b16 %v4304, %v4301
        %v4425 = vpack.c.b16 %v4308, %v4305
        %v4426 = vpack.c.b16 %v4309, %v4306
        %v4427 = vpack.c.b16 %v4310, %v4307
        %v4428 = vpack.c.b16 %v4314, %v4311
        %v4429 = vpack.c.b16 %v4315, %v4312
        %v4430 = vpack.c.b16 %v4316, %v4313
        %v4431 = vpack.c.b16 %v4320, %v4317
        %v4432 = vpack.c.b16 %v4321, %v4318
        %v4433 = vpack.c.b16 %v4322, %v4319
        %v4434 = vpack.c.b16 %v4326, %v4323
        %v4435 = vpack.c.b16 %v4327, %v4324
        %v4436 = vpack.c.b16 %v4328, %v4325
        %v4437 = vpack.c.b16 %v4332, %v4329
        %v4438 = vpack.c.b16 %v4333, %v4330
        %v4439 = vpack.c.b16 %v4334, %v4331
        %v4440 = vpack.c.b16 %v4338, %v4335
        %v4441 = vpack.c.b16 %v4339, %v4336
        %v4442 = vpack.c.b16 %v4340, %v4337
        %v4443 = vpack.c.b16 %v4344, %v4341
        %v4444 = vpack.c.b16 %v4345, %v4342
        %v4445 = vpack.c.b16 %v4346, %v4343
        %v4446 = vpack.c.b16 %v4350, %v4347
        %v4447 = vpack.c.b16 %v4351, %v4348
        %v4448 = vpack.c.b16 %v4352, %v4349
        %v4449 = vpack.c.b16 %v4356, %v4353
        %v4450 = vpack.c.b16 %v4357, %v4354
        %v4451 = vpack.c.b16 %v4358, %v4355
        %v4452 = vpack.c.b16 %v4362, %v4359
        %v4453 = vpack.c.b16 %v4363, %v4360
        %v4454 = vpack.c.b16 %v4364, %v4361
        %v4455 = vpack.c.b16 %v4368, %v4365
        %v4456 = vpack.c.b16 %v4369, %v4366
        %v4457 = vpack.c.b16 %v4370, %v4367
        %v4458 = vpack.c.b16 %v4374, %v4371
        %v4459 = vpack.c.b16 %v4375, %v4372
        %v4460 = vpack.c.b16 %v4376, %v4373
        %v4461 = vpack.c.b16 %v4380, %v4377
        %v4462 = vpack.c.b16 %v4381, %v4378
        %v4463 = vpack.c.b16 %v4382, %v4379
        %v4464 = vpack.c.b16 %v4386, %v4383
        %v4465 = vpack.c.b16 %v4387, %v4384
        %v4466 = vpack.c.b16 %v4388, %v4385
        %v4467 = vpack.c.b16 %v4392, %v4389
        %v4468 = vpack.c.b16 %v4393, %v4390
        %v4469 = vpack.c.b16 %v4394, %v4391
        %v4470 = vpack.c.b16 %v4398, %v4395
        %v4471 = vpack.c.b16 %v4399, %v4396
        %v4472 = vpack.c.b16 %v4400, %v4397
        %4545 = vmatpush.bf16.msra.mxu0 %v4422
        %4546 = vmatpush.bf16.msra.mxu0 %v4419
        %4547 = vmatpush.bf16.msra.mxu0 %v4416
        %4548 = vmatpush.bf16.msra.mxu0 %v4413
        %4549 = vmatpush.bf16.msra.mxu0 %v4410
        %4550 = vmatpush.bf16.msra.mxu0 %v4407
        %4551 = vmatpush.bf16.msra.mxu0 %v4404
        %4552 = vmatpush.bf16.msra.mxu0 %v4401
        %4553 = vmatmul.bf16.gmra.mxu0 %v3431
        %v4554 = vpop.f32.mrf.mxu0
        %v4555 = vadd.f32 %v4073, %v4554
        %v4556 = vpop.f32.mrf.mxu0
        %v4557 = vadd.f32 %v4075, %v4556
        %4558 = vdwg.mxu0
        %4559 = vmatpush.bf16.msra.mxu0 %v4446
        %4560 = vmatpush.bf16.msra.mxu0 %v4443
        %4561 = vmatpush.bf16.msra.mxu0 %v4440
        %4562 = vmatpush.bf16.msra.mxu0 %v4437
        %4563 = vmatpush.bf16.msra.mxu0 %v4434
        %4564 = vmatpush.bf16.msra.mxu0 %v4431
        %4565 = vmatpush.bf16.msra.mxu0 %v4428
        %4566 = vmatpush.bf16.msra.mxu0 %v4425
        %4567 = vmatmul.bf16.gmra.mxu0 %v3432
        %v4568 = vpop.f32.mrf.mxu0
        %v4569 = vadd.f32 %v4555, %v4568
        %v4570 = vpop.f32.mrf.mxu0
        %v4571 = vadd.f32 %v4557, %v4570
        %4572 = vdwg.mxu0
        %4573 = vmatpush.bf16.msra.mxu0 %v4470
        %4574 = vmatpush.bf16.msra.mxu0 %v4467
        %4575 = vmatpush.bf16.msra.mxu0 %v4464
        %4576 = vmatpush.bf16.msra.mxu0 %v4461
        %4577 = vmatpush.bf16.msra.mxu0 %v4458
        %4578 = vmatpush.bf16.msra.mxu0 %v4455
        %4579 = vmatpush.bf16.msra.mxu0 %v4452
        %4580 = vmatpush.bf16.msra.mxu0 %v4449
        %4581 = vmatmul.bf16.gmra.mxu0 %v3433
        %v4582 = vpop.f32.mrf.mxu0
        %v4583 = vadd.f32 %v4569, %v4582
        %v4584 = vpop.f32.mrf.mxu0
        %v4585 = vadd.f32 %v4571, %v4584
        %4586 = vdwg.mxu0
        %4587 = vmatpush.bf16.msra.mxu0 %v4423
        %4588 = vmatpush.bf16.msra.mxu0 %v4420
        %4589 = vmatpush.bf16.msra.mxu0 %v4417
        %4590 = vmatpush.bf16.msra.mxu0 %v4414
        %4591 = vmatpush.bf16.msra.mxu0 %v4411
        %4592 = vmatpush.bf16.msra.mxu0 %v4408
        %4593 = vmatpush.bf16.msra.mxu0 %v4405
        %4594 = vmatpush.bf16.msra.mxu0 %v4402
        %4595 = vmatmul.bf16.gmra.mxu0 %v3431
        %v4596 = vpop.f32.mrf.mxu0
        %v4597 = vadd.f32 %v4115, %v4596
        %v4598 = vpop.f32.mrf.mxu0
        %v4599 = vadd.f32 %v4117, %v4598
        %4600 = vdwg.mxu0
        %4601 = vmatpush.bf16.msra.mxu0 %v4447
        %4602 = vmatpush.bf16.msra.mxu0 %v4444
        %4603 = vmatpush.bf16.msra.mxu0 %v4441
        %4604 = vmatpush.bf16.msra.mxu0 %v4438
        %4605 = vmatpush.bf16.msra.mxu0 %v4435
        %4606 = vmatpush.bf16.msra.mxu0 %v4432
        %4607 = vmatpush.bf16.msra.mxu0 %v4429
        %4608 = vmatpush.bf16.msra.mxu0 %v4426
        %4609 = vmatmul.bf16.gmra.mxu0 %v3432
        %v4610 = vpop.f32.mrf.mxu0
        %v4611 = vadd.f32 %v4597, %v4610
        %v4612 = vpop.f32.mrf.mxu0
        %v4613 = vadd.f32 %v4599, %v4612
        %4614 = vdwg.mxu0
        %4615 = vmatpush.bf16.msra.mxu0 %v4471
        %4616 = vmatpush.bf16.msra.mxu0 %v4468
        %4617 = vmatpush.bf16.msra.mxu0 %v4465
        %4618 = vmatpush.bf16.msra.mxu0 %v4462
        %4619 = vmatpush.bf16.msra.mxu0 %v4459
        %4620 = vmatpush.bf16.msra.mxu0 %v4456
        %4621 = vmatpush.bf16.msra.mxu0 %v4453
        %4622 = vmatpush.bf16.msra.mxu0 %v4450
        %4623 = vmatmul.bf16.gmra.mxu0 %v3433
        %v4624 = vpop.f32.mrf.mxu0
        %v4625 = vadd.f32 %v4611, %v4624
        %v4626 = vpop.f32.mrf.mxu0
        %v4627 = vadd.f32 %v4613, %v4626
        %4628 = vdwg.mxu0
        %4629 = vmatpush.bf16.msra.mxu0 %v4424
        %4630 = vmatpush.bf16.msra.mxu0 %v4421
        %4631 = vmatpush.bf16.msra.mxu0 %v4418
        %4632 = vmatpush.bf16.msra.mxu0 %v4415
        %4633 = vmatpush.bf16.msra.mxu0 %v4412
        %4634 = vmatpush.bf16.msra.mxu0 %v4409
        %4635 = vmatpush.bf16.msra.mxu0 %v4406
        %4636 = vmatpush.bf16.msra.mxu0 %v4403
        %4637 = vmatmul.bf16.gmra.mxu0 %v3431
        %v4638 = vpop.f32.mrf.mxu0
        %v4639 = vadd.f32 %v4157, %v4638
        %v4640 = vpop.f32.mrf.mxu0
        %v4641 = vadd.f32 %v4159, %v4640
        %4642 = vdwg.mxu0
        %4643 = vmatpush.bf16.msra.mxu0 %v4448
        %4644 = vmatpush.bf16.msra.mxu0 %v4445
        %4645 = vmatpush.bf16.msra.mxu0 %v4442
        %4646 = vmatpush.bf16.msra.mxu0 %v4439
        %4647 = vmatpush.bf16.msra.mxu0 %v4436
        %4648 = vmatpush.bf16.msra.mxu0 %v4433
        %4649 = vmatpush.bf16.msra.mxu0 %v4430
        %4650 = vmatpush.bf16.msra.mxu0 %v4427
        %4651 = vmatmul.bf16.gmra.mxu0 %v3432
        %v4652 = vpop.f32.mrf.mxu0
        %v4653 = vadd.f32 %v4639, %v4652
        %v4654 = vpop.f32.mrf.mxu0
        %v4655 = vadd.f32 %v4641, %v4654
        %4656 = vdwg.mxu0
        %4657 = vmatpush.bf16.msra.mxu0 %v4472
        %4658 = vmatpush.bf16.msra.mxu0 %v4469
        %4659 = vmatpush.bf16.msra.mxu0 %v4466
        %4660 = vmatpush.bf16.msra.mxu0 %v4463
        %4661 = vmatpush.bf16.msra.mxu0 %v4460
        %4662 = vmatpush.bf16.msra.mxu0 %v4457
        %4663 = vmatpush.bf16.msra.mxu0 %v4454
        %4664 = vmatpush.bf16.msra.mxu0 %v4451
        %4665 = vmatmul.bf16.gmra.mxu0 %v3433
        %v4666 = vpop.f32.mrf.mxu0
        %v4667 = vadd.f32 %v4653, %v4666
        %v4668 = vpop.f32.mrf.mxu0
        %v4669 = vadd.f32 %v4655, %v4668
        %4670 = vdwg.mxu0
        %s4671 = scalar_lea.vmem [#allocation14], 1152
        %v4672 = vld [vmem:[%s4671] sm:$0xff]
        %v4673 = vld [vmem:[%s4671 + $0x8] sm:$0xf]
        %v4674 = vld [vmem:[%s4671 + $0xc] sm:$0xff]
        %v4675 = vld [vmem:[%s4671 + $0x14] sm:$0xf]
        %v4676 = vld [vmem:[%s4671 + $0x18] sm:$0xff]
        %v4677 = vld [vmem:[%s4671 + $0x20] sm:$0xf]
        %v4678 = vld [vmem:[%s4671 + $0x24] sm:$0xff]
        %v4679 = vld [vmem:[%s4671 + $0x2c] sm:$0xf]
        %v4680 = vld [vmem:[%s4671 + $0x30] sm:$0xff]
        %v4681 = vld [vmem:[%s4671 + $0x38] sm:$0xf]
        %v4682 = vld [vmem:[%s4671 + $0x3c] sm:$0xff]
        %v4683 = vld [vmem:[%s4671 + $0x44] sm:$0xf]
        %v4684 = vld [vmem:[%s4671 + $0x48] sm:$0xff]
        %v4685 = vld [vmem:[%s4671 + $0x50] sm:$0xf]
        %v4686 = vld [vmem:[%s4671 + $0x54] sm:$0xff]
        %v4687 = vld [vmem:[%s4671 + $0x5c] sm:$0xf]
        %v4688 = vld [vmem:[%s4671 + $0x60] sm:$0xff]
        %v4689 = vld [vmem:[%s4671 + $0x68] sm:$0xf]
        %v4690 = vld [vmem:[%s4671 + $0x6c] sm:$0xff]
        %v4691 = vld [vmem:[%s4671 + $0x74] sm:$0xf]
        %v4692 = vld [vmem:[%s4671 + $0x78] sm:$0xff]
        %v4693 = vld [vmem:[%s4671 + $0x80] sm:$0xf]
        %v4694 = vld [vmem:[%s4671 + $0x84] sm:$0xff]
        %v4695 = vld [vmem:[%s4671 + $0x8c] sm:$0xf]
        %v4696 = vld [vmem:[%s4671 + $0x90] sm:$0xff]
        %v4697 = vld [vmem:[%s4671 + $0x98] sm:$0xf]
        %v4698 = vld [vmem:[%s4671 + $0x9c] sm:$0xff]
        %v4699 = vld [vmem:[%s4671 + $0xa4] sm:$0xf]
        %v4700 = vld [vmem:[%s4671 + $0xa8] sm:$0xff]
        %v4701 = vld [vmem:[%s4671 + $0xb0] sm:$0xf]
        %v4702 = vld [vmem:[%s4671 + $0xb4] sm:$0xff]
        %v4703 = vld [vmem:[%s4671 + $0xbc] sm:$0xf]
        %v4704 = vld [vmem:[%s4671 + $0xc0] sm:$0xff]
        %v4705 = vld [vmem:[%s4671 + $0xc8] sm:$0xf]
        %v4706 = vld [vmem:[%s4671 + $0xcc] sm:$0xff]
        %v4707 = vld [vmem:[%s4671 + $0xd4] sm:$0xf]
        %v4708 = vld [vmem:[%s4671 + $0xd8] sm:$0xff]
        %v4709 = vld [vmem:[%s4671 + $0xe0] sm:$0xf]
        %v4710 = vld [vmem:[%s4671 + $0xe4] sm:$0xff]
        %v4711 = vld [vmem:[%s4671 + $0xec] sm:$0xf]
        %v4712 = vld [vmem:[%s4671 + $0xf0] sm:$0xff]
        %v4713 = vld [vmem:[%s4671 + $0xf8] sm:$0xf]
        %v4714 = vld [vmem:[%s4671 + $0xfc] sm:$0xff]
        %v4715 = vld [vmem:[%s4671 + $0x104] sm:$0xf]
        %v4716 = vld [vmem:[%s4671 + $0x108] sm:$0xff]
        %v4717 = vld [vmem:[%s4671 + $0x110] sm:$0xf]
        %v4718 = vld [vmem:[%s4671 + $0x114] sm:$0xff]
        %v4719 = vld [vmem:[%s4671 + $0x11c] sm:$0xf]
        %v4720 = vld [vmem:[%s4671 + $0x120] sm:$0xff]
        %v4721 = vld [vmem:[%s4671 + $0x128] sm:$0xf]
        %v4722 = vld [vmem:[%s4671 + $0x12c] sm:$0xff]
        %v4723 = vld [vmem:[%s4671 + $0x134] sm:$0xf]
        %v4724 = vld [vmem:[%s4671 + $0x138] sm:$0xff]
        %v4725 = vld [vmem:[%s4671 + $0x140] sm:$0xf]
        %v4726 = vld [vmem:[%s4671 + $0x144] sm:$0xff]
        %v4727 = vld [vmem:[%s4671 + $0x14c] sm:$0xf]
        %v4728 = vld [vmem:[%s4671 + $0x150] sm:$0xff]
        %v4729 = vld [vmem:[%s4671 + $0x158] sm:$0xf]
        %v4730 = vld [vmem:[%s4671 + $0x15c] sm:$0xff]
        %v4731 = vld [vmem:[%s4671 + $0x164] sm:$0xf]
        %v4732 = vld [vmem:[%s4671 + $0x168] sm:$0xff]
        %v4733 = vld [vmem:[%s4671 + $0x170] sm:$0xf]
        %v4734 = vld [vmem:[%s4671 + $0x174] sm:$0xff]
        %v4735 = vld [vmem:[%s4671 + $0x17c] sm:$0xf]
        %v4736 = vld [vmem:[%s4671 + $0x180] sm:$0xff]
        %v4737 = vld [vmem:[%s4671 + $0x188] sm:$0xf]
        %v4738 = vld [vmem:[%s4671 + $0x18c] sm:$0xff]
        %v4739 = vld [vmem:[%s4671 + $0x194] sm:$0xf]
        %v4740 = vld [vmem:[%s4671 + $0x198] sm:$0xff]
        %v4741 = vld [vmem:[%s4671 + $0x1a0] sm:$0xf]
        %v4742 = vld [vmem:[%s4671 + $0x1a4] sm:$0xff]
        %v4743 = vld [vmem:[%s4671 + $0x1ac] sm:$0xf]
        %v4744 = vld [vmem:[%s4671 + $0x1b0] sm:$0xff]
        %v4745 = vld [vmem:[%s4671 + $0x1b8] sm:$0xf]
        %v4746 = vld [vmem:[%s4671 + $0x1bc] sm:$0xff]
        %v4747 = vld [vmem:[%s4671 + $0x1c4] sm:$0xf]
        %v4748 = vld [vmem:[%s4671 + $0x1c8] sm:$0xff]
        %v4749 = vld [vmem:[%s4671 + $0x1d0] sm:$0xf]
        %v4750 = vld [vmem:[%s4671 + $0x1d4] sm:$0xff]
        %v4751 = vld [vmem:[%s4671 + $0x1dc] sm:$0xf]
        %v4752 = vld [vmem:[%s4671 + $0x1e0] sm:$0xff]
        %v4753 = vld [vmem:[%s4671 + $0x1e8] sm:$0xf]
        %v4754 = vld [vmem:[%s4671 + $0x1ec] sm:$0xff]
        %v4755 = vld [vmem:[%s4671 + $0x1f4] sm:$0xf]
        %v4756 = vld [vmem:[%s4671 + $0x1f8] sm:$0xff]
        %v4757 = vld [vmem:[%s4671 + $0x200] sm:$0xf]
        %v4758 = vld [vmem:[%s4671 + $0x204] sm:$0xff]
        %v4759 = vld [vmem:[%s4671 + $0x20c] sm:$0xf]
        %v4760 = vld [vmem:[%s4671 + $0x210] sm:$0xff]
        %v4761 = vld [vmem:[%s4671 + $0x218] sm:$0xf]
        %v4762 = vld [vmem:[%s4671 + $0x21c] sm:$0xff]
        %v4763 = vld [vmem:[%s4671 + $0x224] sm:$0xf]
        %v4764 = vld [vmem:[%s4671 + $0x228] sm:$0xff]
        %v4765 = vld [vmem:[%s4671 + $0x230] sm:$0xf]
        %v4766 = vld [vmem:[%s4671 + $0x234] sm:$0xff]
        %v4767 = vld [vmem:[%s4671 + $0x23c] sm:$0xf]
        %v4771 = vrot.slane %v3431, 1
        %v4772 = vrot.slane %v3432, 1
        %v4773 = vrot.slane %v3433, 1
        %v4873 = vunpack.c.l.b16 %v4672
        %v4874 = vunpack.c.h.b16 %v4672
        %v4875 = vunpack.c.l.b16 %v4673
        %v4876 = vunpack.c.l.b16 %v4674
        %v4877 = vunpack.c.h.b16 %v4674
        %v4878 = vunpack.c.l.b16 %v4675
        %v4879 = vunpack.c.l.b16 %v4676
        %v4880 = vunpack.c.h.b16 %v4676
        %v4881 = vunpack.c.l.b16 %v4677
        %v4882 = vunpack.c.l.b16 %v4678
        %v4883 = vunpack.c.h.b16 %v4678
        %v4884 = vunpack.c.l.b16 %v4679
        %v4885 = vunpack.c.l.b16 %v4680
        %v4886 = vunpack.c.h.b16 %v4680
        %v4887 = vunpack.c.l.b16 %v4681
        %v4888 = vunpack.c.l.b16 %v4682
        %v4889 = vunpack.c.h.b16 %v4682
        %v4890 = vunpack.c.l.b16 %v4683
        %v4891 = vunpack.c.l.b16 %v4684
        %v4892 = vunpack.c.h.b16 %v4684
        %v4893 = vunpack.c.l.b16 %v4685
        %v4894 = vunpack.c.l.b16 %v4686
        %v4895 = vunpack.c.h.b16 %v4686
        %v4896 = vunpack.c.l.b16 %v4687
        %v4897 = vunpack.c.l.b16 %v4688
        %v4898 = vunpack.c.h.b16 %v4688
        %v4899 = vunpack.c.l.b16 %v4689
        %v4900 = vunpack.c.l.b16 %v4690
        %v4901 = vunpack.c.h.b16 %v4690
        %v4902 = vunpack.c.l.b16 %v4691
        %v4903 = vunpack.c.l.b16 %v4692
        %v4904 = vunpack.c.h.b16 %v4692
        %v4905 = vunpack.c.l.b16 %v4693
        %v4906 = vunpack.c.l.b16 %v4694
        %v4907 = vunpack.c.h.b16 %v4694
        %v4908 = vunpack.c.l.b16 %v4695
        %v4909 = vunpack.c.l.b16 %v4696
        %v4910 = vunpack.c.h.b16 %v4696
        %v4911 = vunpack.c.l.b16 %v4697
        %v4912 = vunpack.c.l.b16 %v4698
        %v4913 = vunpack.c.h.b16 %v4698
        %v4914 = vunpack.c.l.b16 %v4699
        %v4915 = vunpack.c.l.b16 %v4700
        %v4916 = vunpack.c.h.b16 %v4700
        %v4917 = vunpack.c.l.b16 %v4701
        %v4918 = vunpack.c.l.b16 %v4702
        %v4919 = vunpack.c.h.b16 %v4702
        %v4920 = vunpack.c.l.b16 %v4703
        %v4921 = vunpack.c.l.b16 %v4704
        %v4922 = vunpack.c.h.b16 %v4704
        %v4923 = vunpack.c.l.b16 %v4705
        %v4924 = vunpack.c.l.b16 %v4706
        %v4925 = vunpack.c.h.b16 %v4706
        %v4926 = vunpack.c.l.b16 %v4707
        %v4927 = vunpack.c.l.b16 %v4708
        %v4928 = vunpack.c.h.b16 %v4708
        %v4929 = vunpack.c.l.b16 %v4709
        %v4930 = vunpack.c.l.b16 %v4710
        %v4931 = vunpack.c.h.b16 %v4710
        %v4932 = vunpack.c.l.b16 %v4711
        %v4933 = vunpack.c.l.b16 %v4712
        %v4934 = vunpack.c.h.b16 %v4712
        %v4935 = vunpack.c.l.b16 %v4713
        %v4936 = vunpack.c.l.b16 %v4714
        %v4937 = vunpack.c.h.b16 %v4714
        %v4938 = vunpack.c.l.b16 %v4715
        %v4939 = vunpack.c.l.b16 %v4716
        %v4940 = vunpack.c.h.b16 %v4716
        %v4941 = vunpack.c.l.b16 %v4717
        %v4942 = vunpack.c.l.b16 %v4718
        %v4943 = vunpack.c.h.b16 %v4718
        %v4944 = vunpack.c.l.b16 %v4719
        %v4945 = vunpack.c.l.b16 %v4720
        %v4946 = vunpack.c.h.b16 %v4720
        %v4947 = vunpack.c.l.b16 %v4721
        %v4948 = vunpack.c.l.b16 %v4722
        %v4949 = vunpack.c.h.b16 %v4722
        %v4950 = vunpack.c.l.b16 %v4723
        %v4951 = vunpack.c.l.b16 %v4724
        %v4952 = vunpack.c.h.b16 %v4724
        %v4953 = vunpack.c.l.b16 %v4725
        %v4954 = vunpack.c.l.b16 %v4726
        %v4955 = vunpack.c.h.b16 %v4726
        %v4956 = vunpack.c.l.b16 %v4727
        %v4957 = vunpack.c.l.b16 %v4728
        %v4958 = vunpack.c.h.b16 %v4728
        %v4959 = vunpack.c.l.b16 %v4729
        %v4960 = vunpack.c.l.b16 %v4730
        %v4961 = vunpack.c.h.b16 %v4730
        %v4962 = vunpack.c.l.b16 %v4731
        %v4963 = vunpack.c.l.b16 %v4732
        %v4964 = vunpack.c.h.b16 %v4732
        %v4965 = vunpack.c.l.b16 %v4733
        %v4966 = vunpack.c.l.b16 %v4734
        %v4967 = vunpack.c.h.b16 %v4734
        %v4968 = vunpack.c.l.b16 %v4735
        %v4969 = vunpack.c.l.b16 %v4736
        %v4970 = vunpack.c.h.b16 %v4736
        %v4971 = vunpack.c.l.b16 %v4737
        %v4972 = vunpack.c.l.b16 %v4738
        %v4973 = vunpack.c.h.b16 %v4738
        %v4974 = vunpack.c.l.b16 %v4739
        %v4975 = vunpack.c.l.b16 %v4740
        %v4976 = vunpack.c.h.b16 %v4740
        %v4977 = vunpack.c.l.b16 %v4741
        %v4978 = vunpack.c.l.b16 %v4742
        %v4979 = vunpack.c.h.b16 %v4742
        %v4980 = vunpack.c.l.b16 %v4743
        %v4981 = vunpack.c.l.b16 %v4744
        %v4982 = vunpack.c.h.b16 %v4744
        %v4983 = vunpack.c.l.b16 %v4745
        %v4984 = vunpack.c.l.b16 %v4746
        %v4985 = vunpack.c.h.b16 %v4746
        %v4986 = vunpack.c.l.b16 %v4747
        %v4987 = vunpack.c.l.b16 %v4748
        %v4988 = vunpack.c.h.b16 %v4748
        %v4989 = vunpack.c.l.b16 %v4749
        %v4990 = vunpack.c.l.b16 %v4750
        %v4991 = vunpack.c.h.b16 %v4750
        %v4992 = vunpack.c.l.b16 %v4751
        %v4993 = vunpack.c.l.b16 %v4752
        %v4994 = vunpack.c.h.b16 %v4752
        %v4995 = vunpack.c.l.b16 %v4753
        %v4996 = vunpack.c.l.b16 %v4754
        %v4997 = vunpack.c.h.b16 %v4754
        %v4998 = vunpack.c.l.b16 %v4755
        %v4999 = vunpack.c.l.b16 %v4756
        %v5000 = vunpack.c.h.b16 %v4756
        %v5001 = vunpack.c.l.b16 %v4757
        %v5002 = vunpack.c.l.b16 %v4758
        %v5003 = vunpack.c.h.b16 %v4758
        %v5004 = vunpack.c.l.b16 %v4759
        %v5005 = vunpack.c.l.b16 %v4760
        %v5006 = vunpack.c.h.b16 %v4760
        %v5007 = vunpack.c.l.b16 %v4761
        %v5008 = vunpack.c.l.b16 %v4762
        %v5009 = vunpack.c.h.b16 %v4762
        %v5010 = vunpack.c.l.b16 %v4763
        %v5011 = vunpack.c.l.b16 %v4764
        %v5012 = vunpack.c.h.b16 %v4764
        %v5013 = vunpack.c.l.b16 %v4765
        %v5014 = vunpack.c.l.b16 %v4766
        %v5015 = vunpack.c.h.b16 %v4766
        %v5016 = vunpack.c.l.b16 %v4767
        %v5017 = vpack.c.b16 %v4876, %v4873
        %v5018 = vpack.c.b16 %v4877, %v4874
        %v5019 = vpack.c.b16 %v4878, %v4875
        %v5020 = vpack.c.b16 %v4882, %v4879
        %v5021 = vpack.c.b16 %v4883, %v4880
        %v5022 = vpack.c.b16 %v4884, %v4881
        %v5023 = vpack.c.b16 %v4888, %v4885
        %v5024 = vpack.c.b16 %v4889, %v4886
        %v5025 = vpack.c.b16 %v4890, %v4887
        %v5026 = vpack.c.b16 %v4894, %v4891
        %v5027 = vpack.c.b16 %v4895, %v4892
        %v5028 = vpack.c.b16 %v4896, %v4893
        %v5029 = vpack.c.b16 %v4900, %v4897
        %v5030 = vpack.c.b16 %v4901, %v4898
        %v5031 = vpack.c.b16 %v4902, %v4899
        %v5032 = vpack.c.b16 %v4906, %v4903
        %v5033 = vpack.c.b16 %v4907, %v4904
        %v5034 = vpack.c.b16 %v4908, %v4905
        %v5035 = vpack.c.b16 %v4912, %v4909
        %v5036 = vpack.c.b16 %v4913, %v4910
        %v5037 = vpack.c.b16 %v4914, %v4911
        %v5038 = vpack.c.b16 %v4918, %v4915
        %v5039 = vpack.c.b16 %v4919, %v4916
        %v5040 = vpack.c.b16 %v4920, %v4917
        %v5041 = vpack.c.b16 %v4924, %v4921
        %v5042 = vpack.c.b16 %v4925, %v4922
        %v5043 = vpack.c.b16 %v4926, %v4923
        %v5044 = vpack.c.b16 %v4930, %v4927
        %v5045 = vpack.c.b16 %v4931, %v4928
        %v5046 = vpack.c.b16 %v4932, %v4929
        %v5047 = vpack.c.b16 %v4936, %v4933
        %v5048 = vpack.c.b16 %v4937, %v4934
        %v5049 = vpack.c.b16 %v4938, %v4935
        %v5050 = vpack.c.b16 %v4942, %v4939
        %v5051 = vpack.c.b16 %v4943, %v4940
        %v5052 = vpack.c.b16 %v4944, %v4941
        %v5053 = vpack.c.b16 %v4948, %v4945
        %v5054 = vpack.c.b16 %v4949, %v4946
        %v5055 = vpack.c.b16 %v4950, %v4947
        %v5056 = vpack.c.b16 %v4954, %v4951
        %v5057 = vpack.c.b16 %v4955, %v4952
        %v5058 = vpack.c.b16 %v4956, %v4953
        %v5059 = vpack.c.b16 %v4960, %v4957
        %v5060 = vpack.c.b16 %v4961, %v4958
        %v5061 = vpack.c.b16 %v4962, %v4959
        %v5062 = vpack.c.b16 %v4966, %v4963
        %v5063 = vpack.c.b16 %v4967, %v4964
        %v5064 = vpack.c.b16 %v4968, %v4965
        %v5065 = vpack.c.b16 %v4972, %v4969
        %v5066 = vpack.c.b16 %v4973, %v4970
        %v5067 = vpack.c.b16 %v4974, %v4971
        %v5068 = vpack.c.b16 %v4978, %v4975
        %v5069 = vpack.c.b16 %v4979, %v4976
        %v5070 = vpack.c.b16 %v4980, %v4977
        %v5071 = vpack.c.b16 %v4984, %v4981
        %v5072 = vpack.c.b16 %v4985, %v4982
        %v5073 = vpack.c.b16 %v4986, %v4983
        %v5074 = vpack.c.b16 %v4990, %v4987
        %v5075 = vpack.c.b16 %v4991, %v4988
        %v5076 = vpack.c.b16 %v4992, %v4989
        %v5077 = vpack.c.b16 %v4996, %v4993
        %v5078 = vpack.c.b16 %v4997, %v4994
        %v5079 = vpack.c.b16 %v4998, %v4995
        %v5080 = vpack.c.b16 %v5002, %v4999
        %v5081 = vpack.c.b16 %v5003, %v5000
        %v5082 = vpack.c.b16 %v5004, %v5001
        %v5083 = vpack.c.b16 %v5008, %v5005
        %v5084 = vpack.c.b16 %v5009, %v5006
        %v5085 = vpack.c.b16 %v5010, %v5007
        %v5086 = vpack.c.b16 %v5014, %v5011
        %v5087 = vpack.c.b16 %v5015, %v5012
        %v5088 = vpack.c.b16 %v5016, %v5013
        %5161 = vmatpush.bf16.msra.mxu0 %v5038
        %5162 = vmatpush.bf16.msra.mxu0 %v5035
        %5163 = vmatpush.bf16.msra.mxu0 %v5032
        %5164 = vmatpush.bf16.msra.mxu0 %v5029
        %5165 = vmatpush.bf16.msra.mxu0 %v5026
        %5166 = vmatpush.bf16.msra.mxu0 %v5023
        %5167 = vmatpush.bf16.msra.mxu0 %v5020
        %5168 = vmatpush.bf16.msra.mxu0 %v5017
        %5169 = vmatmul.bf16.gmra.mxu0 %v4771
        %v5170 = vpop.f32.mrf.mxu0
        %v5171 = vadd.f32 0.0, %v5170
        %v5172 = vpop.f32.mrf.mxu0
        %v5173 = vadd.f32 0.0, %v5172
        %5174 = vdwg.mxu0
        %5175 = vmatpush.bf16.msra.mxu0 %v5062
        %5176 = vmatpush.bf16.msra.mxu0 %v5059
        %5177 = vmatpush.bf16.msra.mxu0 %v5056
        %5178 = vmatpush.bf16.msra.mxu0 %v5053
        %5179 = vmatpush.bf16.msra.mxu0 %v5050
        %5180 = vmatpush.bf16.msra.mxu0 %v5047
        %5181 = vmatpush.bf16.msra.mxu0 %v5044
        %5182 = vmatpush.bf16.msra.mxu0 %v5041
        %5183 = vmatmul.bf16.gmra.mxu0 %v4772
        %v5184 = vpop.f32.mrf.mxu0
        %v5185 = vadd.f32 %v5171, %v5184
        %v5186 = vpop.f32.mrf.mxu0
        %v5187 = vadd.f32 %v5173, %v5186
        %5188 = vdwg.mxu0
        %5189 = vmatpush.bf16.msra.mxu0 %v5086
        %5190 = vmatpush.bf16.msra.mxu0 %v5083
        %5191 = vmatpush.bf16.msra.mxu0 %v5080
        %5192 = vmatpush.bf16.msra.mxu0 %v5077
        %5193 = vmatpush.bf16.msra.mxu0 %v5074
        %5194 = vmatpush.bf16.msra.mxu0 %v5071
        %5195 = vmatpush.bf16.msra.mxu0 %v5068
        %5196 = vmatpush.bf16.msra.mxu0 %v5065
        %5197 = vmatmul.bf16.gmra.mxu0 %v4773
        %v5198 = vpop.f32.mrf.mxu0
        %v5199 = vadd.f32 %v5185, %v5198
        %v5200 = vpop.f32.mrf.mxu0
        %v5201 = vadd.f32 %v5187, %v5200
        %5202 = vdwg.mxu0
        %5203 = vmatpush.bf16.msra.mxu0 %v5039
        %5204 = vmatpush.bf16.msra.mxu0 %v5036
        %5205 = vmatpush.bf16.msra.mxu0 %v5033
        %5206 = vmatpush.bf16.msra.mxu0 %v5030
        %5207 = vmatpush.bf16.msra.mxu0 %v5027
        %5208 = vmatpush.bf16.msra.mxu0 %v5024
        %5209 = vmatpush.bf16.msra.mxu0 %v5021
        %5210 = vmatpush.bf16.msra.mxu0 %v5018
        %5211 = vmatmul.bf16.gmra.mxu0 %v4771
        %v5212 = vpop.f32.mrf.mxu0
        %v5213 = vadd.f32 0.0, %v5212
        %v5214 = vpop.f32.mrf.mxu0
        %v5215 = vadd.f32 0.0, %v5214
        %5216 = vdwg.mxu0
        %5217 = vmatpush.bf16.msra.mxu0 %v5063
        %5218 = vmatpush.bf16.msra.mxu0 %v5060
        %5219 = vmatpush.bf16.msra.mxu0 %v5057
        %5220 = vmatpush.bf16.msra.mxu0 %v5054
        %5221 = vmatpush.bf16.msra.mxu0 %v5051
        %5222 = vmatpush.bf16.msra.mxu0 %v5048
        %5223 = vmatpush.bf16.msra.mxu0 %v5045
        %5224 = vmatpush.bf16.msra.mxu0 %v5042
        %5225 = vmatmul.bf16.gmra.mxu0 %v4772
        %v5226 = vpop.f32.mrf.mxu0
        %v5227 = vadd.f32 %v5213, %v5226
        %v5228 = vpop.f32.mrf.mxu0
        %v5229 = vadd.f32 %v5215, %v5228
        %5230 = vdwg.mxu0
        %5231 = vmatpush.bf16.msra.mxu0 %v5087
        %5232 = vmatpush.bf16.msra.mxu0 %v5084
        %5233 = vmatpush.bf16.msra.mxu0 %v5081
        %5234 = vmatpush.bf16.msra.mxu0 %v5078
        %5235 = vmatpush.bf16.msra.mxu0 %v5075
        %5236 = vmatpush.bf16.msra.mxu0 %v5072
        %5237 = vmatpush.bf16.msra.mxu0 %v5069
        %5238 = vmatpush.bf16.msra.mxu0 %v5066
        %5239 = vmatmul.bf16.gmra.mxu0 %v4773
        %v5240 = vpop.f32.mrf.mxu0
        %v5241 = vadd.f32 %v5227, %v5240
        %v5242 = vpop.f32.mrf.mxu0
        %v5243 = vadd.f32 %v5229, %v5242
        %5244 = vdwg.mxu0
        %5245 = vmatpush.bf16.msra.mxu0 %v5040
        %5246 = vmatpush.bf16.msra.mxu0 %v5037
        %5247 = vmatpush.bf16.msra.mxu0 %v5034
        %5248 = vmatpush.bf16.msra.mxu0 %v5031
        %5249 = vmatpush.bf16.msra.mxu0 %v5028
        %5250 = vmatpush.bf16.msra.mxu0 %v5025
        %5251 = vmatpush.bf16.msra.mxu0 %v5022
        %5252 = vmatpush.bf16.msra.mxu0 %v5019
        %5253 = vmatmul.bf16.gmra.mxu0 %v4771
        %v5254 = vpop.f32.mrf.mxu0
        %v5255 = vadd.f32 0.0, %v5254
        %v5256 = vpop.f32.mrf.mxu0
        %v5257 = vadd.f32 0.0, %v5256
        %5258 = vdwg.mxu0
        %5259 = vmatpush.bf16.msra.mxu0 %v5064
        %5260 = vmatpush.bf16.msra.mxu0 %v5061
        %5261 = vmatpush.bf16.msra.mxu0 %v5058
        %5262 = vmatpush.bf16.msra.mxu0 %v5055
        %5263 = vmatpush.bf16.msra.mxu0 %v5052
        %5264 = vmatpush.bf16.msra.mxu0 %v5049
        %5265 = vmatpush.bf16.msra.mxu0 %v5046
        %5266 = vmatpush.bf16.msra.mxu0 %v5043
        %5267 = vmatmul.bf16.gmra.mxu0 %v4772
        %v5268 = vpop.f32.mrf.mxu0
        %v5269 = vadd.f32 %v5255, %v5268
        %v5270 = vpop.f32.mrf.mxu0
        %v5271 = vadd.f32 %v5257, %v5270
        %5272 = vdwg.mxu0
        %5273 = vmatpush.bf16.msra.mxu0 %v5088
        %5274 = vmatpush.bf16.msra.mxu0 %v5085
        %5275 = vmatpush.bf16.msra.mxu0 %v5082
        %5276 = vmatpush.bf16.msra.mxu0 %v5079
        %5277 = vmatpush.bf16.msra.mxu0 %v5076
        %5278 = vmatpush.bf16.msra.mxu0 %v5073
        %5279 = vmatpush.bf16.msra.mxu0 %v5070
        %5280 = vmatpush.bf16.msra.mxu0 %v5067
        %5281 = vmatmul.bf16.gmra.mxu0 %v4773
        %v5282 = vpop.f32.mrf.mxu0
        %v5283 = vadd.f32 %v5269, %v5282
        %v5284 = vpop.f32.mrf.mxu0
        %v5285 = vadd.f32 %v5271, %v5284
        %5286 = vdwg.mxu0
        %v5287 = vadd.f32 %v4583, %v5199
        %v5288 = vadd.f32 %v4625, %v5241
        %v5289 = vadd.f32 %v4667, %v5283
        %v5290 = vadd.f32 %v4585, %v5201
        %v5291 = vadd.f32 %v4627, %v5243
        %v5292 = vadd.f32 %v4669, %v5285
        %v5293 = vld [vmem:[#allocation16] sm:$0x7]
        %v5295 = vperm.slane %v5293, 0
        %v5296 = vperm.slane %v5293, 1
        %v5297 = vperm.slane %v5293, 2
        %v5301 = vmul.f32 %v5287, %v5295
        %v5302 = vmul.f32 %v5288, %v5296
        %v5303 = vmul.f32 %v5289, %v5297
        %v5304 = vmul.f32 %v5290, %v5295
        %v5305 = vmul.f32 %v5291, %v5296
        %v5306 = vmul.f32 %v5292, %v5297
        %v5307 = vld [vmem:[#allocation17] sm:$0x7]
        %v5309 = vperm.slane %v5307, 0
        %v5310 = vperm.slane %v5307, 1
        %v5311 = vperm.slane %v5307, 2
        %v5315 = vadd.f32 %v5301, %v5309
        %v5316 = vadd.f32 %v5302, %v5310
        %v5317 = vadd.f32 %v5303, %v5311
        %v5318 = vadd.f32 %v5304, %v5309
        %v5319 = vadd.f32 %v5305, %v5310
        %v5320 = vadd.f32 %v5306, %v5311
        %v5321 = vtanh.pop %v5315
        %v5322 = vtanh.pop %v5316
        %v5323 = vtanh.pop %v5317
        %v5324 = vtanh.pop %v5318
        %v5325 = vtanh.pop %v5319
        %v5326 = vtanh.pop %v5320
        %v5327 = vld [vmem:[#allocation20] sm:$0x1]
        %v5328 = vpack.c.bf16 %v5321, %v5321
        %v5329 = vpack.c.bf16 %v5322, %v5322
        %v5330 = vpack.c.bf16 %v5323, %v5323
        %v5331 = vld [vmem:[#allocation19] sm:$0xf]
        %v5332 = vld [vmem:[#allocation19 + $0x4] sm:$0xf]
        %v5333 = vld [vmem:[#allocation19 + $0x8] sm:$0xf]
        %v5334 = vld [vmem:[#allocation19 + $0xc] sm:$0xf]
        %v5335 = vld [vmem:[#allocation19 + $0x10] sm:$0xf]
        %v5336 = vld [vmem:[#allocation19 + $0x14] sm:$0xf]
        %v5337 = vld [vmem:[#allocation19 + $0x18] sm:$0xf]
        %v5338 = vld [vmem:[#allocation19 + $0x1c] sm:$0xf]
        %v5339 = vld [vmem:[#allocation19 + $0x20] sm:$0xf]
        %v5340 = vld [vmem:[#allocation19 + $0x24] sm:$0xf]
        %v5341 = vld [vmem:[#allocation19 + $0x28] sm:$0xf]
        %v5342 = vld [vmem:[#allocation19 + $0x2c] sm:$0xf]
        %v5343 = vld [vmem:[#allocation19 + $0x30] sm:$0xf]
        %v5344 = vld [vmem:[#allocation19 + $0x34] sm:$0xf]
        %v5345 = vld [vmem:[#allocation19 + $0x38] sm:$0xf]
        %v5346 = vld [vmem:[#allocation19 + $0x3c] sm:$0xf]
        %v5347 = vld [vmem:[#allocation19 + $0x40] sm:$0xf]
        %v5348 = vld [vmem:[#allocation19 + $0x44] sm:$0xf]
        %v5349 = vld [vmem:[#allocation19 + $0x48] sm:$0xf]
        %v5350 = vld [vmem:[#allocation19 + $0x4c] sm:$0xf]
        %v5351 = vld [vmem:[#allocation19 + $0x50] sm:$0xf]
        %v5352 = vld [vmem:[#allocation19 + $0x54] sm:$0xf]
        %v5353 = vld [vmem:[#allocation19 + $0x58] sm:$0xf]
        %v5354 = vld [vmem:[#allocation19 + $0x5c] sm:$0xf]
        %v5355 = vld [vmem:[#allocation19 + $0x60] sm:$0xf]
        %v5356 = vld [vmem:[#allocation19 + $0x64] sm:$0xf]
        %v5357 = vld [vmem:[#allocation19 + $0x68] sm:$0xf]
        %v5358 = vld [vmem:[#allocation19 + $0x6c] sm:$0xf]
        %v5359 = vld [vmem:[#allocation19 + $0x70] sm:$0xf]
        %v5360 = vld [vmem:[#allocation19 + $0x74] sm:$0xf]
        %v5361 = vld [vmem:[#allocation19 + $0x78] sm:$0xf]
        %v5362 = vld [vmem:[#allocation19 + $0x7c] sm:$0xf]
        %v5363 = vld [vmem:[#allocation19 + $0x80] sm:$0xf]
        %v5364 = vld [vmem:[#allocation19 + $0x84] sm:$0xf]
        %v5365 = vld [vmem:[#allocation19 + $0x88] sm:$0xf]
        %v5366 = vld [vmem:[#allocation19 + $0x8c] sm:$0xf]
        %v5367 = vld [vmem:[#allocation19 + $0x90] sm:$0xf]
        %v5368 = vld [vmem:[#allocation19 + $0x94] sm:$0xf]
        %v5369 = vld [vmem:[#allocation19 + $0x98] sm:$0xf]
        %v5370 = vld [vmem:[#allocation19 + $0x9c] sm:$0xf]
        %v5371 = vld [vmem:[#allocation19 + $0xa0] sm:$0xf]
        %v5372 = vld [vmem:[#allocation19 + $0xa4] sm:$0xf]
        %v5373 = vld [vmem:[#allocation19 + $0xa8] sm:$0xf]
        %v5374 = vld [vmem:[#allocation19 + $0xac] sm:$0xf]
        %v5375 = vld [vmem:[#allocation19 + $0xb0] sm:$0xf]
        %v5376 = vld [vmem:[#allocation19 + $0xb4] sm:$0xf]
        %v5377 = vld [vmem:[#allocation19 + $0xb8] sm:$0xf]
        %v5378 = vld [vmem:[#allocation19 + $0xbc] sm:$0xf]
        %v5427 = vunpack.c.l.b16 %v5331
        %v5428 = vunpack.c.l.b16 %v5332
        %v5429 = vunpack.c.l.b16 %v5333
        %v5430 = vunpack.c.l.b16 %v5334
        %v5431 = vunpack.c.l.b16 %v5335
        %v5432 = vunpack.c.l.b16 %v5336
        %v5433 = vunpack.c.l.b16 %v5337
        %v5434 = vunpack.c.l.b16 %v5338
        %v5435 = vunpack.c.l.b16 %v5339
        %v5436 = vunpack.c.l.b16 %v5340
        %v5437 = vunpack.c.l.b16 %v5341
        %v5438 = vunpack.c.l.b16 %v5342
        %v5439 = vunpack.c.l.b16 %v5343
        %v5440 = vunpack.c.l.b16 %v5344
        %v5441 = vunpack.c.l.b16 %v5345
        %v5442 = vunpack.c.l.b16 %v5346
        %v5443 = vunpack.c.l.b16 %v5347
        %v5444 = vunpack.c.l.b16 %v5348
        %v5445 = vunpack.c.l.b16 %v5349
        %v5446 = vunpack.c.l.b16 %v5350
        %v5447 = vunpack.c.l.b16 %v5351
        %v5448 = vunpack.c.l.b16 %v5352
        %v5449 = vunpack.c.l.b16 %v5353
        %v5450 = vunpack.c.l.b16 %v5354
        %v5451 = vunpack.c.l.b16 %v5355
        %v5452 = vunpack.c.l.b16 %v5356
        %v5453 = vunpack.c.l.b16 %v5357
        %v5454 = vunpack.c.l.b16 %v5358
        %v5455 = vunpack.c.l.b16 %v5359
        %v5456 = vunpack.c.l.b16 %v5360
        %v5457 = vunpack.c.l.b16 %v5361
        %v5458 = vunpack.c.l.b16 %v5362
        %v5459 = vunpack.c.l.b16 %v5363
        %v5460 = vunpack.c.l.b16 %v5364
        %v5461 = vunpack.c.l.b16 %v5365
        %v5462 = vunpack.c.l.b16 %v5366
        %v5463 = vunpack.c.l.b16 %v5367
        %v5464 = vunpack.c.l.b16 %v5368
        %v5465 = vunpack.c.l.b16 %v5369
        %v5466 = vunpack.c.l.b16 %v5370
        %v5467 = vunpack.c.l.b16 %v5371
        %v5468 = vunpack.c.l.b16 %v5372
        %v5469 = vunpack.c.l.b16 %v5373
        %v5470 = vunpack.c.l.b16 %v5374
        %v5471 = vunpack.c.l.b16 %v5375
        %v5472 = vunpack.c.l.b16 %v5376
        %v5473 = vunpack.c.l.b16 %v5377
        %v5474 = vunpack.c.l.b16 %v5378
        %v5475 = vpack.c.b16 %v5428, %v5427
        %v5476 = vpack.c.b16 %v5430, %v5429
        %v5477 = vpack.c.b16 %v5432, %v5431
        %v5478 = vpack.c.b16 %v5434, %v5433
        %v5479 = vpack.c.b16 %v5436, %v5435
        %v5480 = vpack.c.b16 %v5438, %v5437
        %v5481 = vpack.c.b16 %v5440, %v5439
        %v5482 = vpack.c.b16 %v5442, %v5441
        %v5483 = vpack.c.b16 %v5444, %v5443
        %v5484 = vpack.c.b16 %v5446, %v5445
        %v5485 = vpack.c.b16 %v5448, %v5447
        %v5486 = vpack.c.b16 %v5450, %v5449
        %v5487 = vpack.c.b16 %v5452, %v5451
        %v5488 = vpack.c.b16 %v5454, %v5453
        %v5489 = vpack.c.b16 %v5456, %v5455
        %v5490 = vpack.c.b16 %v5458, %v5457
        %v5491 = vpack.c.b16 %v5460, %v5459
        %v5492 = vpack.c.b16 %v5462, %v5461
        %v5493 = vpack.c.b16 %v5464, %v5463
        %v5494 = vpack.c.b16 %v5466, %v5465
        %v5495 = vpack.c.b16 %v5468, %v5467
        %v5496 = vpack.c.b16 %v5470, %v5469
        %v5497 = vpack.c.b16 %v5472, %v5471
        %v5498 = vpack.c.b16 %v5474, %v5473
        %5523 = vmatpush.bf16.msra.mxu0 %v5482
        %5524 = vmatpush.bf16.msra.mxu0 %v5481
        %5525 = vmatpush.bf16.msra.mxu0 %v5480
        %5526 = vmatpush.bf16.msra.mxu0 %v5479
        %5527 = vmatpush.bf16.msra.mxu0 %v5478
        %5528 = vmatpush.bf16.msra.mxu0 %v5477
        %5529 = vmatpush.bf16.msra.mxu0 %v5476
        %5530 = vmatpush.bf16.msra.mxu0 %v5475
        %5531 = vmatmul.bf16.gmra.mxu0 %v5328
        %v5532 = vpop.f32.mrf.mxu0
        %v5533 = vadd.f32 0.0, %v5532
        %v5534 = vpop.f32.mrf.mxu0
        %5535 = vdwg.mxu0
        %5536 = vmatpush.bf16.msra.mxu0 %v5490
        %5537 = vmatpush.bf16.msra.mxu0 %v5489
        %5538 = vmatpush.bf16.msra.mxu0 %v5488
        %5539 = vmatpush.bf16.msra.mxu0 %v5487
        %5540 = vmatpush.bf16.msra.mxu0 %v5486
        %5541 = vmatpush.bf16.msra.mxu0 %v5485
        %5542 = vmatpush.bf16.msra.mxu0 %v5484
        %5543 = vmatpush.bf16.msra.mxu0 %v5483
        %5544 = vmatmul.bf16.gmra.mxu0 %v5329
        %v5545 = vpop.f32.mrf.mxu0
        %v5546 = vadd.f32 %v5533, %v5545
        %v5547 = vpop.f32.mrf.mxu0
        %5548 = vdwg.mxu0
        %5549 = vmatpush.bf16.msra.mxu0 %v5498
        %5550 = vmatpush.bf16.msra.mxu0 %v5497
        %5551 = vmatpush.bf16.msra.mxu0 %v5496
        %5552 = vmatpush.bf16.msra.mxu0 %v5495
        %5553 = vmatpush.bf16.msra.mxu0 %v5494
        %5554 = vmatpush.bf16.msra.mxu0 %v5493
        %5555 = vmatpush.bf16.msra.mxu0 %v5492
        %5556 = vmatpush.bf16.msra.mxu0 %v5491
        %5557 = vmatmul.bf16.gmra.mxu0 %v5330
        %v5558 = vpop.f32.mrf.mxu0
        %v5559 = vadd.f32 %v5546, %v5558
        %v5560 = vpop.f32.mrf.mxu0
        %5561 = vdwg.mxu0
        %v5562 = vadd.f32 %v5327, %v5559
        %s5563 = scalar_lea.vmem [#allocation19], 192
        %v5564 = vld [vmem:[%s5563] sm:$0xf]
        %v5565 = vld [vmem:[%s5563 + $0x4] sm:$0xf]
        %v5566 = vld [vmem:[%s5563 + $0x8] sm:$0xf]
        %v5567 = vld [vmem:[%s5563 + $0xc] sm:$0xf]
        %v5568 = vld [vmem:[%s5563 + $0x10] sm:$0xf]
        %v5569 = vld [vmem:[%s5563 + $0x14] sm:$0xf]
        %v5570 = vld [vmem:[%s5563 + $0x18] sm:$0xf]
        %v5571 = vld [vmem:[%s5563 + $0x1c] sm:$0xf]
        %v5572 = vld [vmem:[%s5563 + $0x20] sm:$0xf]
        %v5573 = vld [vmem:[%s5563 + $0x24] sm:$0xf]
        %v5574 = vld [vmem:[%s5563 + $0x28] sm:$0xf]
        %v5575 = vld [vmem:[%s5563 + $0x2c] sm:$0xf]
        %v5576 = vld [vmem:[%s5563 + $0x30] sm:$0xf]
        %v5577 = vld [vmem:[%s5563 + $0x34] sm:$0xf]
        %v5578 = vld [vmem:[%s5563 + $0x38] sm:$0xf]
        %v5579 = vld [vmem:[%s5563 + $0x3c] sm:$0xf]
        %v5580 = vld [vmem:[%s5563 + $0x40] sm:$0xf]
        %v5581 = vld [vmem:[%s5563 + $0x44] sm:$0xf]
        %v5582 = vld [vmem:[%s5563 + $0x48] sm:$0xf]
        %v5583 = vld [vmem:[%s5563 + $0x4c] sm:$0xf]
        %v5584 = vld [vmem:[%s5563 + $0x50] sm:$0xf]
        %v5585 = vld [vmem:[%s5563 + $0x54] sm:$0xf]
        %v5586 = vld [vmem:[%s5563 + $0x58] sm:$0xf]
        %v5587 = vld [vmem:[%s5563 + $0x5c] sm:$0xf]
        %v5588 = vld [vmem:[%s5563 + $0x60] sm:$0xf]
        %v5589 = vld [vmem:[%s5563 + $0x64] sm:$0xf]
        %v5590 = vld [vmem:[%s5563 + $0x68] sm:$0xf]
        %v5591 = vld [vmem:[%s5563 + $0x6c] sm:$0xf]
        %v5592 = vld [vmem:[%s5563 + $0x70] sm:$0xf]
        %v5593 = vld [vmem:[%s5563 + $0x74] sm:$0xf]
        %v5594 = vld [vmem:[%s5563 + $0x78] sm:$0xf]
        %v5595 = vld [vmem:[%s5563 + $0x7c] sm:$0xf]
        %v5596 = vld [vmem:[%s5563 + $0x80] sm:$0xf]
        %v5597 = vld [vmem:[%s5563 + $0x84] sm:$0xf]
        %v5598 = vld [vmem:[%s5563 + $0x88] sm:$0xf]
        %v5599 = vld [vmem:[%s5563 + $0x8c] sm:$0xf]
        %v5600 = vld [vmem:[%s5563 + $0x90] sm:$0xf]
        %v5601 = vld [vmem:[%s5563 + $0x94] sm:$0xf]
        %v5602 = vld [vmem:[%s5563 + $0x98] sm:$0xf]
        %v5603 = vld [vmem:[%s5563 + $0x9c] sm:$0xf]
        %v5604 = vld [vmem:[%s5563 + $0xa0] sm:$0xf]
        %v5605 = vld [vmem:[%s5563 + $0xa4] sm:$0xf]
        %v5606 = vld [vmem:[%s5563 + $0xa8] sm:$0xf]
        %v5607 = vld [vmem:[%s5563 + $0xac] sm:$0xf]
        %v5608 = vld [vmem:[%s5563 + $0xb0] sm:$0xf]
        %v5609 = vld [vmem:[%s5563 + $0xb4] sm:$0xf]
        %v5610 = vld [vmem:[%s5563 + $0xb8] sm:$0xf]
        %v5611 = vld [vmem:[%s5563 + $0xbc] sm:$0xf]
        %v5613 = vshrl.u32 %v5328, 16
        %v5616 = vshrl.u32 %v5329, 16
        %v5619 = vshrl.u32 %v5330, 16
        %v5672 = vunpack.c.l.b16 %v5564
        %v5673 = vunpack.c.l.b16 %v5565
        %v5674 = vunpack.c.l.b16 %v5566
        %v5675 = vunpack.c.l.b16 %v5567
        %v5676 = vunpack.c.l.b16 %v5568
        %v5677 = vunpack.c.l.b16 %v5569
        %v5678 = vunpack.c.l.b16 %v5570
        %v5679 = vunpack.c.l.b16 %v5571
        %v5680 = vunpack.c.l.b16 %v5572
        %v5681 = vunpack.c.l.b16 %v5573
        %v5682 = vunpack.c.l.b16 %v5574
        %v5683 = vunpack.c.l.b16 %v5575
        %v5684 = vunpack.c.l.b16 %v5576
        %v5685 = vunpack.c.l.b16 %v5577
        %v5686 = vunpack.c.l.b16 %v5578
        %v5687 = vunpack.c.l.b16 %v5579
        %v5688 = vunpack.c.l.b16 %v5580
        %v5689 = vunpack.c.l.b16 %v5581
        %v5690 = vunpack.c.l.b16 %v5582
        %v5691 = vunpack.c.l.b16 %v5583
        %v5692 = vunpack.c.l.b16 %v5584
        %v5693 = vunpack.c.l.b16 %v5585
        %v5694 = vunpack.c.l.b16 %v5586
        %v5695 = vunpack.c.l.b16 %v5587
        %v5696 = vunpack.c.l.b16 %v5588
        %v5697 = vunpack.c.l.b16 %v5589
        %v5698 = vunpack.c.l.b16 %v5590
        %v5699 = vunpack.c.l.b16 %v5591
        %v5700 = vunpack.c.l.b16 %v5592
        %v5701 = vunpack.c.l.b16 %v5593
        %v5702 = vunpack.c.l.b16 %v5594
        %v5703 = vunpack.c.l.b16 %v5595
        %v5704 = vunpack.c.l.b16 %v5596
        %v5705 = vunpack.c.l.b16 %v5597
        %v5706 = vunpack.c.l.b16 %v5598
        %v5707 = vunpack.c.l.b16 %v5599
        %v5708 = vunpack.c.l.b16 %v5600
        %v5709 = vunpack.c.l.b16 %v5601
        %v5710 = vunpack.c.l.b16 %v5602
        %v5711 = vunpack.c.l.b16 %v5603
        %v5712 = vunpack.c.l.b16 %v5604
        %v5713 = vunpack.c.l.b16 %v5605
        %v5714 = vunpack.c.l.b16 %v5606
        %v5715 = vunpack.c.l.b16 %v5607
        %v5716 = vunpack.c.l.b16 %v5608
        %v5717 = vunpack.c.l.b16 %v5609
        %v5718 = vunpack.c.l.b16 %v5610
        %v5719 = vunpack.c.l.b16 %v5611
        %v5720 = vpack.c.b16 %v5673, %v5672
        %v5721 = vpack.c.b16 %v5675, %v5674
        %v5722 = vpack.c.b16 %v5677, %v5676
        %v5723 = vpack.c.b16 %v5679, %v5678
        %v5724 = vpack.c.b16 %v5681, %v5680
        %v5725 = vpack.c.b16 %v5683, %v5682
        %v5726 = vpack.c.b16 %v5685, %v5684
        %v5727 = vpack.c.b16 %v5687, %v5686
        %v5728 = vpack.c.b16 %v5689, %v5688
        %v5729 = vpack.c.b16 %v5691, %v5690
        %v5730 = vpack.c.b16 %v5693, %v5692
        %v5731 = vpack.c.b16 %v5695, %v5694
        %v5732 = vpack.c.b16 %v5697, %v5696
        %v5733 = vpack.c.b16 %v5699, %v5698
        %v5734 = vpack.c.b16 %v5701, %v5700
        %v5735 = vpack.c.b16 %v5703, %v5702
        %v5736 = vpack.c.b16 %v5705, %v5704
        %v5737 = vpack.c.b16 %v5707, %v5706
        %v5738 = vpack.c.b16 %v5709, %v5708
        %v5739 = vpack.c.b16 %v5711, %v5710
        %v5740 = vpack.c.b16 %v5713, %v5712
        %v5741 = vpack.c.b16 %v5715, %v5714
        %v5742 = vpack.c.b16 %v5717, %v5716
        %v5743 = vpack.c.b16 %v5719, %v5718
        %5768 = vmatpush.bf16.msra.mxu0 %v5727
        %5769 = vmatpush.bf16.msra.mxu0 %v5726
        %5770 = vmatpush.bf16.msra.mxu0 %v5725
        %5771 = vmatpush.bf16.msra.mxu0 %v5724
        %5772 = vmatpush.bf16.msra.mxu0 %v5723
        %5773 = vmatpush.bf16.msra.mxu0 %v5722
        %5774 = vmatpush.bf16.msra.mxu0 %v5721
        %5775 = vmatpush.bf16.msra.mxu0 %v5720
        %5776 = vmatmul.bf16.gmra.mxu0 %v5613
        %v5777 = vpop.f32.mrf.mxu0
        %v5778 = vadd.f32 0.0, %v5777
        %v5779 = vpop.f32.mrf.mxu0
        %5780 = vdwg.mxu0
        %5781 = vmatpush.bf16.msra.mxu0 %v5735
        %5782 = vmatpush.bf16.msra.mxu0 %v5734
        %5783 = vmatpush.bf16.msra.mxu0 %v5733
        %5784 = vmatpush.bf16.msra.mxu0 %v5732
        %5785 = vmatpush.bf16.msra.mxu0 %v5731
        %5786 = vmatpush.bf16.msra.mxu0 %v5730
        %5787 = vmatpush.bf16.msra.mxu0 %v5729
        %5788 = vmatpush.bf16.msra.mxu0 %v5728
        %5789 = vmatmul.bf16.gmra.mxu0 %v5616
        %v5790 = vpop.f32.mrf.mxu0
        %v5791 = vadd.f32 %v5778, %v5790
        %v5792 = vpop.f32.mrf.mxu0
        %5793 = vdwg.mxu0
        %5794 = vmatpush.bf16.msra.mxu0 %v5743
        %5795 = vmatpush.bf16.msra.mxu0 %v5742
        %5796 = vmatpush.bf16.msra.mxu0 %v5741
        %5797 = vmatpush.bf16.msra.mxu0 %v5740
        %5798 = vmatpush.bf16.msra.mxu0 %v5739
        %5799 = vmatpush.bf16.msra.mxu0 %v5738
        %5800 = vmatpush.bf16.msra.mxu0 %v5737
        %5801 = vmatpush.bf16.msra.mxu0 %v5736
        %5802 = vmatmul.bf16.gmra.mxu0 %v5619
        %v5803 = vpop.f32.mrf.mxu0
        %v5804 = vadd.f32 %v5791, %v5803
        %v5805 = vpop.f32.mrf.mxu0
        %5806 = vdwg.mxu0
        %v5807 = vadd.f32 %v5562, %v5804
        %s5808 = scalar_lea.vmem [#allocation19], 384
        %v5809 = vld [vmem:[%s5808] sm:$0xf]
        %v5810 = vld [vmem:[%s5808 + $0x4] sm:$0xf]
        %v5811 = vld [vmem:[%s5808 + $0x8] sm:$0xf]
        %v5812 = vld [vmem:[%s5808 + $0xc] sm:$0xf]
        %v5813 = vld [vmem:[%s5808 + $0x10] sm:$0xf]
        %v5814 = vld [vmem:[%s5808 + $0x14] sm:$0xf]
        %v5815 = vld [vmem:[%s5808 + $0x18] sm:$0xf]
        %v5816 = vld [vmem:[%s5808 + $0x1c] sm:$0xf]
        %v5817 = vld [vmem:[%s5808 + $0x20] sm:$0xf]
        %v5818 = vld [vmem:[%s5808 + $0x24] sm:$0xf]
        %v5819 = vld [vmem:[%s5808 + $0x28] sm:$0xf]
        %v5820 = vld [vmem:[%s5808 + $0x2c] sm:$0xf]
        %v5821 = vld [vmem:[%s5808 + $0x30] sm:$0xf]
        %v5822 = vld [vmem:[%s5808 + $0x34] sm:$0xf]
        %v5823 = vld [vmem:[%s5808 + $0x38] sm:$0xf]
        %v5824 = vld [vmem:[%s5808 + $0x3c] sm:$0xf]
        %v5825 = vld [vmem:[%s5808 + $0x40] sm:$0xf]
        %v5826 = vld [vmem:[%s5808 + $0x44] sm:$0xf]
        %v5827 = vld [vmem:[%s5808 + $0x48] sm:$0xf]
        %v5828 = vld [vmem:[%s5808 + $0x4c] sm:$0xf]
        %v5829 = vld [vmem:[%s5808 + $0x50] sm:$0xf]
        %v5830 = vld [vmem:[%s5808 + $0x54] sm:$0xf]
        %v5831 = vld [vmem:[%s5808 + $0x58] sm:$0xf]
        %v5832 = vld [vmem:[%s5808 + $0x5c] sm:$0xf]
        %v5833 = vld [vmem:[%s5808 + $0x60] sm:$0xf]
        %v5834 = vld [vmem:[%s5808 + $0x64] sm:$0xf]
        %v5835 = vld [vmem:[%s5808 + $0x68] sm:$0xf]
        %v5836 = vld [vmem:[%s5808 + $0x6c] sm:$0xf]
        %v5837 = vld [vmem:[%s5808 + $0x70] sm:$0xf]
        %v5838 = vld [vmem:[%s5808 + $0x74] sm:$0xf]
        %v5839 = vld [vmem:[%s5808 + $0x78] sm:$0xf]
        %v5840 = vld [vmem:[%s5808 + $0x7c] sm:$0xf]
        %v5841 = vld [vmem:[%s5808 + $0x80] sm:$0xf]
        %v5842 = vld [vmem:[%s5808 + $0x84] sm:$0xf]
        %v5843 = vld [vmem:[%s5808 + $0x88] sm:$0xf]
        %v5844 = vld [vmem:[%s5808 + $0x8c] sm:$0xf]
        %v5845 = vld [vmem:[%s5808 + $0x90] sm:$0xf]
        %v5846 = vld [vmem:[%s5808 + $0x94] sm:$0xf]
        %v5847 = vld [vmem:[%s5808 + $0x98] sm:$0xf]
        %v5848 = vld [vmem:[%s5808 + $0x9c] sm:$0xf]
        %v5849 = vld [vmem:[%s5808 + $0xa0] sm:$0xf]
        %v5850 = vld [vmem:[%s5808 + $0xa4] sm:$0xf]
        %v5851 = vld [vmem:[%s5808 + $0xa8] sm:$0xf]
        %v5852 = vld [vmem:[%s5808 + $0xac] sm:$0xf]
        %v5853 = vld [vmem:[%s5808 + $0xb0] sm:$0xf]
        %v5854 = vld [vmem:[%s5808 + $0xb4] sm:$0xf]
        %v5855 = vld [vmem:[%s5808 + $0xb8] sm:$0xf]
        %v5856 = vld [vmem:[%s5808 + $0xbc] sm:$0xf]
        %v5860 = vrot.slane %v5328, 1
        %v5861 = vrot.slane %v5329, 1
        %v5862 = vrot.slane %v5330, 1
        %v5914 = vunpack.c.l.b16 %v5809
        %v5915 = vunpack.c.l.b16 %v5810
        %v5916 = vunpack.c.l.b16 %v5811
        %v5917 = vunpack.c.l.b16 %v5812
        %v5918 = vunpack.c.l.b16 %v5813
        %v5919 = vunpack.c.l.b16 %v5814
        %v5920 = vunpack.c.l.b16 %v5815
        %v5921 = vunpack.c.l.b16 %v5816
        %v5922 = vunpack.c.l.b16 %v5817
        %v5923 = vunpack.c.l.b16 %v5818
        %v5924 = vunpack.c.l.b16 %v5819
        %v5925 = vunpack.c.l.b16 %v5820
        %v5926 = vunpack.c.l.b16 %v5821
        %v5927 = vunpack.c.l.b16 %v5822
        %v5928 = vunpack.c.l.b16 %v5823
        %v5929 = vunpack.c.l.b16 %v5824
        %v5930 = vunpack.c.l.b16 %v5825
        %v5931 = vunpack.c.l.b16 %v5826
        %v5932 = vunpack.c.l.b16 %v5827
        %v5933 = vunpack.c.l.b16 %v5828
        %v5934 = vunpack.c.l.b16 %v5829
        %v5935 = vunpack.c.l.b16 %v5830
        %v5936 = vunpack.c.l.b16 %v5831
        %v5937 = vunpack.c.l.b16 %v5832
        %v5938 = vunpack.c.l.b16 %v5833
        %v5939 = vunpack.c.l.b16 %v5834
        %v5940 = vunpack.c.l.b16 %v5835
        %v5941 = vunpack.c.l.b16 %v5836
        %v5942 = vunpack.c.l.b16 %v5837
        %v5943 = vunpack.c.l.b16 %v5838
        %v5944 = vunpack.c.l.b16 %v5839
        %v5945 = vunpack.c.l.b16 %v5840
        %v5946 = vunpack.c.l.b16 %v5841
        %v5947 = vunpack.c.l.b16 %v5842
        %v5948 = vunpack.c.l.b16 %v5843
        %v5949 = vunpack.c.l.b16 %v5844
        %v5950 = vunpack.c.l.b16 %v5845
        %v5951 = vunpack.c.l.b16 %v5846
        %v5952 = vunpack.c.l.b16 %v5847
        %v5953 = vunpack.c.l.b16 %v5848
        %v5954 = vunpack.c.l.b16 %v5849
        %v5955 = vunpack.c.l.b16 %v5850
        %v5956 = vunpack.c.l.b16 %v5851
        %v5957 = vunpack.c.l.b16 %v5852
        %v5958 = vunpack.c.l.b16 %v5853
        %v5959 = vunpack.c.l.b16 %v5854
        %v5960 = vunpack.c.l.b16 %v5855
        %v5961 = vunpack.c.l.b16 %v5856
        %v5962 = vpack.c.b16 %v5915, %v5914
        %v5963 = vpack.c.b16 %v5917, %v5916
        %v5964 = vpack.c.b16 %v5919, %v5918
        %v5965 = vpack.c.b16 %v5921, %v5920
        %v5966 = vpack.c.b16 %v5923, %v5922
        %v5967 = vpack.c.b16 %v5925, %v5924
        %v5968 = vpack.c.b16 %v5927, %v5926
        %v5969 = vpack.c.b16 %v5929, %v5928
        %v5970 = vpack.c.b16 %v5931, %v5930
        %v5971 = vpack.c.b16 %v5933, %v5932
        %v5972 = vpack.c.b16 %v5935, %v5934
        %v5973 = vpack.c.b16 %v5937, %v5936
        %v5974 = vpack.c.b16 %v5939, %v5938
        %v5975 = vpack.c.b16 %v5941, %v5940
        %v5976 = vpack.c.b16 %v5943, %v5942
        %v5977 = vpack.c.b16 %v5945, %v5944
        %v5978 = vpack.c.b16 %v5947, %v5946
        %v5979 = vpack.c.b16 %v5949, %v5948
        %v5980 = vpack.c.b16 %v5951, %v5950
        %v5981 = vpack.c.b16 %v5953, %v5952
        %v5982 = vpack.c.b16 %v5955, %v5954
        %v5983 = vpack.c.b16 %v5957, %v5956
        %v5984 = vpack.c.b16 %v5959, %v5958
        %v5985 = vpack.c.b16 %v5961, %v5960
        %6010 = vmatpush.bf16.msra.mxu0 %v5969
        %6011 = vmatpush.bf16.msra.mxu0 %v5968
        %6012 = vmatpush.bf16.msra.mxu0 %v5967
        %6013 = vmatpush.bf16.msra.mxu0 %v5966
        %6014 = vmatpush.bf16.msra.mxu0 %v5965
        %6015 = vmatpush.bf16.msra.mxu0 %v5964
        %6016 = vmatpush.bf16.msra.mxu0 %v5963
        %6017 = vmatpush.bf16.msra.mxu0 %v5962
        %6018 = vmatmul.bf16.gmra.mxu0 %v5860
        %v6019 = vpop.f32.mrf.mxu0
        %v6020 = vadd.f32 0.0, %v6019
        %v6021 = vpop.f32.mrf.mxu0
        %6022 = vdwg.mxu0
        %6023 = vmatpush.bf16.msra.mxu0 %v5977
        %6024 = vmatpush.bf16.msra.mxu0 %v5976
        %6025 = vmatpush.bf16.msra.mxu0 %v5975
        %6026 = vmatpush.bf16.msra.mxu0 %v5974
        %6027 = vmatpush.bf16.msra.mxu0 %v5973
        %6028 = vmatpush.bf16.msra.mxu0 %v5972
        %6029 = vmatpush.bf16.msra.mxu0 %v5971
        %6030 = vmatpush.bf16.msra.mxu0 %v5970
        %6031 = vmatmul.bf16.gmra.mxu0 %v5861
        %v6032 = vpop.f32.mrf.mxu0
        %v6033 = vadd.f32 %v6020, %v6032
        %v6034 = vpop.f32.mrf.mxu0
        %6035 = vdwg.mxu0
        %6036 = vmatpush.bf16.msra.mxu0 %v5985
        %6037 = vmatpush.bf16.msra.mxu0 %v5984
        %6038 = vmatpush.bf16.msra.mxu0 %v5983
        %6039 = vmatpush.bf16.msra.mxu0 %v5982
        %6040 = vmatpush.bf16.msra.mxu0 %v5981
        %6041 = vmatpush.bf16.msra.mxu0 %v5980
        %6042 = vmatpush.bf16.msra.mxu0 %v5979
        %6043 = vmatpush.bf16.msra.mxu0 %v5978
        %6044 = vmatmul.bf16.gmra.mxu0 %v5862
        %v6045 = vpop.f32.mrf.mxu0
        %v6046 = vadd.f32 %v6033, %v6045
        %v6047 = vpop.f32.mrf.mxu0
        %6048 = vdwg.mxu0
        %v6049 = vadd.f32 %v5807, %v6046
        %s6050 = scalar_lea.vmem [#allocation19], 576
        %v6051 = vld [vmem:[%s6050] sm:$0xf]
        %v6052 = vld [vmem:[%s6050 + $0x4] sm:$0xf]
        %v6053 = vld [vmem:[%s6050 + $0x8] sm:$0xf]
        %v6054 = vld [vmem:[%s6050 + $0xc] sm:$0xf]
        %v6055 = vld [vmem:[%s6050 + $0x10] sm:$0xf]
        %v6056 = vld [vmem:[%s6050 + $0x14] sm:$0xf]
        %v6057 = vld [vmem:[%s6050 + $0x18] sm:$0xf]
        %v6058 = vld [vmem:[%s6050 + $0x1c] sm:$0xf]
        %v6059 = vld [vmem:[%s6050 + $0x20] sm:$0xf]
        %v6060 = vld [vmem:[%s6050 + $0x24] sm:$0xf]
        %v6061 = vld [vmem:[%s6050 + $0x28] sm:$0xf]
        %v6062 = vld [vmem:[%s6050 + $0x2c] sm:$0xf]
        %v6063 = vld [vmem:[%s6050 + $0x30] sm:$0xf]
        %v6064 = vld [vmem:[%s6050 + $0x34] sm:$0xf]
        %v6065 = vld [vmem:[%s6050 + $0x38] sm:$0xf]
        %v6066 = vld [vmem:[%s6050 + $0x3c] sm:$0xf]
        %v6067 = vld [vmem:[%s6050 + $0x40] sm:$0xf]
        %v6068 = vld [vmem:[%s6050 + $0x44] sm:$0xf]
        %v6069 = vld [vmem:[%s6050 + $0x48] sm:$0xf]
        %v6070 = vld [vmem:[%s6050 + $0x4c] sm:$0xf]
        %v6071 = vld [vmem:[%s6050 + $0x50] sm:$0xf]
        %v6072 = vld [vmem:[%s6050 + $0x54] sm:$0xf]
        %v6073 = vld [vmem:[%s6050 + $0x58] sm:$0xf]
        %v6074 = vld [vmem:[%s6050 + $0x5c] sm:$0xf]
        %v6075 = vld [vmem:[%s6050 + $0x60] sm:$0xf]
        %v6076 = vld [vmem:[%s6050 + $0x64] sm:$0xf]
        %v6077 = vld [vmem:[%s6050 + $0x68] sm:$0xf]
        %v6078 = vld [vmem:[%s6050 + $0x6c] sm:$0xf]
        %v6079 = vld [vmem:[%s6050 + $0x70] sm:$0xf]
        %v6080 = vld [vmem:[%s6050 + $0x74] sm:$0xf]
        %v6081 = vld [vmem:[%s6050 + $0x78] sm:$0xf]
        %v6082 = vld [vmem:[%s6050 + $0x7c] sm:$0xf]
        %v6083 = vld [vmem:[%s6050 + $0x80] sm:$0xf]
        %v6084 = vld [vmem:[%s6050 + $0x84] sm:$0xf]
        %v6085 = vld [vmem:[%s6050 + $0x88] sm:$0xf]
        %v6086 = vld [vmem:[%s6050 + $0x8c] sm:$0xf]
        %v6087 = vld [vmem:[%s6050 + $0x90] sm:$0xf]
        %v6088 = vld [vmem:[%s6050 + $0x94] sm:$0xf]
        %v6089 = vld [vmem:[%s6050 + $0x98] sm:$0xf]
        %v6090 = vld [vmem:[%s6050 + $0x9c] sm:$0xf]
        %v6091 = vld [vmem:[%s6050 + $0xa0] sm:$0xf]
        %v6092 = vld [vmem:[%s6050 + $0xa4] sm:$0xf]
        %v6093 = vld [vmem:[%s6050 + $0xa8] sm:$0xf]
        %v6094 = vld [vmem:[%s6050 + $0xac] sm:$0xf]
        %v6095 = vld [vmem:[%s6050 + $0xb0] sm:$0xf]
        %v6096 = vld [vmem:[%s6050 + $0xb4] sm:$0xf]
        %v6097 = vld [vmem:[%s6050 + $0xb8] sm:$0xf]
        %v6098 = vld [vmem:[%s6050 + $0xbc] sm:$0xf]
        %v6099 = vrot.slane %v5613, 1
        %v6100 = vrot.slane %v5616, 1
        %v6101 = vrot.slane %v5619, 1
        %v6153 = vunpack.c.l.b16 %v6051
        %v6154 = vunpack.c.l.b16 %v6052
        %v6155 = vunpack.c.l.b16 %v6053
        %v6156 = vunpack.c.l.b16 %v6054
        %v6157 = vunpack.c.l.b16 %v6055
        %v6158 = vunpack.c.l.b16 %v6056
        %v6159 = vunpack.c.l.b16 %v6057
        %v6160 = vunpack.c.l.b16 %v6058
        %v6161 = vunpack.c.l.b16 %v6059
        %v6162 = vunpack.c.l.b16 %v6060
        %v6163 = vunpack.c.l.b16 %v6061
        %v6164 = vunpack.c.l.b16 %v6062
        %v6165 = vunpack.c.l.b16 %v6063
        %v6166 = vunpack.c.l.b16 %v6064
        %v6167 = vunpack.c.l.b16 %v6065
        %v6168 = vunpack.c.l.b16 %v6066
        %v6169 = vunpack.c.l.b16 %v6067
        %v6170 = vunpack.c.l.b16 %v6068
        %v6171 = vunpack.c.l.b16 %v6069
        %v6172 = vunpack.c.l.b16 %v6070
        %v6173 = vunpack.c.l.b16 %v6071
        %v6174 = vunpack.c.l.b16 %v6072
        %v6175 = vunpack.c.l.b16 %v6073
        %v6176 = vunpack.c.l.b16 %v6074
        %v6177 = vunpack.c.l.b16 %v6075
        %v6178 = vunpack.c.l.b16 %v6076
        %v6179 = vunpack.c.l.b16 %v6077
        %v6180 = vunpack.c.l.b16 %v6078
        %v6181 = vunpack.c.l.b16 %v6079
        %v6182 = vunpack.c.l.b16 %v6080
        %v6183 = vunpack.c.l.b16 %v6081
        %v6184 = vunpack.c.l.b16 %v6082
        %v6185 = vunpack.c.l.b16 %v6083
        %v6186 = vunpack.c.l.b16 %v6084
        %v6187 = vunpack.c.l.b16 %v6085
        %v6188 = vunpack.c.l.b16 %v6086
        %v6189 = vunpack.c.l.b16 %v6087
        %v6190 = vunpack.c.l.b16 %v6088
        %v6191 = vunpack.c.l.b16 %v6089
        %v6192 = vunpack.c.l.b16 %v6090
        %v6193 = vunpack.c.l.b16 %v6091
        %v6194 = vunpack.c.l.b16 %v6092
        %v6195 = vunpack.c.l.b16 %v6093
        %v6196 = vunpack.c.l.b16 %v6094
        %v6197 = vunpack.c.l.b16 %v6095
        %v6198 = vunpack.c.l.b16 %v6096
        %v6199 = vunpack.c.l.b16 %v6097
        %v6200 = vunpack.c.l.b16 %v6098
        %v6201 = vpack.c.b16 %v6154, %v6153
        %v6202 = vpack.c.b16 %v6156, %v6155
        %v6203 = vpack.c.b16 %v6158, %v6157
        %v6204 = vpack.c.b16 %v6160, %v6159
        %v6205 = vpack.c.b16 %v6162, %v6161
        %v6206 = vpack.c.b16 %v6164, %v6163
        %v6207 = vpack.c.b16 %v6166, %v6165
        %v6208 = vpack.c.b16 %v6168, %v6167
        %v6209 = vpack.c.b16 %v6170, %v6169
        %v6210 = vpack.c.b16 %v6172, %v6171
        %v6211 = vpack.c.b16 %v6174, %v6173
        %v6212 = vpack.c.b16 %v6176, %v6175
        %v6213 = vpack.c.b16 %v6178, %v6177
        %v6214 = vpack.c.b16 %v6180, %v6179
        %v6215 = vpack.c.b16 %v6182, %v6181
        %v6216 = vpack.c.b16 %v6184, %v6183
        %v6217 = vpack.c.b16 %v6186, %v6185
        %v6218 = vpack.c.b16 %v6188, %v6187
        %v6219 = vpack.c.b16 %v6190, %v6189
        %v6220 = vpack.c.b16 %v6192, %v6191
        %v6221 = vpack.c.b16 %v6194, %v6193
        %v6222 = vpack.c.b16 %v6196, %v6195
        %v6223 = vpack.c.b16 %v6198, %v6197
        %v6224 = vpack.c.b16 %v6200, %v6199
        %6249 = vmatpush.bf16.msra.mxu0 %v6208
        %6250 = vmatpush.bf16.msra.mxu0 %v6207
        %6251 = vmatpush.bf16.msra.mxu0 %v6206
        %6252 = vmatpush.bf16.msra.mxu0 %v6205
        %6253 = vmatpush.bf16.msra.mxu0 %v6204
        %6254 = vmatpush.bf16.msra.mxu0 %v6203
        %6255 = vmatpush.bf16.msra.mxu0 %v6202
        %6256 = vmatpush.bf16.msra.mxu0 %v6201
        %6257 = vmatmul.bf16.gmra.mxu0 %v6099
        %v6258 = vpop.f32.mrf.mxu0
        %v6259 = vadd.f32 0.0, %v6258
        %v6260 = vpop.f32.mrf.mxu0
        %6261 = vdwg.mxu0
        %6262 = vmatpush.bf16.msra.mxu0 %v6216
        %6263 = vmatpush.bf16.msra.mxu0 %v6215
        %6264 = vmatpush.bf16.msra.mxu0 %v6214
        %6265 = vmatpush.bf16.msra.mxu0 %v6213
        %6266 = vmatpush.bf16.msra.mxu0 %v6212
        %6267 = vmatpush.bf16.msra.mxu0 %v6211
        %6268 = vmatpush.bf16.msra.mxu0 %v6210
        %6269 = vmatpush.bf16.msra.mxu0 %v6209
        %6270 = vmatmul.bf16.gmra.mxu0 %v6100
        %v6271 = vpop.f32.mrf.mxu0
        %v6272 = vadd.f32 %v6259, %v6271
        %v6273 = vpop.f32.mrf.mxu0
        %6274 = vdwg.mxu0
        %6275 = vmatpush.bf16.msra.mxu0 %v6224
        %6276 = vmatpush.bf16.msra.mxu0 %v6223
        %6277 = vmatpush.bf16.msra.mxu0 %v6222
        %6278 = vmatpush.bf16.msra.mxu0 %v6221
        %6279 = vmatpush.bf16.msra.mxu0 %v6220
        %6280 = vmatpush.bf16.msra.mxu0 %v6219
        %6281 = vmatpush.bf16.msra.mxu0 %v6218
        %6282 = vmatpush.bf16.msra.mxu0 %v6217
        %6283 = vmatmul.bf16.gmra.mxu0 %v6101
        %v6284 = vpop.f32.mrf.mxu0
        %v6285 = vadd.f32 %v6272, %v6284
        %v6286 = vpop.f32.mrf.mxu0
        %6287 = vdwg.mxu0
        %v6288 = vadd.f32 %v6049, %v6285
        %s6289 = scalar_lea.vmem [#allocation19], 768
        %v6290 = vld [vmem:[%s6289] sm:$0xf]
        %v6291 = vld [vmem:[%s6289 + $0x4] sm:$0xf]
        %v6292 = vld [vmem:[%s6289 + $0x8] sm:$0xf]
        %v6293 = vld [vmem:[%s6289 + $0xc] sm:$0xf]
        %v6294 = vld [vmem:[%s6289 + $0x10] sm:$0xf]
        %v6295 = vld [vmem:[%s6289 + $0x14] sm:$0xf]
        %v6296 = vld [vmem:[%s6289 + $0x18] sm:$0xf]
        %v6297 = vld [vmem:[%s6289 + $0x1c] sm:$0xf]
        %v6298 = vld [vmem:[%s6289 + $0x20] sm:$0xf]
        %v6299 = vld [vmem:[%s6289 + $0x24] sm:$0xf]
        %v6300 = vld [vmem:[%s6289 + $0x28] sm:$0xf]
        %v6301 = vld [vmem:[%s6289 + $0x2c] sm:$0xf]
        %v6302 = vld [vmem:[%s6289 + $0x30] sm:$0xf]
        %v6303 = vld [vmem:[%s6289 + $0x34] sm:$0xf]
        %v6304 = vld [vmem:[%s6289 + $0x38] sm:$0xf]
        %v6305 = vld [vmem:[%s6289 + $0x3c] sm:$0xf]
        %v6306 = vld [vmem:[%s6289 + $0x40] sm:$0xf]
        %v6307 = vld [vmem:[%s6289 + $0x44] sm:$0xf]
        %v6308 = vld [vmem:[%s6289 + $0x48] sm:$0xf]
        %v6309 = vld [vmem:[%s6289 + $0x4c] sm:$0xf]
        %v6310 = vld [vmem:[%s6289 + $0x50] sm:$0xf]
        %v6311 = vld [vmem:[%s6289 + $0x54] sm:$0xf]
        %v6312 = vld [vmem:[%s6289 + $0x58] sm:$0xf]
        %v6313 = vld [vmem:[%s6289 + $0x5c] sm:$0xf]
        %v6314 = vld [vmem:[%s6289 + $0x60] sm:$0xf]
        %v6315 = vld [vmem:[%s6289 + $0x64] sm:$0xf]
        %v6316 = vld [vmem:[%s6289 + $0x68] sm:$0xf]
        %v6317 = vld [vmem:[%s6289 + $0x6c] sm:$0xf]
        %v6318 = vld [vmem:[%s6289 + $0x70] sm:$0xf]
        %v6319 = vld [vmem:[%s6289 + $0x74] sm:$0xf]
        %v6320 = vld [vmem:[%s6289 + $0x78] sm:$0xf]
        %v6321 = vld [vmem:[%s6289 + $0x7c] sm:$0xf]
        %v6322 = vld [vmem:[%s6289 + $0x80] sm:$0xf]
        %v6323 = vld [vmem:[%s6289 + $0x84] sm:$0xf]
        %v6324 = vld [vmem:[%s6289 + $0x88] sm:$0xf]
        %v6325 = vld [vmem:[%s6289 + $0x8c] sm:$0xf]
        %v6326 = vld [vmem:[%s6289 + $0x90] sm:$0xf]
        %v6327 = vld [vmem:[%s6289 + $0x94] sm:$0xf]
        %v6328 = vld [vmem:[%s6289 + $0x98] sm:$0xf]
        %v6329 = vld [vmem:[%s6289 + $0x9c] sm:$0xf]
        %v6330 = vld [vmem:[%s6289 + $0xa0] sm:$0xf]
        %v6331 = vld [vmem:[%s6289 + $0xa4] sm:$0xf]
        %v6332 = vld [vmem:[%s6289 + $0xa8] sm:$0xf]
        %v6333 = vld [vmem:[%s6289 + $0xac] sm:$0xf]
        %v6334 = vld [vmem:[%s6289 + $0xb0] sm:$0xf]
        %v6335 = vld [vmem:[%s6289 + $0xb4] sm:$0xf]
        %v6336 = vld [vmem:[%s6289 + $0xb8] sm:$0xf]
        %v6337 = vld [vmem:[%s6289 + $0xbc] sm:$0xf]
        %v6338 = vrot.slane %v5328, 2
        %v6339 = vrot.slane %v5329, 2
        %v6340 = vrot.slane %v5330, 2
        %v6392 = vunpack.c.l.b16 %v6290
        %v6393 = vunpack.c.l.b16 %v6291
        %v6394 = vunpack.c.l.b16 %v6292
        %v6395 = vunpack.c.l.b16 %v6293
        %v6396 = vunpack.c.l.b16 %v6294
        %v6397 = vunpack.c.l.b16 %v6295
        %v6398 = vunpack.c.l.b16 %v6296
        %v6399 = vunpack.c.l.b16 %v6297
        %v6400 = vunpack.c.l.b16 %v6298
        %v6401 = vunpack.c.l.b16 %v6299
        %v6402 = vunpack.c.l.b16 %v6300
        %v6403 = vunpack.c.l.b16 %v6301
        %v6404 = vunpack.c.l.b16 %v6302
        %v6405 = vunpack.c.l.b16 %v6303
        %v6406 = vunpack.c.l.b16 %v6304
        %v6407 = vunpack.c.l.b16 %v6305
        %v6408 = vunpack.c.l.b16 %v6306
        %v6409 = vunpack.c.l.b16 %v6307
        %v6410 = vunpack.c.l.b16 %v6308
        %v6411 = vunpack.c.l.b16 %v6309
        %v6412 = vunpack.c.l.b16 %v6310
        %v6413 = vunpack.c.l.b16 %v6311
        %v6414 = vunpack.c.l.b16 %v6312
        %v6415 = vunpack.c.l.b16 %v6313
        %v6416 = vunpack.c.l.b16 %v6314
        %v6417 = vunpack.c.l.b16 %v6315
        %v6418 = vunpack.c.l.b16 %v6316
        %v6419 = vunpack.c.l.b16 %v6317
        %v6420 = vunpack.c.l.b16 %v6318
        %v6421 = vunpack.c.l.b16 %v6319
        %v6422 = vunpack.c.l.b16 %v6320
        %v6423 = vunpack.c.l.b16 %v6321
        %v6424 = vunpack.c.l.b16 %v6322
        %v6425 = vunpack.c.l.b16 %v6323
        %v6426 = vunpack.c.l.b16 %v6324
        %v6427 = vunpack.c.l.b16 %v6325
        %v6428 = vunpack.c.l.b16 %v6326
        %v6429 = vunpack.c.l.b16 %v6327
        %v6430 = vunpack.c.l.b16 %v6328
        %v6431 = vunpack.c.l.b16 %v6329
        %v6432 = vunpack.c.l.b16 %v6330
        %v6433 = vunpack.c.l.b16 %v6331
        %v6434 = vunpack.c.l.b16 %v6332
        %v6435 = vunpack.c.l.b16 %v6333
        %v6436 = vunpack.c.l.b16 %v6334
        %v6437 = vunpack.c.l.b16 %v6335
        %v6438 = vunpack.c.l.b16 %v6336
        %v6439 = vunpack.c.l.b16 %v6337
        %v6440 = vpack.c.b16 %v6393, %v6392
        %v6441 = vpack.c.b16 %v6395, %v6394
        %v6442 = vpack.c.b16 %v6397, %v6396
        %v6443 = vpack.c.b16 %v6399, %v6398
        %v6444 = vpack.c.b16 %v6401, %v6400
        %v6445 = vpack.c.b16 %v6403, %v6402
        %v6446 = vpack.c.b16 %v6405, %v6404
        %v6447 = vpack.c.b16 %v6407, %v6406
        %v6448 = vpack.c.b16 %v6409, %v6408
        %v6449 = vpack.c.b16 %v6411, %v6410
        %v6450 = vpack.c.b16 %v6413, %v6412
        %v6451 = vpack.c.b16 %v6415, %v6414
        %v6452 = vpack.c.b16 %v6417, %v6416
        %v6453 = vpack.c.b16 %v6419, %v6418
        %v6454 = vpack.c.b16 %v6421, %v6420
        %v6455 = vpack.c.b16 %v6423, %v6422
        %v6456 = vpack.c.b16 %v6425, %v6424
        %v6457 = vpack.c.b16 %v6427, %v6426
        %v6458 = vpack.c.b16 %v6429, %v6428
        %v6459 = vpack.c.b16 %v6431, %v6430
        %v6460 = vpack.c.b16 %v6433, %v6432
        %v6461 = vpack.c.b16 %v6435, %v6434
        %v6462 = vpack.c.b16 %v6437, %v6436
        %v6463 = vpack.c.b16 %v6439, %v6438
        %6488 = vmatpush.bf16.msra.mxu0 %v6447
        %6489 = vmatpush.bf16.msra.mxu0 %v6446
        %6490 = vmatpush.bf16.msra.mxu0 %v6445
        %6491 = vmatpush.bf16.msra.mxu0 %v6444
        %6492 = vmatpush.bf16.msra.mxu0 %v6443
        %6493 = vmatpush.bf16.msra.mxu0 %v6442
        %6494 = vmatpush.bf16.msra.mxu0 %v6441
        %6495 = vmatpush.bf16.msra.mxu0 %v6440
        %6496 = vmatmul.bf16.gmra.mxu0 %v6338
        %v6497 = vpop.f32.mrf.mxu0
        %v6498 = vadd.f32 0.0, %v6497
        %v6499 = vpop.f32.mrf.mxu0
        %6500 = vdwg.mxu0
        %6501 = vmatpush.bf16.msra.mxu0 %v6455
        %6502 = vmatpush.bf16.msra.mxu0 %v6454
        %6503 = vmatpush.bf16.msra.mxu0 %v6453
        %6504 = vmatpush.bf16.msra.mxu0 %v6452
        %6505 = vmatpush.bf16.msra.mxu0 %v6451
        %6506 = vmatpush.bf16.msra.mxu0 %v6450
        %6507 = vmatpush.bf16.msra.mxu0 %v6449
        %6508 = vmatpush.bf16.msra.mxu0 %v6448
        %6509 = vmatmul.bf16.gmra.mxu0 %v6339
        %v6510 = vpop.f32.mrf.mxu0
        %v6511 = vadd.f32 %v6498, %v6510
        %v6512 = vpop.f32.mrf.mxu0
        %6513 = vdwg.mxu0
        %6514 = vmatpush.bf16.msra.mxu0 %v6463
        %6515 = vmatpush.bf16.msra.mxu0 %v6462
        %6516 = vmatpush.bf16.msra.mxu0 %v6461
        %6517 = vmatpush.bf16.msra.mxu0 %v6460
        %6518 = vmatpush.bf16.msra.mxu0 %v6459
        %6519 = vmatpush.bf16.msra.mxu0 %v6458
        %6520 = vmatpush.bf16.msra.mxu0 %v6457
        %6521 = vmatpush.bf16.msra.mxu0 %v6456
        %6522 = vmatmul.bf16.gmra.mxu0 %v6340
        %v6523 = vpop.f32.mrf.mxu0
        %v6524 = vadd.f32 %v6511, %v6523
        %v6525 = vpop.f32.mrf.mxu0
        %6526 = vdwg.mxu0
        %v6527 = vadd.f32 %v6288, %v6524
        %s6528 = scalar_lea.vmem [#allocation19], 960
        %v6529 = vld [vmem:[%s6528] sm:$0xf]
        %v6530 = vld [vmem:[%s6528 + $0x4] sm:$0xf]
        %v6531 = vld [vmem:[%s6528 + $0x8] sm:$0xf]
        %v6532 = vld [vmem:[%s6528 + $0xc] sm:$0xf]
        %v6533 = vld [vmem:[%s6528 + $0x10] sm:$0xf]
        %v6534 = vld [vmem:[%s6528 + $0x14] sm:$0xf]
        %v6535 = vld [vmem:[%s6528 + $0x18] sm:$0xf]
        %v6536 = vld [vmem:[%s6528 + $0x1c] sm:$0xf]
        %v6537 = vld [vmem:[%s6528 + $0x20] sm:$0xf]
        %v6538 = vld [vmem:[%s6528 + $0x24] sm:$0xf]
        %v6539 = vld [vmem:[%s6528 + $0x28] sm:$0xf]
        %v6540 = vld [vmem:[%s6528 + $0x2c] sm:$0xf]
        %v6541 = vld [vmem:[%s6528 + $0x30] sm:$0xf]
        %v6542 = vld [vmem:[%s6528 + $0x34] sm:$0xf]
        %v6543 = vld [vmem:[%s6528 + $0x38] sm:$0xf]
        %v6544 = vld [vmem:[%s6528 + $0x3c] sm:$0xf]
        %v6545 = vld [vmem:[%s6528 + $0x40] sm:$0xf]
        %v6546 = vld [vmem:[%s6528 + $0x44] sm:$0xf]
        %v6547 = vld [vmem:[%s6528 + $0x48] sm:$0xf]
        %v6548 = vld [vmem:[%s6528 + $0x4c] sm:$0xf]
        %v6549 = vld [vmem:[%s6528 + $0x50] sm:$0xf]
        %v6550 = vld [vmem:[%s6528 + $0x54] sm:$0xf]
        %v6551 = vld [vmem:[%s6528 + $0x58] sm:$0xf]
        %v6552 = vld [vmem:[%s6528 + $0x5c] sm:$0xf]
        %v6553 = vld [vmem:[%s6528 + $0x60] sm:$0xf]
        %v6554 = vld [vmem:[%s6528 + $0x64] sm:$0xf]
        %v6555 = vld [vmem:[%s6528 + $0x68] sm:$0xf]
        %v6556 = vld [vmem:[%s6528 + $0x6c] sm:$0xf]
        %v6557 = vld [vmem:[%s6528 + $0x70] sm:$0xf]
        %v6558 = vld [vmem:[%s6528 + $0x74] sm:$0xf]
        %v6559 = vld [vmem:[%s6528 + $0x78] sm:$0xf]
        %v6560 = vld [vmem:[%s6528 + $0x7c] sm:$0xf]
        %v6561 = vld [vmem:[%s6528 + $0x80] sm:$0xf]
        %v6562 = vld [vmem:[%s6528 + $0x84] sm:$0xf]
        %v6563 = vld [vmem:[%s6528 + $0x88] sm:$0xf]
        %v6564 = vld [vmem:[%s6528 + $0x8c] sm:$0xf]
        %v6565 = vld [vmem:[%s6528 + $0x90] sm:$0xf]
        %v6566 = vld [vmem:[%s6528 + $0x94] sm:$0xf]
        %v6567 = vld [vmem:[%s6528 + $0x98] sm:$0xf]
        %v6568 = vld [vmem:[%s6528 + $0x9c] sm:$0xf]
        %v6569 = vld [vmem:[%s6528 + $0xa0] sm:$0xf]
        %v6570 = vld [vmem:[%s6528 + $0xa4] sm:$0xf]
        %v6571 = vld [vmem:[%s6528 + $0xa8] sm:$0xf]
        %v6572 = vld [vmem:[%s6528 + $0xac] sm:$0xf]
        %v6573 = vld [vmem:[%s6528 + $0xb0] sm:$0xf]
        %v6574 = vld [vmem:[%s6528 + $0xb4] sm:$0xf]
        %v6575 = vld [vmem:[%s6528 + $0xb8] sm:$0xf]
        %v6576 = vld [vmem:[%s6528 + $0xbc] sm:$0xf]
        %v6577 = vrot.slane %v5613, 2
        %v6578 = vrot.slane %v5616, 2
        %v6579 = vrot.slane %v5619, 2
        %v6631 = vunpack.c.l.b16 %v6529
        %v6632 = vunpack.c.l.b16 %v6530
        %v6633 = vunpack.c.l.b16 %v6531
        %v6634 = vunpack.c.l.b16 %v6532
        %v6635 = vunpack.c.l.b16 %v6533
        %v6636 = vunpack.c.l.b16 %v6534
        %v6637 = vunpack.c.l.b16 %v6535
        %v6638 = vunpack.c.l.b16 %v6536
        %v6639 = vunpack.c.l.b16 %v6537
        %v6640 = vunpack.c.l.b16 %v6538
        %v6641 = vunpack.c.l.b16 %v6539
        %v6642 = vunpack.c.l.b16 %v6540
        %v6643 = vunpack.c.l.b16 %v6541
        %v6644 = vunpack.c.l.b16 %v6542
        %v6645 = vunpack.c.l.b16 %v6543
        %v6646 = vunpack.c.l.b16 %v6544
        %v6647 = vunpack.c.l.b16 %v6545
        %v6648 = vunpack.c.l.b16 %v6546
        %v6649 = vunpack.c.l.b16 %v6547
        %v6650 = vunpack.c.l.b16 %v6548
        %v6651 = vunpack.c.l.b16 %v6549
        %v6652 = vunpack.c.l.b16 %v6550
        %v6653 = vunpack.c.l.b16 %v6551
        %v6654 = vunpack.c.l.b16 %v6552
        %v6655 = vunpack.c.l.b16 %v6553
        %v6656 = vunpack.c.l.b16 %v6554
        %v6657 = vunpack.c.l.b16 %v6555
        %v6658 = vunpack.c.l.b16 %v6556
        %v6659 = vunpack.c.l.b16 %v6557
        %v6660 = vunpack.c.l.b16 %v6558
        %v6661 = vunpack.c.l.b16 %v6559
        %v6662 = vunpack.c.l.b16 %v6560
        %v6663 = vunpack.c.l.b16 %v6561
        %v6664 = vunpack.c.l.b16 %v6562
        %v6665 = vunpack.c.l.b16 %v6563
        %v6666 = vunpack.c.l.b16 %v6564
        %v6667 = vunpack.c.l.b16 %v6565
        %v6668 = vunpack.c.l.b16 %v6566
        %v6669 = vunpack.c.l.b16 %v6567
        %v6670 = vunpack.c.l.b16 %v6568
        %v6671 = vunpack.c.l.b16 %v6569
        %v6672 = vunpack.c.l.b16 %v6570
        %v6673 = vunpack.c.l.b16 %v6571
        %v6674 = vunpack.c.l.b16 %v6572
        %v6675 = vunpack.c.l.b16 %v6573
        %v6676 = vunpack.c.l.b16 %v6574
        %v6677 = vunpack.c.l.b16 %v6575
        %v6678 = vunpack.c.l.b16 %v6576
        %v6679 = vpack.c.b16 %v6632, %v6631
        %v6680 = vpack.c.b16 %v6634, %v6633
        %v6681 = vpack.c.b16 %v6636, %v6635
        %v6682 = vpack.c.b16 %v6638, %v6637
        %v6683 = vpack.c.b16 %v6640, %v6639
        %v6684 = vpack.c.b16 %v6642, %v6641
        %v6685 = vpack.c.b16 %v6644, %v6643
        %v6686 = vpack.c.b16 %v6646, %v6645
        %v6687 = vpack.c.b16 %v6648, %v6647
        %v6688 = vpack.c.b16 %v6650, %v6649
        %v6689 = vpack.c.b16 %v6652, %v6651
        %v6690 = vpack.c.b16 %v6654, %v6653
        %v6691 = vpack.c.b16 %v6656, %v6655
        %v6692 = vpack.c.b16 %v6658, %v6657
        %v6693 = vpack.c.b16 %v6660, %v6659
        %v6694 = vpack.c.b16 %v6662, %v6661
        %v6695 = vpack.c.b16 %v6664, %v6663
        %v6696 = vpack.c.b16 %v6666, %v6665
        %v6697 = vpack.c.b16 %v6668, %v6667
        %v6698 = vpack.c.b16 %v6670, %v6669
        %v6699 = vpack.c.b16 %v6672, %v6671
        %v6700 = vpack.c.b16 %v6674, %v6673
        %v6701 = vpack.c.b16 %v6676, %v6675
        %v6702 = vpack.c.b16 %v6678, %v6677
        %6727 = vmatpush.bf16.msra.mxu0 %v6686
        %6728 = vmatpush.bf16.msra.mxu0 %v6685
        %6729 = vmatpush.bf16.msra.mxu0 %v6684
        %6730 = vmatpush.bf16.msra.mxu0 %v6683
        %6731 = vmatpush.bf16.msra.mxu0 %v6682
        %6732 = vmatpush.bf16.msra.mxu0 %v6681
        %6733 = vmatpush.bf16.msra.mxu0 %v6680
        %6734 = vmatpush.bf16.msra.mxu0 %v6679
        %6735 = vmatmul.bf16.gmra.mxu0 %v6577
        %v6736 = vpop.f32.mrf.mxu0
        %v6737 = vadd.f32 0.0, %v6736
        %v6738 = vpop.f32.mrf.mxu0
        %6739 = vdwg.mxu0
        %6740 = vmatpush.bf16.msra.mxu0 %v6694
        %6741 = vmatpush.bf16.msra.mxu0 %v6693
        %6742 = vmatpush.bf16.msra.mxu0 %v6692
        %6743 = vmatpush.bf16.msra.mxu0 %v6691
        %6744 = vmatpush.bf16.msra.mxu0 %v6690
        %6745 = vmatpush.bf16.msra.mxu0 %v6689
        %6746 = vmatpush.bf16.msra.mxu0 %v6688
        %6747 = vmatpush.bf16.msra.mxu0 %v6687
        %6748 = vmatmul.bf16.gmra.mxu0 %v6578
        %v6749 = vpop.f32.mrf.mxu0
        %v6750 = vadd.f32 %v6737, %v6749
        %v6751 = vpop.f32.mrf.mxu0
        %6752 = vdwg.mxu0
        %6753 = vmatpush.bf16.msra.mxu0 %v6702
        %6754 = vmatpush.bf16.msra.mxu0 %v6701
        %6755 = vmatpush.bf16.msra.mxu0 %v6700
        %6756 = vmatpush.bf16.msra.mxu0 %v6699
        %6757 = vmatpush.bf16.msra.mxu0 %v6698
        %6758 = vmatpush.bf16.msra.mxu0 %v6697
        %6759 = vmatpush.bf16.msra.mxu0 %v6696
        %6760 = vmatpush.bf16.msra.mxu0 %v6695
        %6761 = vmatmul.bf16.gmra.mxu0 %v6579
        %v6762 = vpop.f32.mrf.mxu0
        %v6763 = vadd.f32 %v6750, %v6762
        %v6764 = vpop.f32.mrf.mxu0
        %6765 = vdwg.mxu0
        %v6766 = vadd.f32 %v6527, %v6763
        %s6767 = scalar_lea.vmem [#allocation19], 1152
        %v6768 = vld [vmem:[%s6767] sm:$0xf]
        %v6769 = vld [vmem:[%s6767 + $0x4] sm:$0xf]
        %v6770 = vld [vmem:[%s6767 + $0x8] sm:$0xf]
        %v6771 = vld [vmem:[%s6767 + $0xc] sm:$0xf]
        %v6772 = vld [vmem:[%s6767 + $0x10] sm:$0xf]
        %v6773 = vld [vmem:[%s6767 + $0x14] sm:$0xf]
        %v6774 = vld [vmem:[%s6767 + $0x18] sm:$0xf]
        %v6775 = vld [vmem:[%s6767 + $0x1c] sm:$0xf]
        %v6776 = vld [vmem:[%s6767 + $0x20] sm:$0xf]
        %v6777 = vld [vmem:[%s6767 + $0x24] sm:$0xf]
        %v6778 = vld [vmem:[%s6767 + $0x28] sm:$0xf]
        %v6779 = vld [vmem:[%s6767 + $0x2c] sm:$0xf]
        %v6780 = vld [vmem:[%s6767 + $0x30] sm:$0xf]
        %v6781 = vld [vmem:[%s6767 + $0x34] sm:$0xf]
        %v6782 = vld [vmem:[%s6767 + $0x38] sm:$0xf]
        %v6783 = vld [vmem:[%s6767 + $0x3c] sm:$0xf]
        %v6784 = vld [vmem:[%s6767 + $0x40] sm:$0xf]
        %v6785 = vld [vmem:[%s6767 + $0x44] sm:$0xf]
        %v6786 = vld [vmem:[%s6767 + $0x48] sm:$0xf]
        %v6787 = vld [vmem:[%s6767 + $0x4c] sm:$0xf]
        %v6788 = vld [vmem:[%s6767 + $0x50] sm:$0xf]
        %v6789 = vld [vmem:[%s6767 + $0x54] sm:$0xf]
        %v6790 = vld [vmem:[%s6767 + $0x58] sm:$0xf]
        %v6791 = vld [vmem:[%s6767 + $0x5c] sm:$0xf]
        %v6792 = vld [vmem:[%s6767 + $0x60] sm:$0xf]
        %v6793 = vld [vmem:[%s6767 + $0x64] sm:$0xf]
        %v6794 = vld [vmem:[%s6767 + $0x68] sm:$0xf]
        %v6795 = vld [vmem:[%s6767 + $0x6c] sm:$0xf]
        %v6796 = vld [vmem:[%s6767 + $0x70] sm:$0xf]
        %v6797 = vld [vmem:[%s6767 + $0x74] sm:$0xf]
        %v6798 = vld [vmem:[%s6767 + $0x78] sm:$0xf]
        %v6799 = vld [vmem:[%s6767 + $0x7c] sm:$0xf]
        %v6800 = vld [vmem:[%s6767 + $0x80] sm:$0xf]
        %v6801 = vld [vmem:[%s6767 + $0x84] sm:$0xf]
        %v6802 = vld [vmem:[%s6767 + $0x88] sm:$0xf]
        %v6803 = vld [vmem:[%s6767 + $0x8c] sm:$0xf]
        %v6804 = vld [vmem:[%s6767 + $0x90] sm:$0xf]
        %v6805 = vld [vmem:[%s6767 + $0x94] sm:$0xf]
        %v6806 = vld [vmem:[%s6767 + $0x98] sm:$0xf]
        %v6807 = vld [vmem:[%s6767 + $0x9c] sm:$0xf]
        %v6808 = vld [vmem:[%s6767 + $0xa0] sm:$0xf]
        %v6809 = vld [vmem:[%s6767 + $0xa4] sm:$0xf]
        %v6810 = vld [vmem:[%s6767 + $0xa8] sm:$0xf]
        %v6811 = vld [vmem:[%s6767 + $0xac] sm:$0xf]
        %v6812 = vld [vmem:[%s6767 + $0xb0] sm:$0xf]
        %v6813 = vld [vmem:[%s6767 + $0xb4] sm:$0xf]
        %v6814 = vld [vmem:[%s6767 + $0xb8] sm:$0xf]
        %v6815 = vld [vmem:[%s6767 + $0xbc] sm:$0xf]
        %v6816 = vrot.slane %v5328, 3
        %v6817 = vrot.slane %v5329, 3
        %v6818 = vrot.slane %v5330, 3
        %v6870 = vunpack.c.l.b16 %v6768
        %v6871 = vunpack.c.l.b16 %v6769
        %v6872 = vunpack.c.l.b16 %v6770
        %v6873 = vunpack.c.l.b16 %v6771
        %v6874 = vunpack.c.l.b16 %v6772
        %v6875 = vunpack.c.l.b16 %v6773
        %v6876 = vunpack.c.l.b16 %v6774
        %v6877 = vunpack.c.l.b16 %v6775
        %v6878 = vunpack.c.l.b16 %v6776
        %v6879 = vunpack.c.l.b16 %v6777
        %v6880 = vunpack.c.l.b16 %v6778
        %v6881 = vunpack.c.l.b16 %v6779
        %v6882 = vunpack.c.l.b16 %v6780
        %v6883 = vunpack.c.l.b16 %v6781
        %v6884 = vunpack.c.l.b16 %v6782
        %v6885 = vunpack.c.l.b16 %v6783
        %v6886 = vunpack.c.l.b16 %v6784
        %v6887 = vunpack.c.l.b16 %v6785
        %v6888 = vunpack.c.l.b16 %v6786
        %v6889 = vunpack.c.l.b16 %v6787
        %v6890 = vunpack.c.l.b16 %v6788
        %v6891 = vunpack.c.l.b16 %v6789
        %v6892 = vunpack.c.l.b16 %v6790
        %v6893 = vunpack.c.l.b16 %v6791
        %v6894 = vunpack.c.l.b16 %v6792
        %v6895 = vunpack.c.l.b16 %v6793
        %v6896 = vunpack.c.l.b16 %v6794
        %v6897 = vunpack.c.l.b16 %v6795
        %v6898 = vunpack.c.l.b16 %v6796
        %v6899 = vunpack.c.l.b16 %v6797
        %v6900 = vunpack.c.l.b16 %v6798
        %v6901 = vunpack.c.l.b16 %v6799
        %v6902 = vunpack.c.l.b16 %v6800
        %v6903 = vunpack.c.l.b16 %v6801
        %v6904 = vunpack.c.l.b16 %v6802
        %v6905 = vunpack.c.l.b16 %v6803
        %v6906 = vunpack.c.l.b16 %v6804
        %v6907 = vunpack.c.l.b16 %v6805
        %v6908 = vunpack.c.l.b16 %v6806
        %v6909 = vunpack.c.l.b16 %v6807
        %v6910 = vunpack.c.l.b16 %v6808
        %v6911 = vunpack.c.l.b16 %v6809
        %v6912 = vunpack.c.l.b16 %v6810
        %v6913 = vunpack.c.l.b16 %v6811
        %v6914 = vunpack.c.l.b16 %v6812
        %v6915 = vunpack.c.l.b16 %v6813
        %v6916 = vunpack.c.l.b16 %v6814
        %v6917 = vunpack.c.l.b16 %v6815
        %v6918 = vpack.c.b16 %v6871, %v6870
        %v6919 = vpack.c.b16 %v6873, %v6872
        %v6920 = vpack.c.b16 %v6875, %v6874
        %v6921 = vpack.c.b16 %v6877, %v6876
        %v6922 = vpack.c.b16 %v6879, %v6878
        %v6923 = vpack.c.b16 %v6881, %v6880
        %v6924 = vpack.c.b16 %v6883, %v6882
        %v6925 = vpack.c.b16 %v6885, %v6884
        %v6926 = vpack.c.b16 %v6887, %v6886
        %v6927 = vpack.c.b16 %v6889, %v6888
        %v6928 = vpack.c.b16 %v6891, %v6890
        %v6929 = vpack.c.b16 %v6893, %v6892
        %v6930 = vpack.c.b16 %v6895, %v6894
        %v6931 = vpack.c.b16 %v6897, %v6896
        %v6932 = vpack.c.b16 %v6899, %v6898
        %v6933 = vpack.c.b16 %v6901, %v6900
        %v6934 = vpack.c.b16 %v6903, %v6902
        %v6935 = vpack.c.b16 %v6905, %v6904
        %v6936 = vpack.c.b16 %v6907, %v6906
        %v6937 = vpack.c.b16 %v6909, %v6908
        %v6938 = vpack.c.b16 %v6911, %v6910
        %v6939 = vpack.c.b16 %v6913, %v6912
        %v6940 = vpack.c.b16 %v6915, %v6914
        %v6941 = vpack.c.b16 %v6917, %v6916
        %6966 = vmatpush.bf16.msra.mxu0 %v6925
        %6967 = vmatpush.bf16.msra.mxu0 %v6924
        %6968 = vmatpush.bf16.msra.mxu0 %v6923
        %6969 = vmatpush.bf16.msra.mxu0 %v6922
        %6970 = vmatpush.bf16.msra.mxu0 %v6921
        %6971 = vmatpush.bf16.msra.mxu0 %v6920
        %6972 = vmatpush.bf16.msra.mxu0 %v6919
        %6973 = vmatpush.bf16.msra.mxu0 %v6918
        %6974 = vmatmul.bf16.gmra.mxu0 %v6816
        %v6975 = vpop.f32.mrf.mxu0
        %v6976 = vadd.f32 0.0, %v6975
        %v6977 = vpop.f32.mrf.mxu0
        %6978 = vdwg.mxu0
        %6979 = vmatpush.bf16.msra.mxu0 %v6933
        %6980 = vmatpush.bf16.msra.mxu0 %v6932
        %6981 = vmatpush.bf16.msra.mxu0 %v6931
        %6982 = vmatpush.bf16.msra.mxu0 %v6930
        %6983 = vmatpush.bf16.msra.mxu0 %v6929
        %6984 = vmatpush.bf16.msra.mxu0 %v6928
        %6985 = vmatpush.bf16.msra.mxu0 %v6927
        %6986 = vmatpush.bf16.msra.mxu0 %v6926
        %6987 = vmatmul.bf16.gmra.mxu0 %v6817
        %v6988 = vpop.f32.mrf.mxu0
        %v6989 = vadd.f32 %v6976, %v6988
        %v6990 = vpop.f32.mrf.mxu0
        %6991 = vdwg.mxu0
        %6992 = vmatpush.bf16.msra.mxu0 %v6941
        %6993 = vmatpush.bf16.msra.mxu0 %v6940
        %6994 = vmatpush.bf16.msra.mxu0 %v6939
        %6995 = vmatpush.bf16.msra.mxu0 %v6938
        %6996 = vmatpush.bf16.msra.mxu0 %v6937
        %6997 = vmatpush.bf16.msra.mxu0 %v6936
        %6998 = vmatpush.bf16.msra.mxu0 %v6935
        %6999 = vmatpush.bf16.msra.mxu0 %v6934
        %7000 = vmatmul.bf16.gmra.mxu0 %v6818
        %v7001 = vpop.f32.mrf.mxu0
        %v7002 = vadd.f32 %v6989, %v7001
        %v7003 = vpop.f32.mrf.mxu0
        %7004 = vdwg.mxu0
        %v7005 = vadd.f32 %v6766, %v7002
        %s7006 = scalar_lea.vmem [#allocation19], 1344
        %v7007 = vld [vmem:[%s7006] sm:$0xf]
        %v7008 = vld [vmem:[%s7006 + $0x4] sm:$0xf]
        %v7009 = vld [vmem:[%s7006 + $0x8] sm:$0xf]
        %v7010 = vld [vmem:[%s7006 + $0xc] sm:$0xf]
        %v7011 = vld [vmem:[%s7006 + $0x10] sm:$0xf]
        %v7012 = vld [vmem:[%s7006 + $0x14] sm:$0xf]
        %v7013 = vld [vmem:[%s7006 + $0x18] sm:$0xf]
        %v7014 = vld [vmem:[%s7006 + $0x1c] sm:$0xf]
        %v7015 = vld [vmem:[%s7006 + $0x20] sm:$0xf]
        %v7016 = vld [vmem:[%s7006 + $0x24] sm:$0xf]
        %v7017 = vld [vmem:[%s7006 + $0x28] sm:$0xf]
        %v7018 = vld [vmem:[%s7006 + $0x2c] sm:$0xf]
        %v7019 = vld [vmem:[%s7006 + $0x30] sm:$0xf]
        %v7020 = vld [vmem:[%s7006 + $0x34] sm:$0xf]
        %v7021 = vld [vmem:[%s7006 + $0x38] sm:$0xf]
        %v7022 = vld [vmem:[%s7006 + $0x3c] sm:$0xf]
        %v7023 = vld [vmem:[%s7006 + $0x40] sm:$0xf]
        %v7024 = vld [vmem:[%s7006 + $0x44] sm:$0xf]
        %v7025 = vld [vmem:[%s7006 + $0x48] sm:$0xf]
        %v7026 = vld [vmem:[%s7006 + $0x4c] sm:$0xf]
        %v7027 = vld [vmem:[%s7006 + $0x50] sm:$0xf]
        %v7028 = vld [vmem:[%s7006 + $0x54] sm:$0xf]
        %v7029 = vld [vmem:[%s7006 + $0x58] sm:$0xf]
        %v7030 = vld [vmem:[%s7006 + $0x5c] sm:$0xf]
        %v7031 = vld [vmem:[%s7006 + $0x60] sm:$0xf]
        %v7032 = vld [vmem:[%s7006 + $0x64] sm:$0xf]
        %v7033 = vld [vmem:[%s7006 + $0x68] sm:$0xf]
        %v7034 = vld [vmem:[%s7006 + $0x6c] sm:$0xf]
        %v7035 = vld [vmem:[%s7006 + $0x70] sm:$0xf]
        %v7036 = vld [vmem:[%s7006 + $0x74] sm:$0xf]
        %v7037 = vld [vmem:[%s7006 + $0x78] sm:$0xf]
        %v7038 = vld [vmem:[%s7006 + $0x7c] sm:$0xf]
        %v7039 = vld [vmem:[%s7006 + $0x80] sm:$0xf]
        %v7040 = vld [vmem:[%s7006 + $0x84] sm:$0xf]
        %v7041 = vld [vmem:[%s7006 + $0x88] sm:$0xf]
        %v7042 = vld [vmem:[%s7006 + $0x8c] sm:$0xf]
        %v7043 = vld [vmem:[%s7006 + $0x90] sm:$0xf]
        %v7044 = vld [vmem:[%s7006 + $0x94] sm:$0xf]
        %v7045 = vld [vmem:[%s7006 + $0x98] sm:$0xf]
        %v7046 = vld [vmem:[%s7006 + $0x9c] sm:$0xf]
        %v7047 = vld [vmem:[%s7006 + $0xa0] sm:$0xf]
        %v7048 = vld [vmem:[%s7006 + $0xa4] sm:$0xf]
        %v7049 = vld [vmem:[%s7006 + $0xa8] sm:$0xf]
        %v7050 = vld [vmem:[%s7006 + $0xac] sm:$0xf]
        %v7051 = vld [vmem:[%s7006 + $0xb0] sm:$0xf]
        %v7052 = vld [vmem:[%s7006 + $0xb4] sm:$0xf]
        %v7053 = vld [vmem:[%s7006 + $0xb8] sm:$0xf]
        %v7054 = vld [vmem:[%s7006 + $0xbc] sm:$0xf]
        %v7055 = vrot.slane %v5613, 3
        %v7056 = vrot.slane %v5616, 3
        %v7057 = vrot.slane %v5619, 3
        %v7109 = vunpack.c.l.b16 %v7007
        %v7110 = vunpack.c.l.b16 %v7008
        %v7111 = vunpack.c.l.b16 %v7009
        %v7112 = vunpack.c.l.b16 %v7010
        %v7113 = vunpack.c.l.b16 %v7011
        %v7114 = vunpack.c.l.b16 %v7012
        %v7115 = vunpack.c.l.b16 %v7013
        %v7116 = vunpack.c.l.b16 %v7014
        %v7117 = vunpack.c.l.b16 %v7015
        %v7118 = vunpack.c.l.b16 %v7016
        %v7119 = vunpack.c.l.b16 %v7017
        %v7120 = vunpack.c.l.b16 %v7018
        %v7121 = vunpack.c.l.b16 %v7019
        %v7122 = vunpack.c.l.b16 %v7020
        %v7123 = vunpack.c.l.b16 %v7021
        %v7124 = vunpack.c.l.b16 %v7022
        %v7125 = vunpack.c.l.b16 %v7023
        %v7126 = vunpack.c.l.b16 %v7024
        %v7127 = vunpack.c.l.b16 %v7025
        %v7128 = vunpack.c.l.b16 %v7026
        %v7129 = vunpack.c.l.b16 %v7027
        %v7130 = vunpack.c.l.b16 %v7028
        %v7131 = vunpack.c.l.b16 %v7029
        %v7132 = vunpack.c.l.b16 %v7030
        %v7133 = vunpack.c.l.b16 %v7031
        %v7134 = vunpack.c.l.b16 %v7032
        %v7135 = vunpack.c.l.b16 %v7033
        %v7136 = vunpack.c.l.b16 %v7034
        %v7137 = vunpack.c.l.b16 %v7035
        %v7138 = vunpack.c.l.b16 %v7036
        %v7139 = vunpack.c.l.b16 %v7037
        %v7140 = vunpack.c.l.b16 %v7038
        %v7141 = vunpack.c.l.b16 %v7039
        %v7142 = vunpack.c.l.b16 %v7040
        %v7143 = vunpack.c.l.b16 %v7041
        %v7144 = vunpack.c.l.b16 %v7042
        %v7145 = vunpack.c.l.b16 %v7043
        %v7146 = vunpack.c.l.b16 %v7044
        %v7147 = vunpack.c.l.b16 %v7045
        %v7148 = vunpack.c.l.b16 %v7046
        %v7149 = vunpack.c.l.b16 %v7047
        %v7150 = vunpack.c.l.b16 %v7048
        %v7151 = vunpack.c.l.b16 %v7049
        %v7152 = vunpack.c.l.b16 %v7050
        %v7153 = vunpack.c.l.b16 %v7051
        %v7154 = vunpack.c.l.b16 %v7052
        %v7155 = vunpack.c.l.b16 %v7053
        %v7156 = vunpack.c.l.b16 %v7054
        %v7157 = vpack.c.b16 %v7110, %v7109
        %v7158 = vpack.c.b16 %v7112, %v7111
        %v7159 = vpack.c.b16 %v7114, %v7113
        %v7160 = vpack.c.b16 %v7116, %v7115
        %v7161 = vpack.c.b16 %v7118, %v7117
        %v7162 = vpack.c.b16 %v7120, %v7119
        %v7163 = vpack.c.b16 %v7122, %v7121
        %v7164 = vpack.c.b16 %v7124, %v7123
        %v7165 = vpack.c.b16 %v7126, %v7125
        %v7166 = vpack.c.b16 %v7128, %v7127
        %v7167 = vpack.c.b16 %v7130, %v7129
        %v7168 = vpack.c.b16 %v7132, %v7131
        %v7169 = vpack.c.b16 %v7134, %v7133
        %v7170 = vpack.c.b16 %v7136, %v7135
        %v7171 = vpack.c.b16 %v7138, %v7137
        %v7172 = vpack.c.b16 %v7140, %v7139
        %v7173 = vpack.c.b16 %v7142, %v7141
        %v7174 = vpack.c.b16 %v7144, %v7143
        %v7175 = vpack.c.b16 %v7146, %v7145
        %v7176 = vpack.c.b16 %v7148, %v7147
        %v7177 = vpack.c.b16 %v7150, %v7149
        %v7178 = vpack.c.b16 %v7152, %v7151
        %v7179 = vpack.c.b16 %v7154, %v7153
        %v7180 = vpack.c.b16 %v7156, %v7155
        %7205 = vmatpush.bf16.msra.mxu0 %v7164
        %7206 = vmatpush.bf16.msra.mxu0 %v7163
        %7207 = vmatpush.bf16.msra.mxu0 %v7162
        %7208 = vmatpush.bf16.msra.mxu0 %v7161
        %7209 = vmatpush.bf16.msra.mxu0 %v7160
        %7210 = vmatpush.bf16.msra.mxu0 %v7159
        %7211 = vmatpush.bf16.msra.mxu0 %v7158
        %7212 = vmatpush.bf16.msra.mxu0 %v7157
        %7213 = vmatmul.bf16.gmra.mxu0 %v7055
        %v7214 = vpop.f32.mrf.mxu0
        %v7215 = vadd.f32 0.0, %v7214
        %v7216 = vpop.f32.mrf.mxu0
        %7217 = vdwg.mxu0
        %7218 = vmatpush.bf16.msra.mxu0 %v7172
        %7219 = vmatpush.bf16.msra.mxu0 %v7171
        %7220 = vmatpush.bf16.msra.mxu0 %v7170
        %7221 = vmatpush.bf16.msra.mxu0 %v7169
        %7222 = vmatpush.bf16.msra.mxu0 %v7168
        %7223 = vmatpush.bf16.msra.mxu0 %v7167
        %7224 = vmatpush.bf16.msra.mxu0 %v7166
        %7225 = vmatpush.bf16.msra.mxu0 %v7165
        %7226 = vmatmul.bf16.gmra.mxu0 %v7056
        %v7227 = vpop.f32.mrf.mxu0
        %v7228 = vadd.f32 %v7215, %v7227
        %v7229 = vpop.f32.mrf.mxu0
        %7230 = vdwg.mxu0
        %7231 = vmatpush.bf16.msra.mxu0 %v7180
        %7232 = vmatpush.bf16.msra.mxu0 %v7179
        %7233 = vmatpush.bf16.msra.mxu0 %v7178
        %7234 = vmatpush.bf16.msra.mxu0 %v7177
        %7235 = vmatpush.bf16.msra.mxu0 %v7176
        %7236 = vmatpush.bf16.msra.mxu0 %v7175
        %7237 = vmatpush.bf16.msra.mxu0 %v7174
        %7238 = vmatpush.bf16.msra.mxu0 %v7173
        %7239 = vmatmul.bf16.gmra.mxu0 %v7057
        %v7240 = vpop.f32.mrf.mxu0
        %v7241 = vadd.f32 %v7228, %v7240
        %v7242 = vpop.f32.mrf.mxu0
        %7243 = vdwg.mxu0
        %v7244 = vadd.f32 %v7005, %v7241
        %v7245 = vpack.c.bf16 %v5324, %v5324
        %v7246 = vpack.c.bf16 %v5325, %v5325
        %v7247 = vpack.c.bf16 %v5326, %v5326
        %s7248 = scalar_lea.vmem [#allocation19], 1536
        %v7249 = vld [vmem:[%s7248] sm:$0xf]
        %v7250 = vld [vmem:[%s7248 + $0x4] sm:$0xf]
        %v7251 = vld [vmem:[%s7248 + $0x8] sm:$0xf]
        %v7252 = vld [vmem:[%s7248 + $0xc] sm:$0xf]
        %v7253 = vld [vmem:[%s7248 + $0x10] sm:$0xf]
        %v7254 = vld [vmem:[%s7248 + $0x14] sm:$0xf]
        %v7255 = vld [vmem:[%s7248 + $0x18] sm:$0xf]
        %v7256 = vld [vmem:[%s7248 + $0x1c] sm:$0xf]
        %v7257 = vld [vmem:[%s7248 + $0x20] sm:$0xf]
        %v7258 = vld [vmem:[%s7248 + $0x24] sm:$0xf]
        %v7259 = vld [vmem:[%s7248 + $0x28] sm:$0xf]
        %v7260 = vld [vmem:[%s7248 + $0x2c] sm:$0xf]
        %v7261 = vld [vmem:[%s7248 + $0x30] sm:$0xf]
        %v7262 = vld [vmem:[%s7248 + $0x34] sm:$0xf]
        %v7263 = vld [vmem:[%s7248 + $0x38] sm:$0xf]
        %v7264 = vld [vmem:[%s7248 + $0x3c] sm:$0xf]
        %v7265 = vld [vmem:[%s7248 + $0x40] sm:$0xf]
        %v7266 = vld [vmem:[%s7248 + $0x44] sm:$0xf]
        %v7267 = vld [vmem:[%s7248 + $0x48] sm:$0xf]
        %v7268 = vld [vmem:[%s7248 + $0x4c] sm:$0xf]
        %v7269 = vld [vmem:[%s7248 + $0x50] sm:$0xf]
        %v7270 = vld [vmem:[%s7248 + $0x54] sm:$0xf]
        %v7271 = vld [vmem:[%s7248 + $0x58] sm:$0xf]
        %v7272 = vld [vmem:[%s7248 + $0x5c] sm:$0xf]
        %v7273 = vld [vmem:[%s7248 + $0x60] sm:$0xf]
        %v7274 = vld [vmem:[%s7248 + $0x64] sm:$0xf]
        %v7275 = vld [vmem:[%s7248 + $0x68] sm:$0xf]
        %v7276 = vld [vmem:[%s7248 + $0x6c] sm:$0xf]
        %v7277 = vld [vmem:[%s7248 + $0x70] sm:$0xf]
        %v7278 = vld [vmem:[%s7248 + $0x74] sm:$0xf]
        %v7279 = vld [vmem:[%s7248 + $0x78] sm:$0xf]
        %v7280 = vld [vmem:[%s7248 + $0x7c] sm:$0xf]
        %v7281 = vld [vmem:[%s7248 + $0x80] sm:$0xf]
        %v7282 = vld [vmem:[%s7248 + $0x84] sm:$0xf]
        %v7283 = vld [vmem:[%s7248 + $0x88] sm:$0xf]
        %v7284 = vld [vmem:[%s7248 + $0x8c] sm:$0xf]
        %v7285 = vld [vmem:[%s7248 + $0x90] sm:$0xf]
        %v7286 = vld [vmem:[%s7248 + $0x94] sm:$0xf]
        %v7287 = vld [vmem:[%s7248 + $0x98] sm:$0xf]
        %v7288 = vld [vmem:[%s7248 + $0x9c] sm:$0xf]
        %v7289 = vld [vmem:[%s7248 + $0xa0] sm:$0xf]
        %v7290 = vld [vmem:[%s7248 + $0xa4] sm:$0xf]
        %v7291 = vld [vmem:[%s7248 + $0xa8] sm:$0xf]
        %v7292 = vld [vmem:[%s7248 + $0xac] sm:$0xf]
        %v7293 = vld [vmem:[%s7248 + $0xb0] sm:$0xf]
        %v7294 = vld [vmem:[%s7248 + $0xb4] sm:$0xf]
        %v7295 = vld [vmem:[%s7248 + $0xb8] sm:$0xf]
        %v7296 = vld [vmem:[%s7248 + $0xbc] sm:$0xf]
        %v7345 = vunpack.c.l.b16 %v7249
        %v7346 = vunpack.c.l.b16 %v7250
        %v7347 = vunpack.c.l.b16 %v7251
        %v7348 = vunpack.c.l.b16 %v7252
        %v7349 = vunpack.c.l.b16 %v7253
        %v7350 = vunpack.c.l.b16 %v7254
        %v7351 = vunpack.c.l.b16 %v7255
        %v7352 = vunpack.c.l.b16 %v7256
        %v7353 = vunpack.c.l.b16 %v7257
        %v7354 = vunpack.c.l.b16 %v7258
        %v7355 = vunpack.c.l.b16 %v7259
        %v7356 = vunpack.c.l.b16 %v7260
        %v7357 = vunpack.c.l.b16 %v7261
        %v7358 = vunpack.c.l.b16 %v7262
        %v7359 = vunpack.c.l.b16 %v7263
        %v7360 = vunpack.c.l.b16 %v7264
        %v7361 = vunpack.c.l.b16 %v7265
        %v7362 = vunpack.c.l.b16 %v7266
        %v7363 = vunpack.c.l.b16 %v7267
        %v7364 = vunpack.c.l.b16 %v7268
        %v7365 = vunpack.c.l.b16 %v7269
        %v7366 = vunpack.c.l.b16 %v7270
        %v7367 = vunpack.c.l.b16 %v7271
        %v7368 = vunpack.c.l.b16 %v7272
        %v7369 = vunpack.c.l.b16 %v7273
        %v7370 = vunpack.c.l.b16 %v7274
        %v7371 = vunpack.c.l.b16 %v7275
        %v7372 = vunpack.c.l.b16 %v7276
        %v7373 = vunpack.c.l.b16 %v7277
        %v7374 = vunpack.c.l.b16 %v7278
        %v7375 = vunpack.c.l.b16 %v7279
        %v7376 = vunpack.c.l.b16 %v7280
        %v7377 = vunpack.c.l.b16 %v7281
        %v7378 = vunpack.c.l.b16 %v7282
        %v7379 = vunpack.c.l.b16 %v7283
        %v7380 = vunpack.c.l.b16 %v7284
        %v7381 = vunpack.c.l.b16 %v7285
        %v7382 = vunpack.c.l.b16 %v7286
        %v7383 = vunpack.c.l.b16 %v7287
        %v7384 = vunpack.c.l.b16 %v7288
        %v7385 = vunpack.c.l.b16 %v7289
        %v7386 = vunpack.c.l.b16 %v7290
        %v7387 = vunpack.c.l.b16 %v7291
        %v7388 = vunpack.c.l.b16 %v7292
        %v7389 = vunpack.c.l.b16 %v7293
        %v7390 = vunpack.c.l.b16 %v7294
        %v7391 = vunpack.c.l.b16 %v7295
        %v7392 = vunpack.c.l.b16 %v7296
        %v7393 = vpack.c.b16 %v7346, %v7345
        %v7394 = vpack.c.b16 %v7348, %v7347
        %v7395 = vpack.c.b16 %v7350, %v7349
        %v7396 = vpack.c.b16 %v7352, %v7351
        %v7397 = vpack.c.b16 %v7354, %v7353
        %v7398 = vpack.c.b16 %v7356, %v7355
        %v7399 = vpack.c.b16 %v7358, %v7357
        %v7400 = vpack.c.b16 %v7360, %v7359
        %v7401 = vpack.c.b16 %v7362, %v7361
        %v7402 = vpack.c.b16 %v7364, %v7363
        %v7403 = vpack.c.b16 %v7366, %v7365
        %v7404 = vpack.c.b16 %v7368, %v7367
        %v7405 = vpack.c.b16 %v7370, %v7369
        %v7406 = vpack.c.b16 %v7372, %v7371
        %v7407 = vpack.c.b16 %v7374, %v7373
        %v7408 = vpack.c.b16 %v7376, %v7375
        %v7409 = vpack.c.b16 %v7378, %v7377
        %v7410 = vpack.c.b16 %v7380, %v7379
        %v7411 = vpack.c.b16 %v7382, %v7381
        %v7412 = vpack.c.b16 %v7384, %v7383
        %v7413 = vpack.c.b16 %v7386, %v7385
        %v7414 = vpack.c.b16 %v7388, %v7387
        %v7415 = vpack.c.b16 %v7390, %v7389
        %v7416 = vpack.c.b16 %v7392, %v7391
        %7441 = vmatpush.bf16.msra.mxu0 %v7400
        %7442 = vmatpush.bf16.msra.mxu0 %v7399
        %7443 = vmatpush.bf16.msra.mxu0 %v7398
        %7444 = vmatpush.bf16.msra.mxu0 %v7397
        %7445 = vmatpush.bf16.msra.mxu0 %v7396
        %7446 = vmatpush.bf16.msra.mxu0 %v7395
        %7447 = vmatpush.bf16.msra.mxu0 %v7394
        %7448 = vmatpush.bf16.msra.mxu0 %v7393
        %7449 = vmatmul.bf16.gmra.mxu0 %v7245
        %v7450 = vpop.f32.mrf.mxu0
        %v7451 = vadd.f32 0.0, %v7450
        %v7452 = vpop.f32.mrf.mxu0
        %7453 = vdwg.mxu0
        %7454 = vmatpush.bf16.msra.mxu0 %v7408
        %7455 = vmatpush.bf16.msra.mxu0 %v7407
        %7456 = vmatpush.bf16.msra.mxu0 %v7406
        %7457 = vmatpush.bf16.msra.mxu0 %v7405
        %7458 = vmatpush.bf16.msra.mxu0 %v7404
        %7459 = vmatpush.bf16.msra.mxu0 %v7403
        %7460 = vmatpush.bf16.msra.mxu0 %v7402
        %7461 = vmatpush.bf16.msra.mxu0 %v7401
        %7462 = vmatmul.bf16.gmra.mxu0 %v7246
        %v7463 = vpop.f32.mrf.mxu0
        %v7464 = vadd.f32 %v7451, %v7463
        %v7465 = vpop.f32.mrf.mxu0
        %7466 = vdwg.mxu0
        %7467 = vmatpush.bf16.msra.mxu0 %v7416
        %7468 = vmatpush.bf16.msra.mxu0 %v7415
        %7469 = vmatpush.bf16.msra.mxu0 %v7414
        %7470 = vmatpush.bf16.msra.mxu0 %v7413
        %7471 = vmatpush.bf16.msra.mxu0 %v7412
        %7472 = vmatpush.bf16.msra.mxu0 %v7411
        %7473 = vmatpush.bf16.msra.mxu0 %v7410
        %7474 = vmatpush.bf16.msra.mxu0 %v7409
        %7475 = vmatmul.bf16.gmra.mxu0 %v7247
        %v7476 = vpop.f32.mrf.mxu0
        %v7477 = vadd.f32 %v7464, %v7476
        %v7478 = vpop.f32.mrf.mxu0
        %7479 = vdwg.mxu0
        %v7480 = vadd.f32 %v7244, %v7477
        %s7481 = scalar_lea.vmem [#allocation19], 1728
        %v7482 = vld [vmem:[%s7481] sm:$0xf]
        %v7483 = vld [vmem:[%s7481 + $0x4] sm:$0xf]
        %v7484 = vld [vmem:[%s7481 + $0x8] sm:$0xf]
        %v7485 = vld [vmem:[%s7481 + $0xc] sm:$0xf]
        %v7486 = vld [vmem:[%s7481 + $0x10] sm:$0xf]
        %v7487 = vld [vmem:[%s7481 + $0x14] sm:$0xf]
        %v7488 = vld [vmem:[%s7481 + $0x18] sm:$0xf]
        %v7489 = vld [vmem:[%s7481 + $0x1c] sm:$0xf]
        %v7490 = vld [vmem:[%s7481 + $0x20] sm:$0xf]
        %v7491 = vld [vmem:[%s7481 + $0x24] sm:$0xf]
        %v7492 = vld [vmem:[%s7481 + $0x28] sm:$0xf]
        %v7493 = vld [vmem:[%s7481 + $0x2c] sm:$0xf]
        %v7494 = vld [vmem:[%s7481 + $0x30] sm:$0xf]
        %v7495 = vld [vmem:[%s7481 + $0x34] sm:$0xf]
        %v7496 = vld [vmem:[%s7481 + $0x38] sm:$0xf]
        %v7497 = vld [vmem:[%s7481 + $0x3c] sm:$0xf]
        %v7498 = vld [vmem:[%s7481 + $0x40] sm:$0xf]
        %v7499 = vld [vmem:[%s7481 + $0x44] sm:$0xf]
        %v7500 = vld [vmem:[%s7481 + $0x48] sm:$0xf]
        %v7501 = vld [vmem:[%s7481 + $0x4c] sm:$0xf]
        %v7502 = vld [vmem:[%s7481 + $0x50] sm:$0xf]
        %v7503 = vld [vmem:[%s7481 + $0x54] sm:$0xf]
        %v7504 = vld [vmem:[%s7481 + $0x58] sm:$0xf]
        %v7505 = vld [vmem:[%s7481 + $0x5c] sm:$0xf]
        %v7506 = vld [vmem:[%s7481 + $0x60] sm:$0xf]
        %v7507 = vld [vmem:[%s7481 + $0x64] sm:$0xf]
        %v7508 = vld [vmem:[%s7481 + $0x68] sm:$0xf]
        %v7509 = vld [vmem:[%s7481 + $0x6c] sm:$0xf]
        %v7510 = vld [vmem:[%s7481 + $0x70] sm:$0xf]
        %v7511 = vld [vmem:[%s7481 + $0x74] sm:$0xf]
        %v7512 = vld [vmem:[%s7481 + $0x78] sm:$0xf]
        %v7513 = vld [vmem:[%s7481 + $0x7c] sm:$0xf]
        %v7514 = vld [vmem:[%s7481 + $0x80] sm:$0xf]
        %v7515 = vld [vmem:[%s7481 + $0x84] sm:$0xf]
        %v7516 = vld [vmem:[%s7481 + $0x88] sm:$0xf]
        %v7517 = vld [vmem:[%s7481 + $0x8c] sm:$0xf]
        %v7518 = vld [vmem:[%s7481 + $0x90] sm:$0xf]
        %v7519 = vld [vmem:[%s7481 + $0x94] sm:$0xf]
        %v7520 = vld [vmem:[%s7481 + $0x98] sm:$0xf]
        %v7521 = vld [vmem:[%s7481 + $0x9c] sm:$0xf]
        %v7522 = vld [vmem:[%s7481 + $0xa0] sm:$0xf]
        %v7523 = vld [vmem:[%s7481 + $0xa4] sm:$0xf]
        %v7524 = vld [vmem:[%s7481 + $0xa8] sm:$0xf]
        %v7525 = vld [vmem:[%s7481 + $0xac] sm:$0xf]
        %v7526 = vld [vmem:[%s7481 + $0xb0] sm:$0xf]
        %v7527 = vld [vmem:[%s7481 + $0xb4] sm:$0xf]
        %v7528 = vld [vmem:[%s7481 + $0xb8] sm:$0xf]
        %v7529 = vld [vmem:[%s7481 + $0xbc] sm:$0xf]
        %v7531 = vshrl.u32 %v7245, 16
        %v7534 = vshrl.u32 %v7246, 16
        %v7537 = vshrl.u32 %v7247, 16
        %v7590 = vunpack.c.l.b16 %v7482
        %v7591 = vunpack.c.l.b16 %v7483
        %v7592 = vunpack.c.l.b16 %v7484
        %v7593 = vunpack.c.l.b16 %v7485
        %v7594 = vunpack.c.l.b16 %v7486
        %v7595 = vunpack.c.l.b16 %v7487
        %v7596 = vunpack.c.l.b16 %v7488
        %v7597 = vunpack.c.l.b16 %v7489
        %v7598 = vunpack.c.l.b16 %v7490
        %v7599 = vunpack.c.l.b16 %v7491
        %v7600 = vunpack.c.l.b16 %v7492
        %v7601 = vunpack.c.l.b16 %v7493
        %v7602 = vunpack.c.l.b16 %v7494
        %v7603 = vunpack.c.l.b16 %v7495
        %v7604 = vunpack.c.l.b16 %v7496
        %v7605 = vunpack.c.l.b16 %v7497
        %v7606 = vunpack.c.l.b16 %v7498
        %v7607 = vunpack.c.l.b16 %v7499
        %v7608 = vunpack.c.l.b16 %v7500
        %v7609 = vunpack.c.l.b16 %v7501
        %v7610 = vunpack.c.l.b16 %v7502
        %v7611 = vunpack.c.l.b16 %v7503
        %v7612 = vunpack.c.l.b16 %v7504
        %v7613 = vunpack.c.l.b16 %v7505
        %v7614 = vunpack.c.l.b16 %v7506
        %v7615 = vunpack.c.l.b16 %v7507
        %v7616 = vunpack.c.l.b16 %v7508
        %v7617 = vunpack.c.l.b16 %v7509
        %v7618 = vunpack.c.l.b16 %v7510
        %v7619 = vunpack.c.l.b16 %v7511
        %v7620 = vunpack.c.l.b16 %v7512
        %v7621 = vunpack.c.l.b16 %v7513
        %v7622 = vunpack.c.l.b16 %v7514
        %v7623 = vunpack.c.l.b16 %v7515
        %v7624 = vunpack.c.l.b16 %v7516
        %v7625 = vunpack.c.l.b16 %v7517
        %v7626 = vunpack.c.l.b16 %v7518
        %v7627 = vunpack.c.l.b16 %v7519
        %v7628 = vunpack.c.l.b16 %v7520
        %v7629 = vunpack.c.l.b16 %v7521
        %v7630 = vunpack.c.l.b16 %v7522
        %v7631 = vunpack.c.l.b16 %v7523
        %v7632 = vunpack.c.l.b16 %v7524
        %v7633 = vunpack.c.l.b16 %v7525
        %v7634 = vunpack.c.l.b16 %v7526
        %v7635 = vunpack.c.l.b16 %v7527
        %v7636 = vunpack.c.l.b16 %v7528
        %v7637 = vunpack.c.l.b16 %v7529
        %v7638 = vpack.c.b16 %v7591, %v7590
        %v7639 = vpack.c.b16 %v7593, %v7592
        %v7640 = vpack.c.b16 %v7595, %v7594
        %v7641 = vpack.c.b16 %v7597, %v7596
        %v7642 = vpack.c.b16 %v7599, %v7598
        %v7643 = vpack.c.b16 %v7601, %v7600
        %v7644 = vpack.c.b16 %v7603, %v7602
        %v7645 = vpack.c.b16 %v7605, %v7604
        %v7646 = vpack.c.b16 %v7607, %v7606
        %v7647 = vpack.c.b16 %v7609, %v7608
        %v7648 = vpack.c.b16 %v7611, %v7610
        %v7649 = vpack.c.b16 %v7613, %v7612
        %v7650 = vpack.c.b16 %v7615, %v7614
        %v7651 = vpack.c.b16 %v7617, %v7616
        %v7652 = vpack.c.b16 %v7619, %v7618
        %v7653 = vpack.c.b16 %v7621, %v7620
        %v7654 = vpack.c.b16 %v7623, %v7622
        %v7655 = vpack.c.b16 %v7625, %v7624
        %v7656 = vpack.c.b16 %v7627, %v7626
        %v7657 = vpack.c.b16 %v7629, %v7628
        %v7658 = vpack.c.b16 %v7631, %v7630
        %v7659 = vpack.c.b16 %v7633, %v7632
        %v7660 = vpack.c.b16 %v7635, %v7634
        %v7661 = vpack.c.b16 %v7637, %v7636
        %7686 = vmatpush.bf16.msra.mxu0 %v7645
        %7687 = vmatpush.bf16.msra.mxu0 %v7644
        %7688 = vmatpush.bf16.msra.mxu0 %v7643
        %7689 = vmatpush.bf16.msra.mxu0 %v7642
        %7690 = vmatpush.bf16.msra.mxu0 %v7641
        %7691 = vmatpush.bf16.msra.mxu0 %v7640
        %7692 = vmatpush.bf16.msra.mxu0 %v7639
        %7693 = vmatpush.bf16.msra.mxu0 %v7638
        %7694 = vmatmul.bf16.gmra.mxu0 %v7531
        %v7695 = vpop.f32.mrf.mxu0
        %v7696 = vadd.f32 0.0, %v7695
        %v7697 = vpop.f32.mrf.mxu0
        %7698 = vdwg.mxu0
        %7699 = vmatpush.bf16.msra.mxu0 %v7653
        %7700 = vmatpush.bf16.msra.mxu0 %v7652
        %7701 = vmatpush.bf16.msra.mxu0 %v7651
        %7702 = vmatpush.bf16.msra.mxu0 %v7650
        %7703 = vmatpush.bf16.msra.mxu0 %v7649
        %7704 = vmatpush.bf16.msra.mxu0 %v7648
        %7705 = vmatpush.bf16.msra.mxu0 %v7647
        %7706 = vmatpush.bf16.msra.mxu0 %v7646
        %7707 = vmatmul.bf16.gmra.mxu0 %v7534
        %v7708 = vpop.f32.mrf.mxu0
        %v7709 = vadd.f32 %v7696, %v7708
        %v7710 = vpop.f32.mrf.mxu0
        %7711 = vdwg.mxu0
        %7712 = vmatpush.bf16.msra.mxu0 %v7661
        %7713 = vmatpush.bf16.msra.mxu0 %v7660
        %7714 = vmatpush.bf16.msra.mxu0 %v7659
        %7715 = vmatpush.bf16.msra.mxu0 %v7658
        %7716 = vmatpush.bf16.msra.mxu0 %v7657
        %7717 = vmatpush.bf16.msra.mxu0 %v7656
        %7718 = vmatpush.bf16.msra.mxu0 %v7655
        %7719 = vmatpush.bf16.msra.mxu0 %v7654
        %7720 = vmatmul.bf16.gmra.mxu0 %v7537
        %v7721 = vpop.f32.mrf.mxu0
        %v7722 = vadd.f32 %v7709, %v7721
        %v7723 = vpop.f32.mrf.mxu0
        %7724 = vdwg.mxu0
        %v7725 = vadd.f32 %v7480, %v7722
        %7726 = vst [vmem:[%s600] sm:$0x1] %v7725
        %s7727 = sand.u32 %s300, 1
        %s7728 = scalar_lea.sflag [#allocation4], %s7727
        %s7729 = sand.u32 %s300, 1
        %s7730 = scalar_lea.vmem [#allocation22], %s7729
        // Predicated region
        $region117: #{tpu_custom_call.1} parent=67 // pred_check
          %p7731 = pneg %p310
        $region118: #{tpu_custom_call.1} parent=67 // pred_check_branch
          %7733 = sbr.rel (%p7731) target = $region120
        $region119: #{tpu_custom_call.1} parent=67 // pred_region
          %7735 = vsyncadd %s7728, 0
          %s7736 = scalar_lea.hbm %s12, %s35
          %s7738 = sshll.u32 %s7730, 4
          %s7739 = int_to_ptr.vmem [resolvable:$true] %s7738
          %s7740 = sshll.u32 %s7736, 4
          %s7741 = int_to_ptr.hbm [resolvable:$true] %s7740
          %7743 = dma.vmem_to_hbm [thread:$0]  %s7739, 16, %s7741, %s7728
        $region120: #{tpu_custom_call.1} parent=67 // pred_fallthru
          _
      $region68: #{tpu_custom_call.1} parent=5 // pred_fallthru
        _
      %p7744 = scmp.le.s32.totalorder 2, %s30
      // Predicated region
      $region121: #{tpu_custom_call.1} parent=5 // pred_check
        %p7745 = pneg %p7744
      $region122: #{tpu_custom_call.1} parent=5 // pred_check_branch
        %7747 = sbr.rel (%p7745) target = $region124
      $region123: #{tpu_custom_call.1} parent=5 // pred_region
        %s7748 = ssub.s32 %s30, 2
        // Predicated region
        $region125: #{tpu_custom_call.1} parent=123 // pred_check
          %p7749 = pneg %p316
        $region126: #{tpu_custom_call.1} parent=123 // pred_check_branch
          %7751 = sbr.rel (%p7749) target = $region128
        $region127: #{tpu_custom_call.1} parent=123 // pred_region
          %s7752 = sand.u32 %s301, 1
          %s7753 = scalar_lea.sflag [#allocation4], %s7752
          %s7754 = sand.u32 %s301, 1
          %s7755 = scalar_lea.vmem [#allocation22], %s7754
          %7757 = dma.done %s7753, 16
        $region128: #{tpu_custom_call.1} parent=123 // pred_fallthru
          _
      $region124: #{tpu_custom_call.1} parent=5 // pred_fallthru
        _
    $region6: #{tpu_custom_call.1} parent=1 // loop_footer
      %s34 = sadd.s32 1, %s30
    $region7: #{tpu_custom_call.1} parent=1 // loop_footer_branch
      %29 = sbr.rel target = $region3
    $region8: #{tpu_custom_call.1} parent=1 // loop_exit
      _
    %7758 = vsyncpa [#allocation3], 1
    %s7759 = scalar_lea.sflag [#allocation3], 1
    %7760 = vsyncpa %s7759, 1
    %7761 = vsyncpa [#allocation6], 1
    %7762 = vsyncpa [#allocation9], 1
    %7763 = vsyncpa [#allocation12], 1
    %7764 = vsyncpa [#allocation15], 1
    %7765 = vsyncpa [#allocation18], 1
    %7766 = vsyncpa [#allocation21], 1
    %7767 = vsyncpa [#allocation4], 1
    %s7768 = scalar_lea.sflag [#allocation4], 1
    %7769 = vsyncpa %s7768, 1

</llo_original>
